<compile_context>
chip_gen: v7x
topology: tpu7x:2x2x1
jax: 0.10.0
libtpu: 0.0.40
codegen_flags: <defaults>
</compile_context>

<pallas_src>
import jax
import jax.numpy as jnp
from jax import lax
from jax.experimental import pallas as pl
from jax.experimental.pallas import tpu as pltpu

# ----------------------------------------------------------------------------
# Config (detectron2 defaults)
# ----------------------------------------------------------------------------
NUM_COARSE_SEGM_CHANNELS = 2
NUM_PATCHES = 24
DECONV_KERNEL = 4           # ConvTranspose2d(k=4, stride=2, padding=1)
UP_SCALE = 2                # bilinear x2, align_corners=False

HEAD_CHANNELS = (NUM_COARSE_SEGM_CHANNELS,        # ann_index
                 NUM_PATCHES + 1,                 # index_uv
                 NUM_PATCHES + 1,                 # u
                 NUM_PATCHES + 1)                 # v
COUT_TOTAL = sum(HEAD_CHANNELS)                   # 77
COUT_PAD = 128                                    # lane-dense packed width


# ----------------------------------------------------------------------------
# Pallas kernel: packed deconv (4 heads) + bias + fused 2x bilinear upsample
# ----------------------------------------------------------------------------
def _predictor_kernel(x_ref, w_ref, bias_ref, lo_ref, hi_ref):
    # x_ref   : (1, H+2, W+2, Cin)       bf16  zero-padded NHWC input
    # w_ref   : (4, 4*Cin, COUT_PAD)     bf16  per-sub-grid fused-K deconv weights
    #           sub = ry*2+rx ; K-block a*2+b <-> kernel tap (3-ry-2a, 3-rx-2b)
    # bias_ref: (1, COUT_PAD)            f32   packed bias
    # lo_ref  : (1, 4,  H, W, COUT_PAD)  f32   lowres sub-grids, class = 2*ry+rx
    #           lowres[2*iy+ry, 2*ix+rx] = lo[class, iy, ix]
    # hi_ref  : (1, 16, H, W, COUT_PAD)  f32   upsampled, class = rowcls*4+colcls
    #           hires[4*iy+rowcls, 4*ix+colcls] = hi[class, iy, ix]
    H, W = lo_ref.shape[2], lo_ref.shape[3]
    C = lo_ref.shape[4]
    bias = bias_ref[...]                                       # (1, C) f32

    # ---- packed transposed conv: 4 output sub-grids, one K=4*Cin matmul each --
    sub = [[None, None], [None, None]]
    for ry in range(2):
        for rx in range(2):
            taps = []
            for a in range(2):
                for b in range(2):
                    p = x_ref[0, ry + a:ry + a + H, rx + b:rx + b + W, :]
                    taps.append(p.reshape(H * W, -1))          # (H*W, Cin) bf16
            lhs = jnp.concatenate(taps, axis=1)                # (H*W, 4*Cin)
            acc = jnp.dot(lhs, w_ref[ry * 2 + rx],
                          preferred_element_type=jnp.float32) + bias
            s = acc.reshape(H, W, C)
            sub[ry][rx] = s
            lo_ref[0, ry * 2 + rx] = s

    # ---- fused 2x bilinear upsample (align_corners=False), sub-grid domain ----
    # lowres row 2*iy+ry -> hires rows 4*iy + (2*ry + p), p in {0,1}
    #   p=0: 0.75*low[j] + 0.25*low[j-1 clamped]
    #   p=1: 0.75*low[j] + 0.25*low[j+1 clamped]
    rowc = [[None, None] for _ in range(4)]                    # [rowclass][rx]
    for rx in range(2):
        s0, s1 = sub[0][rx], sub[1][rx]
        prev = jnp.concatenate([s0[:1], s1[:-1]], axis=0)      # clamp at top
        nxt = jnp.concatenate([s0[1:], s1[-1:]], axis=0)       # clamp at bottom
        rowc[0][rx] = 0.75 * s0 + 0.25 * prev                  # (ry=0, p=0)
        rowc[1][rx] = 0.75 * s0 + 0.25 * s1                    # (ry=0, p=1)
        rowc[2][rx] = 0.75 * s1 + 0.25 * s0                    # (ry=1, p=0)
        rowc[3][rx] = 0.75 * s1 + 0.25 * nxt                   # (ry=1, p=1)
    for rc in range(4):
        c0, c1 = rowc[rc][0], rowc[rc][1]
        prev = jnp.concatenate([c0[:, :1], c1[:, :-1]], axis=1)
        nxt = jnp.concatenate([c0[:, 1:], c1[:, -1:]], axis=1)
        hi_ref[0, rc * 4 + 0] = 0.75 * c0 + 0.25 * prev        # (rx=0, q=0)
        hi_ref[0, rc * 4 + 1] = 0.75 * c0 + 0.25 * c1          # (rx=0, q=1)
        hi_ref[0, rc * 4 + 2] = 0.75 * c1 + 0.25 * c0          # (rx=1, q=0)
        hi_ref[0, rc * 4 + 3] = 0.75 * c1 + 0.25 * nxt         # (rx=1, q=1)


# ----------------------------------------------------------------------------
# Glue: class-slab layout -> NCHW, channel splitting
# ----------------------------------------------------------------------------
def _assemble_nchw(cls_out, f):
    """cls_out: (N, f*f, H, W, C), class = rowclass*f + colclass, with
    fullres[n, f*iy + rowclass, f*ix + colclass, c] = cls_out[n, class, iy, ix, c].
    Returns NCHW (N, C, f*H, f*W)."""
    N, _, H, W, C = cls_out.shape
    t = cls_out.reshape(N, f, f, H, W, C)
    t = jnp.transpose(t, (0, 5, 3, 1, 4, 2))                   # (N, C, H, f, W, f)
    return t.reshape(N, C, H * f, W * f)


def _split_heads(x_nchw):
    outs, off = [], 0
    for c in HEAD_CHANNELS:
        outs.append(x_nchw[:, off:off + c])
        off += c
    return outs


# ----------------------------------------------------------------------------
# Parameters (kaiming-normal 'fan_out' weights, zero bias; packed for the kernel)
# ----------------------------------------------------------------------------
def init_params(key, in_channels):
    keys = jax.random.split(key, len(HEAD_CHANNELS))
    k = DECONV_KERNEL
    ws, bs = [], []
    for kk, cout in zip(keys, HEAD_CHANNELS):
        # ConvTranspose2d weight shape (Cin, Cout, k, k): fan_out = Cin * k * k
        fan_out = in_channels * k * k
        std = (2.0 / fan_out) ** 0.5
        ws.append(std * jax.random.normal(kk, (in_channels, cout, k, k),
                                          jnp.float32))
        bs.append(jnp.zeros((cout,), jnp.float32))      # nn.init.constant_(bias, 0)

    w_cat = jnp.concatenate(ws, axis=1)                 # (Cin, 77, 4, 4)
    b_cat = jnp.concatenate(bs, axis=0)                 # (77,)
    pad_c = COUT_PAD - COUT_TOTAL
    w_cat_p = jnp.pad(w_cat, ((0, 0), (0, pad_c), (0, 0), (0, 0)))
    b_cat_p = jnp.pad(b_cat, ((0, pad_c),))

    # Pack: one (4*Cin, 128) weight per output sub-grid (ry, rx); K-block order
    # (a, b) matches the patch-concat order in the kernel.
    subs = []
    for ry in range(2):
        for rx in range(2):
            blocks = []
            for a in range(2):
                for b in range(2):
                    ky = 3 - ry - 2 * a
                    kx = 3 - rx - 2 * b
                    blocks.append(w_cat_p[:, :, ky, kx])        # (Cin, 128)
            subs.append(jnp.concatenate(blocks, axis=0))        # (4*Cin, 128)
    w_packed = jnp.stack(subs, axis=0).astype(jnp.bfloat16)     # (4, 4*Cin, 128)
    b_packed = b_cat_p.reshape(1, COUT_PAD).astype(jnp.float32)

    params = {"w_packed": w_packed, "b_packed": b_packed}
    # bf16-rounded f32 copies for the pure-XLA reference check
    ref = {"w_cat": w_cat.astype(jnp.bfloat16).astype(jnp.float32),
           "b_cat": b_cat}
    return params, ref


# ----------------------------------------------------------------------------
# Forward pass
# ----------------------------------------------------------------------------
def densepose_predictor_forward(x_nchw, params):
    N, Cin, H, W = x_nchw.shape
    # NCHW -> NHWC, bf16 MXU inputs, zero-pad spatial halo for the deconv taps.
    x = jnp.transpose(x_nchw, (0, 2, 3, 1)).astype(jnp.bfloat16)
    xp = jnp.pad(x, ((0, 0), (1, 1), (1, 1), (0, 0)))

    lo, hi = pl.pallas_call(
        _predictor_kernel,
        out_shape=(
            jax.ShapeDtypeStruct((N, 4, H, W, COUT_PAD), jnp.float32),
            jax.ShapeDtypeStruct((N, 16, H, W, COUT_PAD), jnp.float32),
        ),
        grid_spec=pltpu.PrefetchScalarGridSpec(
            num_scalar_prefetch=0,
            grid=(N,),
            in_specs=[
                pl.BlockSpec((1, H + 2, W + 2, Cin), lambda n: (n, 0, 0, 0)),
                pl.BlockSpec((4, 4 * Cin, COUT_PAD), lambda n: (0, 0, 0)),
                pl.BlockSpec((1, COUT_PAD), lambda n: (0, 0)),
            ],
            out_specs=[
                pl.BlockSpec((1, 4, H, W, COUT_PAD), lambda n: (n, 0, 0, 0, 0)),
                pl.BlockSpec((1, 16, H, W, COUT_PAD), lambda n: (n, 0, 0, 0, 0)),
            ],
        ),
        compiler_params=pltpu.CompilerParams(
            dimension_semantics=("parallel",)),
    )(xp, params["w_packed"], params["b_packed"])

    lowres_nchw = _assemble_nchw(lo, 2)                 # (N, 128, 2H, 2W)
    hires_nchw = _assemble_nchw(hi, 2 * UP_SCALE)       # (N, 128, 4H, 4W)

    ann_index_lowres, index_uv_lowres, u_lowres, v_lowres = _split_heads(lowres_nchw)
    ann_index, index_uv, u, v = _split_heads(hires_nchw)

    # TODO(synk): UV-confidence deconv heads (sigma/kappa) omitted — cfg default
    # MODEL.ROI_DENSEPOSE_HEAD.UV_CONFIDENCE.ENABLED = False, so they are None.
    sigma_1 = sigma_2 = kappa_u = kappa_v = None
    sigma_1_lowres = sigma_2_lowres = kappa_u_lowres = kappa_v_lowres = None

    return ((ann_index, index_uv, u, v),
            (ann_index_lowres, index_uv_lowres, u_lowres, v_lowres),
            (sigma_1, sigma_2, kappa_u, kappa_v),
            (sigma_1_lowres, sigma_2_lowres, kappa_u_lowres, kappa_v_lowres))


# ----------------------------------------------------------------------------
# Pure-XLA reference (transposed conv via lhs-dilated conv + explicit bilinear)
# ----------------------------------------------------------------------------
def _reference_forward(x_nchw, w_cat, b_cat):
    K = DECONV_KERNEL
    x = jnp.transpose(x_nchw, (0, 2, 3, 1)).astype(jnp.bfloat16).astype(jnp.float32)
    # HWIO kernel, spatially flipped (ConvTranspose == lhs-dilated correlation
    # with the flipped kernel and padding = K - 1 - p = 2).
    w_hwio = jnp.transpose(w_cat, (2, 3, 0, 1))[::-1, ::-1]
    low = lax.conv_general_dilated(
        x, w_hwio, window_strides=(1, 1),
        padding=((K - 2, K - 2), (K - 2, K - 2)), lhs_dilation=(2, 2),
        dimension_numbers=("NHWC", "HWIO", "NHWC")) + b_cat
    low = jnp.transpose(low, (0, 3, 1, 2))              # (N, 77, 2H, 2W)

    def up_axis(arr, axis):
        size = arr.shape[axis]
        o = jnp.arange(2 * size)
        src = jnp.maximum((o + 0.5) / 2.0 - 0.5, 0.0)
        i0 = jnp.floor(src).astype(jnp.int32)
        i1 = jnp.minimum(i0 + 1, size - 1)
        w1 = (src - i0).astype(arr.dtype)
        shape = [1] * arr.ndim
        shape[axis] = 2 * size
        w1 = w1.reshape(shape)
        return (1.0 - w1) * jnp.take(arr, i0, axis=axis) + w1 * jnp.take(arr, i1, axis=axis)

    high = up_axis(up_axis(low, 2), 3)                  # (N, 77, 4H, 4W)
    return low, high


# ----------------------------------------------------------------------------
# Main
# ----------------------------------------------------------------------------
if __name__ == "__main__":
    BATCH, CIN, H, W = 2, 128, 16, 16

    key = jax.random.PRNGKey(0)
    k_x, k_p = jax.random.split(key)
    x = jax.random.normal(k_x, (BATCH, CIN, H, W), dtype=jnp.float32)
    params, ref_params = init_params(k_p, CIN)

    fwd = jax.jit(densepose_predictor_forward)
    out = fwd(x, params)
    out = jax.block_until_ready(out)
    hi_out, lo_out, conf, conf_lo = out

    ann_index, index_uv, u, v = hi_out
    ann_index_lo, index_uv_lo, u_lo, v_lo = lo_out

    # --- shape / finiteness checks -------------------------------------------
    assert ann_index.shape == (BATCH, NUM_COARSE_SEGM_CHANNELS, 4 * H, 4 * W), ann_index.shape
    assert index_uv.shape == (BATCH, NUM_PATCHES + 1, 4 * H, 4 * W), index_uv.shape
    assert u.shape == (BATCH, NUM_PATCHES + 1, 4 * H, 4 * W), u.shape
    assert v.shape == (BATCH, NUM_PATCHES + 1, 4 * H, 4 * W), v.shape
    assert ann_index_lo.shape == (BATCH, NUM_COARSE_SEGM_CHANNELS, 2 * H, 2 * W), ann_index_lo.shape
    assert index_uv_lo.shape == (BATCH, NUM_PATCHES + 1, 2 * H, 2 * W), index_uv_lo.shape
    assert u_lo.shape == (BATCH, NUM_PATCHES + 1, 2 * H, 2 * W), u_lo.shape
    assert v_lo.shape == (BATCH, NUM_PATCHES + 1, 2 * H, 2 * W), v_lo.shape
    assert all(c is None for c in conf) and all(c is None for c in conf_lo)
    for arr in (ann_index, index_uv, u, v, ann_index_lo, index_uv_lo, u_lo, v_lo):
        assert bool(jnp.all(jnp.isfinite(arr)))

    # --- numerical check against a pure-XLA reference ------------------------
    low_ref, high_ref = jax.jit(_reference_forward)(x, ref_params["w_cat"],
                                                    ref_params["b_cat"])
    low_got = jnp.concatenate([ann_index_lo, index_uv_lo, u_lo, v_lo], axis=1)
    high_got = jnp.concatenate([ann_index, index_uv, u, v], axis=1)
    assert bool(jnp.allclose(low_got, low_ref, rtol=1e-3, atol=1e-3)), \
        float(jnp.max(jnp.abs(low_got - low_ref)))
    assert bool(jnp.allclose(high_got, high_ref, rtol=1e-3, atol=1e-3)), \
        float(jnp.max(jnp.abs(high_got - high_ref)))

    print("KERNEL_OK")
</pallas_src>

<mosaic_0001>
module attributes {stable_mosaic.version = 11 : i64} {
  func.func @_predictor_kernel(%arg0: i32, %arg1: memref<1x18x18x128xbf16, #tpu.memory_space<vmem>>, %arg2: memref<4x512x128xbf16, #tpu.memory_space<vmem>>, %arg3: memref<1x128xf32, #tpu.memory_space<vmem>>, %arg4: memref<1x4x16x16x128xf32, #tpu.memory_space<vmem>>, %arg5: memref<1x16x16x16x128xf32, #tpu.memory_space<vmem>>) attributes {dimension_semantics = [#tpu.dimension_semantics<parallel>], iteration_bounds = array<i64: 2>, scalar_prefetch = 0 : i64, scratch_operands = 0 : i64, tpu.core_type = #tpu.core_type<tc>, window_params = [{transform_indices = @transform_0, window_bounds = array<i64: 1, 18, 18, 128>}, {pipeline_mode = #tpu.pipeline_mode<synchronous>, transform_indices = @transform_1, window_bounds = array<i64: 4, 512, 128>}, {pipeline_mode = #tpu.pipeline_mode<synchronous>, transform_indices = @transform_2, window_bounds = array<i64: 1, 128>}, {transform_indices = @transform_3, window_bounds = array<i64: 1, 4, 16, 16, 128>}, {transform_indices = @transform_4, window_bounds = array<i64: 1, 16, 16, 16, 128>}]} {
    %c0 = arith.constant 0 : index
    %c0_0 = arith.constant 0 : index
    %0 = vector.load %arg3[%c0, %c0_0] : memref<1x128xf32, #tpu.memory_space<vmem>>, vector<1x128xf32>
    %c0_1 = arith.constant 0 : index
    %c0_2 = arith.constant 0 : index
    %c0_3 = arith.constant 0 : index
    %c0_4 = arith.constant 0 : index
    %1 = vector.load %arg1[%c0_1, %c0_2, %c0_3, %c0_4] : memref<1x18x18x128xbf16, #tpu.memory_space<vmem>>, vector<1x16x16x128xbf16>
    %2 = vector.shape_cast %1 : vector<1x16x16x128xbf16> to vector<16x16x128xbf16>
    %3 = vector.shape_cast %2 : vector<16x16x128xbf16> to vector<256x128xbf16>
    %c0_5 = arith.constant 0 : index
    %c0_6 = arith.constant 0 : index
    %c1 = arith.constant 1 : index
    %c0_7 = arith.constant 0 : index
    %4 = vector.load %arg1[%c0_5, %c0_6, %c1, %c0_7] : memref<1x18x18x128xbf16, #tpu.memory_space<vmem>>, vector<1x16x16x128xbf16>
    %5 = vector.shape_cast %4 : vector<1x16x16x128xbf16> to vector<16x16x128xbf16>
    %6 = vector.shape_cast %5 : vector<16x16x128xbf16> to vector<256x128xbf16>
    %c0_8 = arith.constant 0 : index
    %c1_9 = arith.constant 1 : index
    %c0_10 = arith.constant 0 : index
    %c0_11 = arith.constant 0 : index
    %7 = vector.load %arg1[%c0_8, %c1_9, %c0_10, %c0_11] : memref<1x18x18x128xbf16, #tpu.memory_space<vmem>>, vector<1x16x16x128xbf16>
    %8 = vector.shape_cast %7 : vector<1x16x16x128xbf16> to vector<16x16x128xbf16>
    %9 = vector.shape_cast %8 : vector<16x16x128xbf16> to vector<256x128xbf16>
    %c0_12 = arith.constant 0 : index
    %c1_13 = arith.constant 1 : index
    %c1_14 = arith.constant 1 : index
    %c0_15 = arith.constant 0 : index
    %10 = vector.load %arg1[%c0_12, %c1_13, %c1_14, %c0_15] : memref<1x18x18x128xbf16, #tpu.memory_space<vmem>>, vector<1x16x16x128xbf16>
    %11 = vector.shape_cast %10 : vector<1x16x16x128xbf16> to vector<16x16x128xbf16>
    %12 = vector.shape_cast %11 : vector<16x16x128xbf16> to vector<256x128xbf16>
    %13 = tpu.concatenate %3, %6, %9, %12 in 1 : vector<256x128xbf16>, vector<256x128xbf16>, vector<256x128xbf16>, vector<256x128xbf16> -> vector<256x512xbf16>
    %c0_16 = arith.constant 0 : index
    %c0_17 = arith.constant 0 : index
    %c0_18 = arith.constant 0 : index
    %14 = vector.load %arg2[%c0_16, %c0_17, %c0_18] : memref<4x512x128xbf16, #tpu.memory_space<vmem>>, vector<1x512x128xbf16>
    %15 = vector.shape_cast %14 : vector<1x512x128xbf16> to vector<512x128xbf16>
    %cst = arith.constant dense<0.000000e+00> : vector<256x128xf32>
    %16 = tpu.matmul %13, %15, %cst {dimension_numbers = #tpu.dot_dimension_numbers<[1], [0], [0], [1], [0, 0, 1, 1], [], []>} : vector<256x512xbf16>, vector<512x128xbf16>, vector<256x128xf32> -> vector<256x128xf32>
    %17 = vector.broadcast %0 : vector<1x128xf32> to vector<256x128xf32>
    %18 = arith.addf %16, %17 : vector<256x128xf32>
    %19 = vector.shape_cast %18 : vector<256x128xf32> to vector<16x16x128xf32>
    %c0_19 = arith.constant 0 : index
    %c0_20 = arith.constant 0 : index
    %c0_21 = arith.constant 0 : index
    %c0_22 = arith.constant 0 : index
    %c0_23 = arith.constant 0 : index
    %20 = vector.load %arg4[%c0_19, %c0_20, %c0_21, %c0_22, %c0_23] : memref<1x4x16x16x128xf32, #tpu.memory_space<vmem>>, vector<1x1x16x16x128xf32>
    %21 = vector.shape_cast %20 : vector<1x1x16x16x128xf32> to vector<16x16x128xf32>
    %22 = vector.shape_cast %19 : vector<16x16x128xf32> to vector<1x1x16x16x128xf32>
    tpu.vector_store %arg4[%c0_19, %c0_20, %c0_21, %c0_22, %c0_23], %22 {strides = array<i32>} : memref<1x4x16x16x128xf32, #tpu.memory_space<vmem>>, vector<1x1x16x16x128xf32>,
    %c0_24 = arith.constant 0 : index
    %c0_25 = arith.constant 0 : index
    %c1_26 = arith.constant 1 : index
    %c0_27 = arith.constant 0 : index
    %23 = vector.load %arg1[%c0_24, %c0_25, %c1_26, %c0_27] : memref<1x18x18x128xbf16, #tpu.memory_space<vmem>>, vector<1x16x16x128xbf16>
    %24 = vector.shape_cast %23 : vector<1x16x16x128xbf16> to vector<16x16x128xbf16>
    %25 = vector.shape_cast %24 : vector<16x16x128xbf16> to vector<256x128xbf16>
    %c0_28 = arith.constant 0 : index
    %c0_29 = arith.constant 0 : index
    %c2 = arith.constant 2 : index
    %c0_30 = arith.constant 0 : index
    %26 = vector.load %arg1[%c0_28, %c0_29, %c2, %c0_30] : memref<1x18x18x128xbf16, #tpu.memory_space<vmem>>, vector<1x16x16x128xbf16>
    %27 = vector.shape_cast %26 : vector<1x16x16x128xbf16> to vector<16x16x128xbf16>
    %28 = vector.shape_cast %27 : vector<16x16x128xbf16> to vector<256x128xbf16>
    %c0_31 = arith.constant 0 : index
    %c1_32 = arith.constant 1 : index
    %c1_33 = arith.constant 1 : index
    %c0_34 = arith.constant 0 : index
    %29 = vector.load %arg1[%c0_31, %c1_32, %c1_33, %c0_34] : memref<1x18x18x128xbf16, #tpu.memory_space<vmem>>, vector<1x16x16x128xbf16>
    %30 = vector.shape_cast %29 : vector<1x16x16x128xbf16> to vector<16x16x128xbf16>
    %31 = vector.shape_cast %30 : vector<16x16x128xbf16> to vector<256x128xbf16>
    %c0_35 = arith.constant 0 : index
    %c1_36 = arith.constant 1 : index
    %c2_37 = arith.constant 2 : index
    %c0_38 = arith.constant 0 : index
    %32 = vector.load %arg1[%c0_35, %c1_36, %c2_37, %c0_38] : memref<1x18x18x128xbf16, #tpu.memory_space<vmem>>, vector<1x16x16x128xbf16>
    %33 = vector.shape_cast %32 : vector<1x16x16x128xbf16> to vector<16x16x128xbf16>
    %34 = vector.shape_cast %33 : vector<16x16x128xbf16> to vector<256x128xbf16>
    %35 = tpu.concatenate %25, %28, %31, %34 in 1 : vector<256x128xbf16>, vector<256x128xbf16>, vector<256x128xbf16>, vector<256x128xbf16> -> vector<256x512xbf16>
    %c1_39 = arith.constant 1 : index
    %c0_40 = arith.constant 0 : index
    %c0_41 = arith.constant 0 : index
    %36 = vector.load %arg2[%c1_39, %c0_40, %c0_41] : memref<4x512x128xbf16, #tpu.memory_space<vmem>>, vector<1x512x128xbf16>
    %37 = vector.shape_cast %36 : vector<1x512x128xbf16> to vector<512x128xbf16>
    %cst_42 = arith.constant dense<0.000000e+00> : vector<256x128xf32>
    %38 = tpu.matmul %35, %37, %cst_42 {dimension_numbers = #tpu.dot_dimension_numbers<[1], [0], [0], [1], [0, 0, 1, 1], [], []>} : vector<256x512xbf16>, vector<512x128xbf16>, vector<256x128xf32> -> vector<256x128xf32>
    %39 = vector.broadcast %0 : vector<1x128xf32> to vector<256x128xf32>
    %40 = arith.addf %38, %39 : vector<256x128xf32>
    %41 = vector.shape_cast %40 : vector<256x128xf32> to vector<16x16x128xf32>
    %c0_43 = arith.constant 0 : index
    %c1_44 = arith.constant 1 : index
    %c0_45 = arith.constant 0 : index
    %c0_46 = arith.constant 0 : index
    %c0_47 = arith.constant 0 : index
    %42 = vector.load %arg4[%c0_43, %c1_44, %c0_45, %c0_46, %c0_47] : memref<1x4x16x16x128xf32, #tpu.memory_space<vmem>>, vector<1x1x16x16x128xf32>
    %43 = vector.shape_cast %42 : vector<1x1x16x16x128xf32> to vector<16x16x128xf32>
    %44 = vector.shape_cast %41 : vector<16x16x128xf32> to vector<1x1x16x16x128xf32>
    tpu.vector_store %arg4[%c0_43, %c1_44, %c0_45, %c0_46, %c0_47], %44 {strides = array<i32>} : memref<1x4x16x16x128xf32, #tpu.memory_space<vmem>>, vector<1x1x16x16x128xf32>,
    %c0_48 = arith.constant 0 : index
    %c1_49 = arith.constant 1 : index
    %c0_50 = arith.constant 0 : index
    %c0_51 = arith.constant 0 : index
    %45 = vector.load %arg1[%c0_48, %c1_49, %c0_50, %c0_51] : memref<1x18x18x128xbf16, #tpu.memory_space<vmem>>, vector<1x16x16x128xbf16>
    %46 = vector.shape_cast %45 : vector<1x16x16x128xbf16> to vector<16x16x128xbf16>
    %47 = vector.shape_cast %46 : vector<16x16x128xbf16> to vector<256x128xbf16>
    %c0_52 = arith.constant 0 : index
    %c1_53 = arith.constant 1 : index
    %c1_54 = arith.constant 1 : index
    %c0_55 = arith.constant 0 : index
    %48 = vector.load %arg1[%c0_52, %c1_53, %c1_54, %c0_55] : memref<1x18x18x128xbf16, #tpu.memory_space<vmem>>, vector<1x16x16x128xbf16>
    %49 = vector.shape_cast %48 : vector<1x16x16x128xbf16> to vector<16x16x128xbf16>
    %50 = vector.shape_cast %49 : vector<16x16x128xbf16> to vector<256x128xbf16>
    %c0_56 = arith.constant 0 : index
    %c2_57 = arith.constant 2 : index
    %c0_58 = arith.constant 0 : index
    %c0_59 = arith.constant 0 : index
    %51 = vector.load %arg1[%c0_56, %c2_57, %c0_58, %c0_59] : memref<1x18x18x128xbf16, #tpu.memory_space<vmem>>, vector<1x16x16x128xbf16>
    %52 = vector.shape_cast %51 : vector<1x16x16x128xbf16> to vector<16x16x128xbf16>
    %53 = vector.shape_cast %52 : vector<16x16x128xbf16> to vector<256x128xbf16>
    %c0_60 = arith.constant 0 : index
    %c2_61 = arith.constant 2 : index
    %c1_62 = arith.constant 1 : index
    %c0_63 = arith.constant 0 : index
    %54 = vector.load %arg1[%c0_60, %c2_61, %c1_62, %c0_63] : memref<1x18x18x128xbf16, #tpu.memory_space<vmem>>, vector<1x16x16x128xbf16>
    %55 = vector.shape_cast %54 : vector<1x16x16x128xbf16> to vector<16x16x128xbf16>
    %56 = vector.shape_cast %55 : vector<16x16x128xbf16> to vector<256x128xbf16>
    %57 = tpu.concatenate %47, %50, %53, %56 in 1 : vector<256x128xbf16>, vector<256x128xbf16>, vector<256x128xbf16>, vector<256x128xbf16> -> vector<256x512xbf16>
    %c2_64 = arith.constant 2 : index
    %c0_65 = arith.constant 0 : index
    %c0_66 = arith.constant 0 : index
    %58 = vector.load %arg2[%c2_64, %c0_65, %c0_66] : memref<4x512x128xbf16, #tpu.memory_space<vmem>>, vector<1x512x128xbf16>
    %59 = vector.shape_cast %58 : vector<1x512x128xbf16> to vector<512x128xbf16>
    %cst_67 = arith.constant dense<0.000000e+00> : vector<256x128xf32>
    %60 = tpu.matmul %57, %59, %cst_67 {dimension_numbers = #tpu.dot_dimension_numbers<[1], [0], [0], [1], [0, 0, 1, 1], [], []>} : vector<256x512xbf16>, vector<512x128xbf16>, vector<256x128xf32> -> vector<256x128xf32>
    %61 = vector.broadcast %0 : vector<1x128xf32> to vector<256x128xf32>
    %62 = arith.addf %60, %61 : vector<256x128xf32>
    %63 = vector.shape_cast %62 : vector<256x128xf32> to vector<16x16x128xf32>
    %c0_68 = arith.constant 0 : index
    %c2_69 = arith.constant 2 : index
    %c0_70 = arith.constant 0 : index
    %c0_71 = arith.constant 0 : index
    %c0_72 = arith.constant 0 : index
    %64 = vector.load %arg4[%c0_68, %c2_69, %c0_70, %c0_71, %c0_72] : memref<1x4x16x16x128xf32, #tpu.memory_space<vmem>>, vector<1x1x16x16x128xf32>
    %65 = vector.shape_cast %64 : vector<1x1x16x16x128xf32> to vector<16x16x128xf32>
    %66 = vector.shape_cast %63 : vector<16x16x128xf32> to vector<1x1x16x16x128xf32>
    tpu.vector_store %arg4[%c0_68, %c2_69, %c0_70, %c0_71, %c0_72], %66 {strides = array<i32>} : memref<1x4x16x16x128xf32, #tpu.memory_space<vmem>>, vector<1x1x16x16x128xf32>,
    %c0_73 = arith.constant 0 : index
    %c1_74 = arith.constant 1 : index
    %c1_75 = arith.constant 1 : index
    %c0_76 = arith.constant 0 : index
    %67 = vector.load %arg1[%c0_73, %c1_74, %c1_75, %c0_76] : memref<1x18x18x128xbf16, #tpu.memory_space<vmem>>, vector<1x16x16x128xbf16>
    %68 = vector.shape_cast %67 : vector<1x16x16x128xbf16> to vector<16x16x128xbf16>
    %69 = vector.shape_cast %68 : vector<16x16x128xbf16> to vector<256x128xbf16>
    %c0_77 = arith.constant 0 : index
    %c1_78 = arith.constant 1 : index
    %c2_79 = arith.constant 2 : index
    %c0_80 = arith.constant 0 : index
    %70 = vector.load %arg1[%c0_77, %c1_78, %c2_79, %c0_80] : memref<1x18x18x128xbf16, #tpu.memory_space<vmem>>, vector<1x16x16x128xbf16>
    %71 = vector.shape_cast %70 : vector<1x16x16x128xbf16> to vector<16x16x128xbf16>
    %72 = vector.shape_cast %71 : vector<16x16x128xbf16> to vector<256x128xbf16>
    %c0_81 = arith.constant 0 : index
    %c2_82 = arith.constant 2 : index
    %c1_83 = arith.constant 1 : index
    %c0_84 = arith.constant 0 : index
    %73 = vector.load %arg1[%c0_81, %c2_82, %c1_83, %c0_84] : memref<1x18x18x128xbf16, #tpu.memory_space<vmem>>, vector<1x16x16x128xbf16>
    %74 = vector.shape_cast %73 : vector<1x16x16x128xbf16> to vector<16x16x128xbf16>
    %75 = vector.shape_cast %74 : vector<16x16x128xbf16> to vector<256x128xbf16>
    %c0_85 = arith.constant 0 : index
    %c2_86 = arith.constant 2 : index
    %c2_87 = arith.constant 2 : index
    %c0_88 = arith.constant 0 : index
    %76 = vector.load %arg1[%c0_85, %c2_86, %c2_87, %c0_88] : memref<1x18x18x128xbf16, #tpu.memory_space<vmem>>, vector<1x16x16x128xbf16>
    %77 = vector.shape_cast %76 : vector<1x16x16x128xbf16> to vector<16x16x128xbf16>
    %78 = vector.shape_cast %77 : vector<16x16x128xbf16> to vector<256x128xbf16>
    %79 = tpu.concatenate %69, %72, %75, %78 in 1 : vector<256x128xbf16>, vector<256x128xbf16>, vector<256x128xbf16>, vector<256x128xbf16> -> vector<256x512xbf16>
    %c3 = arith.constant 3 : index
    %c0_89 = arith.constant 0 : index
    %c0_90 = arith.constant 0 : index
    %80 = vector.load %arg2[%c3, %c0_89, %c0_90] : memref<4x512x128xbf16, #tpu.memory_space<vmem>>, vector<1x512x128xbf16>
    %81 = vector.shape_cast %80 : vector<1x512x128xbf16> to vector<512x128xbf16>
    %cst_91 = arith.constant dense<0.000000e+00> : vector<256x128xf32>
    %82 = tpu.matmul %79, %81, %cst_91 {dimension_numbers = #tpu.dot_dimension_numbers<[1], [0], [0], [1], [0, 0, 1, 1], [], []>} : vector<256x512xbf16>, vector<512x128xbf16>, vector<256x128xf32> -> vector<256x128xf32>
    %83 = vector.broadcast %0 : vector<1x128xf32> to vector<256x128xf32>
    %84 = arith.addf %82, %83 : vector<256x128xf32>
    %85 = vector.shape_cast %84 : vector<256x128xf32> to vector<16x16x128xf32>
    %c0_92 = arith.constant 0 : index
    %c3_93 = arith.constant 3 : index
    %c0_94 = arith.constant 0 : index
    %c0_95 = arith.constant 0 : index
    %c0_96 = arith.constant 0 : index
    %86 = vector.load %arg4[%c0_92, %c3_93, %c0_94, %c0_95, %c0_96] : memref<1x4x16x16x128xf32, #tpu.memory_space<vmem>>, vector<1x1x16x16x128xf32>
    %87 = vector.shape_cast %86 : vector<1x1x16x16x128xf32> to vector<16x16x128xf32>
    %88 = vector.shape_cast %85 : vector<16x16x128xf32> to vector<1x1x16x16x128xf32>
    tpu.vector_store %arg4[%c0_92, %c3_93, %c0_94, %c0_95, %c0_96], %88 {strides = array<i32>} : memref<1x4x16x16x128xf32, #tpu.memory_space<vmem>>, vector<1x1x16x16x128xf32>,
    %89 = vector.extract_strided_slice %19 {offsets = [0, 0, 0], sizes = [1, 16, 128], strides = [1, 1, 1]} : vector<16x16x128xf32> to vector<1x16x128xf32>
    %90 = vector.extract_strided_slice %63 {offsets = [0, 0, 0], sizes = [15, 16, 128], strides = [1, 1, 1]} : vector<16x16x128xf32> to vector<15x16x128xf32>
    %91 = tpu.concatenate %89, %90 in 0 : vector<1x16x128xf32>, vector<15x16x128xf32> -> vector<16x16x128xf32>
    %92 = vector.extract_strided_slice %19 {offsets = [1, 0, 0], sizes = [15, 16, 128], strides = [1, 1, 1]} : vector<16x16x128xf32> to vector<15x16x128xf32>
    %93 = vector.extract_strided_slice %63 {offsets = [15, 0, 0], sizes = [1, 16, 128], strides = [1, 1, 1]} : vector<16x16x128xf32> to vector<1x16x128xf32>
    %94 = tpu.concatenate %92, %93 in 0 : vector<15x16x128xf32>, vector<1x16x128xf32> -> vector<16x16x128xf32>
    %cst_97 = arith.constant 7.500000e-01 : f32
    %95 = vector.broadcast %cst_97 : f32 to vector<16x16x128xf32>
    %96 = arith.mulf %95, %19 : vector<16x16x128xf32>
    %cst_98 = arith.constant 2.500000e-01 : f32
    %97 = vector.broadcast %cst_98 : f32 to vector<16x16x128xf32>
    %98 = arith.mulf %97, %91 : vector<16x16x128xf32>
    %99 = arith.addf %96, %98 : vector<16x16x128xf32>
    %cst_99 = arith.constant 7.500000e-01 : f32
    %100 = vector.broadcast %cst_99 : f32 to vector<16x16x128xf32>
    %101 = arith.mulf %100, %19 : vector<16x16x128xf32>
    %cst_100 = arith.constant 2.500000e-01 : f32
    %102 = vector.broadcast %cst_100 : f32 to vector<16x16x128xf32>
    %103 = arith.mulf %102, %63 : vector<16x16x128xf32>
    %104 = arith.addf %101, %103 : vector<16x16x128xf32>
    %cst_101 = arith.constant 7.500000e-01 : f32
    %105 = vector.broadcast %cst_101 : f32 to vector<16x16x128xf32>
    %106 = arith.mulf %105, %63 : vector<16x16x128xf32>
    %cst_102 = arith.constant 2.500000e-01 : f32
    %107 = vector.broadcast %cst_102 : f32 to vector<16x16x128xf32>
    %108 = arith.mulf %107, %19 : vector<16x16x128xf32>
    %109 = arith.addf %106, %108 : vector<16x16x128xf32>
    %cst_103 = arith.constant 7.500000e-01 : f32
    %110 = vector.broadcast %cst_103 : f32 to vector<16x16x128xf32>
    %111 = arith.mulf %110, %63 : vector<16x16x128xf32>
    %cst_104 = arith.constant 2.500000e-01 : f32
    %112 = vector.broadcast %cst_104 : f32 to vector<16x16x128xf32>
    %113 = arith.mulf %112, %94 : vector<16x16x128xf32>
    %114 = arith.addf %111, %113 : vector<16x16x128xf32>
    %115 = vector.extract_strided_slice %41 {offsets = [0, 0, 0], sizes = [1, 16, 128], strides = [1, 1, 1]} : vector<16x16x128xf32> to vector<1x16x128xf32>
    %116 = vector.extract_strided_slice %85 {offsets = [0, 0, 0], sizes = [15, 16, 128], strides = [1, 1, 1]} : vector<16x16x128xf32> to vector<15x16x128xf32>
    %117 = tpu.concatenate %115, %116 in 0 : vector<1x16x128xf32>, vector<15x16x128xf32> -> vector<16x16x128xf32>
    %118 = vector.extract_strided_slice %41 {offsets = [1, 0, 0], sizes = [15, 16, 128], strides = [1, 1, 1]} : vector<16x16x128xf32> to vector<15x16x128xf32>
    %119 = vector.extract_strided_slice %85 {offsets = [15, 0, 0], sizes = [1, 16, 128], strides = [1, 1, 1]} : vector<16x16x128xf32> to vector<1x16x128xf32>
    %120 = tpu.concatenate %118, %119 in 0 : vector<15x16x128xf32>, vector<1x16x128xf32> -> vector<16x16x128xf32>
    %cst_105 = arith.constant 7.500000e-01 : f32
    %121 = vector.broadcast %cst_105 : f32 to vector<16x16x128xf32>
    %122 = arith.mulf %121, %41 : vector<16x16x128xf32>
    %cst_106 = arith.constant 2.500000e-01 : f32
    %123 = vector.broadcast %cst_106 : f32 to vector<16x16x128xf32>
    %124 = arith.mulf %123, %117 : vector<16x16x128xf32>
    %125 = arith.addf %122, %124 : vector<16x16x128xf32>
    %cst_107 = arith.constant 7.500000e-01 : f32
    %126 = vector.broadcast %cst_107 : f32 to vector<16x16x128xf32>
    %127 = arith.mulf %126, %41 : vector<16x16x128xf32>
    %cst_108 = arith.constant 2.500000e-01 : f32
    %128 = vector.broadcast %cst_108 : f32 to vector<16x16x128xf32>
    %129 = arith.mulf %128, %85 : vector<16x16x128xf32>
    %130 = arith.addf %127, %129 : vector<16x16x128xf32>
    %cst_109 = arith.constant 7.500000e-01 : f32
    %131 = vector.broadcast %cst_109 : f32 to vector<16x16x128xf32>
    %132 = arith.mulf %131, %85 : vector<16x16x128xf32>
    %cst_110 = arith.constant 2.500000e-01 : f32
    %133 = vector.broadcast %cst_110 : f32 to vector<16x16x128xf32>
    %134 = arith.mulf %133, %41 : vector<16x16x128xf32>
    %135 = arith.addf %132, %134 : vector<16x16x128xf32>
    %cst_111 = arith.constant 7.500000e-01 : f32
    %136 = vector.broadcast %cst_111 : f32 to vector<16x16x128xf32>
    %137 = arith.mulf %136, %85 : vector<16x16x128xf32>
    %cst_112 = arith.constant 2.500000e-01 : f32
    %138 = vector.broadcast %cst_112 : f32 to vector<16x16x128xf32>
    %139 = arith.mulf %138, %120 : vector<16x16x128xf32>
    %140 = arith.addf %137, %139 : vector<16x16x128xf32>
    %141 = vector.extract_strided_slice %99 {offsets = [0, 0, 0], sizes = [16, 1, 128], strides = [1, 1, 1]} : vector<16x16x128xf32> to vector<16x1x128xf32>
    %142 = vector.extract_strided_slice %125 {offsets = [0, 0, 0], sizes = [16, 15, 128], strides = [1, 1, 1]} : vector<16x16x128xf32> to vector<16x15x128xf32>
    %143 = tpu.concatenate %141, %142 in 1 : vector<16x1x128xf32>, vector<16x15x128xf32> -> vector<16x16x128xf32>
    %144 = vector.extract_strided_slice %99 {offsets = [0, 1, 0], sizes = [16, 15, 128], strides = [1, 1, 1]} : vector<16x16x128xf32> to vector<16x15x128xf32>
    %145 = vector.extract_strided_slice %125 {offsets = [0, 15, 0], sizes = [16, 1, 128], strides = [1, 1, 1]} : vector<16x16x128xf32> to vector<16x1x128xf32>
    %146 = tpu.concatenate %144, %145 in 1 : vector<16x15x128xf32>, vector<16x1x128xf32> -> vector<16x16x128xf32>
    %cst_113 = arith.constant 7.500000e-01 : f32
    %147 = vector.broadcast %cst_113 : f32 to vector<16x16x128xf32>
    %148 = arith.mulf %147, %99 : vector<16x16x128xf32>
    %cst_114 = arith.constant 2.500000e-01 : f32
    %149 = vector.broadcast %cst_114 : f32 to vector<16x16x128xf32>
    %150 = arith.mulf %149, %143 : vector<16x16x128xf32>
    %151 = arith.addf %148, %150 : vector<16x16x128xf32>
    %c0_115 = arith.constant 0 : index
    %c0_116 = arith.constant 0 : index
    %c0_117 = arith.constant 0 : index
    %c0_118 = arith.constant 0 : index
    %c0_119 = arith.constant 0 : index
    %152 = vector.load %arg5[%c0_115, %c0_116, %c0_117, %c0_118, %c0_119] : memref<1x16x16x16x128xf32, #tpu.memory_space<vmem>>, vector<1x1x16x16x128xf32>
    %153 = vector.shape_cast %152 : vector<1x1x16x16x128xf32> to vector<16x16x128xf32>
    %154 = vector.shape_cast %151 : vector<16x16x128xf32> to vector<1x1x16x16x128xf32>
    tpu.vector_store %arg5[%c0_115, %c0_116, %c0_117, %c0_118, %c0_119], %154 {strides = array<i32>} : memref<1x16x16x16x128xf32, #tpu.memory_space<vmem>>, vector<1x1x16x16x128xf32>,
    %cst_120 = arith.constant 7.500000e-01 : f32
    %155 = vector.broadcast %cst_120 : f32 to vector<16x16x128xf32>
    %156 = arith.mulf %155, %99 : vector<16x16x128xf32>
    %cst_121 = arith.constant 2.500000e-01 : f32
    %157 = vector.broadcast %cst_121 : f32 to vector<16x16x128xf32>
    %158 = arith.mulf %157, %125 : vector<16x16x128xf32>
    %159 = arith.addf %156, %158 : vector<16x16x128xf32>
    %c0_122 = arith.constant 0 : index
    %c1_123 = arith.constant 1 : index
    %c0_124 = arith.constant 0 : index
    %c0_125 = arith.constant 0 : index
    %c0_126 = arith.constant 0 : index
    %160 = vector.load %arg5[%c0_122, %c1_123, %c0_124, %c0_125, %c0_126] : memref<1x16x16x16x128xf32, #tpu.memory_space<vmem>>, vector<1x1x16x16x128xf32>
    %161 = vector.shape_cast %160 : vector<1x1x16x16x128xf32> to vector<16x16x128xf32>
    %162 = vector.shape_cast %159 : vector<16x16x128xf32> to vector<1x1x16x16x128xf32>
    tpu.vector_store %arg5[%c0_122, %c1_123, %c0_124, %c0_125, %c0_126], %162 {strides = array<i32>} : memref<1x16x16x16x128xf32, #tpu.memory_space<vmem>>, vector<1x1x16x16x128xf32>,
    %cst_127 = arith.constant 7.500000e-01 : f32
    %163 = vector.broadcast %cst_127 : f32 to vector<16x16x128xf32>
    %164 = arith.mulf %163, %125 : vector<16x16x128xf32>
    %cst_128 = arith.constant 2.500000e-01 : f32
    %165 = vector.broadcast %cst_128 : f32 to vector<16x16x128xf32>
    %166 = arith.mulf %165, %99 : vector<16x16x128xf32>
    %167 = arith.addf %164, %166 : vector<16x16x128xf32>
    %c0_129 = arith.constant 0 : index
    %c2_130 = arith.constant 2 : index
    %c0_131 = arith.constant 0 : index
    %c0_132 = arith.constant 0 : index
    %c0_133 = arith.constant 0 : index
    %168 = vector.load %arg5[%c0_129, %c2_130, %c0_131, %c0_132, %c0_133] : memref<1x16x16x16x128xf32, #tpu.memory_space<vmem>>, vector<1x1x16x16x128xf32>
    %169 = vector.shape_cast %168 : vector<1x1x16x16x128xf32> to vector<16x16x128xf32>
    %170 = vector.shape_cast %167 : vector<16x16x128xf32> to vector<1x1x16x16x128xf32>
    tpu.vector_store %arg5[%c0_129, %c2_130, %c0_131, %c0_132, %c0_133], %170 {strides = array<i32>} : memref<1x16x16x16x128xf32, #tpu.memory_space<vmem>>, vector<1x1x16x16x128xf32>,
    %cst_134 = arith.constant 7.500000e-01 : f32
    %171 = vector.broadcast %cst_134 : f32 to vector<16x16x128xf32>
    %172 = arith.mulf %171, %125 : vector<16x16x128xf32>
    %cst_135 = arith.constant 2.500000e-01 : f32
    %173 = vector.broadcast %cst_135 : f32 to vector<16x16x128xf32>
    %174 = arith.mulf %173, %146 : vector<16x16x128xf32>
    %175 = arith.addf %172, %174 : vector<16x16x128xf32>
    %c0_136 = arith.constant 0 : index
    %c3_137 = arith.constant 3 : index
    %c0_138 = arith.constant 0 : index
    %c0_139 = arith.constant 0 : index
    %c0_140 = arith.constant 0 : index
    %176 = vector.load %arg5[%c0_136, %c3_137, %c0_138, %c0_139, %c0_140] : memref<1x16x16x16x128xf32, #tpu.memory_space<vmem>>, vector<1x1x16x16x128xf32>
    %177 = vector.shape_cast %176 : vector<1x1x16x16x128xf32> to vector<16x16x128xf32>
    %178 = vector.shape_cast %175 : vector<16x16x128xf32> to vector<1x1x16x16x128xf32>
    tpu.vector_store %arg5[%c0_136, %c3_137, %c0_138, %c0_139, %c0_140], %178 {strides = array<i32>} : memref<1x16x16x16x128xf32, #tpu.memory_space<vmem>>, vector<1x1x16x16x128xf32>,
    %179 = vector.extract_strided_slice %104 {offsets = [0, 0, 0], sizes = [16, 1, 128], strides = [1, 1, 1]} : vector<16x16x128xf32> to vector<16x1x128xf32>
    %180 = vector.extract_strided_slice %130 {offsets = [0, 0, 0], sizes = [16, 15, 128], strides = [1, 1, 1]} : vector<16x16x128xf32> to vector<16x15x128xf32>
    %181 = tpu.concatenate %179, %180 in 1 : vector<16x1x128xf32>, vector<16x15x128xf32> -> vector<16x16x128xf32>
    %182 = vector.extract_strided_slice %104 {offsets = [0, 1, 0], sizes = [16, 15, 128], strides = [1, 1, 1]} : vector<16x16x128xf32> to vector<16x15x128xf32>
    %183 = vector.extract_strided_slice %130 {offsets = [0, 15, 0], sizes = [16, 1, 128], strides = [1, 1, 1]} : vector<16x16x128xf32> to vector<16x1x128xf32>
    %184 = tpu.concatenate %182, %183 in 1 : vector<16x15x128xf32>, vector<16x1x128xf32> -> vector<16x16x128xf32>
    %cst_141 = arith.constant 7.500000e-01 : f32
    %185 = vector.broadcast %cst_141 : f32 to vector<16x16x128xf32>
    %186 = arith.mulf %185, %104 : vector<16x16x128xf32>
    %cst_142 = arith.constant 2.500000e-01 : f32
    %187 = vector.broadcast %cst_142 : f32 to vector<16x16x128xf32>
    %188 = arith.mulf %187, %181 : vector<16x16x128xf32>
    %189 = arith.addf %186, %188 : vector<16x16x128xf32>
    %c0_143 = arith.constant 0 : index
    %c4 = arith.constant 4 : index
    %c0_144 = arith.constant 0 : index
    %c0_145 = arith.constant 0 : index
    %c0_146 = arith.constant 0 : index
    %190 = vector.load %arg5[%c0_143, %c4, %c0_144, %c0_145, %c0_146] : memref<1x16x16x16x128xf32, #tpu.memory_space<vmem>>, vector<1x1x16x16x128xf32>
    %191 = vector.shape_cast %190 : vector<1x1x16x16x128xf32> to vector<16x16x128xf32>
    %192 = vector.shape_cast %189 : vector<16x16x128xf32> to vector<1x1x16x16x128xf32>
    tpu.vector_store %arg5[%c0_143, %c4, %c0_144, %c0_145, %c0_146], %192 {strides = array<i32>} : memref<1x16x16x16x128xf32, #tpu.memory_space<vmem>>, vector<1x1x16x16x128xf32>,
    %cst_147 = arith.constant 7.500000e-01 : f32
    %193 = vector.broadcast %cst_147 : f32 to vector<16x16x128xf32>
    %194 = arith.mulf %193, %104 : vector<16x16x128xf32>
    %cst_148 = arith.constant 2.500000e-01 : f32
    %195 = vector.broadcast %cst_148 : f32 to vector<16x16x128xf32>
    %196 = arith.mulf %195, %130 : vector<16x16x128xf32>
    %197 = arith.addf %194, %196 : vector<16x16x128xf32>
    %c0_149 = arith.constant 0 : index
    %c5 = arith.constant 5 : index
    %c0_150 = arith.constant 0 : index
    %c0_151 = arith.constant 0 : index
    %c0_152 = arith.constant 0 : index
    %198 = vector.load %arg5[%c0_149, %c5, %c0_150, %c0_151, %c0_152] : memref<1x16x16x16x128xf32, #tpu.memory_space<vmem>>, vector<1x1x16x16x128xf32>
    %199 = vector.shape_cast %198 : vector<1x1x16x16x128xf32> to vector<16x16x128xf32>
    %200 = vector.shape_cast %197 : vector<16x16x128xf32> to vector<1x1x16x16x128xf32>
    tpu.vector_store %arg5[%c0_149, %c5, %c0_150, %c0_151, %c0_152], %200 {strides = array<i32>} : memref<1x16x16x16x128xf32, #tpu.memory_space<vmem>>, vector<1x1x16x16x128xf32>,
    %cst_153 = arith.constant 7.500000e-01 : f32
    %201 = vector.broadcast %cst_153 : f32 to vector<16x16x128xf32>
    %202 = arith.mulf %201, %130 : vector<16x16x128xf32>
    %cst_154 = arith.constant 2.500000e-01 : f32
    %203 = vector.broadcast %cst_154 : f32 to vector<16x16x128xf32>
    %204 = arith.mulf %203, %104 : vector<16x16x128xf32>
    %205 = arith.addf %202, %204 : vector<16x16x128xf32>
    %c0_155 = arith.constant 0 : index
    %c6 = arith.constant 6 : index
    %c0_156 = arith.constant 0 : index
    %c0_157 = arith.constant 0 : index
    %c0_158 = arith.constant 0 : index
    %206 = vector.load %arg5[%c0_155, %c6, %c0_156, %c0_157, %c0_158] : memref<1x16x16x16x128xf32, #tpu.memory_space<vmem>>, vector<1x1x16x16x128xf32>
    %207 = vector.shape_cast %206 : vector<1x1x16x16x128xf32> to vector<16x16x128xf32>
    %208 = vector.shape_cast %205 : vector<16x16x128xf32> to vector<1x1x16x16x128xf32>
    tpu.vector_store %arg5[%c0_155, %c6, %c0_156, %c0_157, %c0_158], %208 {strides = array<i32>} : memref<1x16x16x16x128xf32, #tpu.memory_space<vmem>>, vector<1x1x16x16x128xf32>,
    %cst_159 = arith.constant 7.500000e-01 : f32
    %209 = vector.broadcast %cst_159 : f32 to vector<16x16x128xf32>
    %210 = arith.mulf %209, %130 : vector<16x16x128xf32>
    %cst_160 = arith.constant 2.500000e-01 : f32
    %211 = vector.broadcast %cst_160 : f32 to vector<16x16x128xf32>
    %212 = arith.mulf %211, %184 : vector<16x16x128xf32>
    %213 = arith.addf %210, %212 : vector<16x16x128xf32>
    %c0_161 = arith.constant 0 : index
    %c7 = arith.constant 7 : index
    %c0_162 = arith.constant 0 : index
    %c0_163 = arith.constant 0 : index
    %c0_164 = arith.constant 0 : index
    %214 = vector.load %arg5[%c0_161, %c7, %c0_162, %c0_163, %c0_164] : memref<1x16x16x16x128xf32, #tpu.memory_space<vmem>>, vector<1x1x16x16x128xf32>
    %215 = vector.shape_cast %214 : vector<1x1x16x16x128xf32> to vector<16x16x128xf32>
    %216 = vector.shape_cast %213 : vector<16x16x128xf32> to vector<1x1x16x16x128xf32>
    tpu.vector_store %arg5[%c0_161, %c7, %c0_162, %c0_163, %c0_164], %216 {strides = array<i32>} : memref<1x16x16x16x128xf32, #tpu.memory_space<vmem>>, vector<1x1x16x16x128xf32>,
    %217 = vector.extract_strided_slice %109 {offsets = [0, 0, 0], sizes = [16, 1, 128], strides = [1, 1, 1]} : vector<16x16x128xf32> to vector<16x1x128xf32>
    %218 = vector.extract_strided_slice %135 {offsets = [0, 0, 0], sizes = [16, 15, 128], strides = [1, 1, 1]} : vector<16x16x128xf32> to vector<16x15x128xf32>
    %219 = tpu.concatenate %217, %218 in 1 : vector<16x1x128xf32>, vector<16x15x128xf32> -> vector<16x16x128xf32>
    %220 = vector.extract_strided_slice %109 {offsets = [0, 1, 0], sizes = [16, 15, 128], strides = [1, 1, 1]} : vector<16x16x128xf32> to vector<16x15x128xf32>
    %221 = vector.extract_strided_slice %135 {offsets = [0, 15, 0], sizes = [16, 1, 128], strides = [1, 1, 1]} : vector<16x16x128xf32> to vector<16x1x128xf32>
    %222 = tpu.concatenate %220, %221 in 1 : vector<16x15x128xf32>, vector<16x1x128xf32> -> vector<16x16x128xf32>
    %cst_165 = arith.constant 7.500000e-01 : f32
    %223 = vector.broadcast %cst_165 : f32 to vector<16x16x128xf32>
    %224 = arith.mulf %223, %109 : vector<16x16x128xf32>
    %cst_166 = arith.constant 2.500000e-01 : f32
    %225 = vector.broadcast %cst_166 : f32 to vector<16x16x128xf32>
    %226 = arith.mulf %225, %219 : vector<16x16x128xf32>
    %227 = arith.addf %224, %226 : vector<16x16x128xf32>
    %c0_167 = arith.constant 0 : index
    %c8 = arith.constant 8 : index
    %c0_168 = arith.constant 0 : index
    %c0_169 = arith.constant 0 : index
    %c0_170 = arith.constant 0 : index
    %228 = vector.load %arg5[%c0_167, %c8, %c0_168, %c0_169, %c0_170] : memref<1x16x16x16x128xf32, #tpu.memory_space<vmem>>, vector<1x1x16x16x128xf32>
    %229 = vector.shape_cast %228 : vector<1x1x16x16x128xf32> to vector<16x16x128xf32>
    %230 = vector.shape_cast %227 : vector<16x16x128xf32> to vector<1x1x16x16x128xf32>
    tpu.vector_store %arg5[%c0_167, %c8, %c0_168, %c0_169, %c0_170], %230 {strides = array<i32>} : memref<1x16x16x16x128xf32, #tpu.memory_space<vmem>>, vector<1x1x16x16x128xf32>,
    %cst_171 = arith.constant 7.500000e-01 : f32
    %231 = vector.broadcast %cst_171 : f32 to vector<16x16x128xf32>
    %232 = arith.mulf %231, %109 : vector<16x16x128xf32>
    %cst_172 = arith.constant 2.500000e-01 : f32
    %233 = vector.broadcast %cst_172 : f32 to vector<16x16x128xf32>
    %234 = arith.mulf %233, %135 : vector<16x16x128xf32>
    %235 = arith.addf %232, %234 : vector<16x16x128xf32>
    %c0_173 = arith.constant 0 : index
    %c9 = arith.constant 9 : index
    %c0_174 = arith.constant 0 : index
    %c0_175 = arith.constant 0 : index
    %c0_176 = arith.constant 0 : index
    %236 = vector.load %arg5[%c0_173, %c9, %c0_174, %c0_175, %c0_176] : memref<1x16x16x16x128xf32, #tpu.memory_space<vmem>>, vector<1x1x16x16x128xf32>
    %237 = vector.shape_cast %236 : vector<1x1x16x16x128xf32> to vector<16x16x128xf32>
    %238 = vector.shape_cast %235 : vector<16x16x128xf32> to vector<1x1x16x16x128xf32>
    tpu.vector_store %arg5[%c0_173, %c9, %c0_174, %c0_175, %c0_176], %238 {strides = array<i32>} : memref<1x16x16x16x128xf32, #tpu.memory_space<vmem>>, vector<1x1x16x16x128xf32>,
    %cst_177 = arith.constant 7.500000e-01 : f32
    %239 = vector.broadcast %cst_177 : f32 to vector<16x16x128xf32>
    %240 = arith.mulf %239, %135 : vector<16x16x128xf32>
    %cst_178 = arith.constant 2.500000e-01 : f32
    %241 = vector.broadcast %cst_178 : f32 to vector<16x16x128xf32>
    %242 = arith.mulf %241, %109 : vector<16x16x128xf32>
    %243 = arith.addf %240, %242 : vector<16x16x128xf32>
    %c0_179 = arith.constant 0 : index
    %c10 = arith.constant 10 : index
    %c0_180 = arith.constant 0 : index
    %c0_181 = arith.constant 0 : index
    %c0_182 = arith.constant 0 : index
    %244 = vector.load %arg5[%c0_179, %c10, %c0_180, %c0_181, %c0_182] : memref<1x16x16x16x128xf32, #tpu.memory_space<vmem>>, vector<1x1x16x16x128xf32>
    %245 = vector.shape_cast %244 : vector<1x1x16x16x128xf32> to vector<16x16x128xf32>
    %246 = vector.shape_cast %243 : vector<16x16x128xf32> to vector<1x1x16x16x128xf32>
    tpu.vector_store %arg5[%c0_179, %c10, %c0_180, %c0_181, %c0_182], %246 {strides = array<i32>} : memref<1x16x16x16x128xf32, #tpu.memory_space<vmem>>, vector<1x1x16x16x128xf32>,
    %cst_183 = arith.constant 7.500000e-01 : f32
    %247 = vector.broadcast %cst_183 : f32 to vector<16x16x128xf32>
    %248 = arith.mulf %247, %135 : vector<16x16x128xf32>
    %cst_184 = arith.constant 2.500000e-01 : f32
    %249 = vector.broadcast %cst_184 : f32 to vector<16x16x128xf32>
    %250 = arith.mulf %249, %222 : vector<16x16x128xf32>
    %251 = arith.addf %248, %250 : vector<16x16x128xf32>
    %c0_185 = arith.constant 0 : index
    %c11 = arith.constant 11 : index
    %c0_186 = arith.constant 0 : index
    %c0_187 = arith.constant 0 : index
    %c0_188 = arith.constant 0 : index
    %252 = vector.load %arg5[%c0_185, %c11, %c0_186, %c0_187, %c0_188] : memref<1x16x16x16x128xf32, #tpu.memory_space<vmem>>, vector<1x1x16x16x128xf32>
    %253 = vector.shape_cast %252 : vector<1x1x16x16x128xf32> to vector<16x16x128xf32>
    %254 = vector.shape_cast %251 : vector<16x16x128xf32> to vector<1x1x16x16x128xf32>
    tpu.vector_store %arg5[%c0_185, %c11, %c0_186, %c0_187, %c0_188], %254 {strides = array<i32>} : memref<1x16x16x16x128xf32, #tpu.memory_space<vmem>>, vector<1x1x16x16x128xf32>,
    %255 = vector.extract_strided_slice %114 {offsets = [0, 0, 0], sizes = [16, 1, 128], strides = [1, 1, 1]} : vector<16x16x128xf32> to vector<16x1x128xf32>
    %256 = vector.extract_strided_slice %140 {offsets = [0, 0, 0], sizes = [16, 15, 128], strides = [1, 1, 1]} : vector<16x16x128xf32> to vector<16x15x128xf32>
    %257 = tpu.concatenate %255, %256 in 1 : vector<16x1x128xf32>, vector<16x15x128xf32> -> vector<16x16x128xf32>
    %258 = vector.extract_strided_slice %114 {offsets = [0, 1, 0], sizes = [16, 15, 128], strides = [1, 1, 1]} : vector<16x16x128xf32> to vector<16x15x128xf32>
    %259 = vector.extract_strided_slice %140 {offsets = [0, 15, 0], sizes = [16, 1, 128], strides = [1, 1, 1]} : vector<16x16x128xf32> to vector<16x1x128xf32>
    %260 = tpu.concatenate %258, %259 in 1 : vector<16x15x128xf32>, vector<16x1x128xf32> -> vector<16x16x128xf32>
    %cst_189 = arith.constant 7.500000e-01 : f32
    %261 = vector.broadcast %cst_189 : f32 to vector<16x16x128xf32>
    %262 = arith.mulf %261, %114 : vector<16x16x128xf32>
    %cst_190 = arith.constant 2.500000e-01 : f32
    %263 = vector.broadcast %cst_190 : f32 to vector<16x16x128xf32>
    %264 = arith.mulf %263, %257 : vector<16x16x128xf32>
    %265 = arith.addf %262, %264 : vector<16x16x128xf32>
    %c0_191 = arith.constant 0 : index
    %c12 = arith.constant 12 : index
    %c0_192 = arith.constant 0 : index
    %c0_193 = arith.constant 0 : index
    %c0_194 = arith.constant 0 : index
    %266 = vector.load %arg5[%c0_191, %c12, %c0_192, %c0_193, %c0_194] : memref<1x16x16x16x128xf32, #tpu.memory_space<vmem>>, vector<1x1x16x16x128xf32>
    %267 = vector.shape_cast %266 : vector<1x1x16x16x128xf32> to vector<16x16x128xf32>
    %268 = vector.shape_cast %265 : vector<16x16x128xf32> to vector<1x1x16x16x128xf32>
    tpu.vector_store %arg5[%c0_191, %c12, %c0_192, %c0_193, %c0_194], %268 {strides = array<i32>} : memref<1x16x16x16x128xf32, #tpu.memory_space<vmem>>, vector<1x1x16x16x128xf32>,
    %cst_195 = arith.constant 7.500000e-01 : f32
    %269 = vector.broadcast %cst_195 : f32 to vector<16x16x128xf32>
    %270 = arith.mulf %269, %114 : vector<16x16x128xf32>
    %cst_196 = arith.constant 2.500000e-01 : f32
    %271 = vector.broadcast %cst_196 : f32 to vector<16x16x128xf32>
    %272 = arith.mulf %271, %140 : vector<16x16x128xf32>
    %273 = arith.addf %270, %272 : vector<16x16x128xf32>
    %c0_197 = arith.constant 0 : index
    %c13 = arith.constant 13 : index
    %c0_198 = arith.constant 0 : index
    %c0_199 = arith.constant 0 : index
    %c0_200 = arith.constant 0 : index
    %274 = vector.load %arg5[%c0_197, %c13, %c0_198, %c0_199, %c0_200] : memref<1x16x16x16x128xf32, #tpu.memory_space<vmem>>, vector<1x1x16x16x128xf32>
    %275 = vector.shape_cast %274 : vector<1x1x16x16x128xf32> to vector<16x16x128xf32>
    %276 = vector.shape_cast %273 : vector<16x16x128xf32> to vector<1x1x16x16x128xf32>
    tpu.vector_store %arg5[%c0_197, %c13, %c0_198, %c0_199, %c0_200], %276 {strides = array<i32>} : memref<1x16x16x16x128xf32, #tpu.memory_space<vmem>>, vector<1x1x16x16x128xf32>,
    %cst_201 = arith.constant 7.500000e-01 : f32
    %277 = vector.broadcast %cst_201 : f32 to vector<16x16x128xf32>
    %278 = arith.mulf %277, %140 : vector<16x16x128xf32>
    %cst_202 = arith.constant 2.500000e-01 : f32
    %279 = vector.broadcast %cst_202 : f32 to vector<16x16x128xf32>
    %280 = arith.mulf %279, %114 : vector<16x16x128xf32>
    %281 = arith.addf %278, %280 : vector<16x16x128xf32>
    %c0_203 = arith.constant 0 : index
    %c14 = arith.constant 14 : index
    %c0_204 = arith.constant 0 : index
    %c0_205 = arith.constant 0 : index
    %c0_206 = arith.constant 0 : index
    %282 = vector.load %arg5[%c0_203, %c14, %c0_204, %c0_205, %c0_206] : memref<1x16x16x16x128xf32, #tpu.memory_space<vmem>>, vector<1x1x16x16x128xf32>
    %283 = vector.shape_cast %282 : vector<1x1x16x16x128xf32> to vector<16x16x128xf32>
    %284 = vector.shape_cast %281 : vector<16x16x128xf32> to vector<1x1x16x16x128xf32>
    tpu.vector_store %arg5[%c0_203, %c14, %c0_204, %c0_205, %c0_206], %284 {strides = array<i32>} : memref<1x16x16x16x128xf32, #tpu.memory_space<vmem>>, vector<1x1x16x16x128xf32>,
    %cst_207 = arith.constant 7.500000e-01 : f32
    %285 = vector.broadcast %cst_207 : f32 to vector<16x16x128xf32>
    %286 = arith.mulf %285, %140 : vector<16x16x128xf32>
    %cst_208 = arith.constant 2.500000e-01 : f32
    %287 = vector.broadcast %cst_208 : f32 to vector<16x16x128xf32>
    %288 = arith.mulf %287, %260 : vector<16x16x128xf32>
    %289 = arith.addf %286, %288 : vector<16x16x128xf32>
    %c0_209 = arith.constant 0 : index
    %c15 = arith.constant 15 : index
    %c0_210 = arith.constant 0 : index
    %c0_211 = arith.constant 0 : index
    %c0_212 = arith.constant 0 : index
    %290 = vector.load %arg5[%c0_209, %c15, %c0_210, %c0_211, %c0_212] : memref<1x16x16x16x128xf32, #tpu.memory_space<vmem>>, vector<1x1x16x16x128xf32>
    %291 = vector.shape_cast %290 : vector<1x1x16x16x128xf32> to vector<16x16x128xf32>
    %292 = vector.shape_cast %289 : vector<16x16x128xf32> to vector<1x1x16x16x128xf32>
    tpu.vector_store %arg5[%c0_209, %c15, %c0_210, %c0_211, %c0_212], %292 {strides = array<i32>} : memref<1x16x16x16x128xf32, #tpu.memory_space<vmem>>, vector<1x1x16x16x128xf32>,
    return
  }
  func.func @transform_0(%arg0: i32) -> (i32, i32, i32, i32) {
    %c0_i32 = arith.constant 0 : i32
    %c0_i32_0 = arith.constant 0 : i32
    %c0_i32_1 = arith.constant 0 : i32
    %c0_i32_2 = arith.constant 0 : i32
    return %arg0, %c0_i32, %c0_i32_0, %c0_i32_1 : i32, i32, i32, i32
  }
  func.func @transform_1(%arg0: i32) -> (i32, i32, i32) {
    %c0_i32 = arith.constant 0 : i32
    %c0_i32_0 = arith.constant 0 : i32
    %c0_i32_1 = arith.constant 0 : i32
    %c0_i32_2 = arith.constant 0 : i32
    return %c0_i32, %c0_i32_0, %c0_i32_1 : i32, i32, i32
  }
  func.func @transform_2(%arg0: i32) -> (i32, i32) {
    %c0_i32 = arith.constant 0 : i32
    %c0_i32_0 = arith.constant 0 : i32
    %c0_i32_1 = arith.constant 0 : i32
    return %c0_i32, %c0_i32_0 : i32, i32
  }
  func.func @transform_3(%arg0: i32) -> (i32, i32, i32, i32, i32) {
    %c0_i32 = arith.constant 0 : i32
    %c0_i32_0 = arith.constant 0 : i32
    %c0_i32_1 = arith.constant 0 : i32
    %c0_i32_2 = arith.constant 0 : i32
    %c0_i32_3 = arith.constant 0 : i32
    return %arg0, %c0_i32, %c0_i32_0, %c0_i32_1, %c0_i32_2 : i32, i32, i32, i32, i32
  }
  func.func @transform_4(%arg0: i32) -> (i32, i32, i32, i32, i32) {
    %c0_i32 = arith.constant 0 : i32
    %c0_i32_0 = arith.constant 0 : i32
    %c0_i32_1 = arith.constant 0 : i32
    %c0_i32_2 = arith.constant 0 : i32
    %c0_i32_3 = arith.constant 0 : i32
    return %arg0, %c0_i32, %c0_i32_0, %c0_i32_1, %c0_i32_2 : i32, i32, i32, i32, i32
  }
}

</mosaic_0001>

<llo_original>
// kernel: densepose_predictor_forward.1
$region0: #{densepose_predictor_forward.1}
  #allocation0 [shape = 'u32[]', space=smem, size = 0x4, offset = 0x4, fixed_abs, tag = 'smem constant byte address 0x4 - core index']
  #allocation1 [shape = 'u32[144,128]{1,0:T(1,128)}', space=vmem, size = 0x12000, scoped, tag = 'internal scratch']
  %s0 = inlined_call_operand.vmem [shape: bf16[2,18,18,128], index: 0, kind: input, shape index: {}]
  %s1 = inlined_call_operand.hbm [shape: bf16[4,512,128], index: 1, kind: input, shape index: {}]
  %s2 = inlined_call_operand.hbm [shape: f32[1,128], index: 2, kind: input, shape index: {}]
  %s3 = inlined_call_operand.vmem [shape: f32[2,4,16,16,128], index: 3, kind: output, shape index: {0}]
  %s4 = inlined_call_operand.vmem [shape: f32[2,16,16,16,128], index: 4, kind: output, shape index: {1}]
  %5 = xla_tuple %s3, %s4
  %s6 = sld [smem:[#allocation0]]
  $region61: #{densepose_predictor_forward.1} parent=0
    _
  %s8 = ssub.s32 1, %s6
  %s9 = scalar_select 0, %s8, %s6
  $region1: #{densepose_predictor_forward.1} parent=0
    #allocation2 [shape = 'u8[524288]{0}', space=vmem, size = 0x80000, scoped, tag = 'input window, operand 1, single buffered']
    #allocation3 [shape = 's32[2]{0}', space=sflag, size = 0x8, scoped, tag = 'scoped memory for densepose_predictor_forward.1']
    #allocation4 [shape = 'u8[512]{0}', space=vmem, size = 0x400, scoped, tag = 'input window, operand 2, single buffered']
    #allocation5 [shape = 's32[1]{0}', space=sflag, size = 0x4, scoped, tag = 'scoped memory for densepose_predictor_forward.1']
    %10 = vsyncpa [#allocation3], 0
    %11 = vsyncpa [#allocation5], 0
    loop: start=0, step=1, limit=4
    $region2: #{densepose_predictor_forward.1} parent=1 // loop_pre_header
      _
    $region3: #{densepose_predictor_forward.1} parent=1 // loop_header
      %s13 = sphi 0, %s17
      %p14 = scmp.ge.s32.totalorder %s13, 4
      %s23 = sphi 0, %s25
      %s26 = sphi 0, %s23
      %s27 = sphi 0, %s26
      %s43 = sphi 0, %s27
      %s47 = sphi 0, %s47
      %s49 = sphi 0, %s47
      %s50 = sphi 0, %s49
      %s64 = sphi 0, %s50
      %s68 = sphi 0, %s68
      %s70 = sphi 0, %s68
      %s71 = sphi 0, %s70
      %s85 = sphi 0, %s71
      %s91 = sphi 0, %s93
      %s94 = sphi 0, %s91
      %s95 = sphi 0, %s94
      %s111 = sphi 0, %s95
      %s117 = sphi 0, %s119
      %s120 = sphi 0, %s117
      %s121 = sphi 0, %s120
      %s137 = sphi 0, %s121
    $region4: #{densepose_predictor_forward.1} parent=1 // loop_header_branch
      %16 = sbr.rel (%p14) target = $region8
    $region5: #{densepose_predictor_forward.1} parent=1 // loop_body
      %s18 = ssub.s32 %s13, 1
      %s19 = ssub.s32 %s13, 2
      %s20 = sadd.s32 %s13, 1
      %s21 = ssub.s32 %s13, %s20
      %p22 = scmp.eq.s32.totalorder %s21, 0
      %s24 = sadd.s32 %s23, 1
      %s25 = scalar_select %p22, %s23, %s24
      %p28 = pneg %p22
      %p29 = scmp.eq.s32.totalorder %s13, 1
      %p30 = por %p28, %p29
      %p31 = scmp.ne.s32.totalorder %s23, %s26
      %p32 = scmp.eq.s32.totalorder %s13, 0
      %p33 = por %p31, %p32
      %p34 = scmp.ne.s32.totalorder %s23, %s26
      %p35 = scmp.eq.s32.totalorder %s18, 1
      %p36 = por %p34, %p35
      %p37 = scmp.ne.s32.totalorder %s26, %s27
      %p38 = scmp.eq.s32.totalorder %s18, 0
      %p39 = por %p37, %p38
      %p40 = scmp.ne.s32.totalorder %s26, %s27
      %p41 = scmp.eq.s32.totalorder %s19, 1
      %p42 = por %p40, %p41
      %p44 = scmp.ne.s32.totalorder %s27, %s43
      %p45 = scmp.eq.s32.totalorder %s19, 0
      %p46 = por %p44, %p45
      %s48 = sadd.s32 %s47, 1
      %p51 = scmp.eq.s32.totalorder %s13, 1
      %p52 = scmp.ne.s32.totalorder %s47, %s49
      %p53 = scmp.eq.s32.totalorder %s13, 0
      %p54 = por %p52, %p53
      %p55 = scmp.ne.s32.totalorder %s47, %s49
      %p56 = scmp.eq.s32.totalorder %s18, 1
      %p57 = por %p55, %p56
      %p58 = scmp.ne.s32.totalorder %s49, %s50
      %p59 = scmp.eq.s32.totalorder %s18, 0
      %p60 = por %p58, %p59
      %p61 = scmp.ne.s32.totalorder %s49, %s50
      %p62 = scmp.eq.s32.totalorder %s19, 1
      %p63 = por %p61, %p62
      %p65 = scmp.ne.s32.totalorder %s50, %s64
      %p66 = scmp.eq.s32.totalorder %s19, 0
      %p67 = por %p65, %p66
      %s69 = sadd.s32 %s68, 1
      %p72 = scmp.eq.s32.totalorder %s13, 1
      %p73 = scmp.ne.s32.totalorder %s68, %s70
      %p74 = scmp.eq.s32.totalorder %s13, 0
      %p75 = por %p73, %p74
      %p76 = scmp.ne.s32.totalorder %s68, %s70
      %p77 = scmp.eq.s32.totalorder %s18, 1
      %p78 = por %p76, %p77
      %p79 = scmp.ne.s32.totalorder %s70, %s71
      %p80 = scmp.eq.s32.totalorder %s18, 0
      %p81 = por %p79, %p80
      %p82 = scmp.ne.s32.totalorder %s70, %s71
      %p83 = scmp.eq.s32.totalorder %s19, 1
      %p84 = por %p82, %p83
      %p86 = scmp.ne.s32.totalorder %s71, %s85
      %p87 = scmp.eq.s32.totalorder %s19, 0
      %p88 = por %p86, %p87
      %s89 = ssub.s32 %s13, %s20
      %p90 = scmp.eq.s32.totalorder %s89, 0
      %s92 = sadd.s32 %s91, 1
      %s93 = scalar_select %p90, %s91, %s92
      %p96 = pneg %p90
      %p97 = scmp.eq.s32.totalorder %s13, 1
      %p98 = por %p96, %p97
      %p99 = scmp.ne.s32.totalorder %s91, %s94
      %p100 = scmp.eq.s32.totalorder %s13, 0
      %p101 = por %p99, %p100
      %p102 = scmp.ne.s32.totalorder %s91, %s94
      %p103 = scmp.eq.s32.totalorder %s18, 1
      %p104 = por %p102, %p103
      %p105 = scmp.ne.s32.totalorder %s94, %s95
      %p106 = scmp.eq.s32.totalorder %s18, 0
      %p107 = por %p105, %p106
      %p108 = scmp.ne.s32.totalorder %s94, %s95
      %p109 = scmp.eq.s32.totalorder %s19, 1
      %p110 = por %p108, %p109
      %p112 = scmp.ne.s32.totalorder %s95, %s111
      %p113 = scmp.eq.s32.totalorder %s19, 0
      %p114 = por %p112, %p113
      %s115 = ssub.s32 %s13, %s20
      %p116 = scmp.eq.s32.totalorder %s115, 0
      %s118 = sadd.s32 %s117, 1
      %s119 = scalar_select %p116, %s117, %s118
      %p122 = pneg %p116
      %p123 = scmp.eq.s32.totalorder %s13, 1
      %p124 = por %p122, %p123
      %p125 = scmp.ne.s32.totalorder %s117, %s120
      %p126 = scmp.eq.s32.totalorder %s13, 0
      %p127 = por %p125, %p126
      %p128 = scmp.ne.s32.totalorder %s117, %s120
      %p129 = scmp.eq.s32.totalorder %s18, 1
      %p130 = por %p128, %p129
      %p131 = scmp.ne.s32.totalorder %s120, %s121
      %p132 = scmp.eq.s32.totalorder %s18, 0
      %p133 = por %p131, %p132
      %p134 = scmp.ne.s32.totalorder %s120, %s121
      %p135 = scmp.eq.s32.totalorder %s19, 1
      %p136 = por %p134, %p135
      %p138 = scmp.ne.s32.totalorder %s121, %s137
      %p139 = scmp.eq.s32.totalorder %s19, 0
      %p140 = por %p138, %p139
      %p141 = scmp.le.s32.totalorder 1, %s13
      %p142 = scmp.lt.s32.totalorder %s13, 3
      %p143 = pnand %p141, %p142
      %p144 = pneg %p143
      // Predicated region
      $region9: #{densepose_predictor_forward.1} parent=5 // pred_check
        _
      $region10: #{densepose_predictor_forward.1} parent=5 // pred_check_branch
        %146 = sbr.rel (%p143) target = $region12
      $region11: #{densepose_predictor_forward.1} parent=5 // pred_region
        %s147 = ssub.s32 %s13, 1
        // Predicated region
        $region13: #{densepose_predictor_forward.1} parent=11 // pred_check
          %p148 = pneg %p60
        $region14: #{densepose_predictor_forward.1} parent=11 // pred_check_branch
          %150 = sbr.rel (%p148) target = $region16
        $region15: #{densepose_predictor_forward.1} parent=11 // pred_region
          %s152 = ssub.s32 16384, 16384
          %153 = vsyncadd [#allocation3], %s152
          %s154 = sshll.u32 [#allocation2], 4
          %s155 = int_to_ptr.vmem [resolvable:$true] %s154
          %160 = dma.hbm_to_vmem [thread:$0]  %s1, 16384, %s155, [#allocation3], 64, 64, 4
        $region16: #{densepose_predictor_forward.1} parent=11 // pred_fallthru
          _
        // Predicated region
        $region17: #{densepose_predictor_forward.1} parent=11 // pred_check
          %p161 = pneg %p81
        $region18: #{densepose_predictor_forward.1} parent=11 // pred_check_branch
          %163 = sbr.rel (%p161) target = $region20
        $region19: #{densepose_predictor_forward.1} parent=11 // pred_region
          %s165 = ssub.s32 16, 16
          %166 = vsyncadd [#allocation5], %s165
          %s168 = sshll.u32 [#allocation4], 4
          %s169 = int_to_ptr.vmem [resolvable:$true] %s168
          %171 = dma.hbm_to_vmem [thread:$0]  %s2, 16, %s169, [#allocation5]
        $region20: #{densepose_predictor_forward.1} parent=11 // pred_fallthru
          _
      $region12: #{densepose_predictor_forward.1} parent=5 // pred_fallthru
        _
      %p172 = scmp.lt.s32.totalorder %s13, 2
      // Predicated region
      $region21: #{densepose_predictor_forward.1} parent=5 // pred_check
        %p173 = pneg %p172
      $region22: #{densepose_predictor_forward.1} parent=5 // pred_check_branch
        %175 = sbr.rel (%p173) target = $region24
      $region23: #{densepose_predictor_forward.1} parent=5 // pred_region
        // Predicated region
        $region25: #{densepose_predictor_forward.1} parent=23 // pred_check
          %p176 = pneg %p33
        $region26: #{densepose_predictor_forward.1} parent=23 // pred_check_branch
          %178 = sbr.rel (%p176) target = $region28
        $region27: #{densepose_predictor_forward.1} parent=23 // pred_region
          %p179 = scmp.lt.s32.totalorder %s13, 1
          %s180 = scalar_select %p179, %s13, 1
          %s181 = smul.addr %s180, 54
          %s182 = smul.addr %s181, 4
          %s183 = scalar_lea.vmem %s0, %s182
        $region28: #{densepose_predictor_forward.1} parent=23 // pred_fallthru
          _
      $region24: #{densepose_predictor_forward.1} parent=5 // pred_fallthru
        _
      %p184 = scmp.le.s32.totalorder 1, %s13
      %p185 = scmp.lt.s32.totalorder %s13, 3
      %p186 = pnand %p184, %p185
      %p187 = pneg %p186
      // Predicated region
      $region29: #{densepose_predictor_forward.1} parent=5 // pred_check
        _
      $region30: #{densepose_predictor_forward.1} parent=5 // pred_check_branch
        %189 = sbr.rel (%p186) target = $region32
      $region31: #{densepose_predictor_forward.1} parent=5 // pred_region
        %s190 = ssub.s32 %s13, 1
        // Predicated region
        $region33: #{densepose_predictor_forward.1} parent=31 // pred_check
          %p191 = pneg %p60
        $region34: #{densepose_predictor_forward.1} parent=31 // pred_check_branch
          %193 = sbr.rel (%p191) target = $region36
        $region35: #{densepose_predictor_forward.1} parent=31 // pred_region
          %194 = dma.done [#allocation3], 16384
        $region36: #{densepose_predictor_forward.1} parent=31 // pred_fallthru
          _
        // Predicated region
        $region37: #{densepose_predictor_forward.1} parent=31 // pred_check
          %p195 = pneg %p81
        $region38: #{densepose_predictor_forward.1} parent=31 // pred_check_branch
          %197 = sbr.rel (%p195) target = $region40
        $region39: #{densepose_predictor_forward.1} parent=31 // pred_region
          %198 = dma.done [#allocation5], 16
        $region40: #{densepose_predictor_forward.1} parent=31 // pred_fallthru
          _
        %p199 = scmp.lt.s32.totalorder %s18, 1
        %s200 = scalar_select %p199, %s18, 1
        %s201 = smul.addr %s200, 54
        %s202 = smul.addr %s201, 4
        %s203 = scalar_lea.vmem %s0, %s202
        %p204 = pneg %p39
        %p205 = pneg %p36
        %p206 = pneg %p60
        %p207 = pneg %p57
        %p208 = pneg %p81
        %p209 = pneg %p78
        %p210 = pneg %p107
        %p211 = pneg %p104
        %p212 = scmp.lt.s32.totalorder %s18, 1
        %s213 = scalar_select %p212, %s18, 1
        %s214 = smul.addr %s213, 128
        %s215 = smul.addr %s214, 8
        %s216 = scalar_lea.vmem %s3, %s215
        %p217 = pneg %p133
        %p218 = pneg %p130
        %p219 = scmp.lt.s32.totalorder %s18, 1
        %s220 = scalar_select %p219, %s18, 1
        %s221 = smul.addr %s220, 512
        %s222 = smul.addr %s221, 8
        %s223 = scalar_lea.vmem %s4, %s222
        %p224 = scmp.lt.s32.totalorder %s18, 1
        %s225 = scalar_select %p224, %s18, 1
        %s226 = smul.addr %s225, 54
        %s227 = smul.addr %s226, 4
        %s228 = scalar_lea.vmem %s0, %s227
        %p229 = scmp.lt.s32.totalorder %s18, 1
        %s230 = scalar_select %p229, %s18, 1
        %s231 = smul.addr %s230, 128
        %s232 = smul.addr %s231, 8
        %s233 = scalar_lea.vmem %s3, %s232
        %p234 = scmp.lt.s32.totalorder %s18, 1
        %s235 = scalar_select %p234, %s18, 1
        %s236 = smul.addr %s235, 512
        %s237 = smul.addr %s236, 8
        %s238 = scalar_lea.vmem %s4, %s237
        %v240 = vld [vmem:[#allocation4] sm:$0x1]
        %v241 = vld [vmem:[%s228] sm:$0xf]
        %v242 = vld [vmem:[%s228 + $0x4] sm:$0xf]
        %v243 = vld [vmem:[%s228 + $0xc] sm:$0xf]
        %v244 = vld [vmem:[%s228 + $0x10] sm:$0xf]
        %v245 = vld [vmem:[%s228 + $0x18] sm:$0xf]
        %v246 = vld [vmem:[%s228 + $0x1c] sm:$0xf]
        %v247 = vld [vmem:[%s228 + $0x24] sm:$0xf]
        %v248 = vld [vmem:[%s228 + $0x28] sm:$0xf]
        %v249 = vld [vmem:[%s228 + $0x30] sm:$0xf]
        %v250 = vld [vmem:[%s228 + $0x34] sm:$0xf]
        %v251 = vld [vmem:[%s228 + $0x3c] sm:$0xf]
        %v252 = vld [vmem:[%s228 + $0x40] sm:$0xf]
        %v253 = vld [vmem:[%s228 + $0x48] sm:$0xf]
        %v254 = vld [vmem:[%s228 + $0x4c] sm:$0xf]
        %v255 = vld [vmem:[%s228 + $0x54] sm:$0xf]
        %v256 = vld [vmem:[%s228 + $0x58] sm:$0xf]
        %v257 = vld [vmem:[%s228 + $0x60] sm:$0xf]
        %v258 = vld [vmem:[%s228 + $0x64] sm:$0xf]
        %v259 = vld [vmem:[%s228 + $0x6c] sm:$0xf]
        %v260 = vld [vmem:[%s228 + $0x70] sm:$0xf]
        %v261 = vld [vmem:[%s228 + $0x78] sm:$0xf]
        %v262 = vld [vmem:[%s228 + $0x7c] sm:$0xf]
        %v263 = vld [vmem:[%s228 + $0x84] sm:$0xf]
        %v264 = vld [vmem:[%s228 + $0x88] sm:$0xf]
        %v265 = vld [vmem:[%s228 + $0x90] sm:$0xf]
        %v266 = vld [vmem:[%s228 + $0x94] sm:$0xf]
        %v267 = vld [vmem:[%s228 + $0x9c] sm:$0xf]
        %v268 = vld [vmem:[%s228 + $0xa0] sm:$0xf]
        %v269 = vld [vmem:[%s228 + $0xa8] sm:$0xf]
        %v270 = vld [vmem:[%s228 + $0xac] sm:$0xf]
        %v271 = vld [vmem:[%s228 + $0xb4] sm:$0xf]
        %v272 = vld [vmem:[%s228 + $0xb8] sm:$0xf]
        %v273 = vld [vmem:[%s228 + $0x8] sm:$0x1]
        %v274 = vld [vmem:[%s228 + $0x14] sm:$0x1]
        %v275 = vld [vmem:[%s228 + $0x20] sm:$0x1]
        %v276 = vld [vmem:[%s228 + $0x2c] sm:$0x1]
        %v277 = vld [vmem:[%s228 + $0x38] sm:$0x1]
        %v278 = vld [vmem:[%s228 + $0x44] sm:$0x1]
        %v279 = vld [vmem:[%s228 + $0x50] sm:$0x1]
        %v280 = vld [vmem:[%s228 + $0x5c] sm:$0x1]
        %v281 = vld [vmem:[%s228 + $0x68] sm:$0x1]
        %v282 = vld [vmem:[%s228 + $0x74] sm:$0x1]
        %v283 = vld [vmem:[%s228 + $0x80] sm:$0x1]
        %v284 = vld [vmem:[%s228 + $0x8c] sm:$0x1]
        %v285 = vld [vmem:[%s228 + $0x98] sm:$0x1]
        %v286 = vld [vmem:[%s228 + $0xa4] sm:$0x1]
        %v287 = vld [vmem:[%s228 + $0xb0] sm:$0x1]
        %v288 = vld [vmem:[%s228 + $0xbc] sm:$0x1]
        %vm289 = vsmask.f32 3328
        %vm290 = vsmask.f32 7440
        %vm291 = vmor %vm289, %vm290
        %v293 = vshrl.u32 %v241, 16
        %v295 = vrot.slane %v293, 4
        %v296 = vshll.u32 %v241, 16
        %v298 = vrot.slane %v296, 5
        %v299 = vor.u32 %v295, %v298
        %v300 = vrot.slane %v299, 4
        %v302 = vshll.u32 %v242, 16
        %v304 = vrot.slane %v302, 5
        %v305 = vsel %vm291, %v300, %v304
        %v306 = vshrl.u32 %v242, 16
        %v308 = vrot.slane %v306, 4
        %v309 = vor.u32 %v308, %v304
        %v310 = vrot.slane %v309, 4
        %v312 = vshll.u32 %v273, 16
        %v314 = vrot.slane %v312, 5
        %v315 = vsel %vm291, %v310, %v314
        %v317 = vshrl.u32 %v243, 16
        %v319 = vrot.slane %v317, 4
        %v320 = vshll.u32 %v243, 16
        %v322 = vrot.slane %v320, 5
        %v323 = vor.u32 %v319, %v322
        %v324 = vrot.slane %v323, 4
        %v326 = vshll.u32 %v244, 16
        %v328 = vrot.slane %v326, 5
        %v329 = vsel %vm291, %v324, %v328
        %v330 = vshrl.u32 %v244, 16
        %v332 = vrot.slane %v330, 4
        %v333 = vor.u32 %v332, %v328
        %v334 = vrot.slane %v333, 4
        %v336 = vshll.u32 %v274, 16
        %v338 = vrot.slane %v336, 5
        %v339 = vsel %vm291, %v334, %v338
        %v341 = vshrl.u32 %v245, 16
        %v343 = vrot.slane %v341, 4
        %v344 = vshll.u32 %v245, 16
        %v346 = vrot.slane %v344, 5
        %v347 = vor.u32 %v343, %v346
        %v348 = vrot.slane %v347, 4
        %v350 = vshll.u32 %v246, 16
        %v352 = vrot.slane %v350, 5
        %v353 = vsel %vm291, %v348, %v352
        %v354 = vshrl.u32 %v246, 16
        %v356 = vrot.slane %v354, 4
        %v357 = vor.u32 %v356, %v352
        %v358 = vrot.slane %v357, 4
        %v360 = vshll.u32 %v275, 16
        %v362 = vrot.slane %v360, 5
        %v363 = vsel %vm291, %v358, %v362
        %v365 = vshrl.u32 %v247, 16
        %v367 = vrot.slane %v365, 4
        %v368 = vshll.u32 %v247, 16
        %v370 = vrot.slane %v368, 5
        %v371 = vor.u32 %v367, %v370
        %v372 = vrot.slane %v371, 4
        %v374 = vshll.u32 %v248, 16
        %v376 = vrot.slane %v374, 5
        %v377 = vsel %vm291, %v372, %v376
        %v378 = vshrl.u32 %v248, 16
        %v380 = vrot.slane %v378, 4
        %v381 = vor.u32 %v380, %v376
        %v382 = vrot.slane %v381, 4
        %v384 = vshll.u32 %v276, 16
        %v386 = vrot.slane %v384, 5
        %v387 = vsel %vm291, %v382, %v386
        %v389 = vshrl.u32 %v249, 16
        %v391 = vrot.slane %v389, 4
        %v392 = vshll.u32 %v249, 16
        %v394 = vrot.slane %v392, 5
        %v395 = vor.u32 %v391, %v394
        %v396 = vrot.slane %v395, 4
        %v398 = vshll.u32 %v250, 16
        %v400 = vrot.slane %v398, 5
        %v401 = vsel %vm291, %v396, %v400
        %v402 = vshrl.u32 %v250, 16
        %v404 = vrot.slane %v402, 4
        %v405 = vor.u32 %v404, %v400
        %v406 = vrot.slane %v405, 4
        %v408 = vshll.u32 %v277, 16
        %v410 = vrot.slane %v408, 5
        %v411 = vsel %vm291, %v406, %v410
        %v413 = vshrl.u32 %v251, 16
        %v415 = vrot.slane %v413, 4
        %v416 = vshll.u32 %v251, 16
        %v418 = vrot.slane %v416, 5
        %v419 = vor.u32 %v415, %v418
        %v420 = vrot.slane %v419, 4
        %v422 = vshll.u32 %v252, 16
        %v424 = vrot.slane %v422, 5
        %v425 = vsel %vm291, %v420, %v424
        %v426 = vshrl.u32 %v252, 16
        %v428 = vrot.slane %v426, 4
        %v429 = vor.u32 %v428, %v424
        %v430 = vrot.slane %v429, 4
        %v432 = vshll.u32 %v278, 16
        %v434 = vrot.slane %v432, 5
        %v435 = vsel %vm291, %v430, %v434
        %v437 = vshrl.u32 %v253, 16
        %v439 = vrot.slane %v437, 4
        %v440 = vshll.u32 %v253, 16
        %v442 = vrot.slane %v440, 5
        %v443 = vor.u32 %v439, %v442
        %v444 = vrot.slane %v443, 4
        %v446 = vshll.u32 %v254, 16
        %v448 = vrot.slane %v446, 5
        %v449 = vsel %vm291, %v444, %v448
        %v450 = vshrl.u32 %v254, 16
        %v452 = vrot.slane %v450, 4
        %v453 = vor.u32 %v452, %v448
        %v454 = vrot.slane %v453, 4
        %v456 = vshll.u32 %v279, 16
        %v458 = vrot.slane %v456, 5
        %v459 = vsel %vm291, %v454, %v458
        %v461 = vshrl.u32 %v255, 16
        %v463 = vrot.slane %v461, 4
        %v464 = vshll.u32 %v255, 16
        %v466 = vrot.slane %v464, 5
        %v467 = vor.u32 %v463, %v466
        %v468 = vrot.slane %v467, 4
        %v470 = vshll.u32 %v256, 16
        %v472 = vrot.slane %v470, 5
        %v473 = vsel %vm291, %v468, %v472
        %v474 = vshrl.u32 %v256, 16
        %v476 = vrot.slane %v474, 4
        %v477 = vor.u32 %v476, %v472
        %v478 = vrot.slane %v477, 4
        %v480 = vshll.u32 %v280, 16
        %v482 = vrot.slane %v480, 5
        %v483 = vsel %vm291, %v478, %v482
        %v485 = vshrl.u32 %v257, 16
        %v487 = vrot.slane %v485, 4
        %v488 = vshll.u32 %v257, 16
        %v490 = vrot.slane %v488, 5
        %v491 = vor.u32 %v487, %v490
        %v492 = vrot.slane %v491, 4
        %v494 = vshll.u32 %v258, 16
        %v496 = vrot.slane %v494, 5
        %v497 = vsel %vm291, %v492, %v496
        %v498 = vshrl.u32 %v258, 16
        %v500 = vrot.slane %v498, 4
        %v501 = vor.u32 %v500, %v496
        %v502 = vrot.slane %v501, 4
        %v504 = vshll.u32 %v281, 16
        %v506 = vrot.slane %v504, 5
        %v507 = vsel %vm291, %v502, %v506
        %v509 = vshrl.u32 %v259, 16
        %v511 = vrot.slane %v509, 4
        %v512 = vshll.u32 %v259, 16
        %v514 = vrot.slane %v512, 5
        %v515 = vor.u32 %v511, %v514
        %v516 = vrot.slane %v515, 4
        %v518 = vshll.u32 %v260, 16
        %v520 = vrot.slane %v518, 5
        %v521 = vsel %vm291, %v516, %v520
        %v522 = vshrl.u32 %v260, 16
        %v524 = vrot.slane %v522, 4
        %v525 = vor.u32 %v524, %v520
        %v526 = vrot.slane %v525, 4
        %v528 = vshll.u32 %v282, 16
        %v530 = vrot.slane %v528, 5
        %v531 = vsel %vm291, %v526, %v530
        %v533 = vshrl.u32 %v261, 16
        %v535 = vrot.slane %v533, 4
        %v536 = vshll.u32 %v261, 16
        %v538 = vrot.slane %v536, 5
        %v539 = vor.u32 %v535, %v538
        %v540 = vrot.slane %v539, 4
        %v542 = vshll.u32 %v262, 16
        %v544 = vrot.slane %v542, 5
        %v545 = vsel %vm291, %v540, %v544
        %v546 = vshrl.u32 %v262, 16
        %v548 = vrot.slane %v546, 4
        %v549 = vor.u32 %v548, %v544
        %v550 = vrot.slane %v549, 4
        %v552 = vshll.u32 %v283, 16
        %v554 = vrot.slane %v552, 5
        %v555 = vsel %vm291, %v550, %v554
        %v557 = vshrl.u32 %v263, 16
        %v559 = vrot.slane %v557, 4
        %v560 = vshll.u32 %v263, 16
        %v562 = vrot.slane %v560, 5
        %v563 = vor.u32 %v559, %v562
        %v564 = vrot.slane %v563, 4
        %v566 = vshll.u32 %v264, 16
        %v568 = vrot.slane %v566, 5
        %v569 = vsel %vm291, %v564, %v568
        %v570 = vshrl.u32 %v264, 16
        %v572 = vrot.slane %v570, 4
        %v573 = vor.u32 %v572, %v568
        %v574 = vrot.slane %v573, 4
        %v576 = vshll.u32 %v284, 16
        %v578 = vrot.slane %v576, 5
        %v579 = vsel %vm291, %v574, %v578
        %v581 = vshrl.u32 %v265, 16
        %v583 = vrot.slane %v581, 4
        %v584 = vshll.u32 %v265, 16
        %v586 = vrot.slane %v584, 5
        %v587 = vor.u32 %v583, %v586
        %v588 = vrot.slane %v587, 4
        %v590 = vshll.u32 %v266, 16
        %v592 = vrot.slane %v590, 5
        %v593 = vsel %vm291, %v588, %v592
        %v594 = vshrl.u32 %v266, 16
        %v596 = vrot.slane %v594, 4
        %v597 = vor.u32 %v596, %v592
        %v598 = vrot.slane %v597, 4
        %v600 = vshll.u32 %v285, 16
        %v602 = vrot.slane %v600, 5
        %v603 = vsel %vm291, %v598, %v602
        %v605 = vshrl.u32 %v267, 16
        %v607 = vrot.slane %v605, 4
        %v608 = vshll.u32 %v267, 16
        %v610 = vrot.slane %v608, 5
        %v611 = vor.u32 %v607, %v610
        %v612 = vrot.slane %v611, 4
        %v614 = vshll.u32 %v268, 16
        %v616 = vrot.slane %v614, 5
        %v617 = vsel %vm291, %v612, %v616
        %v618 = vshrl.u32 %v268, 16
        %v620 = vrot.slane %v618, 4
        %v621 = vor.u32 %v620, %v616
        %v622 = vrot.slane %v621, 4
        %v624 = vshll.u32 %v286, 16
        %v626 = vrot.slane %v624, 5
        %v627 = vsel %vm291, %v622, %v626
        %v629 = vshrl.u32 %v269, 16
        %v631 = vrot.slane %v629, 4
        %v632 = vshll.u32 %v269, 16
        %v634 = vrot.slane %v632, 5
        %v635 = vor.u32 %v631, %v634
        %v636 = vrot.slane %v635, 4
        %v638 = vshll.u32 %v270, 16
        %v640 = vrot.slane %v638, 5
        %v641 = vsel %vm291, %v636, %v640
        %v642 = vshrl.u32 %v270, 16
        %v644 = vrot.slane %v642, 4
        %v645 = vor.u32 %v644, %v640
        %v646 = vrot.slane %v645, 4
        %v648 = vshll.u32 %v287, 16
        %v650 = vrot.slane %v648, 5
        %v651 = vsel %vm291, %v646, %v650
        %v653 = vshrl.u32 %v271, 16
        %v655 = vrot.slane %v653, 4
        %v656 = vshll.u32 %v271, 16
        %v658 = vrot.slane %v656, 5
        %v659 = vor.u32 %v655, %v658
        %v660 = vrot.slane %v659, 4
        %v662 = vshll.u32 %v272, 16
        %v664 = vrot.slane %v662, 5
        %v665 = vsel %vm291, %v660, %v664
        %v666 = vshrl.u32 %v272, 16
        %v668 = vrot.slane %v666, 4
        %v669 = vor.u32 %v668, %v664
        %v670 = vrot.slane %v669, 4
        %v672 = vshll.u32 %v288, 16
        %v674 = vrot.slane %v672, 5
        %v675 = vsel %vm291, %v670, %v674
        %s676 = scalar_lea.vmem %s228, 12
        %v677 = vld [vmem:[%s676] sm:$0xf]
        %v678 = vld [vmem:[%s676 + $0x4] sm:$0xf]
        %v679 = vld [vmem:[%s676 + $0xc] sm:$0xf]
        %v680 = vld [vmem:[%s676 + $0x10] sm:$0xf]
        %v681 = vld [vmem:[%s676 + $0x18] sm:$0xf]
        %v682 = vld [vmem:[%s676 + $0x1c] sm:$0xf]
        %v683 = vld [vmem:[%s676 + $0x24] sm:$0xf]
        %v684 = vld [vmem:[%s676 + $0x28] sm:$0xf]
        %v685 = vld [vmem:[%s676 + $0x30] sm:$0xf]
        %v686 = vld [vmem:[%s676 + $0x34] sm:$0xf]
        %v687 = vld [vmem:[%s676 + $0x3c] sm:$0xf]
        %v688 = vld [vmem:[%s676 + $0x40] sm:$0xf]
        %v689 = vld [vmem:[%s676 + $0x48] sm:$0xf]
        %v690 = vld [vmem:[%s676 + $0x4c] sm:$0xf]
        %v691 = vld [vmem:[%s676 + $0x54] sm:$0xf]
        %v692 = vld [vmem:[%s676 + $0x58] sm:$0xf]
        %v693 = vld [vmem:[%s676 + $0x60] sm:$0xf]
        %v694 = vld [vmem:[%s676 + $0x64] sm:$0xf]
        %v695 = vld [vmem:[%s676 + $0x6c] sm:$0xf]
        %v696 = vld [vmem:[%s676 + $0x70] sm:$0xf]
        %v697 = vld [vmem:[%s676 + $0x78] sm:$0xf]
        %v698 = vld [vmem:[%s676 + $0x7c] sm:$0xf]
        %v699 = vld [vmem:[%s676 + $0x84] sm:$0xf]
        %v700 = vld [vmem:[%s676 + $0x88] sm:$0xf]
        %v701 = vld [vmem:[%s676 + $0x90] sm:$0xf]
        %v702 = vld [vmem:[%s676 + $0x94] sm:$0xf]
        %v703 = vld [vmem:[%s676 + $0x9c] sm:$0xf]
        %v704 = vld [vmem:[%s676 + $0xa0] sm:$0xf]
        %v705 = vld [vmem:[%s676 + $0xa8] sm:$0xf]
        %v706 = vld [vmem:[%s676 + $0xac] sm:$0xf]
        %v707 = vld [vmem:[%s676 + $0xb4] sm:$0xf]
        %v708 = vld [vmem:[%s676 + $0xb8] sm:$0xf]
        %v709 = vld [vmem:[%s676 + $0x8] sm:$0x1]
        %v710 = vld [vmem:[%s676 + $0x14] sm:$0x1]
        %v711 = vld [vmem:[%s676 + $0x20] sm:$0x1]
        %v712 = vld [vmem:[%s676 + $0x2c] sm:$0x1]
        %v713 = vld [vmem:[%s676 + $0x38] sm:$0x1]
        %v714 = vld [vmem:[%s676 + $0x44] sm:$0x1]
        %v715 = vld [vmem:[%s676 + $0x50] sm:$0x1]
        %v716 = vld [vmem:[%s676 + $0x5c] sm:$0x1]
        %v717 = vld [vmem:[%s676 + $0x68] sm:$0x1]
        %v718 = vld [vmem:[%s676 + $0x74] sm:$0x1]
        %v719 = vld [vmem:[%s676 + $0x80] sm:$0x1]
        %v720 = vld [vmem:[%s676 + $0x8c] sm:$0x1]
        %v721 = vld [vmem:[%s676 + $0x98] sm:$0x1]
        %v722 = vld [vmem:[%s676 + $0xa4] sm:$0x1]
        %v723 = vld [vmem:[%s676 + $0xb0] sm:$0x1]
        %v724 = vld [vmem:[%s676 + $0xbc] sm:$0x1]
        %v726 = vshrl.u32 %v677, 16
        %v728 = vrot.slane %v726, 4
        %v729 = vshll.u32 %v677, 16
        %v731 = vrot.slane %v729, 5
        %v732 = vor.u32 %v728, %v731
        %v733 = vrot.slane %v732, 4
        %v735 = vshll.u32 %v678, 16
        %v737 = vrot.slane %v735, 5
        %v738 = vsel %vm291, %v733, %v737
        %v739 = vshrl.u32 %v678, 16
        %v741 = vrot.slane %v739, 4
        %v742 = vor.u32 %v741, %v737
        %v743 = vrot.slane %v742, 4
        %v745 = vshll.u32 %v709, 16
        %v747 = vrot.slane %v745, 5
        %v748 = vsel %vm291, %v743, %v747
        %v750 = vshrl.u32 %v679, 16
        %v752 = vrot.slane %v750, 4
        %v753 = vshll.u32 %v679, 16
        %v755 = vrot.slane %v753, 5
        %v756 = vor.u32 %v752, %v755
        %v757 = vrot.slane %v756, 4
        %v759 = vshll.u32 %v680, 16
        %v761 = vrot.slane %v759, 5
        %v762 = vsel %vm291, %v757, %v761
        %v763 = vshrl.u32 %v680, 16
        %v765 = vrot.slane %v763, 4
        %v766 = vor.u32 %v765, %v761
        %v767 = vrot.slane %v766, 4
        %v769 = vshll.u32 %v710, 16
        %v771 = vrot.slane %v769, 5
        %v772 = vsel %vm291, %v767, %v771
        %v774 = vshrl.u32 %v681, 16
        %v776 = vrot.slane %v774, 4
        %v777 = vshll.u32 %v681, 16
        %v779 = vrot.slane %v777, 5
        %v780 = vor.u32 %v776, %v779
        %v781 = vrot.slane %v780, 4
        %v783 = vshll.u32 %v682, 16
        %v785 = vrot.slane %v783, 5
        %v786 = vsel %vm291, %v781, %v785
        %v787 = vshrl.u32 %v682, 16
        %v789 = vrot.slane %v787, 4
        %v790 = vor.u32 %v789, %v785
        %v791 = vrot.slane %v790, 4
        %v793 = vshll.u32 %v711, 16
        %v795 = vrot.slane %v793, 5
        %v796 = vsel %vm291, %v791, %v795
        %v798 = vshrl.u32 %v683, 16
        %v800 = vrot.slane %v798, 4
        %v801 = vshll.u32 %v683, 16
        %v803 = vrot.slane %v801, 5
        %v804 = vor.u32 %v800, %v803
        %v805 = vrot.slane %v804, 4
        %v807 = vshll.u32 %v684, 16
        %v809 = vrot.slane %v807, 5
        %v810 = vsel %vm291, %v805, %v809
        %v811 = vshrl.u32 %v684, 16
        %v813 = vrot.slane %v811, 4
        %v814 = vor.u32 %v813, %v809
        %v815 = vrot.slane %v814, 4
        %v817 = vshll.u32 %v712, 16
        %v819 = vrot.slane %v817, 5
        %v820 = vsel %vm291, %v815, %v819
        %v822 = vshrl.u32 %v685, 16
        %v824 = vrot.slane %v822, 4
        %v825 = vshll.u32 %v685, 16
        %v827 = vrot.slane %v825, 5
        %v828 = vor.u32 %v824, %v827
        %v829 = vrot.slane %v828, 4
        %v831 = vshll.u32 %v686, 16
        %v833 = vrot.slane %v831, 5
        %v834 = vsel %vm291, %v829, %v833
        %v835 = vshrl.u32 %v686, 16
        %v837 = vrot.slane %v835, 4
        %v838 = vor.u32 %v837, %v833
        %v839 = vrot.slane %v838, 4
        %v841 = vshll.u32 %v713, 16
        %v843 = vrot.slane %v841, 5
        %v844 = vsel %vm291, %v839, %v843
        %v846 = vshrl.u32 %v687, 16
        %v848 = vrot.slane %v846, 4
        %v849 = vshll.u32 %v687, 16
        %v851 = vrot.slane %v849, 5
        %v852 = vor.u32 %v848, %v851
        %v853 = vrot.slane %v852, 4
        %v855 = vshll.u32 %v688, 16
        %v857 = vrot.slane %v855, 5
        %v858 = vsel %vm291, %v853, %v857
        %v859 = vshrl.u32 %v688, 16
        %v861 = vrot.slane %v859, 4
        %v862 = vor.u32 %v861, %v857
        %v863 = vrot.slane %v862, 4
        %v865 = vshll.u32 %v714, 16
        %v867 = vrot.slane %v865, 5
        %v868 = vsel %vm291, %v863, %v867
        %v870 = vshrl.u32 %v689, 16
        %v872 = vrot.slane %v870, 4
        %v873 = vshll.u32 %v689, 16
        %v875 = vrot.slane %v873, 5
        %v876 = vor.u32 %v872, %v875
        %v877 = vrot.slane %v876, 4
        %v879 = vshll.u32 %v690, 16
        %v881 = vrot.slane %v879, 5
        %v882 = vsel %vm291, %v877, %v881
        %v883 = vshrl.u32 %v690, 16
        %v885 = vrot.slane %v883, 4
        %v886 = vor.u32 %v885, %v881
        %v887 = vrot.slane %v886, 4
        %v889 = vshll.u32 %v715, 16
        %v891 = vrot.slane %v889, 5
        %v892 = vsel %vm291, %v887, %v891
        %v894 = vshrl.u32 %v691, 16
        %v896 = vrot.slane %v894, 4
        %v897 = vshll.u32 %v691, 16
        %v899 = vrot.slane %v897, 5
        %v900 = vor.u32 %v896, %v899
        %v901 = vrot.slane %v900, 4
        %v903 = vshll.u32 %v692, 16
        %v905 = vrot.slane %v903, 5
        %v906 = vsel %vm291, %v901, %v905
        %v907 = vshrl.u32 %v692, 16
        %v909 = vrot.slane %v907, 4
        %v910 = vor.u32 %v909, %v905
        %v911 = vrot.slane %v910, 4
        %v913 = vshll.u32 %v716, 16
        %v915 = vrot.slane %v913, 5
        %v916 = vsel %vm291, %v911, %v915
        %v918 = vshrl.u32 %v693, 16
        %v920 = vrot.slane %v918, 4
        %v921 = vshll.u32 %v693, 16
        %v923 = vrot.slane %v921, 5
        %v924 = vor.u32 %v920, %v923
        %v925 = vrot.slane %v924, 4
        %v927 = vshll.u32 %v694, 16
        %v929 = vrot.slane %v927, 5
        %v930 = vsel %vm291, %v925, %v929
        %v931 = vshrl.u32 %v694, 16
        %v933 = vrot.slane %v931, 4
        %v934 = vor.u32 %v933, %v929
        %v935 = vrot.slane %v934, 4
        %v937 = vshll.u32 %v717, 16
        %v939 = vrot.slane %v937, 5
        %v940 = vsel %vm291, %v935, %v939
        %v942 = vshrl.u32 %v695, 16
        %v944 = vrot.slane %v942, 4
        %v945 = vshll.u32 %v695, 16
        %v947 = vrot.slane %v945, 5
        %v948 = vor.u32 %v944, %v947
        %v949 = vrot.slane %v948, 4
        %v951 = vshll.u32 %v696, 16
        %v953 = vrot.slane %v951, 5
        %v954 = vsel %vm291, %v949, %v953
        %v955 = vshrl.u32 %v696, 16
        %v957 = vrot.slane %v955, 4
        %v958 = vor.u32 %v957, %v953
        %v959 = vrot.slane %v958, 4
        %v961 = vshll.u32 %v718, 16
        %v963 = vrot.slane %v961, 5
        %v964 = vsel %vm291, %v959, %v963
        %v966 = vshrl.u32 %v697, 16
        %v968 = vrot.slane %v966, 4
        %v969 = vshll.u32 %v697, 16
        %v971 = vrot.slane %v969, 5
        %v972 = vor.u32 %v968, %v971
        %v973 = vrot.slane %v972, 4
        %v975 = vshll.u32 %v698, 16
        %v977 = vrot.slane %v975, 5
        %v978 = vsel %vm291, %v973, %v977
        %v979 = vshrl.u32 %v698, 16
        %v981 = vrot.slane %v979, 4
        %v982 = vor.u32 %v981, %v977
        %v983 = vrot.slane %v982, 4
        %v985 = vshll.u32 %v719, 16
        %v987 = vrot.slane %v985, 5
        %v988 = vsel %vm291, %v983, %v987
        %v990 = vshrl.u32 %v699, 16
        %v992 = vrot.slane %v990, 4
        %v993 = vshll.u32 %v699, 16
        %v995 = vrot.slane %v993, 5
        %v996 = vor.u32 %v992, %v995
        %v997 = vrot.slane %v996, 4
        %v999 = vshll.u32 %v700, 16
        %v1001 = vrot.slane %v999, 5
        %v1002 = vsel %vm291, %v997, %v1001
        %v1003 = vshrl.u32 %v700, 16
        %v1005 = vrot.slane %v1003, 4
        %v1006 = vor.u32 %v1005, %v1001
        %v1007 = vrot.slane %v1006, 4
        %v1009 = vshll.u32 %v720, 16
        %v1011 = vrot.slane %v1009, 5
        %v1012 = vsel %vm291, %v1007, %v1011
        %v1014 = vshrl.u32 %v701, 16
        %v1016 = vrot.slane %v1014, 4
        %v1017 = vshll.u32 %v701, 16
        %v1019 = vrot.slane %v1017, 5
        %v1020 = vor.u32 %v1016, %v1019
        %v1021 = vrot.slane %v1020, 4
        %v1023 = vshll.u32 %v702, 16
        %v1025 = vrot.slane %v1023, 5
        %v1026 = vsel %vm291, %v1021, %v1025
        %v1027 = vshrl.u32 %v702, 16
        %v1029 = vrot.slane %v1027, 4
        %v1030 = vor.u32 %v1029, %v1025
        %v1031 = vrot.slane %v1030, 4
        %v1033 = vshll.u32 %v721, 16
        %v1035 = vrot.slane %v1033, 5
        %v1036 = vsel %vm291, %v1031, %v1035
        %v1038 = vshrl.u32 %v703, 16
        %v1040 = vrot.slane %v1038, 4
        %v1041 = vshll.u32 %v703, 16
        %v1043 = vrot.slane %v1041, 5
        %v1044 = vor.u32 %v1040, %v1043
        %v1045 = vrot.slane %v1044, 4
        %v1047 = vshll.u32 %v704, 16
        %v1049 = vrot.slane %v1047, 5
        %v1050 = vsel %vm291, %v1045, %v1049
        %v1051 = vshrl.u32 %v704, 16
        %v1053 = vrot.slane %v1051, 4
        %v1054 = vor.u32 %v1053, %v1049
        %v1055 = vrot.slane %v1054, 4
        %v1057 = vshll.u32 %v722, 16
        %v1059 = vrot.slane %v1057, 5
        %v1060 = vsel %vm291, %v1055, %v1059
        %v1062 = vshrl.u32 %v705, 16
        %v1064 = vrot.slane %v1062, 4
        %v1065 = vshll.u32 %v705, 16
        %v1067 = vrot.slane %v1065, 5
        %v1068 = vor.u32 %v1064, %v1067
        %v1069 = vrot.slane %v1068, 4
        %v1071 = vshll.u32 %v706, 16
        %v1073 = vrot.slane %v1071, 5
        %v1074 = vsel %vm291, %v1069, %v1073
        %v1075 = vshrl.u32 %v706, 16
        %v1077 = vrot.slane %v1075, 4
        %v1078 = vor.u32 %v1077, %v1073
        %v1079 = vrot.slane %v1078, 4
        %v1081 = vshll.u32 %v723, 16
        %v1083 = vrot.slane %v1081, 5
        %v1084 = vsel %vm291, %v1079, %v1083
        %v1086 = vshrl.u32 %v707, 16
        %v1088 = vrot.slane %v1086, 4
        %v1089 = vshll.u32 %v707, 16
        %v1091 = vrot.slane %v1089, 5
        %v1092 = vor.u32 %v1088, %v1091
        %v1093 = vrot.slane %v1092, 4
        %v1095 = vshll.u32 %v708, 16
        %v1097 = vrot.slane %v1095, 5
        %v1098 = vsel %vm291, %v1093, %v1097
        %v1099 = vshrl.u32 %v708, 16
        %v1101 = vrot.slane %v1099, 4
        %v1102 = vor.u32 %v1101, %v1097
        %v1103 = vrot.slane %v1102, 4
        %v1105 = vshll.u32 %v724, 16
        %v1107 = vrot.slane %v1105, 5
        %v1108 = vsel %vm291, %v1103, %v1107
        %v1141 = vunpack.c.l.b16 %v241
        %v1142 = vunpack.c.l.b16 %v242
        %v1143 = vunpack.c.l.b16 %v243
        %v1144 = vunpack.c.l.b16 %v244
        %v1145 = vunpack.c.l.b16 %v245
        %v1146 = vunpack.c.l.b16 %v246
        %v1147 = vunpack.c.l.b16 %v247
        %v1148 = vunpack.c.l.b16 %v248
        %v1149 = vunpack.c.l.b16 %v249
        %v1150 = vunpack.c.l.b16 %v250
        %v1151 = vunpack.c.l.b16 %v251
        %v1152 = vunpack.c.l.b16 %v252
        %v1153 = vunpack.c.l.b16 %v253
        %v1154 = vunpack.c.l.b16 %v254
        %v1155 = vunpack.c.l.b16 %v255
        %v1156 = vunpack.c.l.b16 %v256
        %v1157 = vunpack.c.l.b16 %v257
        %v1158 = vunpack.c.l.b16 %v258
        %v1159 = vunpack.c.l.b16 %v259
        %v1160 = vunpack.c.l.b16 %v260
        %v1161 = vunpack.c.l.b16 %v261
        %v1162 = vunpack.c.l.b16 %v262
        %v1163 = vunpack.c.l.b16 %v263
        %v1164 = vunpack.c.l.b16 %v264
        %v1165 = vunpack.c.l.b16 %v265
        %v1166 = vunpack.c.l.b16 %v266
        %v1167 = vunpack.c.l.b16 %v267
        %v1168 = vunpack.c.l.b16 %v268
        %v1169 = vunpack.c.l.b16 %v269
        %v1170 = vunpack.c.l.b16 %v270
        %v1171 = vunpack.c.l.b16 %v271
        %v1172 = vunpack.c.l.b16 %v272
        %v1173 = vpack.c.b16 %v1142, %v1141
        %v1174 = vpack.c.b16 %v1144, %v1143
        %v1175 = vpack.c.b16 %v1146, %v1145
        %v1176 = vpack.c.b16 %v1148, %v1147
        %v1177 = vpack.c.b16 %v1150, %v1149
        %v1178 = vpack.c.b16 %v1152, %v1151
        %v1179 = vpack.c.b16 %v1154, %v1153
        %v1180 = vpack.c.b16 %v1156, %v1155
        %v1181 = vpack.c.b16 %v1158, %v1157
        %v1182 = vpack.c.b16 %v1160, %v1159
        %v1183 = vpack.c.b16 %v1162, %v1161
        %v1184 = vpack.c.b16 %v1164, %v1163
        %v1185 = vpack.c.b16 %v1166, %v1165
        %v1186 = vpack.c.b16 %v1168, %v1167
        %v1187 = vpack.c.b16 %v1170, %v1169
        %v1188 = vpack.c.b16 %v1172, %v1171
        %v1205 = vunpack.c.l.b16 %v305
        %v1206 = vunpack.c.l.b16 %v315
        %v1207 = vunpack.c.l.b16 %v329
        %v1208 = vunpack.c.l.b16 %v339
        %v1209 = vunpack.c.l.b16 %v353
        %v1210 = vunpack.c.l.b16 %v363
        %v1211 = vunpack.c.l.b16 %v377
        %v1212 = vunpack.c.l.b16 %v387
        %v1213 = vunpack.c.l.b16 %v401
        %v1214 = vunpack.c.l.b16 %v411
        %v1215 = vunpack.c.l.b16 %v425
        %v1216 = vunpack.c.l.b16 %v435
        %v1217 = vunpack.c.l.b16 %v449
        %v1218 = vunpack.c.l.b16 %v459
        %v1219 = vunpack.c.l.b16 %v473
        %v1220 = vunpack.c.l.b16 %v483
        %v1221 = vunpack.c.l.b16 %v497
        %v1222 = vunpack.c.l.b16 %v507
        %v1223 = vunpack.c.l.b16 %v521
        %v1224 = vunpack.c.l.b16 %v531
        %v1225 = vunpack.c.l.b16 %v545
        %v1226 = vunpack.c.l.b16 %v555
        %v1227 = vunpack.c.l.b16 %v569
        %v1228 = vunpack.c.l.b16 %v579
        %v1229 = vunpack.c.l.b16 %v593
        %v1230 = vunpack.c.l.b16 %v603
        %v1231 = vunpack.c.l.b16 %v617
        %v1232 = vunpack.c.l.b16 %v627
        %v1233 = vunpack.c.l.b16 %v641
        %v1234 = vunpack.c.l.b16 %v651
        %v1235 = vunpack.c.l.b16 %v665
        %v1236 = vunpack.c.l.b16 %v675
        %v1237 = vpack.c.b16 %v1206, %v1205
        %v1238 = vpack.c.b16 %v1208, %v1207
        %v1239 = vpack.c.b16 %v1210, %v1209
        %v1240 = vpack.c.b16 %v1212, %v1211
        %v1241 = vpack.c.b16 %v1214, %v1213
        %v1242 = vpack.c.b16 %v1216, %v1215
        %v1243 = vpack.c.b16 %v1218, %v1217
        %v1244 = vpack.c.b16 %v1220, %v1219
        %v1245 = vpack.c.b16 %v1222, %v1221
        %v1246 = vpack.c.b16 %v1224, %v1223
        %v1247 = vpack.c.b16 %v1226, %v1225
        %v1248 = vpack.c.b16 %v1228, %v1227
        %v1249 = vpack.c.b16 %v1230, %v1229
        %v1250 = vpack.c.b16 %v1232, %v1231
        %v1251 = vpack.c.b16 %v1234, %v1233
        %v1252 = vpack.c.b16 %v1236, %v1235
        %v1301 = vunpack.c.l.b16 %v677
        %v1302 = vunpack.c.l.b16 %v678
        %v1303 = vunpack.c.l.b16 %v679
        %v1304 = vunpack.c.l.b16 %v680
        %v1305 = vunpack.c.l.b16 %v681
        %v1306 = vunpack.c.l.b16 %v682
        %v1307 = vunpack.c.l.b16 %v683
        %v1308 = vunpack.c.l.b16 %v684
        %v1309 = vunpack.c.l.b16 %v685
        %v1310 = vunpack.c.l.b16 %v686
        %v1311 = vunpack.c.l.b16 %v687
        %v1312 = vunpack.c.l.b16 %v688
        %v1313 = vunpack.c.l.b16 %v689
        %v1314 = vunpack.c.l.b16 %v690
        %v1315 = vunpack.c.l.b16 %v691
        %v1316 = vunpack.c.l.b16 %v692
        %v1317 = vunpack.c.l.b16 %v693
        %v1318 = vunpack.c.l.b16 %v694
        %v1319 = vunpack.c.l.b16 %v695
        %v1320 = vunpack.c.l.b16 %v696
        %v1321 = vunpack.c.l.b16 %v697
        %v1322 = vunpack.c.l.b16 %v698
        %v1323 = vunpack.c.l.b16 %v699
        %v1324 = vunpack.c.l.b16 %v700
        %v1325 = vunpack.c.l.b16 %v701
        %v1326 = vunpack.c.l.b16 %v702
        %v1327 = vunpack.c.l.b16 %v703
        %v1328 = vunpack.c.l.b16 %v704
        %v1329 = vunpack.c.l.b16 %v705
        %v1330 = vunpack.c.l.b16 %v706
        %v1331 = vunpack.c.l.b16 %v707
        %v1332 = vunpack.c.l.b16 %v708
        %v1333 = vpack.c.b16 %v1302, %v1301
        %v1334 = vpack.c.b16 %v1304, %v1303
        %v1335 = vpack.c.b16 %v1306, %v1305
        %v1336 = vpack.c.b16 %v1308, %v1307
        %v1337 = vpack.c.b16 %v1310, %v1309
        %v1338 = vpack.c.b16 %v1312, %v1311
        %v1339 = vpack.c.b16 %v1314, %v1313
        %v1340 = vpack.c.b16 %v1316, %v1315
        %v1341 = vpack.c.b16 %v1318, %v1317
        %v1342 = vpack.c.b16 %v1320, %v1319
        %v1343 = vpack.c.b16 %v1322, %v1321
        %v1344 = vpack.c.b16 %v1324, %v1323
        %v1345 = vpack.c.b16 %v1326, %v1325
        %v1346 = vpack.c.b16 %v1328, %v1327
        %v1347 = vpack.c.b16 %v1330, %v1329
        %v1348 = vpack.c.b16 %v1332, %v1331
        %v1365 = vunpack.c.l.b16 %v738
        %v1366 = vunpack.c.l.b16 %v748
        %v1367 = vunpack.c.l.b16 %v762
        %v1368 = vunpack.c.l.b16 %v772
        %v1369 = vunpack.c.l.b16 %v786
        %v1370 = vunpack.c.l.b16 %v796
        %v1371 = vunpack.c.l.b16 %v810
        %v1372 = vunpack.c.l.b16 %v820
        %v1373 = vunpack.c.l.b16 %v834
        %v1374 = vunpack.c.l.b16 %v844
        %v1375 = vunpack.c.l.b16 %v858
        %v1376 = vunpack.c.l.b16 %v868
        %v1377 = vunpack.c.l.b16 %v882
        %v1378 = vunpack.c.l.b16 %v892
        %v1379 = vunpack.c.l.b16 %v906
        %v1380 = vunpack.c.l.b16 %v916
        %v1381 = vunpack.c.l.b16 %v930
        %v1382 = vunpack.c.l.b16 %v940
        %v1383 = vunpack.c.l.b16 %v954
        %v1384 = vunpack.c.l.b16 %v964
        %v1385 = vunpack.c.l.b16 %v978
        %v1386 = vunpack.c.l.b16 %v988
        %v1387 = vunpack.c.l.b16 %v1002
        %v1388 = vunpack.c.l.b16 %v1012
        %v1389 = vunpack.c.l.b16 %v1026
        %v1390 = vunpack.c.l.b16 %v1036
        %v1391 = vunpack.c.l.b16 %v1050
        %v1392 = vunpack.c.l.b16 %v1060
        %v1393 = vunpack.c.l.b16 %v1074
        %v1394 = vunpack.c.l.b16 %v1084
        %v1395 = vunpack.c.l.b16 %v1098
        %v1396 = vunpack.c.l.b16 %v1108
        %v1397 = vpack.c.b16 %v1366, %v1365
        %v1398 = vpack.c.b16 %v1368, %v1367
        %v1399 = vpack.c.b16 %v1370, %v1369
        %v1400 = vpack.c.b16 %v1372, %v1371
        %v1401 = vpack.c.b16 %v1374, %v1373
        %v1402 = vpack.c.b16 %v1376, %v1375
        %v1403 = vpack.c.b16 %v1378, %v1377
        %v1404 = vpack.c.b16 %v1380, %v1379
        %v1405 = vpack.c.b16 %v1382, %v1381
        %v1406 = vpack.c.b16 %v1384, %v1383
        %v1407 = vpack.c.b16 %v1386, %v1385
        %v1408 = vpack.c.b16 %v1388, %v1387
        %v1409 = vpack.c.b16 %v1390, %v1389
        %v1410 = vpack.c.b16 %v1392, %v1391
        %v1411 = vpack.c.b16 %v1394, %v1393
        %v1412 = vpack.c.b16 %v1396, %v1395
        %v1429 = vld [vmem:[#allocation2] sm:$0xf]
        %v1430 = vld [vmem:[#allocation2 + $0x4] sm:$0xf]
        %v1431 = vld [vmem:[#allocation2 + $0x8] sm:$0xf]
        %v1432 = vld [vmem:[#allocation2 + $0xc] sm:$0xf]
        %v1433 = vld [vmem:[#allocation2 + $0x10] sm:$0xf]
        %v1434 = vld [vmem:[#allocation2 + $0x14] sm:$0xf]
        %v1435 = vld [vmem:[#allocation2 + $0x18] sm:$0xf]
        %v1436 = vld [vmem:[#allocation2 + $0x1c] sm:$0xf]
        %v1437 = vld [vmem:[#allocation2 + $0x20] sm:$0xf]
        %v1438 = vld [vmem:[#allocation2 + $0x24] sm:$0xf]
        %v1439 = vld [vmem:[#allocation2 + $0x28] sm:$0xf]
        %v1440 = vld [vmem:[#allocation2 + $0x2c] sm:$0xf]
        %v1441 = vld [vmem:[#allocation2 + $0x30] sm:$0xf]
        %v1442 = vld [vmem:[#allocation2 + $0x34] sm:$0xf]
        %v1443 = vld [vmem:[#allocation2 + $0x38] sm:$0xf]
        %v1444 = vld [vmem:[#allocation2 + $0x3c] sm:$0xf]
        %v1445 = vld [vmem:[#allocation2 + $0x40] sm:$0xf]
        %v1446 = vld [vmem:[#allocation2 + $0x44] sm:$0xf]
        %v1447 = vld [vmem:[#allocation2 + $0x48] sm:$0xf]
        %v1448 = vld [vmem:[#allocation2 + $0x4c] sm:$0xf]
        %v1449 = vld [vmem:[#allocation2 + $0x50] sm:$0xf]
        %v1450 = vld [vmem:[#allocation2 + $0x54] sm:$0xf]
        %v1451 = vld [vmem:[#allocation2 + $0x58] sm:$0xf]
        %v1452 = vld [vmem:[#allocation2 + $0x5c] sm:$0xf]
        %v1453 = vld [vmem:[#allocation2 + $0x60] sm:$0xf]
        %v1454 = vld [vmem:[#allocation2 + $0x64] sm:$0xf]
        %v1455 = vld [vmem:[#allocation2 + $0x68] sm:$0xf]
        %v1456 = vld [vmem:[#allocation2 + $0x6c] sm:$0xf]
        %v1457 = vld [vmem:[#allocation2 + $0x70] sm:$0xf]
        %v1458 = vld [vmem:[#allocation2 + $0x74] sm:$0xf]
        %v1459 = vld [vmem:[#allocation2 + $0x78] sm:$0xf]
        %v1460 = vld [vmem:[#allocation2 + $0x7c] sm:$0xf]
        %v1461 = vld [vmem:[#allocation2 + $0x80] sm:$0xf]
        %v1462 = vld [vmem:[#allocation2 + $0x84] sm:$0xf]
        %v1463 = vld [vmem:[#allocation2 + $0x88] sm:$0xf]
        %v1464 = vld [vmem:[#allocation2 + $0x8c] sm:$0xf]
        %v1465 = vld [vmem:[#allocation2 + $0x90] sm:$0xf]
        %v1466 = vld [vmem:[#allocation2 + $0x94] sm:$0xf]
        %v1467 = vld [vmem:[#allocation2 + $0x98] sm:$0xf]
        %v1468 = vld [vmem:[#allocation2 + $0x9c] sm:$0xf]
        %v1469 = vld [vmem:[#allocation2 + $0xa0] sm:$0xf]
        %v1470 = vld [vmem:[#allocation2 + $0xa4] sm:$0xf]
        %v1471 = vld [vmem:[#allocation2 + $0xa8] sm:$0xf]
        %v1472 = vld [vmem:[#allocation2 + $0xac] sm:$0xf]
        %v1473 = vld [vmem:[#allocation2 + $0xb0] sm:$0xf]
        %v1474 = vld [vmem:[#allocation2 + $0xb4] sm:$0xf]
        %v1475 = vld [vmem:[#allocation2 + $0xb8] sm:$0xf]
        %v1476 = vld [vmem:[#allocation2 + $0xbc] sm:$0xf]
        %v1477 = vld [vmem:[#allocation2 + $0xc0] sm:$0xf]
        %v1478 = vld [vmem:[#allocation2 + $0xc4] sm:$0xf]
        %v1479 = vld [vmem:[#allocation2 + $0xc8] sm:$0xf]
        %v1480 = vld [vmem:[#allocation2 + $0xcc] sm:$0xf]
        %v1481 = vld [vmem:[#allocation2 + $0xd0] sm:$0xf]
        %v1482 = vld [vmem:[#allocation2 + $0xd4] sm:$0xf]
        %v1483 = vld [vmem:[#allocation2 + $0xd8] sm:$0xf]
        %v1484 = vld [vmem:[#allocation2 + $0xdc] sm:$0xf]
        %v1485 = vld [vmem:[#allocation2 + $0xe0] sm:$0xf]
        %v1486 = vld [vmem:[#allocation2 + $0xe4] sm:$0xf]
        %v1487 = vld [vmem:[#allocation2 + $0xe8] sm:$0xf]
        %v1488 = vld [vmem:[#allocation2 + $0xec] sm:$0xf]
        %v1489 = vld [vmem:[#allocation2 + $0xf0] sm:$0xf]
        %v1490 = vld [vmem:[#allocation2 + $0xf4] sm:$0xf]
        %v1491 = vld [vmem:[#allocation2 + $0xf8] sm:$0xf]
        %v1492 = vld [vmem:[#allocation2 + $0xfc] sm:$0xf]
        %v1494 = vlaneseq
        %v1495 = vshrl.u32 %v1494, 7
        %v1496 = vsub.s32 0, %v1495
        %v1497 = vrot.slane %v240, %v1496
        %v1563 = vunpack.c.l.b16 %v1429
        %v1564 = vunpack.c.l.b16 %v1430
        %v1565 = vunpack.c.l.b16 %v1431
        %v1566 = vunpack.c.l.b16 %v1432
        %v1567 = vunpack.c.l.b16 %v1433
        %v1568 = vunpack.c.l.b16 %v1434
        %v1569 = vunpack.c.l.b16 %v1435
        %v1570 = vunpack.c.l.b16 %v1436
        %v1571 = vunpack.c.l.b16 %v1437
        %v1572 = vunpack.c.l.b16 %v1438
        %v1573 = vunpack.c.l.b16 %v1439
        %v1574 = vunpack.c.l.b16 %v1440
        %v1575 = vunpack.c.l.b16 %v1441
        %v1576 = vunpack.c.l.b16 %v1442
        %v1577 = vunpack.c.l.b16 %v1443
        %v1578 = vunpack.c.l.b16 %v1444
        %v1579 = vunpack.c.l.b16 %v1445
        %v1580 = vunpack.c.l.b16 %v1446
        %v1581 = vunpack.c.l.b16 %v1447
        %v1582 = vunpack.c.l.b16 %v1448
        %v1583 = vunpack.c.l.b16 %v1449
        %v1584 = vunpack.c.l.b16 %v1450
        %v1585 = vunpack.c.l.b16 %v1451
        %v1586 = vunpack.c.l.b16 %v1452
        %v1587 = vunpack.c.l.b16 %v1453
        %v1588 = vunpack.c.l.b16 %v1454
        %v1589 = vunpack.c.l.b16 %v1455
        %v1590 = vunpack.c.l.b16 %v1456
        %v1591 = vunpack.c.l.b16 %v1457
        %v1592 = vunpack.c.l.b16 %v1458
        %v1593 = vunpack.c.l.b16 %v1459
        %v1594 = vunpack.c.l.b16 %v1460
        %v1595 = vunpack.c.l.b16 %v1461
        %v1596 = vunpack.c.l.b16 %v1462
        %v1597 = vunpack.c.l.b16 %v1463
        %v1598 = vunpack.c.l.b16 %v1464
        %v1599 = vunpack.c.l.b16 %v1465
        %v1600 = vunpack.c.l.b16 %v1466
        %v1601 = vunpack.c.l.b16 %v1467
        %v1602 = vunpack.c.l.b16 %v1468
        %v1603 = vunpack.c.l.b16 %v1469
        %v1604 = vunpack.c.l.b16 %v1470
        %v1605 = vunpack.c.l.b16 %v1471
        %v1606 = vunpack.c.l.b16 %v1472
        %v1607 = vunpack.c.l.b16 %v1473
        %v1608 = vunpack.c.l.b16 %v1474
        %v1609 = vunpack.c.l.b16 %v1475
        %v1610 = vunpack.c.l.b16 %v1476
        %v1611 = vunpack.c.l.b16 %v1477
        %v1612 = vunpack.c.l.b16 %v1478
        %v1613 = vunpack.c.l.b16 %v1479
        %v1614 = vunpack.c.l.b16 %v1480
        %v1615 = vunpack.c.l.b16 %v1481
        %v1616 = vunpack.c.l.b16 %v1482
        %v1617 = vunpack.c.l.b16 %v1483
        %v1618 = vunpack.c.l.b16 %v1484
        %v1619 = vunpack.c.l.b16 %v1485
        %v1620 = vunpack.c.l.b16 %v1486
        %v1621 = vunpack.c.l.b16 %v1487
        %v1622 = vunpack.c.l.b16 %v1488
        %v1623 = vunpack.c.l.b16 %v1489
        %v1624 = vunpack.c.l.b16 %v1490
        %v1625 = vunpack.c.l.b16 %v1491
        %v1626 = vunpack.c.l.b16 %v1492
        %v1627 = vpack.c.b16 %v1564, %v1563
        %v1628 = vpack.c.b16 %v1566, %v1565
        %v1629 = vpack.c.b16 %v1568, %v1567
        %v1630 = vpack.c.b16 %v1570, %v1569
        %v1631 = vpack.c.b16 %v1572, %v1571
        %v1632 = vpack.c.b16 %v1574, %v1573
        %v1633 = vpack.c.b16 %v1576, %v1575
        %v1634 = vpack.c.b16 %v1578, %v1577
        %v1635 = vpack.c.b16 %v1580, %v1579
        %v1636 = vpack.c.b16 %v1582, %v1581
        %v1637 = vpack.c.b16 %v1584, %v1583
        %v1638 = vpack.c.b16 %v1586, %v1585
        %v1639 = vpack.c.b16 %v1588, %v1587
        %v1640 = vpack.c.b16 %v1590, %v1589
        %v1641 = vpack.c.b16 %v1592, %v1591
        %v1642 = vpack.c.b16 %v1594, %v1593
        %v1643 = vpack.c.b16 %v1596, %v1595
        %v1644 = vpack.c.b16 %v1598, %v1597
        %v1645 = vpack.c.b16 %v1600, %v1599
        %v1646 = vpack.c.b16 %v1602, %v1601
        %v1647 = vpack.c.b16 %v1604, %v1603
        %v1648 = vpack.c.b16 %v1606, %v1605
        %v1649 = vpack.c.b16 %v1608, %v1607
        %v1650 = vpack.c.b16 %v1610, %v1609
        %v1651 = vpack.c.b16 %v1612, %v1611
        %v1652 = vpack.c.b16 %v1614, %v1613
        %v1653 = vpack.c.b16 %v1616, %v1615
        %v1654 = vpack.c.b16 %v1618, %v1617
        %v1655 = vpack.c.b16 %v1620, %v1619
        %v1656 = vpack.c.b16 %v1622, %v1621
        %v1657 = vpack.c.b16 %v1624, %v1623
        %v1658 = vpack.c.b16 %v1626, %v1625
        %1691 = vmatprep.subr.bf16.mxu0 0
        %1692 = vmatpush1.bf16.msra.mxu0 %v1627
        %1693 = vmatprep.subr.bf16.mxu0 0
        %1694 = vmatpush1.bf16.msra.mxu0 %v1628
        %1695 = vmatprep.subr.bf16.mxu0 0
        %1696 = vmatpush1.bf16.msra.mxu0 %v1629
        %1697 = vmatprep.subr.bf16.mxu0 0
        %1698 = vmatpush1.bf16.msra.mxu0 %v1630
        %1699 = vmatprep.subr.bf16.mxu0 0
        %1700 = vmatpush1.bf16.msra.mxu0 %v1631
        %1701 = vmatprep.subr.bf16.mxu0 0
        %1702 = vmatpush1.bf16.msra.mxu0 %v1632
        %1703 = vmatprep.subr.bf16.mxu0 0
        %1704 = vmatpush1.bf16.msra.mxu0 %v1633
        %1705 = vmatprep.subr.bf16.mxu0 0
        %1706 = vmatpush1.bf16.msra.mxu0 %v1634
        %1707 = vmatprep.subr.bf16.mxu0 0
        %1708 = vmatpush1.bf16.msra.mxu0 %v1635
        %1709 = vmatprep.subr.bf16.mxu0 0
        %1710 = vmatpush1.bf16.msra.mxu0 %v1636
        %1711 = vmatprep.subr.bf16.mxu0 0
        %1712 = vmatpush1.bf16.msra.mxu0 %v1637
        %1713 = vmatprep.subr.bf16.mxu0 0
        %1714 = vmatpush1.bf16.msra.mxu0 %v1638
        %1715 = vmatprep.subr.bf16.mxu0 0
        %1716 = vmatpush1.bf16.msra.mxu0 %v1639
        %1717 = vmatprep.subr.bf16.mxu0 0
        %1718 = vmatpush1.bf16.msra.mxu0 %v1640
        %1719 = vmatprep.subr.bf16.mxu0 0
        %1720 = vmatpush1.bf16.msra.mxu0 %v1641
        %1721 = vmatprep.subr.bf16.mxu0 0
        %1722 = vmatpush1.bf16.msra.mxu0 %v1642
        %1723 = vmatprep.mubr.bf16.mxu0 %v1237
        %1724 = vmatmul.mubr.bf16.gmra.mrb[0].mxu0 %v1173
        %v1725 = vpop.f32.mrb[0].mxu0
        %v1726 = vadd.f32 %v1497, %v1725
        %v1727 = vpop.f32.mrb[0].mxu0
        %v1728 = vpop.f32.mrb[0].mxu0
        %v1729 = vadd.f32 %v1497, %v1728
        %v1730 = vpop.f32.mrb[0].mxu0
        %1731 = vmatprep.mubr.bf16.mxu0 %v1238
        %1732 = vmatmul.mubr.bf16.gmra.mrb[0].mxu0 %v1174
        %v1733 = vpop.f32.mrb[0].mxu0
        %v1734 = vadd.f32 %v1497, %v1733
        %v1735 = vpop.f32.mrb[0].mxu0
        %v1736 = vpop.f32.mrb[0].mxu0
        %v1737 = vadd.f32 %v1497, %v1736
        %v1738 = vpop.f32.mrb[0].mxu0
        %1739 = vmatprep.mubr.bf16.mxu0 %v1239
        %1740 = vmatmul.mubr.bf16.gmra.mrb[0].mxu0 %v1175
        %v1741 = vpop.f32.mrb[0].mxu0
        %v1742 = vadd.f32 %v1497, %v1741
        %v1743 = vpop.f32.mrb[0].mxu0
        %v1744 = vpop.f32.mrb[0].mxu0
        %v1745 = vadd.f32 %v1497, %v1744
        %v1746 = vpop.f32.mrb[0].mxu0
        %1747 = vmatprep.mubr.bf16.mxu0 %v1240
        %1748 = vmatmul.mubr.bf16.gmra.mrb[0].mxu0 %v1176
        %v1749 = vpop.f32.mrb[0].mxu0
        %v1750 = vadd.f32 %v1497, %v1749
        %v1751 = vpop.f32.mrb[0].mxu0
        %v1752 = vpop.f32.mrb[0].mxu0
        %v1753 = vadd.f32 %v1497, %v1752
        %v1754 = vpop.f32.mrb[0].mxu0
        %1755 = vmatprep.mubr.bf16.mxu0 %v1241
        %1756 = vmatmul.mubr.bf16.gmra.mrb[0].mxu0 %v1177
        %v1757 = vpop.f32.mrb[0].mxu0
        %v1758 = vadd.f32 %v1497, %v1757
        %v1759 = vpop.f32.mrb[0].mxu0
        %v1760 = vpop.f32.mrb[0].mxu0
        %v1761 = vadd.f32 %v1497, %v1760
        %v1762 = vpop.f32.mrb[0].mxu0
        %1763 = vmatprep.mubr.bf16.mxu0 %v1242
        %1764 = vmatmul.mubr.bf16.gmra.mrb[0].mxu0 %v1178
        %v1765 = vpop.f32.mrb[0].mxu0
        %v1766 = vadd.f32 %v1497, %v1765
        %v1767 = vpop.f32.mrb[0].mxu0
        %v1768 = vpop.f32.mrb[0].mxu0
        %v1769 = vadd.f32 %v1497, %v1768
        %v1770 = vpop.f32.mrb[0].mxu0
        %1771 = vmatprep.mubr.bf16.mxu0 %v1243
        %1772 = vmatmul.mubr.bf16.gmra.mrb[0].mxu0 %v1179
        %v1773 = vpop.f32.mrb[0].mxu0
        %v1774 = vadd.f32 %v1497, %v1773
        %v1775 = vpop.f32.mrb[0].mxu0
        %v1776 = vpop.f32.mrb[0].mxu0
        %v1777 = vadd.f32 %v1497, %v1776
        %v1778 = vpop.f32.mrb[0].mxu0
        %1779 = vmatprep.mubr.bf16.mxu0 %v1244
        %1780 = vmatmul.mubr.bf16.gmra.mrb[0].mxu0 %v1180
        %v1781 = vpop.f32.mrb[0].mxu0
        %v1782 = vadd.f32 %v1497, %v1781
        %v1783 = vpop.f32.mrb[0].mxu0
        %v1784 = vpop.f32.mrb[0].mxu0
        %v1785 = vadd.f32 %v1497, %v1784
        %v1786 = vpop.f32.mrb[0].mxu0
        %1787 = vmatprep.mubr.bf16.mxu0 %v1245
        %1788 = vmatmul.mubr.bf16.gmra.mrb[0].mxu0 %v1181
        %v1789 = vpop.f32.mrb[0].mxu0
        %v1790 = vadd.f32 %v1497, %v1789
        %v1791 = vpop.f32.mrb[0].mxu0
        %v1792 = vpop.f32.mrb[0].mxu0
        %v1793 = vadd.f32 %v1497, %v1792
        %v1794 = vpop.f32.mrb[0].mxu0
        %1795 = vmatprep.mubr.bf16.mxu0 %v1246
        %1796 = vmatmul.mubr.bf16.gmra.mrb[0].mxu0 %v1182
        %v1797 = vpop.f32.mrb[0].mxu0
        %v1798 = vadd.f32 %v1497, %v1797
        %v1799 = vpop.f32.mrb[0].mxu0
        %v1800 = vpop.f32.mrb[0].mxu0
        %v1801 = vadd.f32 %v1497, %v1800
        %v1802 = vpop.f32.mrb[0].mxu0
        %1803 = vmatprep.mubr.bf16.mxu0 %v1247
        %1804 = vmatmul.mubr.bf16.gmra.mrb[0].mxu0 %v1183
        %v1805 = vpop.f32.mrb[0].mxu0
        %v1806 = vadd.f32 %v1497, %v1805
        %v1807 = vpop.f32.mrb[0].mxu0
        %v1808 = vpop.f32.mrb[0].mxu0
        %v1809 = vadd.f32 %v1497, %v1808
        %v1810 = vpop.f32.mrb[0].mxu0
        %1811 = vmatprep.mubr.bf16.mxu0 %v1248
        %1812 = vmatmul.mubr.bf16.gmra.mrb[0].mxu0 %v1184
        %v1813 = vpop.f32.mrb[0].mxu0
        %v1814 = vadd.f32 %v1497, %v1813
        %v1815 = vpop.f32.mrb[0].mxu0
        %v1816 = vpop.f32.mrb[0].mxu0
        %v1817 = vadd.f32 %v1497, %v1816
        %v1818 = vpop.f32.mrb[0].mxu0
        %1819 = vmatprep.mubr.bf16.mxu0 %v1249
        %1820 = vmatmul.mubr.bf16.gmra.mrb[0].mxu0 %v1185
        %v1821 = vpop.f32.mrb[0].mxu0
        %v1822 = vadd.f32 %v1497, %v1821
        %v1823 = vpop.f32.mrb[0].mxu0
        %v1824 = vpop.f32.mrb[0].mxu0
        %v1825 = vadd.f32 %v1497, %v1824
        %v1826 = vpop.f32.mrb[0].mxu0
        %1827 = vmatprep.mubr.bf16.mxu0 %v1250
        %1828 = vmatmul.mubr.bf16.gmra.mrb[0].mxu0 %v1186
        %v1829 = vpop.f32.mrb[0].mxu0
        %v1830 = vadd.f32 %v1497, %v1829
        %v1831 = vpop.f32.mrb[0].mxu0
        %v1832 = vpop.f32.mrb[0].mxu0
        %v1833 = vadd.f32 %v1497, %v1832
        %v1834 = vpop.f32.mrb[0].mxu0
        %1835 = vmatprep.mubr.bf16.mxu0 %v1251
        %1836 = vmatmul.mubr.bf16.gmra.mrb[0].mxu0 %v1187
        %v1837 = vpop.f32.mrb[0].mxu0
        %v1838 = vadd.f32 %v1497, %v1837
        %v1839 = vpop.f32.mrb[0].mxu0
        %v1840 = vpop.f32.mrb[0].mxu0
        %v1841 = vadd.f32 %v1497, %v1840
        %v1842 = vpop.f32.mrb[0].mxu0
        %1843 = vmatprep.mubr.bf16.mxu0 %v1252
        %1844 = vmatmul.mubr.bf16.gmra.mrb[0].mxu0 %v1188
        %v1845 = vpop.f32.mrb[0].mxu0
        %v1846 = vadd.f32 %v1497, %v1845
        %v1847 = vpop.f32.mrb[0].mxu0
        %v1848 = vpop.f32.mrb[0].mxu0
        %v1849 = vadd.f32 %v1497, %v1848
        %v1850 = vpop.f32.mrb[0].mxu0
        %1851 = vdwg.mxu0
        %1852 = vmatprep.subr.bf16.mxu0 0
        %1853 = vmatpush1.bf16.msra.mxu0 %v1643
        %1854 = vmatprep.subr.bf16.mxu0 0
        %1855 = vmatpush1.bf16.msra.mxu0 %v1644
        %1856 = vmatprep.subr.bf16.mxu0 0
        %1857 = vmatpush1.bf16.msra.mxu0 %v1645
        %1858 = vmatprep.subr.bf16.mxu0 0
        %1859 = vmatpush1.bf16.msra.mxu0 %v1646
        %1860 = vmatprep.subr.bf16.mxu0 0
        %1861 = vmatpush1.bf16.msra.mxu0 %v1647
        %1862 = vmatprep.subr.bf16.mxu0 0
        %1863 = vmatpush1.bf16.msra.mxu0 %v1648
        %1864 = vmatprep.subr.bf16.mxu0 0
        %1865 = vmatpush1.bf16.msra.mxu0 %v1649
        %1866 = vmatprep.subr.bf16.mxu0 0
        %1867 = vmatpush1.bf16.msra.mxu0 %v1650
        %1868 = vmatprep.subr.bf16.mxu0 0
        %1869 = vmatpush1.bf16.msra.mxu0 %v1651
        %1870 = vmatprep.subr.bf16.mxu0 0
        %1871 = vmatpush1.bf16.msra.mxu0 %v1652
        %1872 = vmatprep.subr.bf16.mxu0 0
        %1873 = vmatpush1.bf16.msra.mxu0 %v1653
        %1874 = vmatprep.subr.bf16.mxu0 0
        %1875 = vmatpush1.bf16.msra.mxu0 %v1654
        %1876 = vmatprep.subr.bf16.mxu0 0
        %1877 = vmatpush1.bf16.msra.mxu0 %v1655
        %1878 = vmatprep.subr.bf16.mxu0 0
        %1879 = vmatpush1.bf16.msra.mxu0 %v1656
        %1880 = vmatprep.subr.bf16.mxu0 0
        %1881 = vmatpush1.bf16.msra.mxu0 %v1657
        %1882 = vmatprep.subr.bf16.mxu0 0
        %1883 = vmatpush1.bf16.msra.mxu0 %v1658
        %1884 = vmatprep.mubr.bf16.mxu0 %v1397
        %1885 = vmatmul.mubr.bf16.gmra.mrb[0].mxu0 %v1333
        %v1886 = vpop.f32.mrb[0].mxu0
        %v1887 = vadd.f32 %v1726, %v1886
        %v1888 = vpop.f32.mrb[0].mxu0
        %v1889 = vpop.f32.mrb[0].mxu0
        %v1890 = vadd.f32 %v1729, %v1889
        %v1891 = vpop.f32.mrb[0].mxu0
        %1892 = vmatprep.mubr.bf16.mxu0 %v1398
        %1893 = vmatmul.mubr.bf16.gmra.mrb[0].mxu0 %v1334
        %v1894 = vpop.f32.mrb[0].mxu0
        %v1895 = vadd.f32 %v1734, %v1894
        %v1896 = vpop.f32.mrb[0].mxu0
        %v1897 = vpop.f32.mrb[0].mxu0
        %v1898 = vadd.f32 %v1737, %v1897
        %v1899 = vpop.f32.mrb[0].mxu0
        %1900 = vmatprep.mubr.bf16.mxu0 %v1399
        %1901 = vmatmul.mubr.bf16.gmra.mrb[0].mxu0 %v1335
        %v1902 = vpop.f32.mrb[0].mxu0
        %v1903 = vadd.f32 %v1742, %v1902
        %v1904 = vpop.f32.mrb[0].mxu0
        %v1905 = vpop.f32.mrb[0].mxu0
        %v1906 = vadd.f32 %v1745, %v1905
        %v1907 = vpop.f32.mrb[0].mxu0
        %1908 = vmatprep.mubr.bf16.mxu0 %v1400
        %1909 = vmatmul.mubr.bf16.gmra.mrb[0].mxu0 %v1336
        %v1910 = vpop.f32.mrb[0].mxu0
        %v1911 = vadd.f32 %v1750, %v1910
        %v1912 = vpop.f32.mrb[0].mxu0
        %v1913 = vpop.f32.mrb[0].mxu0
        %v1914 = vadd.f32 %v1753, %v1913
        %v1915 = vpop.f32.mrb[0].mxu0
        %1916 = vmatprep.mubr.bf16.mxu0 %v1401
        %1917 = vmatmul.mubr.bf16.gmra.mrb[0].mxu0 %v1337
        %v1918 = vpop.f32.mrb[0].mxu0
        %v1919 = vadd.f32 %v1758, %v1918
        %v1920 = vpop.f32.mrb[0].mxu0
        %v1921 = vpop.f32.mrb[0].mxu0
        %v1922 = vadd.f32 %v1761, %v1921
        %v1923 = vpop.f32.mrb[0].mxu0
        %1924 = vmatprep.mubr.bf16.mxu0 %v1402
        %1925 = vmatmul.mubr.bf16.gmra.mrb[0].mxu0 %v1338
        %v1926 = vpop.f32.mrb[0].mxu0
        %v1927 = vadd.f32 %v1766, %v1926
        %v1928 = vpop.f32.mrb[0].mxu0
        %v1929 = vpop.f32.mrb[0].mxu0
        %v1930 = vadd.f32 %v1769, %v1929
        %v1931 = vpop.f32.mrb[0].mxu0
        %1932 = vmatprep.mubr.bf16.mxu0 %v1403
        %1933 = vmatmul.mubr.bf16.gmra.mrb[0].mxu0 %v1339
        %v1934 = vpop.f32.mrb[0].mxu0
        %v1935 = vadd.f32 %v1774, %v1934
        %v1936 = vpop.f32.mrb[0].mxu0
        %v1937 = vpop.f32.mrb[0].mxu0
        %v1938 = vadd.f32 %v1777, %v1937
        %v1939 = vpop.f32.mrb[0].mxu0
        %1940 = vmatprep.mubr.bf16.mxu0 %v1404
        %1941 = vmatmul.mubr.bf16.gmra.mrb[0].mxu0 %v1340
        %v1942 = vpop.f32.mrb[0].mxu0
        %v1943 = vadd.f32 %v1782, %v1942
        %v1944 = vpop.f32.mrb[0].mxu0
        %v1945 = vpop.f32.mrb[0].mxu0
        %v1946 = vadd.f32 %v1785, %v1945
        %v1947 = vpop.f32.mrb[0].mxu0
        %1948 = vmatprep.mubr.bf16.mxu0 %v1405
        %1949 = vmatmul.mubr.bf16.gmra.mrb[0].mxu0 %v1341
        %v1950 = vpop.f32.mrb[0].mxu0
        %v1951 = vadd.f32 %v1790, %v1950
        %v1952 = vpop.f32.mrb[0].mxu0
        %v1953 = vpop.f32.mrb[0].mxu0
        %v1954 = vadd.f32 %v1793, %v1953
        %v1955 = vpop.f32.mrb[0].mxu0
        %1956 = vmatprep.mubr.bf16.mxu0 %v1406
        %1957 = vmatmul.mubr.bf16.gmra.mrb[0].mxu0 %v1342
        %v1958 = vpop.f32.mrb[0].mxu0
        %v1959 = vadd.f32 %v1798, %v1958
        %v1960 = vpop.f32.mrb[0].mxu0
        %v1961 = vpop.f32.mrb[0].mxu0
        %v1962 = vadd.f32 %v1801, %v1961
        %v1963 = vpop.f32.mrb[0].mxu0
        %1964 = vmatprep.mubr.bf16.mxu0 %v1407
        %1965 = vmatmul.mubr.bf16.gmra.mrb[0].mxu0 %v1343
        %v1966 = vpop.f32.mrb[0].mxu0
        %v1967 = vadd.f32 %v1806, %v1966
        %v1968 = vpop.f32.mrb[0].mxu0
        %v1969 = vpop.f32.mrb[0].mxu0
        %v1970 = vadd.f32 %v1809, %v1969
        %v1971 = vpop.f32.mrb[0].mxu0
        %1972 = vmatprep.mubr.bf16.mxu0 %v1408
        %1973 = vmatmul.mubr.bf16.gmra.mrb[0].mxu0 %v1344
        %v1974 = vpop.f32.mrb[0].mxu0
        %v1975 = vadd.f32 %v1814, %v1974
        %v1976 = vpop.f32.mrb[0].mxu0
        %v1977 = vpop.f32.mrb[0].mxu0
        %v1978 = vadd.f32 %v1817, %v1977
        %v1979 = vpop.f32.mrb[0].mxu0
        %1980 = vmatprep.mubr.bf16.mxu0 %v1409
        %1981 = vmatmul.mubr.bf16.gmra.mrb[0].mxu0 %v1345
        %v1982 = vpop.f32.mrb[0].mxu0
        %v1983 = vadd.f32 %v1822, %v1982
        %v1984 = vpop.f32.mrb[0].mxu0
        %v1985 = vpop.f32.mrb[0].mxu0
        %v1986 = vadd.f32 %v1825, %v1985
        %v1987 = vpop.f32.mrb[0].mxu0
        %1988 = vmatprep.mubr.bf16.mxu0 %v1410
        %1989 = vmatmul.mubr.bf16.gmra.mrb[0].mxu0 %v1346
        %v1990 = vpop.f32.mrb[0].mxu0
        %v1991 = vadd.f32 %v1830, %v1990
        %v1992 = vpop.f32.mrb[0].mxu0
        %v1993 = vpop.f32.mrb[0].mxu0
        %v1994 = vadd.f32 %v1833, %v1993
        %v1995 = vpop.f32.mrb[0].mxu0
        %1996 = vmatprep.mubr.bf16.mxu0 %v1411
        %1997 = vmatmul.mubr.bf16.gmra.mrb[0].mxu0 %v1347
        %v1998 = vpop.f32.mrb[0].mxu0
        %v1999 = vadd.f32 %v1838, %v1998
        %v2000 = vpop.f32.mrb[0].mxu0
        %v2001 = vpop.f32.mrb[0].mxu0
        %v2002 = vadd.f32 %v1841, %v2001
        %v2003 = vpop.f32.mrb[0].mxu0
        %2004 = vmatprep.mubr.bf16.mxu0 %v1412
        %2005 = vmatmul.mubr.bf16.gmra.mrb[0].mxu0 %v1348
        %v2006 = vpop.f32.mrb[0].mxu0
        %v2007 = vadd.f32 %v1846, %v2006
        %v2008 = vpop.f32.mrb[0].mxu0
        %v2009 = vpop.f32.mrb[0].mxu0
        %v2010 = vadd.f32 %v1849, %v2009
        %v2011 = vpop.f32.mrb[0].mxu0
        %2012 = vdwg.mxu0
        %2013 = vst [vmem:[%s233] sm:$0xff] %v1887
        %2014 = vst [vmem:[%s233 + $0x8] sm:$0xff] %v1890
        %2015 = vst [vmem:[%s233 + $0x10] sm:$0xff] %v1895
        %2016 = vst [vmem:[%s233 + $0x18] sm:$0xff] %v1898
        %2017 = vst [vmem:[%s233 + $0x20] sm:$0xff] %v1903
        %2018 = vst [vmem:[%s233 + $0x28] sm:$0xff] %v1906
        %2019 = vst [vmem:[%s233 + $0x30] sm:$0xff] %v1911
        %2020 = vst [vmem:[%s233 + $0x38] sm:$0xff] %v1914
        %2021 = vst [vmem:[%s233 + $0x40] sm:$0xff] %v1919
        %2022 = vst [vmem:[%s233 + $0x48] sm:$0xff] %v1922
        %2023 = vst [vmem:[%s233 + $0x50] sm:$0xff] %v1927
        %2024 = vst [vmem:[%s233 + $0x58] sm:$0xff] %v1930
        %2025 = vst [vmem:[%s233 + $0x60] sm:$0xff] %v1935
        %2026 = vst [vmem:[%s233 + $0x68] sm:$0xff] %v1938
        %2027 = vst [vmem:[%s233 + $0x70] sm:$0xff] %v1943
        %2028 = vst [vmem:[%s233 + $0x78] sm:$0xff] %v1946
        %2029 = vst [vmem:[%s233 + $0x80] sm:$0xff] %v1951
        %2030 = vst [vmem:[%s233 + $0x88] sm:$0xff] %v1954
        %2031 = vst [vmem:[%s233 + $0x90] sm:$0xff] %v1959
        %2032 = vst [vmem:[%s233 + $0x98] sm:$0xff] %v1962
        %2033 = vst [vmem:[%s233 + $0xa0] sm:$0xff] %v1967
        %2034 = vst [vmem:[%s233 + $0xa8] sm:$0xff] %v1970
        %2035 = vst [vmem:[%s233 + $0xb0] sm:$0xff] %v1975
        %2036 = vst [vmem:[%s233 + $0xb8] sm:$0xff] %v1978
        %2037 = vst [vmem:[%s233 + $0xc0] sm:$0xff] %v1983
        %2038 = vst [vmem:[%s233 + $0xc8] sm:$0xff] %v1986
        %2039 = vst [vmem:[%s233 + $0xd0] sm:$0xff] %v1991
        %2040 = vst [vmem:[%s233 + $0xd8] sm:$0xff] %v1994
        %2041 = vst [vmem:[%s233 + $0xe0] sm:$0xff] %v1999
        %2042 = vst [vmem:[%s233 + $0xe8] sm:$0xff] %v2002
        %2043 = vst [vmem:[%s233 + $0xf0] sm:$0xff] %v2007
        %2044 = vst [vmem:[%s233 + $0xf8] sm:$0xff] %v2010
        %v2045 = vld [vmem:[%s228] sm:$0xf]
        %v2046 = vld [vmem:[%s228 + $0x4] sm:$0xf]
        %v2047 = vld [vmem:[%s228 + $0x8] sm:$0x1]
        %v2048 = vld [vmem:[%s228 + $0xc] sm:$0xf]
        %v2049 = vld [vmem:[%s228 + $0x10] sm:$0xf]
        %v2050 = vld [vmem:[%s228 + $0x14] sm:$0x1]
        %v2051 = vld [vmem:[%s228 + $0x18] sm:$0xf]
        %v2052 = vld [vmem:[%s228 + $0x1c] sm:$0xf]
        %v2053 = vld [vmem:[%s228 + $0x20] sm:$0x1]
        %v2054 = vld [vmem:[%s228 + $0x24] sm:$0xf]
        %v2055 = vld [vmem:[%s228 + $0x28] sm:$0xf]
        %v2056 = vld [vmem:[%s228 + $0x2c] sm:$0x1]
        %v2057 = vld [vmem:[%s228 + $0x30] sm:$0xf]
        %v2058 = vld [vmem:[%s228 + $0x34] sm:$0xf]
        %v2059 = vld [vmem:[%s228 + $0x38] sm:$0x1]
        %v2060 = vld [vmem:[%s228 + $0x3c] sm:$0xf]
        %v2061 = vld [vmem:[%s228 + $0x40] sm:$0xf]
        %v2062 = vld [vmem:[%s228 + $0x44] sm:$0x1]
        %v2063 = vld [vmem:[%s228 + $0x48] sm:$0xf]
        %v2064 = vld [vmem:[%s228 + $0x4c] sm:$0xf]
        %v2065 = vld [vmem:[%s228 + $0x50] sm:$0x1]
        %v2066 = vld [vmem:[%s228 + $0x54] sm:$0xf]
        %v2067 = vld [vmem:[%s228 + $0x58] sm:$0xf]
        %v2068 = vld [vmem:[%s228 + $0x5c] sm:$0x1]
        %v2069 = vld [vmem:[%s228 + $0x60] sm:$0xf]
        %v2070 = vld [vmem:[%s228 + $0x64] sm:$0xf]
        %v2071 = vld [vmem:[%s228 + $0x68] sm:$0x1]
        %v2072 = vld [vmem:[%s228 + $0x6c] sm:$0xf]
        %v2073 = vld [vmem:[%s228 + $0x70] sm:$0xf]
        %v2074 = vld [vmem:[%s228 + $0x74] sm:$0x1]
        %v2075 = vld [vmem:[%s228 + $0x78] sm:$0xf]
        %v2076 = vld [vmem:[%s228 + $0x7c] sm:$0xf]
        %v2077 = vld [vmem:[%s228 + $0x80] sm:$0x1]
        %v2078 = vld [vmem:[%s228 + $0x84] sm:$0xf]
        %v2079 = vld [vmem:[%s228 + $0x88] sm:$0xf]
        %v2080 = vld [vmem:[%s228 + $0x8c] sm:$0x1]
        %v2081 = vld [vmem:[%s228 + $0x90] sm:$0xf]
        %v2082 = vld [vmem:[%s228 + $0x94] sm:$0xf]
        %v2083 = vld [vmem:[%s228 + $0x98] sm:$0x1]
        %v2084 = vld [vmem:[%s228 + $0x9c] sm:$0xf]
        %v2085 = vld [vmem:[%s228 + $0xa0] sm:$0xf]
        %v2086 = vld [vmem:[%s228 + $0xa4] sm:$0x1]
        %v2087 = vld [vmem:[%s228 + $0xa8] sm:$0xf]
        %v2088 = vld [vmem:[%s228 + $0xac] sm:$0xf]
        %v2089 = vld [vmem:[%s228 + $0xb0] sm:$0x1]
        %v2090 = vld [vmem:[%s228 + $0xb4] sm:$0xf]
        %v2091 = vld [vmem:[%s228 + $0xb8] sm:$0xf]
        %v2092 = vld [vmem:[%s228 + $0xbc] sm:$0x1]
        %v2094 = vshrl.u32 %v2045, 16
        %v2096 = vrot.slane %v2094, 4
        %v2097 = vshll.u32 %v2045, 16
        %v2099 = vrot.slane %v2097, 5
        %v2100 = vor.u32 %v2096, %v2099
        %v2101 = vrot.slane %v2100, 4
        %v2103 = vshll.u32 %v2046, 16
        %v2105 = vrot.slane %v2103, 5
        %v2106 = vsel %vm291, %v2101, %v2105
        %v2107 = vshrl.u32 %v2046, 16
        %v2109 = vrot.slane %v2107, 4
        %v2110 = vor.u32 %v2109, %v2105
        %v2111 = vrot.slane %v2110, 4
        %v2113 = vshll.u32 %v2047, 16
        %v2115 = vrot.slane %v2113, 5
        %v2116 = vsel %vm291, %v2111, %v2115
        %v2118 = vshrl.u32 %v2048, 16
        %v2120 = vrot.slane %v2118, 4
        %v2121 = vshll.u32 %v2048, 16
        %v2123 = vrot.slane %v2121, 5
        %v2124 = vor.u32 %v2120, %v2123
        %v2125 = vrot.slane %v2124, 4
        %v2127 = vshll.u32 %v2049, 16
        %v2129 = vrot.slane %v2127, 5
        %v2130 = vsel %vm291, %v2125, %v2129
        %v2131 = vshrl.u32 %v2049, 16
        %v2133 = vrot.slane %v2131, 4
        %v2134 = vor.u32 %v2133, %v2129
        %v2135 = vrot.slane %v2134, 4
        %v2137 = vshll.u32 %v2050, 16
        %v2139 = vrot.slane %v2137, 5
        %v2140 = vsel %vm291, %v2135, %v2139
        %v2142 = vshrl.u32 %v2051, 16
        %v2144 = vrot.slane %v2142, 4
        %v2145 = vshll.u32 %v2051, 16
        %v2147 = vrot.slane %v2145, 5
        %v2148 = vor.u32 %v2144, %v2147
        %v2149 = vrot.slane %v2148, 4
        %v2151 = vshll.u32 %v2052, 16
        %v2153 = vrot.slane %v2151, 5
        %v2154 = vsel %vm291, %v2149, %v2153
        %v2155 = vshrl.u32 %v2052, 16
        %v2157 = vrot.slane %v2155, 4
        %v2158 = vor.u32 %v2157, %v2153
        %v2159 = vrot.slane %v2158, 4
        %v2161 = vshll.u32 %v2053, 16
        %v2163 = vrot.slane %v2161, 5
        %v2164 = vsel %vm291, %v2159, %v2163
        %v2166 = vshrl.u32 %v2054, 16
        %v2168 = vrot.slane %v2166, 4
        %v2169 = vshll.u32 %v2054, 16
        %v2171 = vrot.slane %v2169, 5
        %v2172 = vor.u32 %v2168, %v2171
        %v2173 = vrot.slane %v2172, 4
        %v2175 = vshll.u32 %v2055, 16
        %v2177 = vrot.slane %v2175, 5
        %v2178 = vsel %vm291, %v2173, %v2177
        %v2179 = vshrl.u32 %v2055, 16
        %v2181 = vrot.slane %v2179, 4
        %v2182 = vor.u32 %v2181, %v2177
        %v2183 = vrot.slane %v2182, 4
        %v2185 = vshll.u32 %v2056, 16
        %v2187 = vrot.slane %v2185, 5
        %v2188 = vsel %vm291, %v2183, %v2187
        %v2190 = vshrl.u32 %v2057, 16
        %v2192 = vrot.slane %v2190, 4
        %v2193 = vshll.u32 %v2057, 16
        %v2195 = vrot.slane %v2193, 5
        %v2196 = vor.u32 %v2192, %v2195
        %v2197 = vrot.slane %v2196, 4
        %v2199 = vshll.u32 %v2058, 16
        %v2201 = vrot.slane %v2199, 5
        %v2202 = vsel %vm291, %v2197, %v2201
        %v2203 = vshrl.u32 %v2058, 16
        %v2205 = vrot.slane %v2203, 4
        %v2206 = vor.u32 %v2205, %v2201
        %v2207 = vrot.slane %v2206, 4
        %v2209 = vshll.u32 %v2059, 16
        %v2211 = vrot.slane %v2209, 5
        %v2212 = vsel %vm291, %v2207, %v2211
        %v2214 = vshrl.u32 %v2060, 16
        %v2216 = vrot.slane %v2214, 4
        %v2217 = vshll.u32 %v2060, 16
        %v2219 = vrot.slane %v2217, 5
        %v2220 = vor.u32 %v2216, %v2219
        %v2221 = vrot.slane %v2220, 4
        %v2223 = vshll.u32 %v2061, 16
        %v2225 = vrot.slane %v2223, 5
        %v2226 = vsel %vm291, %v2221, %v2225
        %v2227 = vshrl.u32 %v2061, 16
        %v2229 = vrot.slane %v2227, 4
        %v2230 = vor.u32 %v2229, %v2225
        %v2231 = vrot.slane %v2230, 4
        %v2233 = vshll.u32 %v2062, 16
        %v2235 = vrot.slane %v2233, 5
        %v2236 = vsel %vm291, %v2231, %v2235
        %v2238 = vshrl.u32 %v2063, 16
        %v2240 = vrot.slane %v2238, 4
        %v2241 = vshll.u32 %v2063, 16
        %v2243 = vrot.slane %v2241, 5
        %v2244 = vor.u32 %v2240, %v2243
        %v2245 = vrot.slane %v2244, 4
        %v2247 = vshll.u32 %v2064, 16
        %v2249 = vrot.slane %v2247, 5
        %v2250 = vsel %vm291, %v2245, %v2249
        %v2251 = vshrl.u32 %v2064, 16
        %v2253 = vrot.slane %v2251, 4
        %v2254 = vor.u32 %v2253, %v2249
        %v2255 = vrot.slane %v2254, 4
        %v2257 = vshll.u32 %v2065, 16
        %v2259 = vrot.slane %v2257, 5
        %v2260 = vsel %vm291, %v2255, %v2259
        %v2262 = vshrl.u32 %v2066, 16
        %v2264 = vrot.slane %v2262, 4
        %v2265 = vshll.u32 %v2066, 16
        %v2267 = vrot.slane %v2265, 5
        %v2268 = vor.u32 %v2264, %v2267
        %v2269 = vrot.slane %v2268, 4
        %v2271 = vshll.u32 %v2067, 16
        %v2273 = vrot.slane %v2271, 5
        %v2274 = vsel %vm291, %v2269, %v2273
        %v2275 = vshrl.u32 %v2067, 16
        %v2277 = vrot.slane %v2275, 4
        %v2278 = vor.u32 %v2277, %v2273
        %v2279 = vrot.slane %v2278, 4
        %v2281 = vshll.u32 %v2068, 16
        %v2283 = vrot.slane %v2281, 5
        %v2284 = vsel %vm291, %v2279, %v2283
        %v2286 = vshrl.u32 %v2069, 16
        %v2288 = vrot.slane %v2286, 4
        %v2289 = vshll.u32 %v2069, 16
        %v2291 = vrot.slane %v2289, 5
        %v2292 = vor.u32 %v2288, %v2291
        %v2293 = vrot.slane %v2292, 4
        %v2295 = vshll.u32 %v2070, 16
        %v2297 = vrot.slane %v2295, 5
        %v2298 = vsel %vm291, %v2293, %v2297
        %v2299 = vshrl.u32 %v2070, 16
        %v2301 = vrot.slane %v2299, 4
        %v2302 = vor.u32 %v2301, %v2297
        %v2303 = vrot.slane %v2302, 4
        %v2305 = vshll.u32 %v2071, 16
        %v2307 = vrot.slane %v2305, 5
        %v2308 = vsel %vm291, %v2303, %v2307
        %v2310 = vshrl.u32 %v2072, 16
        %v2312 = vrot.slane %v2310, 4
        %v2313 = vshll.u32 %v2072, 16
        %v2315 = vrot.slane %v2313, 5
        %v2316 = vor.u32 %v2312, %v2315
        %v2317 = vrot.slane %v2316, 4
        %v2319 = vshll.u32 %v2073, 16
        %v2321 = vrot.slane %v2319, 5
        %v2322 = vsel %vm291, %v2317, %v2321
        %v2323 = vshrl.u32 %v2073, 16
        %v2325 = vrot.slane %v2323, 4
        %v2326 = vor.u32 %v2325, %v2321
        %v2327 = vrot.slane %v2326, 4
        %v2329 = vshll.u32 %v2074, 16
        %v2331 = vrot.slane %v2329, 5
        %v2332 = vsel %vm291, %v2327, %v2331
        %v2334 = vshrl.u32 %v2075, 16
        %v2336 = vrot.slane %v2334, 4
        %v2337 = vshll.u32 %v2075, 16
        %v2339 = vrot.slane %v2337, 5
        %v2340 = vor.u32 %v2336, %v2339
        %v2341 = vrot.slane %v2340, 4
        %v2343 = vshll.u32 %v2076, 16
        %v2345 = vrot.slane %v2343, 5
        %v2346 = vsel %vm291, %v2341, %v2345
        %v2347 = vshrl.u32 %v2076, 16
        %v2349 = vrot.slane %v2347, 4
        %v2350 = vor.u32 %v2349, %v2345
        %v2351 = vrot.slane %v2350, 4
        %v2353 = vshll.u32 %v2077, 16
        %v2355 = vrot.slane %v2353, 5
        %v2356 = vsel %vm291, %v2351, %v2355
        %v2358 = vshrl.u32 %v2078, 16
        %v2360 = vrot.slane %v2358, 4
        %v2361 = vshll.u32 %v2078, 16
        %v2363 = vrot.slane %v2361, 5
        %v2364 = vor.u32 %v2360, %v2363
        %v2365 = vrot.slane %v2364, 4
        %v2367 = vshll.u32 %v2079, 16
        %v2369 = vrot.slane %v2367, 5
        %v2370 = vsel %vm291, %v2365, %v2369
        %v2371 = vshrl.u32 %v2079, 16
        %v2373 = vrot.slane %v2371, 4
        %v2374 = vor.u32 %v2373, %v2369
        %v2375 = vrot.slane %v2374, 4
        %v2377 = vshll.u32 %v2080, 16
        %v2379 = vrot.slane %v2377, 5
        %v2380 = vsel %vm291, %v2375, %v2379
        %v2382 = vshrl.u32 %v2081, 16
        %v2384 = vrot.slane %v2382, 4
        %v2385 = vshll.u32 %v2081, 16
        %v2387 = vrot.slane %v2385, 5
        %v2388 = vor.u32 %v2384, %v2387
        %v2389 = vrot.slane %v2388, 4
        %v2391 = vshll.u32 %v2082, 16
        %v2393 = vrot.slane %v2391, 5
        %v2394 = vsel %vm291, %v2389, %v2393
        %v2395 = vshrl.u32 %v2082, 16
        %v2397 = vrot.slane %v2395, 4
        %v2398 = vor.u32 %v2397, %v2393
        %v2399 = vrot.slane %v2398, 4
        %v2401 = vshll.u32 %v2083, 16
        %v2403 = vrot.slane %v2401, 5
        %v2404 = vsel %vm291, %v2399, %v2403
        %v2406 = vshrl.u32 %v2084, 16
        %v2408 = vrot.slane %v2406, 4
        %v2409 = vshll.u32 %v2084, 16
        %v2411 = vrot.slane %v2409, 5
        %v2412 = vor.u32 %v2408, %v2411
        %v2413 = vrot.slane %v2412, 4
        %v2415 = vshll.u32 %v2085, 16
        %v2417 = vrot.slane %v2415, 5
        %v2418 = vsel %vm291, %v2413, %v2417
        %v2419 = vshrl.u32 %v2085, 16
        %v2421 = vrot.slane %v2419, 4
        %v2422 = vor.u32 %v2421, %v2417
        %v2423 = vrot.slane %v2422, 4
        %v2425 = vshll.u32 %v2086, 16
        %v2427 = vrot.slane %v2425, 5
        %v2428 = vsel %vm291, %v2423, %v2427
        %v2430 = vshrl.u32 %v2087, 16
        %v2432 = vrot.slane %v2430, 4
        %v2433 = vshll.u32 %v2087, 16
        %v2435 = vrot.slane %v2433, 5
        %v2436 = vor.u32 %v2432, %v2435
        %v2437 = vrot.slane %v2436, 4
        %v2439 = vshll.u32 %v2088, 16
        %v2441 = vrot.slane %v2439, 5
        %v2442 = vsel %vm291, %v2437, %v2441
        %v2443 = vshrl.u32 %v2088, 16
        %v2445 = vrot.slane %v2443, 4
        %v2446 = vor.u32 %v2445, %v2441
        %v2447 = vrot.slane %v2446, 4
        %v2449 = vshll.u32 %v2089, 16
        %v2451 = vrot.slane %v2449, 5
        %v2452 = vsel %vm291, %v2447, %v2451
        %v2454 = vshrl.u32 %v2090, 16
        %v2456 = vrot.slane %v2454, 4
        %v2457 = vshll.u32 %v2090, 16
        %v2459 = vrot.slane %v2457, 5
        %v2460 = vor.u32 %v2456, %v2459
        %v2461 = vrot.slane %v2460, 4
        %v2463 = vshll.u32 %v2091, 16
        %v2465 = vrot.slane %v2463, 5
        %v2466 = vsel %vm291, %v2461, %v2465
        %v2467 = vshrl.u32 %v2091, 16
        %v2469 = vrot.slane %v2467, 4
        %v2470 = vor.u32 %v2469, %v2465
        %v2471 = vrot.slane %v2470, 4
        %v2473 = vshll.u32 %v2092, 16
        %v2475 = vrot.slane %v2473, 5
        %v2476 = vsel %vm291, %v2471, %v2475
        %v2477 = vld [vmem:[%s228] sm:$0xe]
        %v2478 = vld [vmem:[%s228 + $0xc] sm:$0xe]
        %v2479 = vld [vmem:[%s228 + $0x18] sm:$0xe]
        %v2480 = vld [vmem:[%s228 + $0x24] sm:$0xe]
        %v2481 = vld [vmem:[%s228 + $0x30] sm:$0xe]
        %v2482 = vld [vmem:[%s228 + $0x3c] sm:$0xe]
        %v2483 = vld [vmem:[%s228 + $0x48] sm:$0xe]
        %v2484 = vld [vmem:[%s228 + $0x54] sm:$0xe]
        %v2485 = vld [vmem:[%s228 + $0x60] sm:$0xe]
        %v2486 = vld [vmem:[%s228 + $0x6c] sm:$0xe]
        %v2487 = vld [vmem:[%s228 + $0x78] sm:$0xe]
        %v2488 = vld [vmem:[%s228 + $0x84] sm:$0xe]
        %v2489 = vld [vmem:[%s228 + $0x90] sm:$0xe]
        %v2490 = vld [vmem:[%s228 + $0x9c] sm:$0xe]
        %v2491 = vld [vmem:[%s228 + $0xa8] sm:$0xe]
        %v2492 = vld [vmem:[%s228 + $0xb4] sm:$0xe]
        %vm2541 = vcmask 1042432
        %vm2542 = vcmask 1046532
        %vm2543 = vmor %vm2541, %vm2542
        %v2544 = vrot.slane %v2477, 5
        %v2545 = vrot.slane %v2544, 4
        %v2546 = vrot.slane %v2046, 5
        %v2547 = vsel %vm2543, %v2545, %v2546
        %v2548 = vrot.slane %v2546, 4
        %v2549 = vrot.slane %v2047, 5
        %v2550 = vsel %vm2543, %v2548, %v2549
        %v2551 = vrot.slane %v2478, 5
        %v2552 = vrot.slane %v2551, 4
        %v2553 = vrot.slane %v2049, 5
        %v2554 = vsel %vm2543, %v2552, %v2553
        %v2555 = vrot.slane %v2553, 4
        %v2556 = vrot.slane %v2050, 5
        %v2557 = vsel %vm2543, %v2555, %v2556
        %v2558 = vrot.slane %v2479, 5
        %v2559 = vrot.slane %v2558, 4
        %v2560 = vrot.slane %v2052, 5
        %v2561 = vsel %vm2543, %v2559, %v2560
        %v2562 = vrot.slane %v2560, 4
        %v2563 = vrot.slane %v2053, 5
        %v2564 = vsel %vm2543, %v2562, %v2563
        %v2565 = vrot.slane %v2480, 5
        %v2566 = vrot.slane %v2565, 4
        %v2567 = vrot.slane %v2055, 5
        %v2568 = vsel %vm2543, %v2566, %v2567
        %v2569 = vrot.slane %v2567, 4
        %v2570 = vrot.slane %v2056, 5
        %v2571 = vsel %vm2543, %v2569, %v2570
        %v2572 = vrot.slane %v2481, 5
        %v2573 = vrot.slane %v2572, 4
        %v2574 = vrot.slane %v2058, 5
        %v2575 = vsel %vm2543, %v2573, %v2574
        %v2576 = vrot.slane %v2574, 4
        %v2577 = vrot.slane %v2059, 5
        %v2578 = vsel %vm2543, %v2576, %v2577
        %v2579 = vrot.slane %v2482, 5
        %v2580 = vrot.slane %v2579, 4
        %v2581 = vrot.slane %v2061, 5
        %v2582 = vsel %vm2543, %v2580, %v2581
        %v2583 = vrot.slane %v2581, 4
        %v2584 = vrot.slane %v2062, 5
        %v2585 = vsel %vm2543, %v2583, %v2584
        %v2586 = vrot.slane %v2483, 5
        %v2587 = vrot.slane %v2586, 4
        %v2588 = vrot.slane %v2064, 5
        %v2589 = vsel %vm2543, %v2587, %v2588
        %v2590 = vrot.slane %v2588, 4
        %v2591 = vrot.slane %v2065, 5
        %v2592 = vsel %vm2543, %v2590, %v2591
        %v2593 = vrot.slane %v2484, 5
        %v2594 = vrot.slane %v2593, 4
        %v2595 = vrot.slane %v2067, 5
        %v2596 = vsel %vm2543, %v2594, %v2595
        %v2597 = vrot.slane %v2595, 4
        %v2598 = vrot.slane %v2068, 5
        %v2599 = vsel %vm2543, %v2597, %v2598
        %v2600 = vrot.slane %v2485, 5
        %v2601 = vrot.slane %v2600, 4
        %v2602 = vrot.slane %v2070, 5
        %v2603 = vsel %vm2543, %v2601, %v2602
        %v2604 = vrot.slane %v2602, 4
        %v2605 = vrot.slane %v2071, 5
        %v2606 = vsel %vm2543, %v2604, %v2605
        %v2607 = vrot.slane %v2486, 5
        %v2608 = vrot.slane %v2607, 4
        %v2609 = vrot.slane %v2073, 5
        %v2610 = vsel %vm2543, %v2608, %v2609
        %v2611 = vrot.slane %v2609, 4
        %v2612 = vrot.slane %v2074, 5
        %v2613 = vsel %vm2543, %v2611, %v2612
        %v2614 = vrot.slane %v2487, 5
        %v2615 = vrot.slane %v2614, 4
        %v2616 = vrot.slane %v2076, 5
        %v2617 = vsel %vm2543, %v2615, %v2616
        %v2618 = vrot.slane %v2616, 4
        %v2619 = vrot.slane %v2077, 5
        %v2620 = vsel %vm2543, %v2618, %v2619
        %v2621 = vrot.slane %v2488, 5
        %v2622 = vrot.slane %v2621, 4
        %v2623 = vrot.slane %v2079, 5
        %v2624 = vsel %vm2543, %v2622, %v2623
        %v2625 = vrot.slane %v2623, 4
        %v2626 = vrot.slane %v2080, 5
        %v2627 = vsel %vm2543, %v2625, %v2626
        %v2628 = vrot.slane %v2489, 5
        %v2629 = vrot.slane %v2628, 4
        %v2630 = vrot.slane %v2082, 5
        %v2631 = vsel %vm2543, %v2629, %v2630
        %v2632 = vrot.slane %v2630, 4
        %v2633 = vrot.slane %v2083, 5
        %v2634 = vsel %vm2543, %v2632, %v2633
        %v2635 = vrot.slane %v2490, 5
        %v2636 = vrot.slane %v2635, 4
        %v2637 = vrot.slane %v2085, 5
        %v2638 = vsel %vm2543, %v2636, %v2637
        %v2639 = vrot.slane %v2637, 4
        %v2640 = vrot.slane %v2086, 5
        %v2641 = vsel %vm2543, %v2639, %v2640
        %v2642 = vrot.slane %v2491, 5
        %v2643 = vrot.slane %v2642, 4
        %v2644 = vrot.slane %v2088, 5
        %v2645 = vsel %vm2543, %v2643, %v2644
        %v2646 = vrot.slane %v2644, 4
        %v2647 = vrot.slane %v2089, 5
        %v2648 = vsel %vm2543, %v2646, %v2647
        %v2649 = vrot.slane %v2492, 5
        %v2650 = vrot.slane %v2649, 4
        %v2651 = vrot.slane %v2091, 5
        %v2652 = vsel %vm2543, %v2650, %v2651
        %v2653 = vrot.slane %v2651, 4
        %v2654 = vrot.slane %v2092, 5
        %v2655 = vsel %vm2543, %v2653, %v2654
        %v2656 = vld [vmem:[%s676] sm:$0xf]
        %v2657 = vld [vmem:[%s676 + $0x4] sm:$0xf]
        %v2658 = vld [vmem:[%s676 + $0x8] sm:$0x1]
        %v2659 = vld [vmem:[%s676 + $0xc] sm:$0xf]
        %v2660 = vld [vmem:[%s676 + $0x10] sm:$0xf]
        %v2661 = vld [vmem:[%s676 + $0x14] sm:$0x1]
        %v2662 = vld [vmem:[%s676 + $0x18] sm:$0xf]
        %v2663 = vld [vmem:[%s676 + $0x1c] sm:$0xf]
        %v2664 = vld [vmem:[%s676 + $0x20] sm:$0x1]
        %v2665 = vld [vmem:[%s676 + $0x24] sm:$0xf]
        %v2666 = vld [vmem:[%s676 + $0x28] sm:$0xf]
        %v2667 = vld [vmem:[%s676 + $0x2c] sm:$0x1]
        %v2668 = vld [vmem:[%s676 + $0x30] sm:$0xf]
        %v2669 = vld [vmem:[%s676 + $0x34] sm:$0xf]
        %v2670 = vld [vmem:[%s676 + $0x38] sm:$0x1]
        %v2671 = vld [vmem:[%s676 + $0x3c] sm:$0xf]
        %v2672 = vld [vmem:[%s676 + $0x40] sm:$0xf]
        %v2673 = vld [vmem:[%s676 + $0x44] sm:$0x1]
        %v2674 = vld [vmem:[%s676 + $0x48] sm:$0xf]
        %v2675 = vld [vmem:[%s676 + $0x4c] sm:$0xf]
        %v2676 = vld [vmem:[%s676 + $0x50] sm:$0x1]
        %v2677 = vld [vmem:[%s676 + $0x54] sm:$0xf]
        %v2678 = vld [vmem:[%s676 + $0x58] sm:$0xf]
        %v2679 = vld [vmem:[%s676 + $0x5c] sm:$0x1]
        %v2680 = vld [vmem:[%s676 + $0x60] sm:$0xf]
        %v2681 = vld [vmem:[%s676 + $0x64] sm:$0xf]
        %v2682 = vld [vmem:[%s676 + $0x68] sm:$0x1]
        %v2683 = vld [vmem:[%s676 + $0x6c] sm:$0xf]
        %v2684 = vld [vmem:[%s676 + $0x70] sm:$0xf]
        %v2685 = vld [vmem:[%s676 + $0x74] sm:$0x1]
        %v2686 = vld [vmem:[%s676 + $0x78] sm:$0xf]
        %v2687 = vld [vmem:[%s676 + $0x7c] sm:$0xf]
        %v2688 = vld [vmem:[%s676 + $0x80] sm:$0x1]
        %v2689 = vld [vmem:[%s676 + $0x84] sm:$0xf]
        %v2690 = vld [vmem:[%s676 + $0x88] sm:$0xf]
        %v2691 = vld [vmem:[%s676 + $0x8c] sm:$0x1]
        %v2692 = vld [vmem:[%s676 + $0x90] sm:$0xf]
        %v2693 = vld [vmem:[%s676 + $0x94] sm:$0xf]
        %v2694 = vld [vmem:[%s676 + $0x98] sm:$0x1]
        %v2695 = vld [vmem:[%s676 + $0x9c] sm:$0xf]
        %v2696 = vld [vmem:[%s676 + $0xa0] sm:$0xf]
        %v2697 = vld [vmem:[%s676 + $0xa4] sm:$0x1]
        %v2698 = vld [vmem:[%s676 + $0xa8] sm:$0xf]
        %v2699 = vld [vmem:[%s676 + $0xac] sm:$0xf]
        %v2700 = vld [vmem:[%s676 + $0xb0] sm:$0x1]
        %v2701 = vld [vmem:[%s676 + $0xb4] sm:$0xf]
        %v2702 = vld [vmem:[%s676 + $0xb8] sm:$0xf]
        %v2703 = vld [vmem:[%s676 + $0xbc] sm:$0x1]
        %v2705 = vshrl.u32 %v2656, 16
        %v2707 = vrot.slane %v2705, 4
        %v2708 = vshll.u32 %v2656, 16
        %v2710 = vrot.slane %v2708, 5
        %v2711 = vor.u32 %v2707, %v2710
        %v2712 = vrot.slane %v2711, 4
        %v2714 = vshll.u32 %v2657, 16
        %v2716 = vrot.slane %v2714, 5
        %v2717 = vsel %vm291, %v2712, %v2716
        %v2718 = vshrl.u32 %v2657, 16
        %v2720 = vrot.slane %v2718, 4
        %v2721 = vor.u32 %v2720, %v2716
        %v2722 = vrot.slane %v2721, 4
        %v2724 = vshll.u32 %v2658, 16
        %v2726 = vrot.slane %v2724, 5
        %v2727 = vsel %vm291, %v2722, %v2726
        %v2729 = vshrl.u32 %v2659, 16
        %v2731 = vrot.slane %v2729, 4
        %v2732 = vshll.u32 %v2659, 16
        %v2734 = vrot.slane %v2732, 5
        %v2735 = vor.u32 %v2731, %v2734
        %v2736 = vrot.slane %v2735, 4
        %v2738 = vshll.u32 %v2660, 16
        %v2740 = vrot.slane %v2738, 5
        %v2741 = vsel %vm291, %v2736, %v2740
        %v2742 = vshrl.u32 %v2660, 16
        %v2744 = vrot.slane %v2742, 4
        %v2745 = vor.u32 %v2744, %v2740
        %v2746 = vrot.slane %v2745, 4
        %v2748 = vshll.u32 %v2661, 16
        %v2750 = vrot.slane %v2748, 5
        %v2751 = vsel %vm291, %v2746, %v2750
        %v2753 = vshrl.u32 %v2662, 16
        %v2755 = vrot.slane %v2753, 4
        %v2756 = vshll.u32 %v2662, 16
        %v2758 = vrot.slane %v2756, 5
        %v2759 = vor.u32 %v2755, %v2758
        %v2760 = vrot.slane %v2759, 4
        %v2762 = vshll.u32 %v2663, 16
        %v2764 = vrot.slane %v2762, 5
        %v2765 = vsel %vm291, %v2760, %v2764
        %v2766 = vshrl.u32 %v2663, 16
        %v2768 = vrot.slane %v2766, 4
        %v2769 = vor.u32 %v2768, %v2764
        %v2770 = vrot.slane %v2769, 4
        %v2772 = vshll.u32 %v2664, 16
        %v2774 = vrot.slane %v2772, 5
        %v2775 = vsel %vm291, %v2770, %v2774
        %v2777 = vshrl.u32 %v2665, 16
        %v2779 = vrot.slane %v2777, 4
        %v2780 = vshll.u32 %v2665, 16
        %v2782 = vrot.slane %v2780, 5
        %v2783 = vor.u32 %v2779, %v2782
        %v2784 = vrot.slane %v2783, 4
        %v2786 = vshll.u32 %v2666, 16
        %v2788 = vrot.slane %v2786, 5
        %v2789 = vsel %vm291, %v2784, %v2788
        %v2790 = vshrl.u32 %v2666, 16
        %v2792 = vrot.slane %v2790, 4
        %v2793 = vor.u32 %v2792, %v2788
        %v2794 = vrot.slane %v2793, 4
        %v2796 = vshll.u32 %v2667, 16
        %v2798 = vrot.slane %v2796, 5
        %v2799 = vsel %vm291, %v2794, %v2798
        %v2801 = vshrl.u32 %v2668, 16
        %v2803 = vrot.slane %v2801, 4
        %v2804 = vshll.u32 %v2668, 16
        %v2806 = vrot.slane %v2804, 5
        %v2807 = vor.u32 %v2803, %v2806
        %v2808 = vrot.slane %v2807, 4
        %v2810 = vshll.u32 %v2669, 16
        %v2812 = vrot.slane %v2810, 5
        %v2813 = vsel %vm291, %v2808, %v2812
        %v2814 = vshrl.u32 %v2669, 16
        %v2816 = vrot.slane %v2814, 4
        %v2817 = vor.u32 %v2816, %v2812
        %v2818 = vrot.slane %v2817, 4
        %v2820 = vshll.u32 %v2670, 16
        %v2822 = vrot.slane %v2820, 5
        %v2823 = vsel %vm291, %v2818, %v2822
        %v2825 = vshrl.u32 %v2671, 16
        %v2827 = vrot.slane %v2825, 4
        %v2828 = vshll.u32 %v2671, 16
        %v2830 = vrot.slane %v2828, 5
        %v2831 = vor.u32 %v2827, %v2830
        %v2832 = vrot.slane %v2831, 4
        %v2834 = vshll.u32 %v2672, 16
        %v2836 = vrot.slane %v2834, 5
        %v2837 = vsel %vm291, %v2832, %v2836
        %v2838 = vshrl.u32 %v2672, 16
        %v2840 = vrot.slane %v2838, 4
        %v2841 = vor.u32 %v2840, %v2836
        %v2842 = vrot.slane %v2841, 4
        %v2844 = vshll.u32 %v2673, 16
        %v2846 = vrot.slane %v2844, 5
        %v2847 = vsel %vm291, %v2842, %v2846
        %v2849 = vshrl.u32 %v2674, 16
        %v2851 = vrot.slane %v2849, 4
        %v2852 = vshll.u32 %v2674, 16
        %v2854 = vrot.slane %v2852, 5
        %v2855 = vor.u32 %v2851, %v2854
        %v2856 = vrot.slane %v2855, 4
        %v2858 = vshll.u32 %v2675, 16
        %v2860 = vrot.slane %v2858, 5
        %v2861 = vsel %vm291, %v2856, %v2860
        %v2862 = vshrl.u32 %v2675, 16
        %v2864 = vrot.slane %v2862, 4
        %v2865 = vor.u32 %v2864, %v2860
        %v2866 = vrot.slane %v2865, 4
        %v2868 = vshll.u32 %v2676, 16
        %v2870 = vrot.slane %v2868, 5
        %v2871 = vsel %vm291, %v2866, %v2870
        %v2873 = vshrl.u32 %v2677, 16
        %v2875 = vrot.slane %v2873, 4
        %v2876 = vshll.u32 %v2677, 16
        %v2878 = vrot.slane %v2876, 5
        %v2879 = vor.u32 %v2875, %v2878
        %v2880 = vrot.slane %v2879, 4
        %v2882 = vshll.u32 %v2678, 16
        %v2884 = vrot.slane %v2882, 5
        %v2885 = vsel %vm291, %v2880, %v2884
        %v2886 = vshrl.u32 %v2678, 16
        %v2888 = vrot.slane %v2886, 4
        %v2889 = vor.u32 %v2888, %v2884
        %v2890 = vrot.slane %v2889, 4
        %v2892 = vshll.u32 %v2679, 16
        %v2894 = vrot.slane %v2892, 5
        %v2895 = vsel %vm291, %v2890, %v2894
        %v2897 = vshrl.u32 %v2680, 16
        %v2899 = vrot.slane %v2897, 4
        %v2900 = vshll.u32 %v2680, 16
        %v2902 = vrot.slane %v2900, 5
        %v2903 = vor.u32 %v2899, %v2902
        %v2904 = vrot.slane %v2903, 4
        %v2906 = vshll.u32 %v2681, 16
        %v2908 = vrot.slane %v2906, 5
        %v2909 = vsel %vm291, %v2904, %v2908
        %v2910 = vshrl.u32 %v2681, 16
        %v2912 = vrot.slane %v2910, 4
        %v2913 = vor.u32 %v2912, %v2908
        %v2914 = vrot.slane %v2913, 4
        %v2916 = vshll.u32 %v2682, 16
        %v2918 = vrot.slane %v2916, 5
        %v2919 = vsel %vm291, %v2914, %v2918
        %v2921 = vshrl.u32 %v2683, 16
        %v2923 = vrot.slane %v2921, 4
        %v2924 = vshll.u32 %v2683, 16
        %v2926 = vrot.slane %v2924, 5
        %v2927 = vor.u32 %v2923, %v2926
        %v2928 = vrot.slane %v2927, 4
        %v2930 = vshll.u32 %v2684, 16
        %v2932 = vrot.slane %v2930, 5
        %v2933 = vsel %vm291, %v2928, %v2932
        %v2934 = vshrl.u32 %v2684, 16
        %v2936 = vrot.slane %v2934, 4
        %v2937 = vor.u32 %v2936, %v2932
        %v2938 = vrot.slane %v2937, 4
        %v2940 = vshll.u32 %v2685, 16
        %v2942 = vrot.slane %v2940, 5
        %v2943 = vsel %vm291, %v2938, %v2942
        %v2945 = vshrl.u32 %v2686, 16
        %v2947 = vrot.slane %v2945, 4
        %v2948 = vshll.u32 %v2686, 16
        %v2950 = vrot.slane %v2948, 5
        %v2951 = vor.u32 %v2947, %v2950
        %v2952 = vrot.slane %v2951, 4
        %v2954 = vshll.u32 %v2687, 16
        %v2956 = vrot.slane %v2954, 5
        %v2957 = vsel %vm291, %v2952, %v2956
        %v2958 = vshrl.u32 %v2687, 16
        %v2960 = vrot.slane %v2958, 4
        %v2961 = vor.u32 %v2960, %v2956
        %v2962 = vrot.slane %v2961, 4
        %v2964 = vshll.u32 %v2688, 16
        %v2966 = vrot.slane %v2964, 5
        %v2967 = vsel %vm291, %v2962, %v2966
        %v2969 = vshrl.u32 %v2689, 16
        %v2971 = vrot.slane %v2969, 4
        %v2972 = vshll.u32 %v2689, 16
        %v2974 = vrot.slane %v2972, 5
        %v2975 = vor.u32 %v2971, %v2974
        %v2976 = vrot.slane %v2975, 4
        %v2978 = vshll.u32 %v2690, 16
        %v2980 = vrot.slane %v2978, 5
        %v2981 = vsel %vm291, %v2976, %v2980
        %v2982 = vshrl.u32 %v2690, 16
        %v2984 = vrot.slane %v2982, 4
        %v2985 = vor.u32 %v2984, %v2980
        %v2986 = vrot.slane %v2985, 4
        %v2988 = vshll.u32 %v2691, 16
        %v2990 = vrot.slane %v2988, 5
        %v2991 = vsel %vm291, %v2986, %v2990
        %v2993 = vshrl.u32 %v2692, 16
        %v2995 = vrot.slane %v2993, 4
        %v2996 = vshll.u32 %v2692, 16
        %v2998 = vrot.slane %v2996, 5
        %v2999 = vor.u32 %v2995, %v2998
        %v3000 = vrot.slane %v2999, 4
        %v3002 = vshll.u32 %v2693, 16
        %v3004 = vrot.slane %v3002, 5
        %v3005 = vsel %vm291, %v3000, %v3004
        %v3006 = vshrl.u32 %v2693, 16
        %v3008 = vrot.slane %v3006, 4
        %v3009 = vor.u32 %v3008, %v3004
        %v3010 = vrot.slane %v3009, 4
        %v3012 = vshll.u32 %v2694, 16
        %v3014 = vrot.slane %v3012, 5
        %v3015 = vsel %vm291, %v3010, %v3014
        %v3017 = vshrl.u32 %v2695, 16
        %v3019 = vrot.slane %v3017, 4
        %v3020 = vshll.u32 %v2695, 16
        %v3022 = vrot.slane %v3020, 5
        %v3023 = vor.u32 %v3019, %v3022
        %v3024 = vrot.slane %v3023, 4
        %v3026 = vshll.u32 %v2696, 16
        %v3028 = vrot.slane %v3026, 5
        %v3029 = vsel %vm291, %v3024, %v3028
        %v3030 = vshrl.u32 %v2696, 16
        %v3032 = vrot.slane %v3030, 4
        %v3033 = vor.u32 %v3032, %v3028
        %v3034 = vrot.slane %v3033, 4
        %v3036 = vshll.u32 %v2697, 16
        %v3038 = vrot.slane %v3036, 5
        %v3039 = vsel %vm291, %v3034, %v3038
        %v3041 = vshrl.u32 %v2698, 16
        %v3043 = vrot.slane %v3041, 4
        %v3044 = vshll.u32 %v2698, 16
        %v3046 = vrot.slane %v3044, 5
        %v3047 = vor.u32 %v3043, %v3046
        %v3048 = vrot.slane %v3047, 4
        %v3050 = vshll.u32 %v2699, 16
        %v3052 = vrot.slane %v3050, 5
        %v3053 = vsel %vm291, %v3048, %v3052
        %v3054 = vshrl.u32 %v2699, 16
        %v3056 = vrot.slane %v3054, 4
        %v3057 = vor.u32 %v3056, %v3052
        %v3058 = vrot.slane %v3057, 4
        %v3060 = vshll.u32 %v2700, 16
        %v3062 = vrot.slane %v3060, 5
        %v3063 = vsel %vm291, %v3058, %v3062
        %v3065 = vshrl.u32 %v2701, 16
        %v3067 = vrot.slane %v3065, 4
        %v3068 = vshll.u32 %v2701, 16
        %v3070 = vrot.slane %v3068, 5
        %v3071 = vor.u32 %v3067, %v3070
        %v3072 = vrot.slane %v3071, 4
        %v3074 = vshll.u32 %v2702, 16
        %v3076 = vrot.slane %v3074, 5
        %v3077 = vsel %vm291, %v3072, %v3076
        %v3078 = vshrl.u32 %v2702, 16
        %v3080 = vrot.slane %v3078, 4
        %v3081 = vor.u32 %v3080, %v3076
        %v3082 = vrot.slane %v3081, 4
        %v3084 = vshll.u32 %v2703, 16
        %v3086 = vrot.slane %v3084, 5
        %v3087 = vsel %vm291, %v3082, %v3086
        %v3088 = vld [vmem:[%s676] sm:$0xe]
        %v3089 = vld [vmem:[%s676 + $0xc] sm:$0xe]
        %v3090 = vld [vmem:[%s676 + $0x18] sm:$0xe]
        %v3091 = vld [vmem:[%s676 + $0x24] sm:$0xe]
        %v3092 = vld [vmem:[%s676 + $0x30] sm:$0xe]
        %v3093 = vld [vmem:[%s676 + $0x3c] sm:$0xe]
        %v3094 = vld [vmem:[%s676 + $0x48] sm:$0xe]
        %v3095 = vld [vmem:[%s676 + $0x54] sm:$0xe]
        %v3096 = vld [vmem:[%s676 + $0x60] sm:$0xe]
        %v3097 = vld [vmem:[%s676 + $0x6c] sm:$0xe]
        %v3098 = vld [vmem:[%s676 + $0x78] sm:$0xe]
        %v3099 = vld [vmem:[%s676 + $0x84] sm:$0xe]
        %v3100 = vld [vmem:[%s676 + $0x90] sm:$0xe]
        %v3101 = vld [vmem:[%s676 + $0x9c] sm:$0xe]
        %v3102 = vld [vmem:[%s676 + $0xa8] sm:$0xe]
        %v3103 = vld [vmem:[%s676 + $0xb4] sm:$0xe]
        %v3152 = vrot.slane %v3088, 5
        %v3153 = vrot.slane %v3152, 4
        %v3154 = vrot.slane %v2657, 5
        %v3155 = vsel %vm2543, %v3153, %v3154
        %v3156 = vrot.slane %v3154, 4
        %v3157 = vrot.slane %v2658, 5
        %v3158 = vsel %vm2543, %v3156, %v3157
        %v3159 = vrot.slane %v3089, 5
        %v3160 = vrot.slane %v3159, 4
        %v3161 = vrot.slane %v2660, 5
        %v3162 = vsel %vm2543, %v3160, %v3161
        %v3163 = vrot.slane %v3161, 4
        %v3164 = vrot.slane %v2661, 5
        %v3165 = vsel %vm2543, %v3163, %v3164
        %v3166 = vrot.slane %v3090, 5
        %v3167 = vrot.slane %v3166, 4
        %v3168 = vrot.slane %v2663, 5
        %v3169 = vsel %vm2543, %v3167, %v3168
        %v3170 = vrot.slane %v3168, 4
        %v3171 = vrot.slane %v2664, 5
        %v3172 = vsel %vm2543, %v3170, %v3171
        %v3173 = vrot.slane %v3091, 5
        %v3174 = vrot.slane %v3173, 4
        %v3175 = vrot.slane %v2666, 5
        %v3176 = vsel %vm2543, %v3174, %v3175
        %v3177 = vrot.slane %v3175, 4
        %v3178 = vrot.slane %v2667, 5
        %v3179 = vsel %vm2543, %v3177, %v3178
        %v3180 = vrot.slane %v3092, 5
        %v3181 = vrot.slane %v3180, 4
        %v3182 = vrot.slane %v2669, 5
        %v3183 = vsel %vm2543, %v3181, %v3182
        %v3184 = vrot.slane %v3182, 4
        %v3185 = vrot.slane %v2670, 5
        %v3186 = vsel %vm2543, %v3184, %v3185
        %v3187 = vrot.slane %v3093, 5
        %v3188 = vrot.slane %v3187, 4
        %v3189 = vrot.slane %v2672, 5
        %v3190 = vsel %vm2543, %v3188, %v3189
        %v3191 = vrot.slane %v3189, 4
        %v3192 = vrot.slane %v2673, 5
        %v3193 = vsel %vm2543, %v3191, %v3192
        %v3194 = vrot.slane %v3094, 5
        %v3195 = vrot.slane %v3194, 4
        %v3196 = vrot.slane %v2675, 5
        %v3197 = vsel %vm2543, %v3195, %v3196
        %v3198 = vrot.slane %v3196, 4
        %v3199 = vrot.slane %v2676, 5
        %v3200 = vsel %vm2543, %v3198, %v3199
        %v3201 = vrot.slane %v3095, 5
        %v3202 = vrot.slane %v3201, 4
        %v3203 = vrot.slane %v2678, 5
        %v3204 = vsel %vm2543, %v3202, %v3203
        %v3205 = vrot.slane %v3203, 4
        %v3206 = vrot.slane %v2679, 5
        %v3207 = vsel %vm2543, %v3205, %v3206
        %v3208 = vrot.slane %v3096, 5
        %v3209 = vrot.slane %v3208, 4
        %v3210 = vrot.slane %v2681, 5
        %v3211 = vsel %vm2543, %v3209, %v3210
        %v3212 = vrot.slane %v3210, 4
        %v3213 = vrot.slane %v2682, 5
        %v3214 = vsel %vm2543, %v3212, %v3213
        %v3215 = vrot.slane %v3097, 5
        %v3216 = vrot.slane %v3215, 4
        %v3217 = vrot.slane %v2684, 5
        %v3218 = vsel %vm2543, %v3216, %v3217
        %v3219 = vrot.slane %v3217, 4
        %v3220 = vrot.slane %v2685, 5
        %v3221 = vsel %vm2543, %v3219, %v3220
        %v3222 = vrot.slane %v3098, 5
        %v3223 = vrot.slane %v3222, 4
        %v3224 = vrot.slane %v2687, 5
        %v3225 = vsel %vm2543, %v3223, %v3224
        %v3226 = vrot.slane %v3224, 4
        %v3227 = vrot.slane %v2688, 5
        %v3228 = vsel %vm2543, %v3226, %v3227
        %v3229 = vrot.slane %v3099, 5
        %v3230 = vrot.slane %v3229, 4
        %v3231 = vrot.slane %v2690, 5
        %v3232 = vsel %vm2543, %v3230, %v3231
        %v3233 = vrot.slane %v3231, 4
        %v3234 = vrot.slane %v2691, 5
        %v3235 = vsel %vm2543, %v3233, %v3234
        %v3236 = vrot.slane %v3100, 5
        %v3237 = vrot.slane %v3236, 4
        %v3238 = vrot.slane %v2693, 5
        %v3239 = vsel %vm2543, %v3237, %v3238
        %v3240 = vrot.slane %v3238, 4
        %v3241 = vrot.slane %v2694, 5
        %v3242 = vsel %vm2543, %v3240, %v3241
        %v3243 = vrot.slane %v3101, 5
        %v3244 = vrot.slane %v3243, 4
        %v3245 = vrot.slane %v2696, 5
        %v3246 = vsel %vm2543, %v3244, %v3245
        %v3247 = vrot.slane %v3245, 4
        %v3248 = vrot.slane %v2697, 5
        %v3249 = vsel %vm2543, %v3247, %v3248
        %v3250 = vrot.slane %v3102, 5
        %v3251 = vrot.slane %v3250, 4
        %v3252 = vrot.slane %v2699, 5
        %v3253 = vsel %vm2543, %v3251, %v3252
        %v3254 = vrot.slane %v3252, 4
        %v3255 = vrot.slane %v2700, 5
        %v3256 = vsel %vm2543, %v3254, %v3255
        %v3257 = vrot.slane %v3103, 5
        %v3258 = vrot.slane %v3257, 4
        %v3259 = vrot.slane %v2702, 5
        %v3260 = vsel %vm2543, %v3258, %v3259
        %v3261 = vrot.slane %v3259, 4
        %v3262 = vrot.slane %v2703, 5
        %v3263 = vsel %vm2543, %v3261, %v3262
        %v3264 = vunpack.c.l.b16 %v2106
        %v3265 = vunpack.c.l.b16 %v2116
        %v3266 = vunpack.c.l.b16 %v2130
        %v3267 = vunpack.c.l.b16 %v2140
        %v3268 = vunpack.c.l.b16 %v2154
        %v3269 = vunpack.c.l.b16 %v2164
        %v3270 = vunpack.c.l.b16 %v2178
        %v3271 = vunpack.c.l.b16 %v2188
        %v3272 = vunpack.c.l.b16 %v2202
        %v3273 = vunpack.c.l.b16 %v2212
        %v3274 = vunpack.c.l.b16 %v2226
        %v3275 = vunpack.c.l.b16 %v2236
        %v3276 = vunpack.c.l.b16 %v2250
        %v3277 = vunpack.c.l.b16 %v2260
        %v3278 = vunpack.c.l.b16 %v2274
        %v3279 = vunpack.c.l.b16 %v2284
        %v3280 = vunpack.c.l.b16 %v2298
        %v3281 = vunpack.c.l.b16 %v2308
        %v3282 = vunpack.c.l.b16 %v2322
        %v3283 = vunpack.c.l.b16 %v2332
        %v3284 = vunpack.c.l.b16 %v2346
        %v3285 = vunpack.c.l.b16 %v2356
        %v3286 = vunpack.c.l.b16 %v2370
        %v3287 = vunpack.c.l.b16 %v2380
        %v3288 = vunpack.c.l.b16 %v2394
        %v3289 = vunpack.c.l.b16 %v2404
        %v3290 = vunpack.c.l.b16 %v2418
        %v3291 = vunpack.c.l.b16 %v2428
        %v3292 = vunpack.c.l.b16 %v2442
        %v3293 = vunpack.c.l.b16 %v2452
        %v3294 = vunpack.c.l.b16 %v2466
        %v3295 = vunpack.c.l.b16 %v2476
        %v3296 = vpack.c.b16 %v3265, %v3264
        %v3297 = vpack.c.b16 %v3267, %v3266
        %v3298 = vpack.c.b16 %v3269, %v3268
        %v3299 = vpack.c.b16 %v3271, %v3270
        %v3300 = vpack.c.b16 %v3273, %v3272
        %v3301 = vpack.c.b16 %v3275, %v3274
        %v3302 = vpack.c.b16 %v3277, %v3276
        %v3303 = vpack.c.b16 %v3279, %v3278
        %v3304 = vpack.c.b16 %v3281, %v3280
        %v3305 = vpack.c.b16 %v3283, %v3282
        %v3306 = vpack.c.b16 %v3285, %v3284
        %v3307 = vpack.c.b16 %v3287, %v3286
        %v3308 = vpack.c.b16 %v3289, %v3288
        %v3309 = vpack.c.b16 %v3291, %v3290
        %v3310 = vpack.c.b16 %v3293, %v3292
        %v3311 = vpack.c.b16 %v3295, %v3294
        %v3328 = vunpack.c.l.b16 %v2547
        %v3329 = vunpack.c.l.b16 %v2550
        %v3330 = vunpack.c.l.b16 %v2554
        %v3331 = vunpack.c.l.b16 %v2557
        %v3332 = vunpack.c.l.b16 %v2561
        %v3333 = vunpack.c.l.b16 %v2564
        %v3334 = vunpack.c.l.b16 %v2568
        %v3335 = vunpack.c.l.b16 %v2571
        %v3336 = vunpack.c.l.b16 %v2575
        %v3337 = vunpack.c.l.b16 %v2578
        %v3338 = vunpack.c.l.b16 %v2582
        %v3339 = vunpack.c.l.b16 %v2585
        %v3340 = vunpack.c.l.b16 %v2589
        %v3341 = vunpack.c.l.b16 %v2592
        %v3342 = vunpack.c.l.b16 %v2596
        %v3343 = vunpack.c.l.b16 %v2599
        %v3344 = vunpack.c.l.b16 %v2603
        %v3345 = vunpack.c.l.b16 %v2606
        %v3346 = vunpack.c.l.b16 %v2610
        %v3347 = vunpack.c.l.b16 %v2613
        %v3348 = vunpack.c.l.b16 %v2617
        %v3349 = vunpack.c.l.b16 %v2620
        %v3350 = vunpack.c.l.b16 %v2624
        %v3351 = vunpack.c.l.b16 %v2627
        %v3352 = vunpack.c.l.b16 %v2631
        %v3353 = vunpack.c.l.b16 %v2634
        %v3354 = vunpack.c.l.b16 %v2638
        %v3355 = vunpack.c.l.b16 %v2641
        %v3356 = vunpack.c.l.b16 %v2645
        %v3357 = vunpack.c.l.b16 %v2648
        %v3358 = vunpack.c.l.b16 %v2652
        %v3359 = vunpack.c.l.b16 %v2655
        %v3360 = vpack.c.b16 %v3329, %v3328
        %v3361 = vpack.c.b16 %v3331, %v3330
        %v3362 = vpack.c.b16 %v3333, %v3332
        %v3363 = vpack.c.b16 %v3335, %v3334
        %v3364 = vpack.c.b16 %v3337, %v3336
        %v3365 = vpack.c.b16 %v3339, %v3338
        %v3366 = vpack.c.b16 %v3341, %v3340
        %v3367 = vpack.c.b16 %v3343, %v3342
        %v3368 = vpack.c.b16 %v3345, %v3344
        %v3369 = vpack.c.b16 %v3347, %v3346
        %v3370 = vpack.c.b16 %v3349, %v3348
        %v3371 = vpack.c.b16 %v3351, %v3350
        %v3372 = vpack.c.b16 %v3353, %v3352
        %v3373 = vpack.c.b16 %v3355, %v3354
        %v3374 = vpack.c.b16 %v3357, %v3356
        %v3375 = vpack.c.b16 %v3359, %v3358
        %v3392 = vunpack.c.l.b16 %v2717
        %v3393 = vunpack.c.l.b16 %v2727
        %v3394 = vunpack.c.l.b16 %v2741
        %v3395 = vunpack.c.l.b16 %v2751
        %v3396 = vunpack.c.l.b16 %v2765
        %v3397 = vunpack.c.l.b16 %v2775
        %v3398 = vunpack.c.l.b16 %v2789
        %v3399 = vunpack.c.l.b16 %v2799
        %v3400 = vunpack.c.l.b16 %v2813
        %v3401 = vunpack.c.l.b16 %v2823
        %v3402 = vunpack.c.l.b16 %v2837
        %v3403 = vunpack.c.l.b16 %v2847
        %v3404 = vunpack.c.l.b16 %v2861
        %v3405 = vunpack.c.l.b16 %v2871
        %v3406 = vunpack.c.l.b16 %v2885
        %v3407 = vunpack.c.l.b16 %v2895
        %v3408 = vunpack.c.l.b16 %v2909
        %v3409 = vunpack.c.l.b16 %v2919
        %v3410 = vunpack.c.l.b16 %v2933
        %v3411 = vunpack.c.l.b16 %v2943
        %v3412 = vunpack.c.l.b16 %v2957
        %v3413 = vunpack.c.l.b16 %v2967
        %v3414 = vunpack.c.l.b16 %v2981
        %v3415 = vunpack.c.l.b16 %v2991
        %v3416 = vunpack.c.l.b16 %v3005
        %v3417 = vunpack.c.l.b16 %v3015
        %v3418 = vunpack.c.l.b16 %v3029
        %v3419 = vunpack.c.l.b16 %v3039
        %v3420 = vunpack.c.l.b16 %v3053
        %v3421 = vunpack.c.l.b16 %v3063
        %v3422 = vunpack.c.l.b16 %v3077
        %v3423 = vunpack.c.l.b16 %v3087
        %v3424 = vpack.c.b16 %v3393, %v3392
        %v3425 = vpack.c.b16 %v3395, %v3394
        %v3426 = vpack.c.b16 %v3397, %v3396
        %v3427 = vpack.c.b16 %v3399, %v3398
        %v3428 = vpack.c.b16 %v3401, %v3400
        %v3429 = vpack.c.b16 %v3403, %v3402
        %v3430 = vpack.c.b16 %v3405, %v3404
        %v3431 = vpack.c.b16 %v3407, %v3406
        %v3432 = vpack.c.b16 %v3409, %v3408
        %v3433 = vpack.c.b16 %v3411, %v3410
        %v3434 = vpack.c.b16 %v3413, %v3412
        %v3435 = vpack.c.b16 %v3415, %v3414
        %v3436 = vpack.c.b16 %v3417, %v3416
        %v3437 = vpack.c.b16 %v3419, %v3418
        %v3438 = vpack.c.b16 %v3421, %v3420
        %v3439 = vpack.c.b16 %v3423, %v3422
        %v3456 = vunpack.c.l.b16 %v3155
        %v3457 = vunpack.c.l.b16 %v3158
        %v3458 = vunpack.c.l.b16 %v3162
        %v3459 = vunpack.c.l.b16 %v3165
        %v3460 = vunpack.c.l.b16 %v3169
        %v3461 = vunpack.c.l.b16 %v3172
        %v3462 = vunpack.c.l.b16 %v3176
        %v3463 = vunpack.c.l.b16 %v3179
        %v3464 = vunpack.c.l.b16 %v3183
        %v3465 = vunpack.c.l.b16 %v3186
        %v3466 = vunpack.c.l.b16 %v3190
        %v3467 = vunpack.c.l.b16 %v3193
        %v3468 = vunpack.c.l.b16 %v3197
        %v3469 = vunpack.c.l.b16 %v3200
        %v3470 = vunpack.c.l.b16 %v3204
        %v3471 = vunpack.c.l.b16 %v3207
        %v3472 = vunpack.c.l.b16 %v3211
        %v3473 = vunpack.c.l.b16 %v3214
        %v3474 = vunpack.c.l.b16 %v3218
        %v3475 = vunpack.c.l.b16 %v3221
        %v3476 = vunpack.c.l.b16 %v3225
        %v3477 = vunpack.c.l.b16 %v3228
        %v3478 = vunpack.c.l.b16 %v3232
        %v3479 = vunpack.c.l.b16 %v3235
        %v3480 = vunpack.c.l.b16 %v3239
        %v3481 = vunpack.c.l.b16 %v3242
        %v3482 = vunpack.c.l.b16 %v3246
        %v3483 = vunpack.c.l.b16 %v3249
        %v3484 = vunpack.c.l.b16 %v3253
        %v3485 = vunpack.c.l.b16 %v3256
        %v3486 = vunpack.c.l.b16 %v3260
        %v3487 = vunpack.c.l.b16 %v3263
        %v3488 = vpack.c.b16 %v3457, %v3456
        %v3489 = vpack.c.b16 %v3459, %v3458
        %v3490 = vpack.c.b16 %v3461, %v3460
        %v3491 = vpack.c.b16 %v3463, %v3462
        %v3492 = vpack.c.b16 %v3465, %v3464
        %v3493 = vpack.c.b16 %v3467, %v3466
        %v3494 = vpack.c.b16 %v3469, %v3468
        %v3495 = vpack.c.b16 %v3471, %v3470
        %v3496 = vpack.c.b16 %v3473, %v3472
        %v3497 = vpack.c.b16 %v3475, %v3474
        %v3498 = vpack.c.b16 %v3477, %v3476
        %v3499 = vpack.c.b16 %v3479, %v3478
        %v3500 = vpack.c.b16 %v3481, %v3480
        %v3501 = vpack.c.b16 %v3483, %v3482
        %v3502 = vpack.c.b16 %v3485, %v3484
        %v3503 = vpack.c.b16 %v3487, %v3486
        %s3520 = scalar_lea.vmem [#allocation2], 256
        %v3521 = vld [vmem:[%s3520] sm:$0xf]
        %v3522 = vld [vmem:[%s3520 + $0x4] sm:$0xf]
        %v3523 = vld [vmem:[%s3520 + $0x8] sm:$0xf]
        %v3524 = vld [vmem:[%s3520 + $0xc] sm:$0xf]
        %v3525 = vld [vmem:[%s3520 + $0x10] sm:$0xf]
        %v3526 = vld [vmem:[%s3520 + $0x14] sm:$0xf]
        %v3527 = vld [vmem:[%s3520 + $0x18] sm:$0xf]
        %v3528 = vld [vmem:[%s3520 + $0x1c] sm:$0xf]
        %v3529 = vld [vmem:[%s3520 + $0x20] sm:$0xf]
        %v3530 = vld [vmem:[%s3520 + $0x24] sm:$0xf]
        %v3531 = vld [vmem:[%s3520 + $0x28] sm:$0xf]
        %v3532 = vld [vmem:[%s3520 + $0x2c] sm:$0xf]
        %v3533 = vld [vmem:[%s3520 + $0x30] sm:$0xf]
        %v3534 = vld [vmem:[%s3520 + $0x34] sm:$0xf]
        %v3535 = vld [vmem:[%s3520 + $0x38] sm:$0xf]
        %v3536 = vld [vmem:[%s3520 + $0x3c] sm:$0xf]
        %v3537 = vld [vmem:[%s3520 + $0x40] sm:$0xf]
        %v3538 = vld [vmem:[%s3520 + $0x44] sm:$0xf]
        %v3539 = vld [vmem:[%s3520 + $0x48] sm:$0xf]
        %v3540 = vld [vmem:[%s3520 + $0x4c] sm:$0xf]
        %v3541 = vld [vmem:[%s3520 + $0x50] sm:$0xf]
        %v3542 = vld [vmem:[%s3520 + $0x54] sm:$0xf]
        %v3543 = vld [vmem:[%s3520 + $0x58] sm:$0xf]
        %v3544 = vld [vmem:[%s3520 + $0x5c] sm:$0xf]
        %v3545 = vld [vmem:[%s3520 + $0x60] sm:$0xf]
        %v3546 = vld [vmem:[%s3520 + $0x64] sm:$0xf]
        %v3547 = vld [vmem:[%s3520 + $0x68] sm:$0xf]
        %v3548 = vld [vmem:[%s3520 + $0x6c] sm:$0xf]
        %v3549 = vld [vmem:[%s3520 + $0x70] sm:$0xf]
        %v3550 = vld [vmem:[%s3520 + $0x74] sm:$0xf]
        %v3551 = vld [vmem:[%s3520 + $0x78] sm:$0xf]
        %v3552 = vld [vmem:[%s3520 + $0x7c] sm:$0xf]
        %v3553 = vld [vmem:[%s3520 + $0x80] sm:$0xf]
        %v3554 = vld [vmem:[%s3520 + $0x84] sm:$0xf]
        %v3555 = vld [vmem:[%s3520 + $0x88] sm:$0xf]
        %v3556 = vld [vmem:[%s3520 + $0x8c] sm:$0xf]
        %v3557 = vld [vmem:[%s3520 + $0x90] sm:$0xf]
        %v3558 = vld [vmem:[%s3520 + $0x94] sm:$0xf]
        %v3559 = vld [vmem:[%s3520 + $0x98] sm:$0xf]
        %v3560 = vld [vmem:[%s3520 + $0x9c] sm:$0xf]
        %v3561 = vld [vmem:[%s3520 + $0xa0] sm:$0xf]
        %v3562 = vld [vmem:[%s3520 + $0xa4] sm:$0xf]
        %v3563 = vld [vmem:[%s3520 + $0xa8] sm:$0xf]
        %v3564 = vld [vmem:[%s3520 + $0xac] sm:$0xf]
        %v3565 = vld [vmem:[%s3520 + $0xb0] sm:$0xf]
        %v3566 = vld [vmem:[%s3520 + $0xb4] sm:$0xf]
        %v3567 = vld [vmem:[%s3520 + $0xb8] sm:$0xf]
        %v3568 = vld [vmem:[%s3520 + $0xbc] sm:$0xf]
        %v3569 = vld [vmem:[%s3520 + $0xc0] sm:$0xf]
        %v3570 = vld [vmem:[%s3520 + $0xc4] sm:$0xf]
        %v3571 = vld [vmem:[%s3520 + $0xc8] sm:$0xf]
        %v3572 = vld [vmem:[%s3520 + $0xcc] sm:$0xf]
        %v3573 = vld [vmem:[%s3520 + $0xd0] sm:$0xf]
        %v3574 = vld [vmem:[%s3520 + $0xd4] sm:$0xf]
        %v3575 = vld [vmem:[%s3520 + $0xd8] sm:$0xf]
        %v3576 = vld [vmem:[%s3520 + $0xdc] sm:$0xf]
        %v3577 = vld [vmem:[%s3520 + $0xe0] sm:$0xf]
        %v3578 = vld [vmem:[%s3520 + $0xe4] sm:$0xf]
        %v3579 = vld [vmem:[%s3520 + $0xe8] sm:$0xf]
        %v3580 = vld [vmem:[%s3520 + $0xec] sm:$0xf]
        %v3581 = vld [vmem:[%s3520 + $0xf0] sm:$0xf]
        %v3582 = vld [vmem:[%s3520 + $0xf4] sm:$0xf]
        %v3583 = vld [vmem:[%s3520 + $0xf8] sm:$0xf]
        %v3584 = vld [vmem:[%s3520 + $0xfc] sm:$0xf]
        %v3649 = vunpack.c.l.b16 %v3521
        %v3650 = vunpack.c.l.b16 %v3522
        %v3651 = vunpack.c.l.b16 %v3523
        %v3652 = vunpack.c.l.b16 %v3524
        %v3653 = vunpack.c.l.b16 %v3525
        %v3654 = vunpack.c.l.b16 %v3526
        %v3655 = vunpack.c.l.b16 %v3527
        %v3656 = vunpack.c.l.b16 %v3528
        %v3657 = vunpack.c.l.b16 %v3529
        %v3658 = vunpack.c.l.b16 %v3530
        %v3659 = vunpack.c.l.b16 %v3531
        %v3660 = vunpack.c.l.b16 %v3532
        %v3661 = vunpack.c.l.b16 %v3533
        %v3662 = vunpack.c.l.b16 %v3534
        %v3663 = vunpack.c.l.b16 %v3535
        %v3664 = vunpack.c.l.b16 %v3536
        %v3665 = vunpack.c.l.b16 %v3537
        %v3666 = vunpack.c.l.b16 %v3538
        %v3667 = vunpack.c.l.b16 %v3539
        %v3668 = vunpack.c.l.b16 %v3540
        %v3669 = vunpack.c.l.b16 %v3541
        %v3670 = vunpack.c.l.b16 %v3542
        %v3671 = vunpack.c.l.b16 %v3543
        %v3672 = vunpack.c.l.b16 %v3544
        %v3673 = vunpack.c.l.b16 %v3545
        %v3674 = vunpack.c.l.b16 %v3546
        %v3675 = vunpack.c.l.b16 %v3547
        %v3676 = vunpack.c.l.b16 %v3548
        %v3677 = vunpack.c.l.b16 %v3549
        %v3678 = vunpack.c.l.b16 %v3550
        %v3679 = vunpack.c.l.b16 %v3551
        %v3680 = vunpack.c.l.b16 %v3552
        %v3681 = vunpack.c.l.b16 %v3553
        %v3682 = vunpack.c.l.b16 %v3554
        %v3683 = vunpack.c.l.b16 %v3555
        %v3684 = vunpack.c.l.b16 %v3556
        %v3685 = vunpack.c.l.b16 %v3557
        %v3686 = vunpack.c.l.b16 %v3558
        %v3687 = vunpack.c.l.b16 %v3559
        %v3688 = vunpack.c.l.b16 %v3560
        %v3689 = vunpack.c.l.b16 %v3561
        %v3690 = vunpack.c.l.b16 %v3562
        %v3691 = vunpack.c.l.b16 %v3563
        %v3692 = vunpack.c.l.b16 %v3564
        %v3693 = vunpack.c.l.b16 %v3565
        %v3694 = vunpack.c.l.b16 %v3566
        %v3695 = vunpack.c.l.b16 %v3567
        %v3696 = vunpack.c.l.b16 %v3568
        %v3697 = vunpack.c.l.b16 %v3569
        %v3698 = vunpack.c.l.b16 %v3570
        %v3699 = vunpack.c.l.b16 %v3571
        %v3700 = vunpack.c.l.b16 %v3572
        %v3701 = vunpack.c.l.b16 %v3573
        %v3702 = vunpack.c.l.b16 %v3574
        %v3703 = vunpack.c.l.b16 %v3575
        %v3704 = vunpack.c.l.b16 %v3576
        %v3705 = vunpack.c.l.b16 %v3577
        %v3706 = vunpack.c.l.b16 %v3578
        %v3707 = vunpack.c.l.b16 %v3579
        %v3708 = vunpack.c.l.b16 %v3580
        %v3709 = vunpack.c.l.b16 %v3581
        %v3710 = vunpack.c.l.b16 %v3582
        %v3711 = vunpack.c.l.b16 %v3583
        %v3712 = vunpack.c.l.b16 %v3584
        %v3713 = vpack.c.b16 %v3650, %v3649
        %v3714 = vpack.c.b16 %v3652, %v3651
        %v3715 = vpack.c.b16 %v3654, %v3653
        %v3716 = vpack.c.b16 %v3656, %v3655
        %v3717 = vpack.c.b16 %v3658, %v3657
        %v3718 = vpack.c.b16 %v3660, %v3659
        %v3719 = vpack.c.b16 %v3662, %v3661
        %v3720 = vpack.c.b16 %v3664, %v3663
        %v3721 = vpack.c.b16 %v3666, %v3665
        %v3722 = vpack.c.b16 %v3668, %v3667
        %v3723 = vpack.c.b16 %v3670, %v3669
        %v3724 = vpack.c.b16 %v3672, %v3671
        %v3725 = vpack.c.b16 %v3674, %v3673
        %v3726 = vpack.c.b16 %v3676, %v3675
        %v3727 = vpack.c.b16 %v3678, %v3677
        %v3728 = vpack.c.b16 %v3680, %v3679
        %v3729 = vpack.c.b16 %v3682, %v3681
        %v3730 = vpack.c.b16 %v3684, %v3683
        %v3731 = vpack.c.b16 %v3686, %v3685
        %v3732 = vpack.c.b16 %v3688, %v3687
        %v3733 = vpack.c.b16 %v3690, %v3689
        %v3734 = vpack.c.b16 %v3692, %v3691
        %v3735 = vpack.c.b16 %v3694, %v3693
        %v3736 = vpack.c.b16 %v3696, %v3695
        %v3737 = vpack.c.b16 %v3698, %v3697
        %v3738 = vpack.c.b16 %v3700, %v3699
        %v3739 = vpack.c.b16 %v3702, %v3701
        %v3740 = vpack.c.b16 %v3704, %v3703
        %v3741 = vpack.c.b16 %v3706, %v3705
        %v3742 = vpack.c.b16 %v3708, %v3707
        %v3743 = vpack.c.b16 %v3710, %v3709
        %v3744 = vpack.c.b16 %v3712, %v3711
        %3777 = vmatprep.subr.bf16.mxu0 0
        %3778 = vmatpush1.bf16.msra.mxu0 %v3713
        %3779 = vmatprep.subr.bf16.mxu0 0
        %3780 = vmatpush1.bf16.msra.mxu0 %v3714
        %3781 = vmatprep.subr.bf16.mxu0 0
        %3782 = vmatpush1.bf16.msra.mxu0 %v3715
        %3783 = vmatprep.subr.bf16.mxu0 0
        %3784 = vmatpush1.bf16.msra.mxu0 %v3716
        %3785 = vmatprep.subr.bf16.mxu0 0
        %3786 = vmatpush1.bf16.msra.mxu0 %v3717
        %3787 = vmatprep.subr.bf16.mxu0 0
        %3788 = vmatpush1.bf16.msra.mxu0 %v3718
        %3789 = vmatprep.subr.bf16.mxu0 0
        %3790 = vmatpush1.bf16.msra.mxu0 %v3719
        %3791 = vmatprep.subr.bf16.mxu0 0
        %3792 = vmatpush1.bf16.msra.mxu0 %v3720
        %3793 = vmatprep.subr.bf16.mxu0 0
        %3794 = vmatpush1.bf16.msra.mxu0 %v3721
        %3795 = vmatprep.subr.bf16.mxu0 0
        %3796 = vmatpush1.bf16.msra.mxu0 %v3722
        %3797 = vmatprep.subr.bf16.mxu0 0
        %3798 = vmatpush1.bf16.msra.mxu0 %v3723
        %3799 = vmatprep.subr.bf16.mxu0 0
        %3800 = vmatpush1.bf16.msra.mxu0 %v3724
        %3801 = vmatprep.subr.bf16.mxu0 0
        %3802 = vmatpush1.bf16.msra.mxu0 %v3725
        %3803 = vmatprep.subr.bf16.mxu0 0
        %3804 = vmatpush1.bf16.msra.mxu0 %v3726
        %3805 = vmatprep.subr.bf16.mxu0 0
        %3806 = vmatpush1.bf16.msra.mxu0 %v3727
        %3807 = vmatprep.subr.bf16.mxu0 0
        %3808 = vmatpush1.bf16.msra.mxu0 %v3728
        %3809 = vmatprep.mubr.bf16.mxu0 %v3360
        %3810 = vmatmul.mubr.bf16.gmra.mrb[0].mxu0 %v3296
        %v3811 = vpop.f32.mrb[0].mxu0
        %v3812 = vadd.f32 %v1497, %v3811
        %v3813 = vpop.f32.mrb[0].mxu0
        %v3814 = vpop.f32.mrb[0].mxu0
        %v3815 = vadd.f32 %v1497, %v3814
        %v3816 = vpop.f32.mrb[0].mxu0
        %3817 = vmatprep.mubr.bf16.mxu0 %v3361
        %3818 = vmatmul.mubr.bf16.gmra.mrb[0].mxu0 %v3297
        %v3819 = vpop.f32.mrb[0].mxu0
        %v3820 = vadd.f32 %v1497, %v3819
        %v3821 = vpop.f32.mrb[0].mxu0
        %v3822 = vpop.f32.mrb[0].mxu0
        %v3823 = vadd.f32 %v1497, %v3822
        %v3824 = vpop.f32.mrb[0].mxu0
        %3825 = vmatprep.mubr.bf16.mxu0 %v3362
        %3826 = vmatmul.mubr.bf16.gmra.mrb[0].mxu0 %v3298
        %v3827 = vpop.f32.mrb[0].mxu0
        %v3828 = vadd.f32 %v1497, %v3827
        %v3829 = vpop.f32.mrb[0].mxu0
        %v3830 = vpop.f32.mrb[0].mxu0
        %v3831 = vadd.f32 %v1497, %v3830
        %v3832 = vpop.f32.mrb[0].mxu0
        %3833 = vmatprep.mubr.bf16.mxu0 %v3363
        %3834 = vmatmul.mubr.bf16.gmra.mrb[0].mxu0 %v3299
        %v3835 = vpop.f32.mrb[0].mxu0
        %v3836 = vadd.f32 %v1497, %v3835
        %v3837 = vpop.f32.mrb[0].mxu0
        %v3838 = vpop.f32.mrb[0].mxu0
        %v3839 = vadd.f32 %v1497, %v3838
        %v3840 = vpop.f32.mrb[0].mxu0
        %3841 = vmatprep.mubr.bf16.mxu0 %v3364
        %3842 = vmatmul.mubr.bf16.gmra.mrb[0].mxu0 %v3300
        %v3843 = vpop.f32.mrb[0].mxu0
        %v3844 = vadd.f32 %v1497, %v3843
        %v3845 = vpop.f32.mrb[0].mxu0
        %v3846 = vpop.f32.mrb[0].mxu0
        %v3847 = vadd.f32 %v1497, %v3846
        %v3848 = vpop.f32.mrb[0].mxu0
        %3849 = vmatprep.mubr.bf16.mxu0 %v3365
        %3850 = vmatmul.mubr.bf16.gmra.mrb[0].mxu0 %v3301
        %v3851 = vpop.f32.mrb[0].mxu0
        %v3852 = vadd.f32 %v1497, %v3851
        %v3853 = vpop.f32.mrb[0].mxu0
        %v3854 = vpop.f32.mrb[0].mxu0
        %v3855 = vadd.f32 %v1497, %v3854
        %v3856 = vpop.f32.mrb[0].mxu0
        %3857 = vmatprep.mubr.bf16.mxu0 %v3366
        %3858 = vmatmul.mubr.bf16.gmra.mrb[0].mxu0 %v3302
        %v3859 = vpop.f32.mrb[0].mxu0
        %v3860 = vadd.f32 %v1497, %v3859
        %v3861 = vpop.f32.mrb[0].mxu0
        %v3862 = vpop.f32.mrb[0].mxu0
        %v3863 = vadd.f32 %v1497, %v3862
        %v3864 = vpop.f32.mrb[0].mxu0
        %3865 = vmatprep.mubr.bf16.mxu0 %v3367
        %3866 = vmatmul.mubr.bf16.gmra.mrb[0].mxu0 %v3303
        %v3867 = vpop.f32.mrb[0].mxu0
        %v3868 = vadd.f32 %v1497, %v3867
        %v3869 = vpop.f32.mrb[0].mxu0
        %v3870 = vpop.f32.mrb[0].mxu0
        %v3871 = vadd.f32 %v1497, %v3870
        %v3872 = vpop.f32.mrb[0].mxu0
        %3873 = vmatprep.mubr.bf16.mxu0 %v3368
        %3874 = vmatmul.mubr.bf16.gmra.mrb[0].mxu0 %v3304
        %v3875 = vpop.f32.mrb[0].mxu0
        %v3876 = vadd.f32 %v1497, %v3875
        %v3877 = vpop.f32.mrb[0].mxu0
        %v3878 = vpop.f32.mrb[0].mxu0
        %v3879 = vadd.f32 %v1497, %v3878
        %v3880 = vpop.f32.mrb[0].mxu0
        %3881 = vmatprep.mubr.bf16.mxu0 %v3369
        %3882 = vmatmul.mubr.bf16.gmra.mrb[0].mxu0 %v3305
        %v3883 = vpop.f32.mrb[0].mxu0
        %v3884 = vadd.f32 %v1497, %v3883
        %v3885 = vpop.f32.mrb[0].mxu0
        %v3886 = vpop.f32.mrb[0].mxu0
        %v3887 = vadd.f32 %v1497, %v3886
        %v3888 = vpop.f32.mrb[0].mxu0
        %3889 = vmatprep.mubr.bf16.mxu0 %v3370
        %3890 = vmatmul.mubr.bf16.gmra.mrb[0].mxu0 %v3306
        %v3891 = vpop.f32.mrb[0].mxu0
        %v3892 = vadd.f32 %v1497, %v3891
        %v3893 = vpop.f32.mrb[0].mxu0
        %v3894 = vpop.f32.mrb[0].mxu0
        %v3895 = vadd.f32 %v1497, %v3894
        %v3896 = vpop.f32.mrb[0].mxu0
        %3897 = vmatprep.mubr.bf16.mxu0 %v3371
        %3898 = vmatmul.mubr.bf16.gmra.mrb[0].mxu0 %v3307
        %v3899 = vpop.f32.mrb[0].mxu0
        %v3900 = vadd.f32 %v1497, %v3899
        %v3901 = vpop.f32.mrb[0].mxu0
        %v3902 = vpop.f32.mrb[0].mxu0
        %v3903 = vadd.f32 %v1497, %v3902
        %v3904 = vpop.f32.mrb[0].mxu0
        %3905 = vmatprep.mubr.bf16.mxu0 %v3372
        %3906 = vmatmul.mubr.bf16.gmra.mrb[0].mxu0 %v3308
        %v3907 = vpop.f32.mrb[0].mxu0
        %v3908 = vadd.f32 %v1497, %v3907
        %v3909 = vpop.f32.mrb[0].mxu0
        %v3910 = vpop.f32.mrb[0].mxu0
        %v3911 = vadd.f32 %v1497, %v3910
        %v3912 = vpop.f32.mrb[0].mxu0
        %3913 = vmatprep.mubr.bf16.mxu0 %v3373
        %3914 = vmatmul.mubr.bf16.gmra.mrb[0].mxu0 %v3309
        %v3915 = vpop.f32.mrb[0].mxu0
        %v3916 = vadd.f32 %v1497, %v3915
        %v3917 = vpop.f32.mrb[0].mxu0
        %v3918 = vpop.f32.mrb[0].mxu0
        %v3919 = vadd.f32 %v1497, %v3918
        %v3920 = vpop.f32.mrb[0].mxu0
        %3921 = vmatprep.mubr.bf16.mxu0 %v3374
        %3922 = vmatmul.mubr.bf16.gmra.mrb[0].mxu0 %v3310
        %v3923 = vpop.f32.mrb[0].mxu0
        %v3924 = vadd.f32 %v1497, %v3923
        %v3925 = vpop.f32.mrb[0].mxu0
        %v3926 = vpop.f32.mrb[0].mxu0
        %v3927 = vadd.f32 %v1497, %v3926
        %v3928 = vpop.f32.mrb[0].mxu0
        %3929 = vmatprep.mubr.bf16.mxu0 %v3375
        %3930 = vmatmul.mubr.bf16.gmra.mrb[0].mxu0 %v3311
        %v3931 = vpop.f32.mrb[0].mxu0
        %v3932 = vadd.f32 %v1497, %v3931
        %v3933 = vpop.f32.mrb[0].mxu0
        %v3934 = vpop.f32.mrb[0].mxu0
        %v3935 = vadd.f32 %v1497, %v3934
        %v3936 = vpop.f32.mrb[0].mxu0
        %3937 = vdwg.mxu0
        %3938 = vmatprep.subr.bf16.mxu0 0
        %3939 = vmatpush1.bf16.msra.mxu0 %v3729
        %3940 = vmatprep.subr.bf16.mxu0 0
        %3941 = vmatpush1.bf16.msra.mxu0 %v3730
        %3942 = vmatprep.subr.bf16.mxu0 0
        %3943 = vmatpush1.bf16.msra.mxu0 %v3731
        %3944 = vmatprep.subr.bf16.mxu0 0
        %3945 = vmatpush1.bf16.msra.mxu0 %v3732
        %3946 = vmatprep.subr.bf16.mxu0 0
        %3947 = vmatpush1.bf16.msra.mxu0 %v3733
        %3948 = vmatprep.subr.bf16.mxu0 0
        %3949 = vmatpush1.bf16.msra.mxu0 %v3734
        %3950 = vmatprep.subr.bf16.mxu0 0
        %3951 = vmatpush1.bf16.msra.mxu0 %v3735
        %3952 = vmatprep.subr.bf16.mxu0 0
        %3953 = vmatpush1.bf16.msra.mxu0 %v3736
        %3954 = vmatprep.subr.bf16.mxu0 0
        %3955 = vmatpush1.bf16.msra.mxu0 %v3737
        %3956 = vmatprep.subr.bf16.mxu0 0
        %3957 = vmatpush1.bf16.msra.mxu0 %v3738
        %3958 = vmatprep.subr.bf16.mxu0 0
        %3959 = vmatpush1.bf16.msra.mxu0 %v3739
        %3960 = vmatprep.subr.bf16.mxu0 0
        %3961 = vmatpush1.bf16.msra.mxu0 %v3740
        %3962 = vmatprep.subr.bf16.mxu0 0
        %3963 = vmatpush1.bf16.msra.mxu0 %v3741
        %3964 = vmatprep.subr.bf16.mxu0 0
        %3965 = vmatpush1.bf16.msra.mxu0 %v3742
        %3966 = vmatprep.subr.bf16.mxu0 0
        %3967 = vmatpush1.bf16.msra.mxu0 %v3743
        %3968 = vmatprep.subr.bf16.mxu0 0
        %3969 = vmatpush1.bf16.msra.mxu0 %v3744
        %3970 = vmatprep.mubr.bf16.mxu0 %v3488
        %3971 = vmatmul.mubr.bf16.gmra.mrb[0].mxu0 %v3424
        %v3972 = vpop.f32.mrb[0].mxu0
        %v3973 = vadd.f32 %v3812, %v3972
        %v3974 = vpop.f32.mrb[0].mxu0
        %v3975 = vpop.f32.mrb[0].mxu0
        %v3976 = vadd.f32 %v3815, %v3975
        %v3977 = vpop.f32.mrb[0].mxu0
        %3978 = vmatprep.mubr.bf16.mxu0 %v3489
        %3979 = vmatmul.mubr.bf16.gmra.mrb[0].mxu0 %v3425
        %v3980 = vpop.f32.mrb[0].mxu0
        %v3981 = vadd.f32 %v3820, %v3980
        %v3982 = vpop.f32.mrb[0].mxu0
        %v3983 = vpop.f32.mrb[0].mxu0
        %v3984 = vadd.f32 %v3823, %v3983
        %v3985 = vpop.f32.mrb[0].mxu0
        %3986 = vmatprep.mubr.bf16.mxu0 %v3490
        %3987 = vmatmul.mubr.bf16.gmra.mrb[0].mxu0 %v3426
        %v3988 = vpop.f32.mrb[0].mxu0
        %v3989 = vadd.f32 %v3828, %v3988
        %v3990 = vpop.f32.mrb[0].mxu0
        %v3991 = vpop.f32.mrb[0].mxu0
        %v3992 = vadd.f32 %v3831, %v3991
        %v3993 = vpop.f32.mrb[0].mxu0
        %3994 = vmatprep.mubr.bf16.mxu0 %v3491
        %3995 = vmatmul.mubr.bf16.gmra.mrb[0].mxu0 %v3427
        %v3996 = vpop.f32.mrb[0].mxu0
        %v3997 = vadd.f32 %v3836, %v3996
        %v3998 = vpop.f32.mrb[0].mxu0
        %v3999 = vpop.f32.mrb[0].mxu0
        %v4000 = vadd.f32 %v3839, %v3999
        %v4001 = vpop.f32.mrb[0].mxu0
        %4002 = vmatprep.mubr.bf16.mxu0 %v3492
        %4003 = vmatmul.mubr.bf16.gmra.mrb[0].mxu0 %v3428
        %v4004 = vpop.f32.mrb[0].mxu0
        %v4005 = vadd.f32 %v3844, %v4004
        %v4006 = vpop.f32.mrb[0].mxu0
        %v4007 = vpop.f32.mrb[0].mxu0
        %v4008 = vadd.f32 %v3847, %v4007
        %v4009 = vpop.f32.mrb[0].mxu0
        %4010 = vmatprep.mubr.bf16.mxu0 %v3493
        %4011 = vmatmul.mubr.bf16.gmra.mrb[0].mxu0 %v3429
        %v4012 = vpop.f32.mrb[0].mxu0
        %v4013 = vadd.f32 %v3852, %v4012
        %v4014 = vpop.f32.mrb[0].mxu0
        %v4015 = vpop.f32.mrb[0].mxu0
        %v4016 = vadd.f32 %v3855, %v4015
        %v4017 = vpop.f32.mrb[0].mxu0
        %4018 = vmatprep.mubr.bf16.mxu0 %v3494
        %4019 = vmatmul.mubr.bf16.gmra.mrb[0].mxu0 %v3430
        %v4020 = vpop.f32.mrb[0].mxu0
        %v4021 = vadd.f32 %v3860, %v4020
        %v4022 = vpop.f32.mrb[0].mxu0
        %v4023 = vpop.f32.mrb[0].mxu0
        %v4024 = vadd.f32 %v3863, %v4023
        %v4025 = vpop.f32.mrb[0].mxu0
        %4026 = vmatprep.mubr.bf16.mxu0 %v3495
        %4027 = vmatmul.mubr.bf16.gmra.mrb[0].mxu0 %v3431
        %v4028 = vpop.f32.mrb[0].mxu0
        %v4029 = vadd.f32 %v3868, %v4028
        %v4030 = vpop.f32.mrb[0].mxu0
        %v4031 = vpop.f32.mrb[0].mxu0
        %v4032 = vadd.f32 %v3871, %v4031
        %v4033 = vpop.f32.mrb[0].mxu0
        %4034 = vmatprep.mubr.bf16.mxu0 %v3496
        %4035 = vmatmul.mubr.bf16.gmra.mrb[0].mxu0 %v3432
        %v4036 = vpop.f32.mrb[0].mxu0
        %v4037 = vadd.f32 %v3876, %v4036
        %v4038 = vpop.f32.mrb[0].mxu0
        %v4039 = vpop.f32.mrb[0].mxu0
        %v4040 = vadd.f32 %v3879, %v4039
        %v4041 = vpop.f32.mrb[0].mxu0
        %4042 = vmatprep.mubr.bf16.mxu0 %v3497
        %4043 = vmatmul.mubr.bf16.gmra.mrb[0].mxu0 %v3433
        %v4044 = vpop.f32.mrb[0].mxu0
        %v4045 = vadd.f32 %v3884, %v4044
        %v4046 = vpop.f32.mrb[0].mxu0
        %v4047 = vpop.f32.mrb[0].mxu0
        %v4048 = vadd.f32 %v3887, %v4047
        %v4049 = vpop.f32.mrb[0].mxu0
        %4050 = vmatprep.mubr.bf16.mxu0 %v3498
        %4051 = vmatmul.mubr.bf16.gmra.mrb[0].mxu0 %v3434
        %v4052 = vpop.f32.mrb[0].mxu0
        %v4053 = vadd.f32 %v3892, %v4052
        %v4054 = vpop.f32.mrb[0].mxu0
        %v4055 = vpop.f32.mrb[0].mxu0
        %v4056 = vadd.f32 %v3895, %v4055
        %v4057 = vpop.f32.mrb[0].mxu0
        %4058 = vmatprep.mubr.bf16.mxu0 %v3499
        %4059 = vmatmul.mubr.bf16.gmra.mrb[0].mxu0 %v3435
        %v4060 = vpop.f32.mrb[0].mxu0
        %v4061 = vadd.f32 %v3900, %v4060
        %v4062 = vpop.f32.mrb[0].mxu0
        %v4063 = vpop.f32.mrb[0].mxu0
        %v4064 = vadd.f32 %v3903, %v4063
        %v4065 = vpop.f32.mrb[0].mxu0
        %4066 = vmatprep.mubr.bf16.mxu0 %v3500
        %4067 = vmatmul.mubr.bf16.gmra.mrb[0].mxu0 %v3436
        %v4068 = vpop.f32.mrb[0].mxu0
        %v4069 = vadd.f32 %v3908, %v4068
        %v4070 = vpop.f32.mrb[0].mxu0
        %v4071 = vpop.f32.mrb[0].mxu0
        %v4072 = vadd.f32 %v3911, %v4071
        %v4073 = vpop.f32.mrb[0].mxu0
        %4074 = vmatprep.mubr.bf16.mxu0 %v3501
        %4075 = vmatmul.mubr.bf16.gmra.mrb[0].mxu0 %v3437
        %v4076 = vpop.f32.mrb[0].mxu0
        %v4077 = vadd.f32 %v3916, %v4076
        %v4078 = vpop.f32.mrb[0].mxu0
        %v4079 = vpop.f32.mrb[0].mxu0
        %v4080 = vadd.f32 %v3919, %v4079
        %v4081 = vpop.f32.mrb[0].mxu0
        %4082 = vmatprep.mubr.bf16.mxu0 %v3502
        %4083 = vmatmul.mubr.bf16.gmra.mrb[0].mxu0 %v3438
        %v4084 = vpop.f32.mrb[0].mxu0
        %v4085 = vadd.f32 %v3924, %v4084
        %v4086 = vpop.f32.mrb[0].mxu0
        %v4087 = vpop.f32.mrb[0].mxu0
        %v4088 = vadd.f32 %v3927, %v4087
        %v4089 = vpop.f32.mrb[0].mxu0
        %4090 = vmatprep.mubr.bf16.mxu0 %v3503
        %4091 = vmatmul.mubr.bf16.gmra.mrb[0].mxu0 %v3439
        %v4092 = vpop.f32.mrb[0].mxu0
        %v4093 = vadd.f32 %v3932, %v4092
        %v4094 = vpop.f32.mrb[0].mxu0
        %v4095 = vpop.f32.mrb[0].mxu0
        %v4096 = vadd.f32 %v3935, %v4095
        %v4097 = vpop.f32.mrb[0].mxu0
        %4098 = vdwg.mxu0
        %s4099 = scalar_lea.vmem %s233, 256
        %4100 = vst [vmem:[%s4099] sm:$0xff] %v3973
        %4101 = vst [vmem:[%s4099 + $0x8] sm:$0xff] %v3976
        %4102 = vst [vmem:[%s4099 + $0x10] sm:$0xff] %v3981
        %4103 = vst [vmem:[%s4099 + $0x18] sm:$0xff] %v3984
        %4104 = vst [vmem:[%s4099 + $0x20] sm:$0xff] %v3989
        %4105 = vst [vmem:[%s4099 + $0x28] sm:$0xff] %v3992
        %4106 = vst [vmem:[%s4099 + $0x30] sm:$0xff] %v3997
        %4107 = vst [vmem:[%s4099 + $0x38] sm:$0xff] %v4000
        %4108 = vst [vmem:[%s4099 + $0x40] sm:$0xff] %v4005
        %4109 = vst [vmem:[%s4099 + $0x48] sm:$0xff] %v4008
        %4110 = vst [vmem:[%s4099 + $0x50] sm:$0xff] %v4013
        %4111 = vst [vmem:[%s4099 + $0x58] sm:$0xff] %v4016
        %4112 = vst [vmem:[%s4099 + $0x60] sm:$0xff] %v4021
        %4113 = vst [vmem:[%s4099 + $0x68] sm:$0xff] %v4024
        %4114 = vst [vmem:[%s4099 + $0x70] sm:$0xff] %v4029
        %4115 = vst [vmem:[%s4099 + $0x78] sm:$0xff] %v4032
        %4116 = vst [vmem:[%s4099 + $0x80] sm:$0xff] %v4037
        %4117 = vst [vmem:[%s4099 + $0x88] sm:$0xff] %v4040
        %4118 = vst [vmem:[%s4099 + $0x90] sm:$0xff] %v4045
        %4119 = vst [vmem:[%s4099 + $0x98] sm:$0xff] %v4048
        %4120 = vst [vmem:[%s4099 + $0xa0] sm:$0xff] %v4053
        %4121 = vst [vmem:[%s4099 + $0xa8] sm:$0xff] %v4056
        %4122 = vst [vmem:[%s4099 + $0xb0] sm:$0xff] %v4061
        %4123 = vst [vmem:[%s4099 + $0xb8] sm:$0xff] %v4064
        %4124 = vst [vmem:[%s4099 + $0xc0] sm:$0xff] %v4069
        %4125 = vst [vmem:[%s4099 + $0xc8] sm:$0xff] %v4072
        %4126 = vst [vmem:[%s4099 + $0xd0] sm:$0xff] %v4077
        %4127 = vst [vmem:[%s4099 + $0xd8] sm:$0xff] %v4080
        %4128 = vst [vmem:[%s4099 + $0xe0] sm:$0xff] %v4085
        %4129 = vst [vmem:[%s4099 + $0xe8] sm:$0xff] %v4088
        %4130 = vst [vmem:[%s4099 + $0xf0] sm:$0xff] %v4093
        %4131 = vst [vmem:[%s4099 + $0xf8] sm:$0xff] %v4096
        %v4132 = vld [vmem:[%s676] sm:$0xf]
        %v4133 = vld [vmem:[%s676 + $0x4] sm:$0xf]
        %v4134 = vld [vmem:[%s676 + $0xc] sm:$0xf]
        %v4135 = vld [vmem:[%s676 + $0x10] sm:$0xf]
        %v4136 = vld [vmem:[%s676 + $0x18] sm:$0xf]
        %v4137 = vld [vmem:[%s676 + $0x1c] sm:$0xf]
        %v4138 = vld [vmem:[%s676 + $0x24] sm:$0xf]
        %v4139 = vld [vmem:[%s676 + $0x28] sm:$0xf]
        %v4140 = vld [vmem:[%s676 + $0x30] sm:$0xf]
        %v4141 = vld [vmem:[%s676 + $0x34] sm:$0xf]
        %v4142 = vld [vmem:[%s676 + $0x3c] sm:$0xf]
        %v4143 = vld [vmem:[%s676 + $0x40] sm:$0xf]
        %v4144 = vld [vmem:[%s676 + $0x48] sm:$0xf]
        %v4145 = vld [vmem:[%s676 + $0x4c] sm:$0xf]
        %v4146 = vld [vmem:[%s676 + $0x54] sm:$0xf]
        %v4147 = vld [vmem:[%s676 + $0x58] sm:$0xf]
        %v4148 = vld [vmem:[%s676 + $0x60] sm:$0xf]
        %v4149 = vld [vmem:[%s676 + $0x64] sm:$0xf]
        %v4150 = vld [vmem:[%s676 + $0x6c] sm:$0xf]
        %v4151 = vld [vmem:[%s676 + $0x70] sm:$0xf]
        %v4152 = vld [vmem:[%s676 + $0x78] sm:$0xf]
        %v4153 = vld [vmem:[%s676 + $0x7c] sm:$0xf]
        %v4154 = vld [vmem:[%s676 + $0x84] sm:$0xf]
        %v4155 = vld [vmem:[%s676 + $0x88] sm:$0xf]
        %v4156 = vld [vmem:[%s676 + $0x90] sm:$0xf]
        %v4157 = vld [vmem:[%s676 + $0x94] sm:$0xf]
        %v4158 = vld [vmem:[%s676 + $0x9c] sm:$0xf]
        %v4159 = vld [vmem:[%s676 + $0xa0] sm:$0xf]
        %v4160 = vld [vmem:[%s676 + $0xa8] sm:$0xf]
        %v4161 = vld [vmem:[%s676 + $0xac] sm:$0xf]
        %v4162 = vld [vmem:[%s676 + $0xb4] sm:$0xf]
        %v4163 = vld [vmem:[%s676 + $0xb8] sm:$0xf]
        %v4164 = vld [vmem:[%s676 + $0x8] sm:$0x1]
        %v4165 = vld [vmem:[%s676 + $0x14] sm:$0x1]
        %v4166 = vld [vmem:[%s676 + $0x20] sm:$0x1]
        %v4167 = vld [vmem:[%s676 + $0x2c] sm:$0x1]
        %v4168 = vld [vmem:[%s676 + $0x38] sm:$0x1]
        %v4169 = vld [vmem:[%s676 + $0x44] sm:$0x1]
        %v4170 = vld [vmem:[%s676 + $0x50] sm:$0x1]
        %v4171 = vld [vmem:[%s676 + $0x5c] sm:$0x1]
        %v4172 = vld [vmem:[%s676 + $0x68] sm:$0x1]
        %v4173 = vld [vmem:[%s676 + $0x74] sm:$0x1]
        %v4174 = vld [vmem:[%s676 + $0x80] sm:$0x1]
        %v4175 = vld [vmem:[%s676 + $0x8c] sm:$0x1]
        %v4176 = vld [vmem:[%s676 + $0x98] sm:$0x1]
        %v4177 = vld [vmem:[%s676 + $0xa4] sm:$0x1]
        %v4178 = vld [vmem:[%s676 + $0xb0] sm:$0x1]
        %v4179 = vld [vmem:[%s676 + $0xbc] sm:$0x1]
        %v4181 = vshrl.u32 %v4132, 16
        %v4183 = vrot.slane %v4181, 4
        %v4184 = vshll.u32 %v4132, 16
        %v4186 = vrot.slane %v4184, 5
        %v4187 = vor.u32 %v4183, %v4186
        %v4188 = vrot.slane %v4187, 4
        %v4190 = vshll.u32 %v4133, 16
        %v4192 = vrot.slane %v4190, 5
        %v4193 = vsel %vm291, %v4188, %v4192
        %v4194 = vshrl.u32 %v4133, 16
        %v4196 = vrot.slane %v4194, 4
        %v4197 = vor.u32 %v4196, %v4192
        %v4198 = vrot.slane %v4197, 4
        %v4200 = vshll.u32 %v4164, 16
        %v4202 = vrot.slane %v4200, 5
        %v4203 = vsel %vm291, %v4198, %v4202
        %v4205 = vshrl.u32 %v4134, 16
        %v4207 = vrot.slane %v4205, 4
        %v4208 = vshll.u32 %v4134, 16
        %v4210 = vrot.slane %v4208, 5
        %v4211 = vor.u32 %v4207, %v4210
        %v4212 = vrot.slane %v4211, 4
        %v4214 = vshll.u32 %v4135, 16
        %v4216 = vrot.slane %v4214, 5
        %v4217 = vsel %vm291, %v4212, %v4216
        %v4218 = vshrl.u32 %v4135, 16
        %v4220 = vrot.slane %v4218, 4
        %v4221 = vor.u32 %v4220, %v4216
        %v4222 = vrot.slane %v4221, 4
        %v4224 = vshll.u32 %v4165, 16
        %v4226 = vrot.slane %v4224, 5
        %v4227 = vsel %vm291, %v4222, %v4226
        %v4229 = vshrl.u32 %v4136, 16
        %v4231 = vrot.slane %v4229, 4
        %v4232 = vshll.u32 %v4136, 16
        %v4234 = vrot.slane %v4232, 5
        %v4235 = vor.u32 %v4231, %v4234
        %v4236 = vrot.slane %v4235, 4
        %v4238 = vshll.u32 %v4137, 16
        %v4240 = vrot.slane %v4238, 5
        %v4241 = vsel %vm291, %v4236, %v4240
        %v4242 = vshrl.u32 %v4137, 16
        %v4244 = vrot.slane %v4242, 4
        %v4245 = vor.u32 %v4244, %v4240
        %v4246 = vrot.slane %v4245, 4
        %v4248 = vshll.u32 %v4166, 16
        %v4250 = vrot.slane %v4248, 5
        %v4251 = vsel %vm291, %v4246, %v4250
        %v4253 = vshrl.u32 %v4138, 16
        %v4255 = vrot.slane %v4253, 4
        %v4256 = vshll.u32 %v4138, 16
        %v4258 = vrot.slane %v4256, 5
        %v4259 = vor.u32 %v4255, %v4258
        %v4260 = vrot.slane %v4259, 4
        %v4262 = vshll.u32 %v4139, 16
        %v4264 = vrot.slane %v4262, 5
        %v4265 = vsel %vm291, %v4260, %v4264
        %v4266 = vshrl.u32 %v4139, 16
        %v4268 = vrot.slane %v4266, 4
        %v4269 = vor.u32 %v4268, %v4264
        %v4270 = vrot.slane %v4269, 4
        %v4272 = vshll.u32 %v4167, 16
        %v4274 = vrot.slane %v4272, 5
        %v4275 = vsel %vm291, %v4270, %v4274
        %v4277 = vshrl.u32 %v4140, 16
        %v4279 = vrot.slane %v4277, 4
        %v4280 = vshll.u32 %v4140, 16
        %v4282 = vrot.slane %v4280, 5
        %v4283 = vor.u32 %v4279, %v4282
        %v4284 = vrot.slane %v4283, 4
        %v4286 = vshll.u32 %v4141, 16
        %v4288 = vrot.slane %v4286, 5
        %v4289 = vsel %vm291, %v4284, %v4288
        %v4290 = vshrl.u32 %v4141, 16
        %v4292 = vrot.slane %v4290, 4
        %v4293 = vor.u32 %v4292, %v4288
        %v4294 = vrot.slane %v4293, 4
        %v4296 = vshll.u32 %v4168, 16
        %v4298 = vrot.slane %v4296, 5
        %v4299 = vsel %vm291, %v4294, %v4298
        %v4301 = vshrl.u32 %v4142, 16
        %v4303 = vrot.slane %v4301, 4
        %v4304 = vshll.u32 %v4142, 16
        %v4306 = vrot.slane %v4304, 5
        %v4307 = vor.u32 %v4303, %v4306
        %v4308 = vrot.slane %v4307, 4
        %v4310 = vshll.u32 %v4143, 16
        %v4312 = vrot.slane %v4310, 5
        %v4313 = vsel %vm291, %v4308, %v4312
        %v4314 = vshrl.u32 %v4143, 16
        %v4316 = vrot.slane %v4314, 4
        %v4317 = vor.u32 %v4316, %v4312
        %v4318 = vrot.slane %v4317, 4
        %v4320 = vshll.u32 %v4169, 16
        %v4322 = vrot.slane %v4320, 5
        %v4323 = vsel %vm291, %v4318, %v4322
        %v4325 = vshrl.u32 %v4144, 16
        %v4327 = vrot.slane %v4325, 4
        %v4328 = vshll.u32 %v4144, 16
        %v4330 = vrot.slane %v4328, 5
        %v4331 = vor.u32 %v4327, %v4330
        %v4332 = vrot.slane %v4331, 4
        %v4334 = vshll.u32 %v4145, 16
        %v4336 = vrot.slane %v4334, 5
        %v4337 = vsel %vm291, %v4332, %v4336
        %v4338 = vshrl.u32 %v4145, 16
        %v4340 = vrot.slane %v4338, 4
        %v4341 = vor.u32 %v4340, %v4336
        %v4342 = vrot.slane %v4341, 4
        %v4344 = vshll.u32 %v4170, 16
        %v4346 = vrot.slane %v4344, 5
        %v4347 = vsel %vm291, %v4342, %v4346
        %v4349 = vshrl.u32 %v4146, 16
        %v4351 = vrot.slane %v4349, 4
        %v4352 = vshll.u32 %v4146, 16
        %v4354 = vrot.slane %v4352, 5
        %v4355 = vor.u32 %v4351, %v4354
        %v4356 = vrot.slane %v4355, 4
        %v4358 = vshll.u32 %v4147, 16
        %v4360 = vrot.slane %v4358, 5
        %v4361 = vsel %vm291, %v4356, %v4360
        %v4362 = vshrl.u32 %v4147, 16
        %v4364 = vrot.slane %v4362, 4
        %v4365 = vor.u32 %v4364, %v4360
        %v4366 = vrot.slane %v4365, 4
        %v4368 = vshll.u32 %v4171, 16
        %v4370 = vrot.slane %v4368, 5
        %v4371 = vsel %vm291, %v4366, %v4370
        %v4373 = vshrl.u32 %v4148, 16
        %v4375 = vrot.slane %v4373, 4
        %v4376 = vshll.u32 %v4148, 16
        %v4378 = vrot.slane %v4376, 5
        %v4379 = vor.u32 %v4375, %v4378
        %v4380 = vrot.slane %v4379, 4
        %v4382 = vshll.u32 %v4149, 16
        %v4384 = vrot.slane %v4382, 5
        %v4385 = vsel %vm291, %v4380, %v4384
        %v4386 = vshrl.u32 %v4149, 16
        %v4388 = vrot.slane %v4386, 4
        %v4389 = vor.u32 %v4388, %v4384
        %v4390 = vrot.slane %v4389, 4
        %v4392 = vshll.u32 %v4172, 16
        %v4394 = vrot.slane %v4392, 5
        %v4395 = vsel %vm291, %v4390, %v4394
        %v4397 = vshrl.u32 %v4150, 16
        %v4399 = vrot.slane %v4397, 4
        %v4400 = vshll.u32 %v4150, 16
        %v4402 = vrot.slane %v4400, 5
        %v4403 = vor.u32 %v4399, %v4402
        %v4404 = vrot.slane %v4403, 4
        %v4406 = vshll.u32 %v4151, 16
        %v4408 = vrot.slane %v4406, 5
        %v4409 = vsel %vm291, %v4404, %v4408
        %v4410 = vshrl.u32 %v4151, 16
        %v4412 = vrot.slane %v4410, 4
        %v4413 = vor.u32 %v4412, %v4408
        %v4414 = vrot.slane %v4413, 4
        %v4416 = vshll.u32 %v4173, 16
        %v4418 = vrot.slane %v4416, 5
        %v4419 = vsel %vm291, %v4414, %v4418
        %v4421 = vshrl.u32 %v4152, 16
        %v4423 = vrot.slane %v4421, 4
        %v4424 = vshll.u32 %v4152, 16
        %v4426 = vrot.slane %v4424, 5
        %v4427 = vor.u32 %v4423, %v4426
        %v4428 = vrot.slane %v4427, 4
        %v4430 = vshll.u32 %v4153, 16
        %v4432 = vrot.slane %v4430, 5
        %v4433 = vsel %vm291, %v4428, %v4432
        %v4434 = vshrl.u32 %v4153, 16
        %v4436 = vrot.slane %v4434, 4
        %v4437 = vor.u32 %v4436, %v4432
        %v4438 = vrot.slane %v4437, 4
        %v4440 = vshll.u32 %v4174, 16
        %v4442 = vrot.slane %v4440, 5
        %v4443 = vsel %vm291, %v4438, %v4442
        %v4445 = vshrl.u32 %v4154, 16
        %v4447 = vrot.slane %v4445, 4
        %v4448 = vshll.u32 %v4154, 16
        %v4450 = vrot.slane %v4448, 5
        %v4451 = vor.u32 %v4447, %v4450
        %v4452 = vrot.slane %v4451, 4
        %v4454 = vshll.u32 %v4155, 16
        %v4456 = vrot.slane %v4454, 5
        %v4457 = vsel %vm291, %v4452, %v4456
        %v4458 = vshrl.u32 %v4155, 16
        %v4460 = vrot.slane %v4458, 4
        %v4461 = vor.u32 %v4460, %v4456
        %v4462 = vrot.slane %v4461, 4
        %v4464 = vshll.u32 %v4175, 16
        %v4466 = vrot.slane %v4464, 5
        %v4467 = vsel %vm291, %v4462, %v4466
        %v4469 = vshrl.u32 %v4156, 16
        %v4471 = vrot.slane %v4469, 4
        %v4472 = vshll.u32 %v4156, 16
        %v4474 = vrot.slane %v4472, 5
        %v4475 = vor.u32 %v4471, %v4474
        %v4476 = vrot.slane %v4475, 4
        %v4478 = vshll.u32 %v4157, 16
        %v4480 = vrot.slane %v4478, 5
        %v4481 = vsel %vm291, %v4476, %v4480
        %v4482 = vshrl.u32 %v4157, 16
        %v4484 = vrot.slane %v4482, 4
        %v4485 = vor.u32 %v4484, %v4480
        %v4486 = vrot.slane %v4485, 4
        %v4488 = vshll.u32 %v4176, 16
        %v4490 = vrot.slane %v4488, 5
        %v4491 = vsel %vm291, %v4486, %v4490
        %v4493 = vshrl.u32 %v4158, 16
        %v4495 = vrot.slane %v4493, 4
        %v4496 = vshll.u32 %v4158, 16
        %v4498 = vrot.slane %v4496, 5
        %v4499 = vor.u32 %v4495, %v4498
        %v4500 = vrot.slane %v4499, 4
        %v4502 = vshll.u32 %v4159, 16
        %v4504 = vrot.slane %v4502, 5
        %v4505 = vsel %vm291, %v4500, %v4504
        %v4506 = vshrl.u32 %v4159, 16
        %v4508 = vrot.slane %v4506, 4
        %v4509 = vor.u32 %v4508, %v4504
        %v4510 = vrot.slane %v4509, 4
        %v4512 = vshll.u32 %v4177, 16
        %v4514 = vrot.slane %v4512, 5
        %v4515 = vsel %vm291, %v4510, %v4514
        %v4517 = vshrl.u32 %v4160, 16
        %v4519 = vrot.slane %v4517, 4
        %v4520 = vshll.u32 %v4160, 16
        %v4522 = vrot.slane %v4520, 5
        %v4523 = vor.u32 %v4519, %v4522
        %v4524 = vrot.slane %v4523, 4
        %v4526 = vshll.u32 %v4161, 16
        %v4528 = vrot.slane %v4526, 5
        %v4529 = vsel %vm291, %v4524, %v4528
        %v4530 = vshrl.u32 %v4161, 16
        %v4532 = vrot.slane %v4530, 4
        %v4533 = vor.u32 %v4532, %v4528
        %v4534 = vrot.slane %v4533, 4
        %v4536 = vshll.u32 %v4178, 16
        %v4538 = vrot.slane %v4536, 5
        %v4539 = vsel %vm291, %v4534, %v4538
        %v4541 = vshrl.u32 %v4162, 16
        %v4543 = vrot.slane %v4541, 4
        %v4544 = vshll.u32 %v4162, 16
        %v4546 = vrot.slane %v4544, 5
        %v4547 = vor.u32 %v4543, %v4546
        %v4548 = vrot.slane %v4547, 4
        %v4550 = vshll.u32 %v4163, 16
        %v4552 = vrot.slane %v4550, 5
        %v4553 = vsel %vm291, %v4548, %v4552
        %v4554 = vshrl.u32 %v4163, 16
        %v4556 = vrot.slane %v4554, 4
        %v4557 = vor.u32 %v4556, %v4552
        %v4558 = vrot.slane %v4557, 4
        %v4560 = vshll.u32 %v4179, 16
        %v4562 = vrot.slane %v4560, 5
        %v4563 = vsel %vm291, %v4558, %v4562
        %s4564 = scalar_lea.vmem %s228, 24
        %v4565 = vld [vmem:[%s4564] sm:$0xf]
        %v4566 = vld [vmem:[%s4564 + $0x4] sm:$0xf]
        %v4567 = vld [vmem:[%s4564 + $0xc] sm:$0xf]
        %v4568 = vld [vmem:[%s4564 + $0x10] sm:$0xf]
        %v4569 = vld [vmem:[%s4564 + $0x18] sm:$0xf]
        %v4570 = vld [vmem:[%s4564 + $0x1c] sm:$0xf]
        %v4571 = vld [vmem:[%s4564 + $0x24] sm:$0xf]
        %v4572 = vld [vmem:[%s4564 + $0x28] sm:$0xf]
        %v4573 = vld [vmem:[%s4564 + $0x30] sm:$0xf]
        %v4574 = vld [vmem:[%s4564 + $0x34] sm:$0xf]
        %v4575 = vld [vmem:[%s4564 + $0x3c] sm:$0xf]
        %v4576 = vld [vmem:[%s4564 + $0x40] sm:$0xf]
        %v4577 = vld [vmem:[%s4564 + $0x48] sm:$0xf]
        %v4578 = vld [vmem:[%s4564 + $0x4c] sm:$0xf]
        %v4579 = vld [vmem:[%s4564 + $0x54] sm:$0xf]
        %v4580 = vld [vmem:[%s4564 + $0x58] sm:$0xf]
        %v4581 = vld [vmem:[%s4564 + $0x60] sm:$0xf]
        %v4582 = vld [vmem:[%s4564 + $0x64] sm:$0xf]
        %v4583 = vld [vmem:[%s4564 + $0x6c] sm:$0xf]
        %v4584 = vld [vmem:[%s4564 + $0x70] sm:$0xf]
        %v4585 = vld [vmem:[%s4564 + $0x78] sm:$0xf]
        %v4586 = vld [vmem:[%s4564 + $0x7c] sm:$0xf]
        %v4587 = vld [vmem:[%s4564 + $0x84] sm:$0xf]
        %v4588 = vld [vmem:[%s4564 + $0x88] sm:$0xf]
        %v4589 = vld [vmem:[%s4564 + $0x90] sm:$0xf]
        %v4590 = vld [vmem:[%s4564 + $0x94] sm:$0xf]
        %v4591 = vld [vmem:[%s4564 + $0x9c] sm:$0xf]
        %v4592 = vld [vmem:[%s4564 + $0xa0] sm:$0xf]
        %v4593 = vld [vmem:[%s4564 + $0xa8] sm:$0xf]
        %v4594 = vld [vmem:[%s4564 + $0xac] sm:$0xf]
        %v4595 = vld [vmem:[%s4564 + $0xb4] sm:$0xf]
        %v4596 = vld [vmem:[%s4564 + $0xb8] sm:$0xf]
        %v4597 = vld [vmem:[%s4564 + $0x8] sm:$0x1]
        %v4598 = vld [vmem:[%s4564 + $0x14] sm:$0x1]
        %v4599 = vld [vmem:[%s4564 + $0x20] sm:$0x1]
        %v4600 = vld [vmem:[%s4564 + $0x2c] sm:$0x1]
        %v4601 = vld [vmem:[%s4564 + $0x38] sm:$0x1]
        %v4602 = vld [vmem:[%s4564 + $0x44] sm:$0x1]
        %v4603 = vld [vmem:[%s4564 + $0x50] sm:$0x1]
        %v4604 = vld [vmem:[%s4564 + $0x5c] sm:$0x1]
        %v4605 = vld [vmem:[%s4564 + $0x68] sm:$0x1]
        %v4606 = vld [vmem:[%s4564 + $0x74] sm:$0x1]
        %v4607 = vld [vmem:[%s4564 + $0x80] sm:$0x1]
        %v4608 = vld [vmem:[%s4564 + $0x8c] sm:$0x1]
        %v4609 = vld [vmem:[%s4564 + $0x98] sm:$0x1]
        %v4610 = vld [vmem:[%s4564 + $0xa4] sm:$0x1]
        %v4611 = vld [vmem:[%s4564 + $0xb0] sm:$0x1]
        %v4612 = vld [vmem:[%s4564 + $0xbc] sm:$0x1]
        %v4614 = vshrl.u32 %v4565, 16
        %v4616 = vrot.slane %v4614, 4
        %v4617 = vshll.u32 %v4565, 16
        %v4619 = vrot.slane %v4617, 5
        %v4620 = vor.u32 %v4616, %v4619
        %v4621 = vrot.slane %v4620, 4
        %v4623 = vshll.u32 %v4566, 16
        %v4625 = vrot.slane %v4623, 5
        %v4626 = vsel %vm291, %v4621, %v4625
        %v4627 = vshrl.u32 %v4566, 16
        %v4629 = vrot.slane %v4627, 4
        %v4630 = vor.u32 %v4629, %v4625
        %v4631 = vrot.slane %v4630, 4
        %v4633 = vshll.u32 %v4597, 16
        %v4635 = vrot.slane %v4633, 5
        %v4636 = vsel %vm291, %v4631, %v4635
        %v4638 = vshrl.u32 %v4567, 16
        %v4640 = vrot.slane %v4638, 4
        %v4641 = vshll.u32 %v4567, 16
        %v4643 = vrot.slane %v4641, 5
        %v4644 = vor.u32 %v4640, %v4643
        %v4645 = vrot.slane %v4644, 4
        %v4647 = vshll.u32 %v4568, 16
        %v4649 = vrot.slane %v4647, 5
        %v4650 = vsel %vm291, %v4645, %v4649
        %v4651 = vshrl.u32 %v4568, 16
        %v4653 = vrot.slane %v4651, 4
        %v4654 = vor.u32 %v4653, %v4649
        %v4655 = vrot.slane %v4654, 4
        %v4657 = vshll.u32 %v4598, 16
        %v4659 = vrot.slane %v4657, 5
        %v4660 = vsel %vm291, %v4655, %v4659
        %v4662 = vshrl.u32 %v4569, 16
        %v4664 = vrot.slane %v4662, 4
        %v4665 = vshll.u32 %v4569, 16
        %v4667 = vrot.slane %v4665, 5
        %v4668 = vor.u32 %v4664, %v4667
        %v4669 = vrot.slane %v4668, 4
        %v4671 = vshll.u32 %v4570, 16
        %v4673 = vrot.slane %v4671, 5
        %v4674 = vsel %vm291, %v4669, %v4673
        %v4675 = vshrl.u32 %v4570, 16
        %v4677 = vrot.slane %v4675, 4
        %v4678 = vor.u32 %v4677, %v4673
        %v4679 = vrot.slane %v4678, 4
        %v4681 = vshll.u32 %v4599, 16
        %v4683 = vrot.slane %v4681, 5
        %v4684 = vsel %vm291, %v4679, %v4683
        %v4686 = vshrl.u32 %v4571, 16
        %v4688 = vrot.slane %v4686, 4
        %v4689 = vshll.u32 %v4571, 16
        %v4691 = vrot.slane %v4689, 5
        %v4692 = vor.u32 %v4688, %v4691
        %v4693 = vrot.slane %v4692, 4
        %v4695 = vshll.u32 %v4572, 16
        %v4697 = vrot.slane %v4695, 5
        %v4698 = vsel %vm291, %v4693, %v4697
        %v4699 = vshrl.u32 %v4572, 16
        %v4701 = vrot.slane %v4699, 4
        %v4702 = vor.u32 %v4701, %v4697
        %v4703 = vrot.slane %v4702, 4
        %v4705 = vshll.u32 %v4600, 16
        %v4707 = vrot.slane %v4705, 5
        %v4708 = vsel %vm291, %v4703, %v4707
        %v4710 = vshrl.u32 %v4573, 16
        %v4712 = vrot.slane %v4710, 4
        %v4713 = vshll.u32 %v4573, 16
        %v4715 = vrot.slane %v4713, 5
        %v4716 = vor.u32 %v4712, %v4715
        %v4717 = vrot.slane %v4716, 4
        %v4719 = vshll.u32 %v4574, 16
        %v4721 = vrot.slane %v4719, 5
        %v4722 = vsel %vm291, %v4717, %v4721
        %v4723 = vshrl.u32 %v4574, 16
        %v4725 = vrot.slane %v4723, 4
        %v4726 = vor.u32 %v4725, %v4721
        %v4727 = vrot.slane %v4726, 4
        %v4729 = vshll.u32 %v4601, 16
        %v4731 = vrot.slane %v4729, 5
        %v4732 = vsel %vm291, %v4727, %v4731
        %v4734 = vshrl.u32 %v4575, 16
        %v4736 = vrot.slane %v4734, 4
        %v4737 = vshll.u32 %v4575, 16
        %v4739 = vrot.slane %v4737, 5
        %v4740 = vor.u32 %v4736, %v4739
        %v4741 = vrot.slane %v4740, 4
        %v4743 = vshll.u32 %v4576, 16
        %v4745 = vrot.slane %v4743, 5
        %v4746 = vsel %vm291, %v4741, %v4745
        %v4747 = vshrl.u32 %v4576, 16
        %v4749 = vrot.slane %v4747, 4
        %v4750 = vor.u32 %v4749, %v4745
        %v4751 = vrot.slane %v4750, 4
        %v4753 = vshll.u32 %v4602, 16
        %v4755 = vrot.slane %v4753, 5
        %v4756 = vsel %vm291, %v4751, %v4755
        %v4758 = vshrl.u32 %v4577, 16
        %v4760 = vrot.slane %v4758, 4
        %v4761 = vshll.u32 %v4577, 16
        %v4763 = vrot.slane %v4761, 5
        %v4764 = vor.u32 %v4760, %v4763
        %v4765 = vrot.slane %v4764, 4
        %v4767 = vshll.u32 %v4578, 16
        %v4769 = vrot.slane %v4767, 5
        %v4770 = vsel %vm291, %v4765, %v4769
        %v4771 = vshrl.u32 %v4578, 16
        %v4773 = vrot.slane %v4771, 4
        %v4774 = vor.u32 %v4773, %v4769
        %v4775 = vrot.slane %v4774, 4
        %v4777 = vshll.u32 %v4603, 16
        %v4779 = vrot.slane %v4777, 5
        %v4780 = vsel %vm291, %v4775, %v4779
        %v4782 = vshrl.u32 %v4579, 16
        %v4784 = vrot.slane %v4782, 4
        %v4785 = vshll.u32 %v4579, 16
        %v4787 = vrot.slane %v4785, 5
        %v4788 = vor.u32 %v4784, %v4787
        %v4789 = vrot.slane %v4788, 4
        %v4791 = vshll.u32 %v4580, 16
        %v4793 = vrot.slane %v4791, 5
        %v4794 = vsel %vm291, %v4789, %v4793
        %v4795 = vshrl.u32 %v4580, 16
        %v4797 = vrot.slane %v4795, 4
        %v4798 = vor.u32 %v4797, %v4793
        %v4799 = vrot.slane %v4798, 4
        %v4801 = vshll.u32 %v4604, 16
        %v4803 = vrot.slane %v4801, 5
        %v4804 = vsel %vm291, %v4799, %v4803
        %v4806 = vshrl.u32 %v4581, 16
        %v4808 = vrot.slane %v4806, 4
        %v4809 = vshll.u32 %v4581, 16
        %v4811 = vrot.slane %v4809, 5
        %v4812 = vor.u32 %v4808, %v4811
        %v4813 = vrot.slane %v4812, 4
        %v4815 = vshll.u32 %v4582, 16
        %v4817 = vrot.slane %v4815, 5
        %v4818 = vsel %vm291, %v4813, %v4817
        %v4819 = vshrl.u32 %v4582, 16
        %v4821 = vrot.slane %v4819, 4
        %v4822 = vor.u32 %v4821, %v4817
        %v4823 = vrot.slane %v4822, 4
        %v4825 = vshll.u32 %v4605, 16
        %v4827 = vrot.slane %v4825, 5
        %v4828 = vsel %vm291, %v4823, %v4827
        %v4830 = vshrl.u32 %v4583, 16
        %v4832 = vrot.slane %v4830, 4
        %v4833 = vshll.u32 %v4583, 16
        %v4835 = vrot.slane %v4833, 5
        %v4836 = vor.u32 %v4832, %v4835
        %v4837 = vrot.slane %v4836, 4
        %v4839 = vshll.u32 %v4584, 16
        %v4841 = vrot.slane %v4839, 5
        %v4842 = vsel %vm291, %v4837, %v4841
        %v4843 = vshrl.u32 %v4584, 16
        %v4845 = vrot.slane %v4843, 4
        %v4846 = vor.u32 %v4845, %v4841
        %v4847 = vrot.slane %v4846, 4
        %v4849 = vshll.u32 %v4606, 16
        %v4851 = vrot.slane %v4849, 5
        %v4852 = vsel %vm291, %v4847, %v4851
        %v4854 = vshrl.u32 %v4585, 16
        %v4856 = vrot.slane %v4854, 4
        %v4857 = vshll.u32 %v4585, 16
        %v4859 = vrot.slane %v4857, 5
        %v4860 = vor.u32 %v4856, %v4859
        %v4861 = vrot.slane %v4860, 4
        %v4863 = vshll.u32 %v4586, 16
        %v4865 = vrot.slane %v4863, 5
        %v4866 = vsel %vm291, %v4861, %v4865
        %v4867 = vshrl.u32 %v4586, 16
        %v4869 = vrot.slane %v4867, 4
        %v4870 = vor.u32 %v4869, %v4865
        %v4871 = vrot.slane %v4870, 4
        %v4873 = vshll.u32 %v4607, 16
        %v4875 = vrot.slane %v4873, 5
        %v4876 = vsel %vm291, %v4871, %v4875
        %v4878 = vshrl.u32 %v4587, 16
        %v4880 = vrot.slane %v4878, 4
        %v4881 = vshll.u32 %v4587, 16
        %v4883 = vrot.slane %v4881, 5
        %v4884 = vor.u32 %v4880, %v4883
        %v4885 = vrot.slane %v4884, 4
        %v4887 = vshll.u32 %v4588, 16
        %v4889 = vrot.slane %v4887, 5
        %v4890 = vsel %vm291, %v4885, %v4889
        %v4891 = vshrl.u32 %v4588, 16
        %v4893 = vrot.slane %v4891, 4
        %v4894 = vor.u32 %v4893, %v4889
        %v4895 = vrot.slane %v4894, 4
        %v4897 = vshll.u32 %v4608, 16
        %v4899 = vrot.slane %v4897, 5
        %v4900 = vsel %vm291, %v4895, %v4899
        %v4902 = vshrl.u32 %v4589, 16
        %v4904 = vrot.slane %v4902, 4
        %v4905 = vshll.u32 %v4589, 16
        %v4907 = vrot.slane %v4905, 5
        %v4908 = vor.u32 %v4904, %v4907
        %v4909 = vrot.slane %v4908, 4
        %v4911 = vshll.u32 %v4590, 16
        %v4913 = vrot.slane %v4911, 5
        %v4914 = vsel %vm291, %v4909, %v4913
        %v4915 = vshrl.u32 %v4590, 16
        %v4917 = vrot.slane %v4915, 4
        %v4918 = vor.u32 %v4917, %v4913
        %v4919 = vrot.slane %v4918, 4
        %v4921 = vshll.u32 %v4609, 16
        %v4923 = vrot.slane %v4921, 5
        %v4924 = vsel %vm291, %v4919, %v4923
        %v4926 = vshrl.u32 %v4591, 16
        %v4928 = vrot.slane %v4926, 4
        %v4929 = vshll.u32 %v4591, 16
        %v4931 = vrot.slane %v4929, 5
        %v4932 = vor.u32 %v4928, %v4931
        %v4933 = vrot.slane %v4932, 4
        %v4935 = vshll.u32 %v4592, 16
        %v4937 = vrot.slane %v4935, 5
        %v4938 = vsel %vm291, %v4933, %v4937
        %v4939 = vshrl.u32 %v4592, 16
        %v4941 = vrot.slane %v4939, 4
        %v4942 = vor.u32 %v4941, %v4937
        %v4943 = vrot.slane %v4942, 4
        %v4945 = vshll.u32 %v4610, 16
        %v4947 = vrot.slane %v4945, 5
        %v4948 = vsel %vm291, %v4943, %v4947
        %v4950 = vshrl.u32 %v4593, 16
        %v4952 = vrot.slane %v4950, 4
        %v4953 = vshll.u32 %v4593, 16
        %v4955 = vrot.slane %v4953, 5
        %v4956 = vor.u32 %v4952, %v4955
        %v4957 = vrot.slane %v4956, 4
        %v4959 = vshll.u32 %v4594, 16
        %v4961 = vrot.slane %v4959, 5
        %v4962 = vsel %vm291, %v4957, %v4961
        %v4963 = vshrl.u32 %v4594, 16
        %v4965 = vrot.slane %v4963, 4
        %v4966 = vor.u32 %v4965, %v4961
        %v4967 = vrot.slane %v4966, 4
        %v4969 = vshll.u32 %v4611, 16
        %v4971 = vrot.slane %v4969, 5
        %v4972 = vsel %vm291, %v4967, %v4971
        %v4974 = vshrl.u32 %v4595, 16
        %v4976 = vrot.slane %v4974, 4
        %v4977 = vshll.u32 %v4595, 16
        %v4979 = vrot.slane %v4977, 5
        %v4980 = vor.u32 %v4976, %v4979
        %v4981 = vrot.slane %v4980, 4
        %v4983 = vshll.u32 %v4596, 16
        %v4985 = vrot.slane %v4983, 5
        %v4986 = vsel %vm291, %v4981, %v4985
        %v4987 = vshrl.u32 %v4596, 16
        %v4989 = vrot.slane %v4987, 4
        %v4990 = vor.u32 %v4989, %v4985
        %v4991 = vrot.slane %v4990, 4
        %v4993 = vshll.u32 %v4612, 16
        %v4995 = vrot.slane %v4993, 5
        %v4996 = vsel %vm291, %v4991, %v4995
        %v5029 = vunpack.c.l.b16 %v4132
        %v5030 = vunpack.c.l.b16 %v4133
        %v5031 = vunpack.c.l.b16 %v4134
        %v5032 = vunpack.c.l.b16 %v4135
        %v5033 = vunpack.c.l.b16 %v4136
        %v5034 = vunpack.c.l.b16 %v4137
        %v5035 = vunpack.c.l.b16 %v4138
        %v5036 = vunpack.c.l.b16 %v4139
        %v5037 = vunpack.c.l.b16 %v4140
        %v5038 = vunpack.c.l.b16 %v4141
        %v5039 = vunpack.c.l.b16 %v4142
        %v5040 = vunpack.c.l.b16 %v4143
        %v5041 = vunpack.c.l.b16 %v4144
        %v5042 = vunpack.c.l.b16 %v4145
        %v5043 = vunpack.c.l.b16 %v4146
        %v5044 = vunpack.c.l.b16 %v4147
        %v5045 = vunpack.c.l.b16 %v4148
        %v5046 = vunpack.c.l.b16 %v4149
        %v5047 = vunpack.c.l.b16 %v4150
        %v5048 = vunpack.c.l.b16 %v4151
        %v5049 = vunpack.c.l.b16 %v4152
        %v5050 = vunpack.c.l.b16 %v4153
        %v5051 = vunpack.c.l.b16 %v4154
        %v5052 = vunpack.c.l.b16 %v4155
        %v5053 = vunpack.c.l.b16 %v4156
        %v5054 = vunpack.c.l.b16 %v4157
        %v5055 = vunpack.c.l.b16 %v4158
        %v5056 = vunpack.c.l.b16 %v4159
        %v5057 = vunpack.c.l.b16 %v4160
        %v5058 = vunpack.c.l.b16 %v4161
        %v5059 = vunpack.c.l.b16 %v4162
        %v5060 = vunpack.c.l.b16 %v4163
        %v5061 = vpack.c.b16 %v5030, %v5029
        %v5062 = vpack.c.b16 %v5032, %v5031
        %v5063 = vpack.c.b16 %v5034, %v5033
        %v5064 = vpack.c.b16 %v5036, %v5035
        %v5065 = vpack.c.b16 %v5038, %v5037
        %v5066 = vpack.c.b16 %v5040, %v5039
        %v5067 = vpack.c.b16 %v5042, %v5041
        %v5068 = vpack.c.b16 %v5044, %v5043
        %v5069 = vpack.c.b16 %v5046, %v5045
        %v5070 = vpack.c.b16 %v5048, %v5047
        %v5071 = vpack.c.b16 %v5050, %v5049
        %v5072 = vpack.c.b16 %v5052, %v5051
        %v5073 = vpack.c.b16 %v5054, %v5053
        %v5074 = vpack.c.b16 %v5056, %v5055
        %v5075 = vpack.c.b16 %v5058, %v5057
        %v5076 = vpack.c.b16 %v5060, %v5059
        %v5093 = vunpack.c.l.b16 %v4193
        %v5094 = vunpack.c.l.b16 %v4203
        %v5095 = vunpack.c.l.b16 %v4217
        %v5096 = vunpack.c.l.b16 %v4227
        %v5097 = vunpack.c.l.b16 %v4241
        %v5098 = vunpack.c.l.b16 %v4251
        %v5099 = vunpack.c.l.b16 %v4265
        %v5100 = vunpack.c.l.b16 %v4275
        %v5101 = vunpack.c.l.b16 %v4289
        %v5102 = vunpack.c.l.b16 %v4299
        %v5103 = vunpack.c.l.b16 %v4313
        %v5104 = vunpack.c.l.b16 %v4323
        %v5105 = vunpack.c.l.b16 %v4337
        %v5106 = vunpack.c.l.b16 %v4347
        %v5107 = vunpack.c.l.b16 %v4361
        %v5108 = vunpack.c.l.b16 %v4371
        %v5109 = vunpack.c.l.b16 %v4385
        %v5110 = vunpack.c.l.b16 %v4395
        %v5111 = vunpack.c.l.b16 %v4409
        %v5112 = vunpack.c.l.b16 %v4419
        %v5113 = vunpack.c.l.b16 %v4433
        %v5114 = vunpack.c.l.b16 %v4443
        %v5115 = vunpack.c.l.b16 %v4457
        %v5116 = vunpack.c.l.b16 %v4467
        %v5117 = vunpack.c.l.b16 %v4481
        %v5118 = vunpack.c.l.b16 %v4491
        %v5119 = vunpack.c.l.b16 %v4505
        %v5120 = vunpack.c.l.b16 %v4515
        %v5121 = vunpack.c.l.b16 %v4529
        %v5122 = vunpack.c.l.b16 %v4539
        %v5123 = vunpack.c.l.b16 %v4553
        %v5124 = vunpack.c.l.b16 %v4563
        %v5125 = vpack.c.b16 %v5094, %v5093
        %v5126 = vpack.c.b16 %v5096, %v5095
        %v5127 = vpack.c.b16 %v5098, %v5097
        %v5128 = vpack.c.b16 %v5100, %v5099
        %v5129 = vpack.c.b16 %v5102, %v5101
        %v5130 = vpack.c.b16 %v5104, %v5103
        %v5131 = vpack.c.b16 %v5106, %v5105
        %v5132 = vpack.c.b16 %v5108, %v5107
        %v5133 = vpack.c.b16 %v5110, %v5109
        %v5134 = vpack.c.b16 %v5112, %v5111
        %v5135 = vpack.c.b16 %v5114, %v5113
        %v5136 = vpack.c.b16 %v5116, %v5115
        %v5137 = vpack.c.b16 %v5118, %v5117
        %v5138 = vpack.c.b16 %v5120, %v5119
        %v5139 = vpack.c.b16 %v5122, %v5121
        %v5140 = vpack.c.b16 %v5124, %v5123
        %v5189 = vunpack.c.l.b16 %v4565
        %v5190 = vunpack.c.l.b16 %v4566
        %v5191 = vunpack.c.l.b16 %v4567
        %v5192 = vunpack.c.l.b16 %v4568
        %v5193 = vunpack.c.l.b16 %v4569
        %v5194 = vunpack.c.l.b16 %v4570
        %v5195 = vunpack.c.l.b16 %v4571
        %v5196 = vunpack.c.l.b16 %v4572
        %v5197 = vunpack.c.l.b16 %v4573
        %v5198 = vunpack.c.l.b16 %v4574
        %v5199 = vunpack.c.l.b16 %v4575
        %v5200 = vunpack.c.l.b16 %v4576
        %v5201 = vunpack.c.l.b16 %v4577
        %v5202 = vunpack.c.l.b16 %v4578
        %v5203 = vunpack.c.l.b16 %v4579
        %v5204 = vunpack.c.l.b16 %v4580
        %v5205 = vunpack.c.l.b16 %v4581
        %v5206 = vunpack.c.l.b16 %v4582
        %v5207 = vunpack.c.l.b16 %v4583
        %v5208 = vunpack.c.l.b16 %v4584
        %v5209 = vunpack.c.l.b16 %v4585
        %v5210 = vunpack.c.l.b16 %v4586
        %v5211 = vunpack.c.l.b16 %v4587
        %v5212 = vunpack.c.l.b16 %v4588
        %v5213 = vunpack.c.l.b16 %v4589
        %v5214 = vunpack.c.l.b16 %v4590
        %v5215 = vunpack.c.l.b16 %v4591
        %v5216 = vunpack.c.l.b16 %v4592
        %v5217 = vunpack.c.l.b16 %v4593
        %v5218 = vunpack.c.l.b16 %v4594
        %v5219 = vunpack.c.l.b16 %v4595
        %v5220 = vunpack.c.l.b16 %v4596
        %v5221 = vpack.c.b16 %v5190, %v5189
        %v5222 = vpack.c.b16 %v5192, %v5191
        %v5223 = vpack.c.b16 %v5194, %v5193
        %v5224 = vpack.c.b16 %v5196, %v5195
        %v5225 = vpack.c.b16 %v5198, %v5197
        %v5226 = vpack.c.b16 %v5200, %v5199
        %v5227 = vpack.c.b16 %v5202, %v5201
        %v5228 = vpack.c.b16 %v5204, %v5203
        %v5229 = vpack.c.b16 %v5206, %v5205
        %v5230 = vpack.c.b16 %v5208, %v5207
        %v5231 = vpack.c.b16 %v5210, %v5209
        %v5232 = vpack.c.b16 %v5212, %v5211
        %v5233 = vpack.c.b16 %v5214, %v5213
        %v5234 = vpack.c.b16 %v5216, %v5215
        %v5235 = vpack.c.b16 %v5218, %v5217
        %v5236 = vpack.c.b16 %v5220, %v5219
        %v5253 = vunpack.c.l.b16 %v4626
        %v5254 = vunpack.c.l.b16 %v4636
        %v5255 = vunpack.c.l.b16 %v4650
        %v5256 = vunpack.c.l.b16 %v4660
        %v5257 = vunpack.c.l.b16 %v4674
        %v5258 = vunpack.c.l.b16 %v4684
        %v5259 = vunpack.c.l.b16 %v4698
        %v5260 = vunpack.c.l.b16 %v4708
        %v5261 = vunpack.c.l.b16 %v4722
        %v5262 = vunpack.c.l.b16 %v4732
        %v5263 = vunpack.c.l.b16 %v4746
        %v5264 = vunpack.c.l.b16 %v4756
        %v5265 = vunpack.c.l.b16 %v4770
        %v5266 = vunpack.c.l.b16 %v4780
        %v5267 = vunpack.c.l.b16 %v4794
        %v5268 = vunpack.c.l.b16 %v4804
        %v5269 = vunpack.c.l.b16 %v4818
        %v5270 = vunpack.c.l.b16 %v4828
        %v5271 = vunpack.c.l.b16 %v4842
        %v5272 = vunpack.c.l.b16 %v4852
        %v5273 = vunpack.c.l.b16 %v4866
        %v5274 = vunpack.c.l.b16 %v4876
        %v5275 = vunpack.c.l.b16 %v4890
        %v5276 = vunpack.c.l.b16 %v4900
        %v5277 = vunpack.c.l.b16 %v4914
        %v5278 = vunpack.c.l.b16 %v4924
        %v5279 = vunpack.c.l.b16 %v4938
        %v5280 = vunpack.c.l.b16 %v4948
        %v5281 = vunpack.c.l.b16 %v4962
        %v5282 = vunpack.c.l.b16 %v4972
        %v5283 = vunpack.c.l.b16 %v4986
        %v5284 = vunpack.c.l.b16 %v4996
        %v5285 = vpack.c.b16 %v5254, %v5253
        %v5286 = vpack.c.b16 %v5256, %v5255
        %v5287 = vpack.c.b16 %v5258, %v5257
        %v5288 = vpack.c.b16 %v5260, %v5259
        %v5289 = vpack.c.b16 %v5262, %v5261
        %v5290 = vpack.c.b16 %v5264, %v5263
        %v5291 = vpack.c.b16 %v5266, %v5265
        %v5292 = vpack.c.b16 %v5268, %v5267
        %v5293 = vpack.c.b16 %v5270, %v5269
        %v5294 = vpack.c.b16 %v5272, %v5271
        %v5295 = vpack.c.b16 %v5274, %v5273
        %v5296 = vpack.c.b16 %v5276, %v5275
        %v5297 = vpack.c.b16 %v5278, %v5277
        %v5298 = vpack.c.b16 %v5280, %v5279
        %v5299 = vpack.c.b16 %v5282, %v5281
        %v5300 = vpack.c.b16 %v5284, %v5283
        %s5317 = scalar_lea.vmem [#allocation2], 512
        %v5318 = vld [vmem:[%s5317] sm:$0xf]
        %v5319 = vld [vmem:[%s5317 + $0x4] sm:$0xf]
        %v5320 = vld [vmem:[%s5317 + $0x8] sm:$0xf]
        %v5321 = vld [vmem:[%s5317 + $0xc] sm:$0xf]
        %v5322 = vld [vmem:[%s5317 + $0x10] sm:$0xf]
        %v5323 = vld [vmem:[%s5317 + $0x14] sm:$0xf]
        %v5324 = vld [vmem:[%s5317 + $0x18] sm:$0xf]
        %v5325 = vld [vmem:[%s5317 + $0x1c] sm:$0xf]
        %v5326 = vld [vmem:[%s5317 + $0x20] sm:$0xf]
        %v5327 = vld [vmem:[%s5317 + $0x24] sm:$0xf]
        %v5328 = vld [vmem:[%s5317 + $0x28] sm:$0xf]
        %v5329 = vld [vmem:[%s5317 + $0x2c] sm:$0xf]
        %v5330 = vld [vmem:[%s5317 + $0x30] sm:$0xf]
        %v5331 = vld [vmem:[%s5317 + $0x34] sm:$0xf]
        %v5332 = vld [vmem:[%s5317 + $0x38] sm:$0xf]
        %v5333 = vld [vmem:[%s5317 + $0x3c] sm:$0xf]
        %v5334 = vld [vmem:[%s5317 + $0x40] sm:$0xf]
        %v5335 = vld [vmem:[%s5317 + $0x44] sm:$0xf]
        %v5336 = vld [vmem:[%s5317 + $0x48] sm:$0xf]
        %v5337 = vld [vmem:[%s5317 + $0x4c] sm:$0xf]
        %v5338 = vld [vmem:[%s5317 + $0x50] sm:$0xf]
        %v5339 = vld [vmem:[%s5317 + $0x54] sm:$0xf]
        %v5340 = vld [vmem:[%s5317 + $0x58] sm:$0xf]
        %v5341 = vld [vmem:[%s5317 + $0x5c] sm:$0xf]
        %v5342 = vld [vmem:[%s5317 + $0x60] sm:$0xf]
        %v5343 = vld [vmem:[%s5317 + $0x64] sm:$0xf]
        %v5344 = vld [vmem:[%s5317 + $0x68] sm:$0xf]
        %v5345 = vld [vmem:[%s5317 + $0x6c] sm:$0xf]
        %v5346 = vld [vmem:[%s5317 + $0x70] sm:$0xf]
        %v5347 = vld [vmem:[%s5317 + $0x74] sm:$0xf]
        %v5348 = vld [vmem:[%s5317 + $0x78] sm:$0xf]
        %v5349 = vld [vmem:[%s5317 + $0x7c] sm:$0xf]
        %v5350 = vld [vmem:[%s5317 + $0x80] sm:$0xf]
        %v5351 = vld [vmem:[%s5317 + $0x84] sm:$0xf]
        %v5352 = vld [vmem:[%s5317 + $0x88] sm:$0xf]
        %v5353 = vld [vmem:[%s5317 + $0x8c] sm:$0xf]
        %v5354 = vld [vmem:[%s5317 + $0x90] sm:$0xf]
        %v5355 = vld [vmem:[%s5317 + $0x94] sm:$0xf]
        %v5356 = vld [vmem:[%s5317 + $0x98] sm:$0xf]
        %v5357 = vld [vmem:[%s5317 + $0x9c] sm:$0xf]
        %v5358 = vld [vmem:[%s5317 + $0xa0] sm:$0xf]
        %v5359 = vld [vmem:[%s5317 + $0xa4] sm:$0xf]
        %v5360 = vld [vmem:[%s5317 + $0xa8] sm:$0xf]
        %v5361 = vld [vmem:[%s5317 + $0xac] sm:$0xf]
        %v5362 = vld [vmem:[%s5317 + $0xb0] sm:$0xf]
        %v5363 = vld [vmem:[%s5317 + $0xb4] sm:$0xf]
        %v5364 = vld [vmem:[%s5317 + $0xb8] sm:$0xf]
        %v5365 = vld [vmem:[%s5317 + $0xbc] sm:$0xf]
        %v5366 = vld [vmem:[%s5317 + $0xc0] sm:$0xf]
        %v5367 = vld [vmem:[%s5317 + $0xc4] sm:$0xf]
        %v5368 = vld [vmem:[%s5317 + $0xc8] sm:$0xf]
        %v5369 = vld [vmem:[%s5317 + $0xcc] sm:$0xf]
        %v5370 = vld [vmem:[%s5317 + $0xd0] sm:$0xf]
        %v5371 = vld [vmem:[%s5317 + $0xd4] sm:$0xf]
        %v5372 = vld [vmem:[%s5317 + $0xd8] sm:$0xf]
        %v5373 = vld [vmem:[%s5317 + $0xdc] sm:$0xf]
        %v5374 = vld [vmem:[%s5317 + $0xe0] sm:$0xf]
        %v5375 = vld [vmem:[%s5317 + $0xe4] sm:$0xf]
        %v5376 = vld [vmem:[%s5317 + $0xe8] sm:$0xf]
        %v5377 = vld [vmem:[%s5317 + $0xec] sm:$0xf]
        %v5378 = vld [vmem:[%s5317 + $0xf0] sm:$0xf]
        %v5379 = vld [vmem:[%s5317 + $0xf4] sm:$0xf]
        %v5380 = vld [vmem:[%s5317 + $0xf8] sm:$0xf]
        %v5381 = vld [vmem:[%s5317 + $0xfc] sm:$0xf]
        %v5446 = vunpack.c.l.b16 %v5318
        %v5447 = vunpack.c.l.b16 %v5319
        %v5448 = vunpack.c.l.b16 %v5320
        %v5449 = vunpack.c.l.b16 %v5321
        %v5450 = vunpack.c.l.b16 %v5322
        %v5451 = vunpack.c.l.b16 %v5323
        %v5452 = vunpack.c.l.b16 %v5324
        %v5453 = vunpack.c.l.b16 %v5325
        %v5454 = vunpack.c.l.b16 %v5326
        %v5455 = vunpack.c.l.b16 %v5327
        %v5456 = vunpack.c.l.b16 %v5328
        %v5457 = vunpack.c.l.b16 %v5329
        %v5458 = vunpack.c.l.b16 %v5330
        %v5459 = vunpack.c.l.b16 %v5331
        %v5460 = vunpack.c.l.b16 %v5332
        %v5461 = vunpack.c.l.b16 %v5333
        %v5462 = vunpack.c.l.b16 %v5334
        %v5463 = vunpack.c.l.b16 %v5335
        %v5464 = vunpack.c.l.b16 %v5336
        %v5465 = vunpack.c.l.b16 %v5337
        %v5466 = vunpack.c.l.b16 %v5338
        %v5467 = vunpack.c.l.b16 %v5339
        %v5468 = vunpack.c.l.b16 %v5340
        %v5469 = vunpack.c.l.b16 %v5341
        %v5470 = vunpack.c.l.b16 %v5342
        %v5471 = vunpack.c.l.b16 %v5343
        %v5472 = vunpack.c.l.b16 %v5344
        %v5473 = vunpack.c.l.b16 %v5345
        %v5474 = vunpack.c.l.b16 %v5346
        %v5475 = vunpack.c.l.b16 %v5347
        %v5476 = vunpack.c.l.b16 %v5348
        %v5477 = vunpack.c.l.b16 %v5349
        %v5478 = vunpack.c.l.b16 %v5350
        %v5479 = vunpack.c.l.b16 %v5351
        %v5480 = vunpack.c.l.b16 %v5352
        %v5481 = vunpack.c.l.b16 %v5353
        %v5482 = vunpack.c.l.b16 %v5354
        %v5483 = vunpack.c.l.b16 %v5355
        %v5484 = vunpack.c.l.b16 %v5356
        %v5485 = vunpack.c.l.b16 %v5357
        %v5486 = vunpack.c.l.b16 %v5358
        %v5487 = vunpack.c.l.b16 %v5359
        %v5488 = vunpack.c.l.b16 %v5360
        %v5489 = vunpack.c.l.b16 %v5361
        %v5490 = vunpack.c.l.b16 %v5362
        %v5491 = vunpack.c.l.b16 %v5363
        %v5492 = vunpack.c.l.b16 %v5364
        %v5493 = vunpack.c.l.b16 %v5365
        %v5494 = vunpack.c.l.b16 %v5366
        %v5495 = vunpack.c.l.b16 %v5367
        %v5496 = vunpack.c.l.b16 %v5368
        %v5497 = vunpack.c.l.b16 %v5369
        %v5498 = vunpack.c.l.b16 %v5370
        %v5499 = vunpack.c.l.b16 %v5371
        %v5500 = vunpack.c.l.b16 %v5372
        %v5501 = vunpack.c.l.b16 %v5373
        %v5502 = vunpack.c.l.b16 %v5374
        %v5503 = vunpack.c.l.b16 %v5375
        %v5504 = vunpack.c.l.b16 %v5376
        %v5505 = vunpack.c.l.b16 %v5377
        %v5506 = vunpack.c.l.b16 %v5378
        %v5507 = vunpack.c.l.b16 %v5379
        %v5508 = vunpack.c.l.b16 %v5380
        %v5509 = vunpack.c.l.b16 %v5381
        %v5510 = vpack.c.b16 %v5447, %v5446
        %v5511 = vpack.c.b16 %v5449, %v5448
        %v5512 = vpack.c.b16 %v5451, %v5450
        %v5513 = vpack.c.b16 %v5453, %v5452
        %v5514 = vpack.c.b16 %v5455, %v5454
        %v5515 = vpack.c.b16 %v5457, %v5456
        %v5516 = vpack.c.b16 %v5459, %v5458
        %v5517 = vpack.c.b16 %v5461, %v5460
        %v5518 = vpack.c.b16 %v5463, %v5462
        %v5519 = vpack.c.b16 %v5465, %v5464
        %v5520 = vpack.c.b16 %v5467, %v5466
        %v5521 = vpack.c.b16 %v5469, %v5468
        %v5522 = vpack.c.b16 %v5471, %v5470
        %v5523 = vpack.c.b16 %v5473, %v5472
        %v5524 = vpack.c.b16 %v5475, %v5474
        %v5525 = vpack.c.b16 %v5477, %v5476
        %v5526 = vpack.c.b16 %v5479, %v5478
        %v5527 = vpack.c.b16 %v5481, %v5480
        %v5528 = vpack.c.b16 %v5483, %v5482
        %v5529 = vpack.c.b16 %v5485, %v5484
        %v5530 = vpack.c.b16 %v5487, %v5486
        %v5531 = vpack.c.b16 %v5489, %v5488
        %v5532 = vpack.c.b16 %v5491, %v5490
        %v5533 = vpack.c.b16 %v5493, %v5492
        %v5534 = vpack.c.b16 %v5495, %v5494
        %v5535 = vpack.c.b16 %v5497, %v5496
        %v5536 = vpack.c.b16 %v5499, %v5498
        %v5537 = vpack.c.b16 %v5501, %v5500
        %v5538 = vpack.c.b16 %v5503, %v5502
        %v5539 = vpack.c.b16 %v5505, %v5504
        %v5540 = vpack.c.b16 %v5507, %v5506
        %v5541 = vpack.c.b16 %v5509, %v5508
        %5574 = vmatprep.subr.bf16.mxu0 0
        %5575 = vmatpush1.bf16.msra.mxu0 %v5510
        %5576 = vmatprep.subr.bf16.mxu0 0
        %5577 = vmatpush1.bf16.msra.mxu0 %v5511
        %5578 = vmatprep.subr.bf16.mxu0 0
        %5579 = vmatpush1.bf16.msra.mxu0 %v5512
        %5580 = vmatprep.subr.bf16.mxu0 0
        %5581 = vmatpush1.bf16.msra.mxu0 %v5513
        %5582 = vmatprep.subr.bf16.mxu0 0
        %5583 = vmatpush1.bf16.msra.mxu0 %v5514
        %5584 = vmatprep.subr.bf16.mxu0 0
        %5585 = vmatpush1.bf16.msra.mxu0 %v5515
        %5586 = vmatprep.subr.bf16.mxu0 0
        %5587 = vmatpush1.bf16.msra.mxu0 %v5516
        %5588 = vmatprep.subr.bf16.mxu0 0
        %5589 = vmatpush1.bf16.msra.mxu0 %v5517
        %5590 = vmatprep.subr.bf16.mxu0 0
        %5591 = vmatpush1.bf16.msra.mxu0 %v5518
        %5592 = vmatprep.subr.bf16.mxu0 0
        %5593 = vmatpush1.bf16.msra.mxu0 %v5519
        %5594 = vmatprep.subr.bf16.mxu0 0
        %5595 = vmatpush1.bf16.msra.mxu0 %v5520
        %5596 = vmatprep.subr.bf16.mxu0 0
        %5597 = vmatpush1.bf16.msra.mxu0 %v5521
        %5598 = vmatprep.subr.bf16.mxu0 0
        %5599 = vmatpush1.bf16.msra.mxu0 %v5522
        %5600 = vmatprep.subr.bf16.mxu0 0
        %5601 = vmatpush1.bf16.msra.mxu0 %v5523
        %5602 = vmatprep.subr.bf16.mxu0 0
        %5603 = vmatpush1.bf16.msra.mxu0 %v5524
        %5604 = vmatprep.subr.bf16.mxu0 0
        %5605 = vmatpush1.bf16.msra.mxu0 %v5525
        %5606 = vmatprep.mubr.bf16.mxu0 %v5125
        %5607 = vmatmul.mubr.bf16.gmra.mrb[0].mxu0 %v5061
        %v5608 = vpop.f32.mrb[0].mxu0
        %v5609 = vadd.f32 %v1497, %v5608
        %v5610 = vpop.f32.mrb[0].mxu0
        %v5611 = vpop.f32.mrb[0].mxu0
        %v5612 = vadd.f32 %v1497, %v5611
        %v5613 = vpop.f32.mrb[0].mxu0
        %5614 = vmatprep.mubr.bf16.mxu0 %v5126
        %5615 = vmatmul.mubr.bf16.gmra.mrb[0].mxu0 %v5062
        %v5616 = vpop.f32.mrb[0].mxu0
        %v5617 = vadd.f32 %v1497, %v5616
        %v5618 = vpop.f32.mrb[0].mxu0
        %v5619 = vpop.f32.mrb[0].mxu0
        %v5620 = vadd.f32 %v1497, %v5619
        %v5621 = vpop.f32.mrb[0].mxu0
        %5622 = vmatprep.mubr.bf16.mxu0 %v5127
        %5623 = vmatmul.mubr.bf16.gmra.mrb[0].mxu0 %v5063
        %v5624 = vpop.f32.mrb[0].mxu0
        %v5625 = vadd.f32 %v1497, %v5624
        %v5626 = vpop.f32.mrb[0].mxu0
        %v5627 = vpop.f32.mrb[0].mxu0
        %v5628 = vadd.f32 %v1497, %v5627
        %v5629 = vpop.f32.mrb[0].mxu0
        %5630 = vmatprep.mubr.bf16.mxu0 %v5128
        %5631 = vmatmul.mubr.bf16.gmra.mrb[0].mxu0 %v5064
        %v5632 = vpop.f32.mrb[0].mxu0
        %v5633 = vadd.f32 %v1497, %v5632
        %v5634 = vpop.f32.mrb[0].mxu0
        %v5635 = vpop.f32.mrb[0].mxu0
        %v5636 = vadd.f32 %v1497, %v5635
        %v5637 = vpop.f32.mrb[0].mxu0
        %5638 = vmatprep.mubr.bf16.mxu0 %v5129
        %5639 = vmatmul.mubr.bf16.gmra.mrb[0].mxu0 %v5065
        %v5640 = vpop.f32.mrb[0].mxu0
        %v5641 = vadd.f32 %v1497, %v5640
        %v5642 = vpop.f32.mrb[0].mxu0
        %v5643 = vpop.f32.mrb[0].mxu0
        %v5644 = vadd.f32 %v1497, %v5643
        %v5645 = vpop.f32.mrb[0].mxu0
        %5646 = vmatprep.mubr.bf16.mxu0 %v5130
        %5647 = vmatmul.mubr.bf16.gmra.mrb[0].mxu0 %v5066
        %v5648 = vpop.f32.mrb[0].mxu0
        %v5649 = vadd.f32 %v1497, %v5648
        %v5650 = vpop.f32.mrb[0].mxu0
        %v5651 = vpop.f32.mrb[0].mxu0
        %v5652 = vadd.f32 %v1497, %v5651
        %v5653 = vpop.f32.mrb[0].mxu0
        %5654 = vmatprep.mubr.bf16.mxu0 %v5131
        %5655 = vmatmul.mubr.bf16.gmra.mrb[0].mxu0 %v5067
        %v5656 = vpop.f32.mrb[0].mxu0
        %v5657 = vadd.f32 %v1497, %v5656
        %v5658 = vpop.f32.mrb[0].mxu0
        %v5659 = vpop.f32.mrb[0].mxu0
        %v5660 = vadd.f32 %v1497, %v5659
        %v5661 = vpop.f32.mrb[0].mxu0
        %5662 = vmatprep.mubr.bf16.mxu0 %v5132
        %5663 = vmatmul.mubr.bf16.gmra.mrb[0].mxu0 %v5068
        %v5664 = vpop.f32.mrb[0].mxu0
        %v5665 = vadd.f32 %v1497, %v5664
        %v5666 = vpop.f32.mrb[0].mxu0
        %v5667 = vpop.f32.mrb[0].mxu0
        %v5668 = vadd.f32 %v1497, %v5667
        %v5669 = vpop.f32.mrb[0].mxu0
        %5670 = vmatprep.mubr.bf16.mxu0 %v5133
        %5671 = vmatmul.mubr.bf16.gmra.mrb[0].mxu0 %v5069
        %v5672 = vpop.f32.mrb[0].mxu0
        %v5673 = vadd.f32 %v1497, %v5672
        %v5674 = vpop.f32.mrb[0].mxu0
        %v5675 = vpop.f32.mrb[0].mxu0
        %v5676 = vadd.f32 %v1497, %v5675
        %v5677 = vpop.f32.mrb[0].mxu0
        %5678 = vmatprep.mubr.bf16.mxu0 %v5134
        %5679 = vmatmul.mubr.bf16.gmra.mrb[0].mxu0 %v5070
        %v5680 = vpop.f32.mrb[0].mxu0
        %v5681 = vadd.f32 %v1497, %v5680
        %v5682 = vpop.f32.mrb[0].mxu0
        %v5683 = vpop.f32.mrb[0].mxu0
        %v5684 = vadd.f32 %v1497, %v5683
        %v5685 = vpop.f32.mrb[0].mxu0
        %5686 = vmatprep.mubr.bf16.mxu0 %v5135
        %5687 = vmatmul.mubr.bf16.gmra.mrb[0].mxu0 %v5071
        %v5688 = vpop.f32.mrb[0].mxu0
        %v5689 = vadd.f32 %v1497, %v5688
        %v5690 = vpop.f32.mrb[0].mxu0
        %v5691 = vpop.f32.mrb[0].mxu0
        %v5692 = vadd.f32 %v1497, %v5691
        %v5693 = vpop.f32.mrb[0].mxu0
        %5694 = vmatprep.mubr.bf16.mxu0 %v5136
        %5695 = vmatmul.mubr.bf16.gmra.mrb[0].mxu0 %v5072
        %v5696 = vpop.f32.mrb[0].mxu0
        %v5697 = vadd.f32 %v1497, %v5696
        %v5698 = vpop.f32.mrb[0].mxu0
        %v5699 = vpop.f32.mrb[0].mxu0
        %v5700 = vadd.f32 %v1497, %v5699
        %v5701 = vpop.f32.mrb[0].mxu0
        %5702 = vmatprep.mubr.bf16.mxu0 %v5137
        %5703 = vmatmul.mubr.bf16.gmra.mrb[0].mxu0 %v5073
        %v5704 = vpop.f32.mrb[0].mxu0
        %v5705 = vadd.f32 %v1497, %v5704
        %v5706 = vpop.f32.mrb[0].mxu0
        %v5707 = vpop.f32.mrb[0].mxu0
        %v5708 = vadd.f32 %v1497, %v5707
        %v5709 = vpop.f32.mrb[0].mxu0
        %5710 = vmatprep.mubr.bf16.mxu0 %v5138
        %5711 = vmatmul.mubr.bf16.gmra.mrb[0].mxu0 %v5074
        %v5712 = vpop.f32.mrb[0].mxu0
        %v5713 = vadd.f32 %v1497, %v5712
        %v5714 = vpop.f32.mrb[0].mxu0
        %v5715 = vpop.f32.mrb[0].mxu0
        %v5716 = vadd.f32 %v1497, %v5715
        %v5717 = vpop.f32.mrb[0].mxu0
        %5718 = vmatprep.mubr.bf16.mxu0 %v5139
        %5719 = vmatmul.mubr.bf16.gmra.mrb[0].mxu0 %v5075
        %v5720 = vpop.f32.mrb[0].mxu0
        %v5721 = vadd.f32 %v1497, %v5720
        %v5722 = vpop.f32.mrb[0].mxu0
        %v5723 = vpop.f32.mrb[0].mxu0
        %v5724 = vadd.f32 %v1497, %v5723
        %v5725 = vpop.f32.mrb[0].mxu0
        %5726 = vmatprep.mubr.bf16.mxu0 %v5140
        %5727 = vmatmul.mubr.bf16.gmra.mrb[0].mxu0 %v5076
        %v5728 = vpop.f32.mrb[0].mxu0
        %v5729 = vadd.f32 %v1497, %v5728
        %v5730 = vpop.f32.mrb[0].mxu0
        %v5731 = vpop.f32.mrb[0].mxu0
        %v5732 = vadd.f32 %v1497, %v5731
        %v5733 = vpop.f32.mrb[0].mxu0
        %5734 = vdwg.mxu0
        %5735 = vmatprep.subr.bf16.mxu0 0
        %5736 = vmatpush1.bf16.msra.mxu0 %v5526
        %5737 = vmatprep.subr.bf16.mxu0 0
        %5738 = vmatpush1.bf16.msra.mxu0 %v5527
        %5739 = vmatprep.subr.bf16.mxu0 0
        %5740 = vmatpush1.bf16.msra.mxu0 %v5528
        %5741 = vmatprep.subr.bf16.mxu0 0
        %5742 = vmatpush1.bf16.msra.mxu0 %v5529
        %5743 = vmatprep.subr.bf16.mxu0 0
        %5744 = vmatpush1.bf16.msra.mxu0 %v5530
        %5745 = vmatprep.subr.bf16.mxu0 0
        %5746 = vmatpush1.bf16.msra.mxu0 %v5531
        %5747 = vmatprep.subr.bf16.mxu0 0
        %5748 = vmatpush1.bf16.msra.mxu0 %v5532
        %5749 = vmatprep.subr.bf16.mxu0 0
        %5750 = vmatpush1.bf16.msra.mxu0 %v5533
        %5751 = vmatprep.subr.bf16.mxu0 0
        %5752 = vmatpush1.bf16.msra.mxu0 %v5534
        %5753 = vmatprep.subr.bf16.mxu0 0
        %5754 = vmatpush1.bf16.msra.mxu0 %v5535
        %5755 = vmatprep.subr.bf16.mxu0 0
        %5756 = vmatpush1.bf16.msra.mxu0 %v5536
        %5757 = vmatprep.subr.bf16.mxu0 0
        %5758 = vmatpush1.bf16.msra.mxu0 %v5537
        %5759 = vmatprep.subr.bf16.mxu0 0
        %5760 = vmatpush1.bf16.msra.mxu0 %v5538
        %5761 = vmatprep.subr.bf16.mxu0 0
        %5762 = vmatpush1.bf16.msra.mxu0 %v5539
        %5763 = vmatprep.subr.bf16.mxu0 0
        %5764 = vmatpush1.bf16.msra.mxu0 %v5540
        %5765 = vmatprep.subr.bf16.mxu0 0
        %5766 = vmatpush1.bf16.msra.mxu0 %v5541
        %5767 = vmatprep.mubr.bf16.mxu0 %v5285
        %5768 = vmatmul.mubr.bf16.gmra.mrb[0].mxu0 %v5221
        %v5769 = vpop.f32.mrb[0].mxu0
        %v5770 = vadd.f32 %v5609, %v5769
        %v5771 = vpop.f32.mrb[0].mxu0
        %v5772 = vpop.f32.mrb[0].mxu0
        %v5773 = vadd.f32 %v5612, %v5772
        %v5774 = vpop.f32.mrb[0].mxu0
        %5775 = vmatprep.mubr.bf16.mxu0 %v5286
        %5776 = vmatmul.mubr.bf16.gmra.mrb[0].mxu0 %v5222
        %v5777 = vpop.f32.mrb[0].mxu0
        %v5778 = vadd.f32 %v5617, %v5777
        %v5779 = vpop.f32.mrb[0].mxu0
        %v5780 = vpop.f32.mrb[0].mxu0
        %v5781 = vadd.f32 %v5620, %v5780
        %v5782 = vpop.f32.mrb[0].mxu0
        %5783 = vmatprep.mubr.bf16.mxu0 %v5287
        %5784 = vmatmul.mubr.bf16.gmra.mrb[0].mxu0 %v5223
        %v5785 = vpop.f32.mrb[0].mxu0
        %v5786 = vadd.f32 %v5625, %v5785
        %v5787 = vpop.f32.mrb[0].mxu0
        %v5788 = vpop.f32.mrb[0].mxu0
        %v5789 = vadd.f32 %v5628, %v5788
        %v5790 = vpop.f32.mrb[0].mxu0
        %5791 = vmatprep.mubr.bf16.mxu0 %v5288
        %5792 = vmatmul.mubr.bf16.gmra.mrb[0].mxu0 %v5224
        %v5793 = vpop.f32.mrb[0].mxu0
        %v5794 = vadd.f32 %v5633, %v5793
        %v5795 = vpop.f32.mrb[0].mxu0
        %v5796 = vpop.f32.mrb[0].mxu0
        %v5797 = vadd.f32 %v5636, %v5796
        %v5798 = vpop.f32.mrb[0].mxu0
        %5799 = vmatprep.mubr.bf16.mxu0 %v5289
        %5800 = vmatmul.mubr.bf16.gmra.mrb[0].mxu0 %v5225
        %v5801 = vpop.f32.mrb[0].mxu0
        %v5802 = vadd.f32 %v5641, %v5801
        %v5803 = vpop.f32.mrb[0].mxu0
        %v5804 = vpop.f32.mrb[0].mxu0
        %v5805 = vadd.f32 %v5644, %v5804
        %v5806 = vpop.f32.mrb[0].mxu0
        %5807 = vmatprep.mubr.bf16.mxu0 %v5290
        %5808 = vmatmul.mubr.bf16.gmra.mrb[0].mxu0 %v5226
        %v5809 = vpop.f32.mrb[0].mxu0
        %v5810 = vadd.f32 %v5649, %v5809
        %v5811 = vpop.f32.mrb[0].mxu0
        %v5812 = vpop.f32.mrb[0].mxu0
        %v5813 = vadd.f32 %v5652, %v5812
        %v5814 = vpop.f32.mrb[0].mxu0
        %5815 = vmatprep.mubr.bf16.mxu0 %v5291
        %5816 = vmatmul.mubr.bf16.gmra.mrb[0].mxu0 %v5227
        %v5817 = vpop.f32.mrb[0].mxu0
        %v5818 = vadd.f32 %v5657, %v5817
        %v5819 = vpop.f32.mrb[0].mxu0
        %v5820 = vpop.f32.mrb[0].mxu0
        %v5821 = vadd.f32 %v5660, %v5820
        %v5822 = vpop.f32.mrb[0].mxu0
        %5823 = vmatprep.mubr.bf16.mxu0 %v5292
        %5824 = vmatmul.mubr.bf16.gmra.mrb[0].mxu0 %v5228
        %v5825 = vpop.f32.mrb[0].mxu0
        %v5826 = vadd.f32 %v5665, %v5825
        %v5827 = vpop.f32.mrb[0].mxu0
        %v5828 = vpop.f32.mrb[0].mxu0
        %v5829 = vadd.f32 %v5668, %v5828
        %v5830 = vpop.f32.mrb[0].mxu0
        %5831 = vmatprep.mubr.bf16.mxu0 %v5293
        %5832 = vmatmul.mubr.bf16.gmra.mrb[0].mxu0 %v5229
        %v5833 = vpop.f32.mrb[0].mxu0
        %v5834 = vadd.f32 %v5673, %v5833
        %v5835 = vpop.f32.mrb[0].mxu0
        %v5836 = vpop.f32.mrb[0].mxu0
        %v5837 = vadd.f32 %v5676, %v5836
        %v5838 = vpop.f32.mrb[0].mxu0
        %5839 = vmatprep.mubr.bf16.mxu0 %v5294
        %5840 = vmatmul.mubr.bf16.gmra.mrb[0].mxu0 %v5230
        %v5841 = vpop.f32.mrb[0].mxu0
        %v5842 = vadd.f32 %v5681, %v5841
        %v5843 = vpop.f32.mrb[0].mxu0
        %v5844 = vpop.f32.mrb[0].mxu0
        %v5845 = vadd.f32 %v5684, %v5844
        %v5846 = vpop.f32.mrb[0].mxu0
        %5847 = vmatprep.mubr.bf16.mxu0 %v5295
        %5848 = vmatmul.mubr.bf16.gmra.mrb[0].mxu0 %v5231
        %v5849 = vpop.f32.mrb[0].mxu0
        %v5850 = vadd.f32 %v5689, %v5849
        %v5851 = vpop.f32.mrb[0].mxu0
        %v5852 = vpop.f32.mrb[0].mxu0
        %v5853 = vadd.f32 %v5692, %v5852
        %v5854 = vpop.f32.mrb[0].mxu0
        %5855 = vmatprep.mubr.bf16.mxu0 %v5296
        %5856 = vmatmul.mubr.bf16.gmra.mrb[0].mxu0 %v5232
        %v5857 = vpop.f32.mrb[0].mxu0
        %v5858 = vadd.f32 %v5697, %v5857
        %v5859 = vpop.f32.mrb[0].mxu0
        %v5860 = vpop.f32.mrb[0].mxu0
        %v5861 = vadd.f32 %v5700, %v5860
        %v5862 = vpop.f32.mrb[0].mxu0
        %5863 = vmatprep.mubr.bf16.mxu0 %v5297
        %5864 = vmatmul.mubr.bf16.gmra.mrb[0].mxu0 %v5233
        %v5865 = vpop.f32.mrb[0].mxu0
        %v5866 = vadd.f32 %v5705, %v5865
        %v5867 = vpop.f32.mrb[0].mxu0
        %v5868 = vpop.f32.mrb[0].mxu0
        %v5869 = vadd.f32 %v5708, %v5868
        %v5870 = vpop.f32.mrb[0].mxu0
        %5871 = vmatprep.mubr.bf16.mxu0 %v5298
        %5872 = vmatmul.mubr.bf16.gmra.mrb[0].mxu0 %v5234
        %v5873 = vpop.f32.mrb[0].mxu0
        %v5874 = vadd.f32 %v5713, %v5873
        %v5875 = vpop.f32.mrb[0].mxu0
        %v5876 = vpop.f32.mrb[0].mxu0
        %v5877 = vadd.f32 %v5716, %v5876
        %v5878 = vpop.f32.mrb[0].mxu0
        %5879 = vmatprep.mubr.bf16.mxu0 %v5299
        %5880 = vmatmul.mubr.bf16.gmra.mrb[0].mxu0 %v5235
        %v5881 = vpop.f32.mrb[0].mxu0
        %v5882 = vadd.f32 %v5721, %v5881
        %v5883 = vpop.f32.mrb[0].mxu0
        %v5884 = vpop.f32.mrb[0].mxu0
        %v5885 = vadd.f32 %v5724, %v5884
        %v5886 = vpop.f32.mrb[0].mxu0
        %5887 = vmatprep.mubr.bf16.mxu0 %v5300
        %5888 = vmatmul.mubr.bf16.gmra.mrb[0].mxu0 %v5236
        %v5889 = vpop.f32.mrb[0].mxu0
        %v5890 = vadd.f32 %v5729, %v5889
        %v5891 = vpop.f32.mrb[0].mxu0
        %v5892 = vpop.f32.mrb[0].mxu0
        %v5893 = vadd.f32 %v5732, %v5892
        %v5894 = vpop.f32.mrb[0].mxu0
        %5895 = vdwg.mxu0
        %s5896 = scalar_lea.vmem %s233, 512
        %5897 = vst [vmem:[%s5896] sm:$0xff] %v5770
        %5898 = vst [vmem:[%s5896 + $0x8] sm:$0xff] %v5773
        %5899 = vst [vmem:[%s5896 + $0x10] sm:$0xff] %v5778
        %5900 = vst [vmem:[%s5896 + $0x18] sm:$0xff] %v5781
        %5901 = vst [vmem:[%s5896 + $0x20] sm:$0xff] %v5786
        %5902 = vst [vmem:[%s5896 + $0x28] sm:$0xff] %v5789
        %5903 = vst [vmem:[%s5896 + $0x30] sm:$0xff] %v5794
        %5904 = vst [vmem:[%s5896 + $0x38] sm:$0xff] %v5797
        %5905 = vst [vmem:[%s5896 + $0x40] sm:$0xff] %v5802
        %5906 = vst [vmem:[%s5896 + $0x48] sm:$0xff] %v5805
        %5907 = vst [vmem:[%s5896 + $0x50] sm:$0xff] %v5810
        %5908 = vst [vmem:[%s5896 + $0x58] sm:$0xff] %v5813
        %5909 = vst [vmem:[%s5896 + $0x60] sm:$0xff] %v5818
        %5910 = vst [vmem:[%s5896 + $0x68] sm:$0xff] %v5821
        %5911 = vst [vmem:[%s5896 + $0x70] sm:$0xff] %v5826
        %5912 = vst [vmem:[%s5896 + $0x78] sm:$0xff] %v5829
        %5913 = vst [vmem:[%s5896 + $0x80] sm:$0xff] %v5834
        %5914 = vst [vmem:[%s5896 + $0x88] sm:$0xff] %v5837
        %5915 = vst [vmem:[%s5896 + $0x90] sm:$0xff] %v5842
        %5916 = vst [vmem:[%s5896 + $0x98] sm:$0xff] %v5845
        %5917 = vst [vmem:[%s5896 + $0xa0] sm:$0xff] %v5850
        %5918 = vst [vmem:[%s5896 + $0xa8] sm:$0xff] %v5853
        %5919 = vst [vmem:[%s5896 + $0xb0] sm:$0xff] %v5858
        %5920 = vst [vmem:[%s5896 + $0xb8] sm:$0xff] %v5861
        %5921 = vst [vmem:[%s5896 + $0xc0] sm:$0xff] %v5866
        %5922 = vst [vmem:[%s5896 + $0xc8] sm:$0xff] %v5869
        %5923 = vst [vmem:[%s5896 + $0xd0] sm:$0xff] %v5874
        %5924 = vst [vmem:[%s5896 + $0xd8] sm:$0xff] %v5877
        %5925 = vst [vmem:[%s5896 + $0xe0] sm:$0xff] %v5882
        %5926 = vst [vmem:[%s5896 + $0xe8] sm:$0xff] %v5885
        %5927 = vst [vmem:[%s5896 + $0xf0] sm:$0xff] %v5890
        %5928 = vst [vmem:[%s5896 + $0xf8] sm:$0xff] %v5893
        %v5929 = vld [vmem:[%s676] sm:$0xf]
        %v5930 = vld [vmem:[%s676 + $0x4] sm:$0xf]
        %v5931 = vld [vmem:[%s676 + $0x8] sm:$0x1]
        %v5932 = vld [vmem:[%s676 + $0xc] sm:$0xf]
        %v5933 = vld [vmem:[%s676 + $0x10] sm:$0xf]
        %v5934 = vld [vmem:[%s676 + $0x14] sm:$0x1]
        %v5935 = vld [vmem:[%s676 + $0x18] sm:$0xf]
        %v5936 = vld [vmem:[%s676 + $0x1c] sm:$0xf]
        %v5937 = vld [vmem:[%s676 + $0x20] sm:$0x1]
        %v5938 = vld [vmem:[%s676 + $0x24] sm:$0xf]
        %v5939 = vld [vmem:[%s676 + $0x28] sm:$0xf]
        %v5940 = vld [vmem:[%s676 + $0x2c] sm:$0x1]
        %v5941 = vld [vmem:[%s676 + $0x30] sm:$0xf]
        %v5942 = vld [vmem:[%s676 + $0x34] sm:$0xf]
        %v5943 = vld [vmem:[%s676 + $0x38] sm:$0x1]
        %v5944 = vld [vmem:[%s676 + $0x3c] sm:$0xf]
        %v5945 = vld [vmem:[%s676 + $0x40] sm:$0xf]
        %v5946 = vld [vmem:[%s676 + $0x44] sm:$0x1]
        %v5947 = vld [vmem:[%s676 + $0x48] sm:$0xf]
        %v5948 = vld [vmem:[%s676 + $0x4c] sm:$0xf]
        %v5949 = vld [vmem:[%s676 + $0x50] sm:$0x1]
        %v5950 = vld [vmem:[%s676 + $0x54] sm:$0xf]
        %v5951 = vld [vmem:[%s676 + $0x58] sm:$0xf]
        %v5952 = vld [vmem:[%s676 + $0x5c] sm:$0x1]
        %v5953 = vld [vmem:[%s676 + $0x60] sm:$0xf]
        %v5954 = vld [vmem:[%s676 + $0x64] sm:$0xf]
        %v5955 = vld [vmem:[%s676 + $0x68] sm:$0x1]
        %v5956 = vld [vmem:[%s676 + $0x6c] sm:$0xf]
        %v5957 = vld [vmem:[%s676 + $0x70] sm:$0xf]
        %v5958 = vld [vmem:[%s676 + $0x74] sm:$0x1]
        %v5959 = vld [vmem:[%s676 + $0x78] sm:$0xf]
        %v5960 = vld [vmem:[%s676 + $0x7c] sm:$0xf]
        %v5961 = vld [vmem:[%s676 + $0x80] sm:$0x1]
        %v5962 = vld [vmem:[%s676 + $0x84] sm:$0xf]
        %v5963 = vld [vmem:[%s676 + $0x88] sm:$0xf]
        %v5964 = vld [vmem:[%s676 + $0x8c] sm:$0x1]
        %v5965 = vld [vmem:[%s676 + $0x90] sm:$0xf]
        %v5966 = vld [vmem:[%s676 + $0x94] sm:$0xf]
        %v5967 = vld [vmem:[%s676 + $0x98] sm:$0x1]
        %v5968 = vld [vmem:[%s676 + $0x9c] sm:$0xf]
        %v5969 = vld [vmem:[%s676 + $0xa0] sm:$0xf]
        %v5970 = vld [vmem:[%s676 + $0xa4] sm:$0x1]
        %v5971 = vld [vmem:[%s676 + $0xa8] sm:$0xf]
        %v5972 = vld [vmem:[%s676 + $0xac] sm:$0xf]
        %v5973 = vld [vmem:[%s676 + $0xb0] sm:$0x1]
        %v5974 = vld [vmem:[%s676 + $0xb4] sm:$0xf]
        %v5975 = vld [vmem:[%s676 + $0xb8] sm:$0xf]
        %v5976 = vld [vmem:[%s676 + $0xbc] sm:$0x1]
        %v5978 = vshrl.u32 %v5929, 16
        %v5980 = vrot.slane %v5978, 4
        %v5981 = vshll.u32 %v5929, 16
        %v5983 = vrot.slane %v5981, 5
        %v5984 = vor.u32 %v5980, %v5983
        %v5985 = vrot.slane %v5984, 4
        %v5987 = vshll.u32 %v5930, 16
        %v5989 = vrot.slane %v5987, 5
        %v5990 = vsel %vm291, %v5985, %v5989
        %v5991 = vshrl.u32 %v5930, 16
        %v5993 = vrot.slane %v5991, 4
        %v5994 = vor.u32 %v5993, %v5989
        %v5995 = vrot.slane %v5994, 4
        %v5997 = vshll.u32 %v5931, 16
        %v5999 = vrot.slane %v5997, 5
        %v6000 = vsel %vm291, %v5995, %v5999
        %v6002 = vshrl.u32 %v5932, 16
        %v6004 = vrot.slane %v6002, 4
        %v6005 = vshll.u32 %v5932, 16
        %v6007 = vrot.slane %v6005, 5
        %v6008 = vor.u32 %v6004, %v6007
        %v6009 = vrot.slane %v6008, 4
        %v6011 = vshll.u32 %v5933, 16
        %v6013 = vrot.slane %v6011, 5
        %v6014 = vsel %vm291, %v6009, %v6013
        %v6015 = vshrl.u32 %v5933, 16
        %v6017 = vrot.slane %v6015, 4
        %v6018 = vor.u32 %v6017, %v6013
        %v6019 = vrot.slane %v6018, 4
        %v6021 = vshll.u32 %v5934, 16
        %v6023 = vrot.slane %v6021, 5
        %v6024 = vsel %vm291, %v6019, %v6023
        %v6026 = vshrl.u32 %v5935, 16
        %v6028 = vrot.slane %v6026, 4
        %v6029 = vshll.u32 %v5935, 16
        %v6031 = vrot.slane %v6029, 5
        %v6032 = vor.u32 %v6028, %v6031
        %v6033 = vrot.slane %v6032, 4
        %v6035 = vshll.u32 %v5936, 16
        %v6037 = vrot.slane %v6035, 5
        %v6038 = vsel %vm291, %v6033, %v6037
        %v6039 = vshrl.u32 %v5936, 16
        %v6041 = vrot.slane %v6039, 4
        %v6042 = vor.u32 %v6041, %v6037
        %v6043 = vrot.slane %v6042, 4
        %v6045 = vshll.u32 %v5937, 16
        %v6047 = vrot.slane %v6045, 5
        %v6048 = vsel %vm291, %v6043, %v6047
        %v6050 = vshrl.u32 %v5938, 16
        %v6052 = vrot.slane %v6050, 4
        %v6053 = vshll.u32 %v5938, 16
        %v6055 = vrot.slane %v6053, 5
        %v6056 = vor.u32 %v6052, %v6055
        %v6057 = vrot.slane %v6056, 4
        %v6059 = vshll.u32 %v5939, 16
        %v6061 = vrot.slane %v6059, 5
        %v6062 = vsel %vm291, %v6057, %v6061
        %v6063 = vshrl.u32 %v5939, 16
        %v6065 = vrot.slane %v6063, 4
        %v6066 = vor.u32 %v6065, %v6061
        %v6067 = vrot.slane %v6066, 4
        %v6069 = vshll.u32 %v5940, 16
        %v6071 = vrot.slane %v6069, 5
        %v6072 = vsel %vm291, %v6067, %v6071
        %v6074 = vshrl.u32 %v5941, 16
        %v6076 = vrot.slane %v6074, 4
        %v6077 = vshll.u32 %v5941, 16
        %v6079 = vrot.slane %v6077, 5
        %v6080 = vor.u32 %v6076, %v6079
        %v6081 = vrot.slane %v6080, 4
        %v6083 = vshll.u32 %v5942, 16
        %v6085 = vrot.slane %v6083, 5
        %v6086 = vsel %vm291, %v6081, %v6085
        %v6087 = vshrl.u32 %v5942, 16
        %v6089 = vrot.slane %v6087, 4
        %v6090 = vor.u32 %v6089, %v6085
        %v6091 = vrot.slane %v6090, 4
        %v6093 = vshll.u32 %v5943, 16
        %v6095 = vrot.slane %v6093, 5
        %v6096 = vsel %vm291, %v6091, %v6095
        %v6098 = vshrl.u32 %v5944, 16
        %v6100 = vrot.slane %v6098, 4
        %v6101 = vshll.u32 %v5944, 16
        %v6103 = vrot.slane %v6101, 5
        %v6104 = vor.u32 %v6100, %v6103
        %v6105 = vrot.slane %v6104, 4
        %v6107 = vshll.u32 %v5945, 16
        %v6109 = vrot.slane %v6107, 5
        %v6110 = vsel %vm291, %v6105, %v6109
        %v6111 = vshrl.u32 %v5945, 16
        %v6113 = vrot.slane %v6111, 4
        %v6114 = vor.u32 %v6113, %v6109
        %v6115 = vrot.slane %v6114, 4
        %v6117 = vshll.u32 %v5946, 16
        %v6119 = vrot.slane %v6117, 5
        %v6120 = vsel %vm291, %v6115, %v6119
        %v6122 = vshrl.u32 %v5947, 16
        %v6124 = vrot.slane %v6122, 4
        %v6125 = vshll.u32 %v5947, 16
        %v6127 = vrot.slane %v6125, 5
        %v6128 = vor.u32 %v6124, %v6127
        %v6129 = vrot.slane %v6128, 4
        %v6131 = vshll.u32 %v5948, 16
        %v6133 = vrot.slane %v6131, 5
        %v6134 = vsel %vm291, %v6129, %v6133
        %v6135 = vshrl.u32 %v5948, 16
        %v6137 = vrot.slane %v6135, 4
        %v6138 = vor.u32 %v6137, %v6133
        %v6139 = vrot.slane %v6138, 4
        %v6141 = vshll.u32 %v5949, 16
        %v6143 = vrot.slane %v6141, 5
        %v6144 = vsel %vm291, %v6139, %v6143
        %v6146 = vshrl.u32 %v5950, 16
        %v6148 = vrot.slane %v6146, 4
        %v6149 = vshll.u32 %v5950, 16
        %v6151 = vrot.slane %v6149, 5
        %v6152 = vor.u32 %v6148, %v6151
        %v6153 = vrot.slane %v6152, 4
        %v6155 = vshll.u32 %v5951, 16
        %v6157 = vrot.slane %v6155, 5
        %v6158 = vsel %vm291, %v6153, %v6157
        %v6159 = vshrl.u32 %v5951, 16
        %v6161 = vrot.slane %v6159, 4
        %v6162 = vor.u32 %v6161, %v6157
        %v6163 = vrot.slane %v6162, 4
        %v6165 = vshll.u32 %v5952, 16
        %v6167 = vrot.slane %v6165, 5
        %v6168 = vsel %vm291, %v6163, %v6167
        %v6170 = vshrl.u32 %v5953, 16
        %v6172 = vrot.slane %v6170, 4
        %v6173 = vshll.u32 %v5953, 16
        %v6175 = vrot.slane %v6173, 5
        %v6176 = vor.u32 %v6172, %v6175
        %v6177 = vrot.slane %v6176, 4
        %v6179 = vshll.u32 %v5954, 16
        %v6181 = vrot.slane %v6179, 5
        %v6182 = vsel %vm291, %v6177, %v6181
        %v6183 = vshrl.u32 %v5954, 16
        %v6185 = vrot.slane %v6183, 4
        %v6186 = vor.u32 %v6185, %v6181
        %v6187 = vrot.slane %v6186, 4
        %v6189 = vshll.u32 %v5955, 16
        %v6191 = vrot.slane %v6189, 5
        %v6192 = vsel %vm291, %v6187, %v6191
        %v6194 = vshrl.u32 %v5956, 16
        %v6196 = vrot.slane %v6194, 4
        %v6197 = vshll.u32 %v5956, 16
        %v6199 = vrot.slane %v6197, 5
        %v6200 = vor.u32 %v6196, %v6199
        %v6201 = vrot.slane %v6200, 4
        %v6203 = vshll.u32 %v5957, 16
        %v6205 = vrot.slane %v6203, 5
        %v6206 = vsel %vm291, %v6201, %v6205
        %v6207 = vshrl.u32 %v5957, 16
        %v6209 = vrot.slane %v6207, 4
        %v6210 = vor.u32 %v6209, %v6205
        %v6211 = vrot.slane %v6210, 4
        %v6213 = vshll.u32 %v5958, 16
        %v6215 = vrot.slane %v6213, 5
        %v6216 = vsel %vm291, %v6211, %v6215
        %v6218 = vshrl.u32 %v5959, 16
        %v6220 = vrot.slane %v6218, 4
        %v6221 = vshll.u32 %v5959, 16
        %v6223 = vrot.slane %v6221, 5
        %v6224 = vor.u32 %v6220, %v6223
        %v6225 = vrot.slane %v6224, 4
        %v6227 = vshll.u32 %v5960, 16
        %v6229 = vrot.slane %v6227, 5
        %v6230 = vsel %vm291, %v6225, %v6229
        %v6231 = vshrl.u32 %v5960, 16
        %v6233 = vrot.slane %v6231, 4
        %v6234 = vor.u32 %v6233, %v6229
        %v6235 = vrot.slane %v6234, 4
        %v6237 = vshll.u32 %v5961, 16
        %v6239 = vrot.slane %v6237, 5
        %v6240 = vsel %vm291, %v6235, %v6239
        %v6242 = vshrl.u32 %v5962, 16
        %v6244 = vrot.slane %v6242, 4
        %v6245 = vshll.u32 %v5962, 16
        %v6247 = vrot.slane %v6245, 5
        %v6248 = vor.u32 %v6244, %v6247
        %v6249 = vrot.slane %v6248, 4
        %v6251 = vshll.u32 %v5963, 16
        %v6253 = vrot.slane %v6251, 5
        %v6254 = vsel %vm291, %v6249, %v6253
        %v6255 = vshrl.u32 %v5963, 16
        %v6257 = vrot.slane %v6255, 4
        %v6258 = vor.u32 %v6257, %v6253
        %v6259 = vrot.slane %v6258, 4
        %v6261 = vshll.u32 %v5964, 16
        %v6263 = vrot.slane %v6261, 5
        %v6264 = vsel %vm291, %v6259, %v6263
        %v6266 = vshrl.u32 %v5965, 16
        %v6268 = vrot.slane %v6266, 4
        %v6269 = vshll.u32 %v5965, 16
        %v6271 = vrot.slane %v6269, 5
        %v6272 = vor.u32 %v6268, %v6271
        %v6273 = vrot.slane %v6272, 4
        %v6275 = vshll.u32 %v5966, 16
        %v6277 = vrot.slane %v6275, 5
        %v6278 = vsel %vm291, %v6273, %v6277
        %v6279 = vshrl.u32 %v5966, 16
        %v6281 = vrot.slane %v6279, 4
        %v6282 = vor.u32 %v6281, %v6277
        %v6283 = vrot.slane %v6282, 4
        %v6285 = vshll.u32 %v5967, 16
        %v6287 = vrot.slane %v6285, 5
        %v6288 = vsel %vm291, %v6283, %v6287
        %v6290 = vshrl.u32 %v5968, 16
        %v6292 = vrot.slane %v6290, 4
        %v6293 = vshll.u32 %v5968, 16
        %v6295 = vrot.slane %v6293, 5
        %v6296 = vor.u32 %v6292, %v6295
        %v6297 = vrot.slane %v6296, 4
        %v6299 = vshll.u32 %v5969, 16
        %v6301 = vrot.slane %v6299, 5
        %v6302 = vsel %vm291, %v6297, %v6301
        %v6303 = vshrl.u32 %v5969, 16
        %v6305 = vrot.slane %v6303, 4
        %v6306 = vor.u32 %v6305, %v6301
        %v6307 = vrot.slane %v6306, 4
        %v6309 = vshll.u32 %v5970, 16
        %v6311 = vrot.slane %v6309, 5
        %v6312 = vsel %vm291, %v6307, %v6311
        %v6314 = vshrl.u32 %v5971, 16
        %v6316 = vrot.slane %v6314, 4
        %v6317 = vshll.u32 %v5971, 16
        %v6319 = vrot.slane %v6317, 5
        %v6320 = vor.u32 %v6316, %v6319
        %v6321 = vrot.slane %v6320, 4
        %v6323 = vshll.u32 %v5972, 16
        %v6325 = vrot.slane %v6323, 5
        %v6326 = vsel %vm291, %v6321, %v6325
        %v6327 = vshrl.u32 %v5972, 16
        %v6329 = vrot.slane %v6327, 4
        %v6330 = vor.u32 %v6329, %v6325
        %v6331 = vrot.slane %v6330, 4
        %v6333 = vshll.u32 %v5973, 16
        %v6335 = vrot.slane %v6333, 5
        %v6336 = vsel %vm291, %v6331, %v6335
        %v6338 = vshrl.u32 %v5974, 16
        %v6340 = vrot.slane %v6338, 4
        %v6341 = vshll.u32 %v5974, 16
        %v6343 = vrot.slane %v6341, 5
        %v6344 = vor.u32 %v6340, %v6343
        %v6345 = vrot.slane %v6344, 4
        %v6347 = vshll.u32 %v5975, 16
        %v6349 = vrot.slane %v6347, 5
        %v6350 = vsel %vm291, %v6345, %v6349
        %v6351 = vshrl.u32 %v5975, 16
        %v6353 = vrot.slane %v6351, 4
        %v6354 = vor.u32 %v6353, %v6349
        %v6355 = vrot.slane %v6354, 4
        %v6357 = vshll.u32 %v5976, 16
        %v6359 = vrot.slane %v6357, 5
        %v6360 = vsel %vm291, %v6355, %v6359
        %v6361 = vld [vmem:[%s676] sm:$0xe]
        %v6362 = vld [vmem:[%s676 + $0xc] sm:$0xe]
        %v6363 = vld [vmem:[%s676 + $0x18] sm:$0xe]
        %v6364 = vld [vmem:[%s676 + $0x24] sm:$0xe]
        %v6365 = vld [vmem:[%s676 + $0x30] sm:$0xe]
        %v6366 = vld [vmem:[%s676 + $0x3c] sm:$0xe]
        %v6367 = vld [vmem:[%s676 + $0x48] sm:$0xe]
        %v6368 = vld [vmem:[%s676 + $0x54] sm:$0xe]
        %v6369 = vld [vmem:[%s676 + $0x60] sm:$0xe]
        %v6370 = vld [vmem:[%s676 + $0x6c] sm:$0xe]
        %v6371 = vld [vmem:[%s676 + $0x78] sm:$0xe]
        %v6372 = vld [vmem:[%s676 + $0x84] sm:$0xe]
        %v6373 = vld [vmem:[%s676 + $0x90] sm:$0xe]
        %v6374 = vld [vmem:[%s676 + $0x9c] sm:$0xe]
        %v6375 = vld [vmem:[%s676 + $0xa8] sm:$0xe]
        %v6376 = vld [vmem:[%s676 + $0xb4] sm:$0xe]
        %v6425 = vrot.slane %v6361, 5
        %v6426 = vrot.slane %v6425, 4
        %v6427 = vrot.slane %v5930, 5
        %v6428 = vsel %vm2543, %v6426, %v6427
        %v6429 = vrot.slane %v6427, 4
        %v6430 = vrot.slane %v5931, 5
        %v6431 = vsel %vm2543, %v6429, %v6430
        %v6432 = vrot.slane %v6362, 5
        %v6433 = vrot.slane %v6432, 4
        %v6434 = vrot.slane %v5933, 5
        %v6435 = vsel %vm2543, %v6433, %v6434
        %v6436 = vrot.slane %v6434, 4
        %v6437 = vrot.slane %v5934, 5
        %v6438 = vsel %vm2543, %v6436, %v6437
        %v6439 = vrot.slane %v6363, 5
        %v6440 = vrot.slane %v6439, 4
        %v6441 = vrot.slane %v5936, 5
        %v6442 = vsel %vm2543, %v6440, %v6441
        %v6443 = vrot.slane %v6441, 4
        %v6444 = vrot.slane %v5937, 5
        %v6445 = vsel %vm2543, %v6443, %v6444
        %v6446 = vrot.slane %v6364, 5
        %v6447 = vrot.slane %v6446, 4
        %v6448 = vrot.slane %v5939, 5
        %v6449 = vsel %vm2543, %v6447, %v6448
        %v6450 = vrot.slane %v6448, 4
        %v6451 = vrot.slane %v5940, 5
        %v6452 = vsel %vm2543, %v6450, %v6451
        %v6453 = vrot.slane %v6365, 5
        %v6454 = vrot.slane %v6453, 4
        %v6455 = vrot.slane %v5942, 5
        %v6456 = vsel %vm2543, %v6454, %v6455
        %v6457 = vrot.slane %v6455, 4
        %v6458 = vrot.slane %v5943, 5
        %v6459 = vsel %vm2543, %v6457, %v6458
        %v6460 = vrot.slane %v6366, 5
        %v6461 = vrot.slane %v6460, 4
        %v6462 = vrot.slane %v5945, 5
        %v6463 = vsel %vm2543, %v6461, %v6462
        %v6464 = vrot.slane %v6462, 4
        %v6465 = vrot.slane %v5946, 5
        %v6466 = vsel %vm2543, %v6464, %v6465
        %v6467 = vrot.slane %v6367, 5
        %v6468 = vrot.slane %v6467, 4
        %v6469 = vrot.slane %v5948, 5
        %v6470 = vsel %vm2543, %v6468, %v6469
        %v6471 = vrot.slane %v6469, 4
        %v6472 = vrot.slane %v5949, 5
        %v6473 = vsel %vm2543, %v6471, %v6472
        %v6474 = vrot.slane %v6368, 5
        %v6475 = vrot.slane %v6474, 4
        %v6476 = vrot.slane %v5951, 5
        %v6477 = vsel %vm2543, %v6475, %v6476
        %v6478 = vrot.slane %v6476, 4
        %v6479 = vrot.slane %v5952, 5
        %v6480 = vsel %vm2543, %v6478, %v6479
        %v6481 = vrot.slane %v6369, 5
        %v6482 = vrot.slane %v6481, 4
        %v6483 = vrot.slane %v5954, 5
        %v6484 = vsel %vm2543, %v6482, %v6483
        %v6485 = vrot.slane %v6483, 4
        %v6486 = vrot.slane %v5955, 5
        %v6487 = vsel %vm2543, %v6485, %v6486
        %v6488 = vrot.slane %v6370, 5
        %v6489 = vrot.slane %v6488, 4
        %v6490 = vrot.slane %v5957, 5
        %v6491 = vsel %vm2543, %v6489, %v6490
        %v6492 = vrot.slane %v6490, 4
        %v6493 = vrot.slane %v5958, 5
        %v6494 = vsel %vm2543, %v6492, %v6493
        %v6495 = vrot.slane %v6371, 5
        %v6496 = vrot.slane %v6495, 4
        %v6497 = vrot.slane %v5960, 5
        %v6498 = vsel %vm2543, %v6496, %v6497
        %v6499 = vrot.slane %v6497, 4
        %v6500 = vrot.slane %v5961, 5
        %v6501 = vsel %vm2543, %v6499, %v6500
        %v6502 = vrot.slane %v6372, 5
        %v6503 = vrot.slane %v6502, 4
        %v6504 = vrot.slane %v5963, 5
        %v6505 = vsel %vm2543, %v6503, %v6504
        %v6506 = vrot.slane %v6504, 4
        %v6507 = vrot.slane %v5964, 5
        %v6508 = vsel %vm2543, %v6506, %v6507
        %v6509 = vrot.slane %v6373, 5
        %v6510 = vrot.slane %v6509, 4
        %v6511 = vrot.slane %v5966, 5
        %v6512 = vsel %vm2543, %v6510, %v6511
        %v6513 = vrot.slane %v6511, 4
        %v6514 = vrot.slane %v5967, 5
        %v6515 = vsel %vm2543, %v6513, %v6514
        %v6516 = vrot.slane %v6374, 5
        %v6517 = vrot.slane %v6516, 4
        %v6518 = vrot.slane %v5969, 5
        %v6519 = vsel %vm2543, %v6517, %v6518
        %v6520 = vrot.slane %v6518, 4
        %v6521 = vrot.slane %v5970, 5
        %v6522 = vsel %vm2543, %v6520, %v6521
        %v6523 = vrot.slane %v6375, 5
        %v6524 = vrot.slane %v6523, 4
        %v6525 = vrot.slane %v5972, 5
        %v6526 = vsel %vm2543, %v6524, %v6525
        %v6527 = vrot.slane %v6525, 4
        %v6528 = vrot.slane %v5973, 5
        %v6529 = vsel %vm2543, %v6527, %v6528
        %v6530 = vrot.slane %v6376, 5
        %v6531 = vrot.slane %v6530, 4
        %v6532 = vrot.slane %v5975, 5
        %v6533 = vsel %vm2543, %v6531, %v6532
        %v6534 = vrot.slane %v6532, 4
        %v6535 = vrot.slane %v5976, 5
        %v6536 = vsel %vm2543, %v6534, %v6535
        %v6537 = vld [vmem:[%s4564] sm:$0xf]
        %v6538 = vld [vmem:[%s4564 + $0x4] sm:$0xf]
        %v6539 = vld [vmem:[%s4564 + $0x8] sm:$0x1]
        %v6540 = vld [vmem:[%s4564 + $0xc] sm:$0xf]
        %v6541 = vld [vmem:[%s4564 + $0x10] sm:$0xf]
        %v6542 = vld [vmem:[%s4564 + $0x14] sm:$0x1]
        %v6543 = vld [vmem:[%s4564 + $0x18] sm:$0xf]
        %v6544 = vld [vmem:[%s4564 + $0x1c] sm:$0xf]
        %v6545 = vld [vmem:[%s4564 + $0x20] sm:$0x1]
        %v6546 = vld [vmem:[%s4564 + $0x24] sm:$0xf]
        %v6547 = vld [vmem:[%s4564 + $0x28] sm:$0xf]
        %v6548 = vld [vmem:[%s4564 + $0x2c] sm:$0x1]
        %v6549 = vld [vmem:[%s4564 + $0x30] sm:$0xf]
        %v6550 = vld [vmem:[%s4564 + $0x34] sm:$0xf]
        %v6551 = vld [vmem:[%s4564 + $0x38] sm:$0x1]
        %v6552 = vld [vmem:[%s4564 + $0x3c] sm:$0xf]
        %v6553 = vld [vmem:[%s4564 + $0x40] sm:$0xf]
        %v6554 = vld [vmem:[%s4564 + $0x44] sm:$0x1]
        %v6555 = vld [vmem:[%s4564 + $0x48] sm:$0xf]
        %v6556 = vld [vmem:[%s4564 + $0x4c] sm:$0xf]
        %v6557 = vld [vmem:[%s4564 + $0x50] sm:$0x1]
        %v6558 = vld [vmem:[%s4564 + $0x54] sm:$0xf]
        %v6559 = vld [vmem:[%s4564 + $0x58] sm:$0xf]
        %v6560 = vld [vmem:[%s4564 + $0x5c] sm:$0x1]
        %v6561 = vld [vmem:[%s4564 + $0x60] sm:$0xf]
        %v6562 = vld [vmem:[%s4564 + $0x64] sm:$0xf]
        %v6563 = vld [vmem:[%s4564 + $0x68] sm:$0x1]
        %v6564 = vld [vmem:[%s4564 + $0x6c] sm:$0xf]
        %v6565 = vld [vmem:[%s4564 + $0x70] sm:$0xf]
        %v6566 = vld [vmem:[%s4564 + $0x74] sm:$0x1]
        %v6567 = vld [vmem:[%s4564 + $0x78] sm:$0xf]
        %v6568 = vld [vmem:[%s4564 + $0x7c] sm:$0xf]
        %v6569 = vld [vmem:[%s4564 + $0x80] sm:$0x1]
        %v6570 = vld [vmem:[%s4564 + $0x84] sm:$0xf]
        %v6571 = vld [vmem:[%s4564 + $0x88] sm:$0xf]
        %v6572 = vld [vmem:[%s4564 + $0x8c] sm:$0x1]
        %v6573 = vld [vmem:[%s4564 + $0x90] sm:$0xf]
        %v6574 = vld [vmem:[%s4564 + $0x94] sm:$0xf]
        %v6575 = vld [vmem:[%s4564 + $0x98] sm:$0x1]
        %v6576 = vld [vmem:[%s4564 + $0x9c] sm:$0xf]
        %v6577 = vld [vmem:[%s4564 + $0xa0] sm:$0xf]
        %v6578 = vld [vmem:[%s4564 + $0xa4] sm:$0x1]
        %v6579 = vld [vmem:[%s4564 + $0xa8] sm:$0xf]
        %v6580 = vld [vmem:[%s4564 + $0xac] sm:$0xf]
        %v6581 = vld [vmem:[%s4564 + $0xb0] sm:$0x1]
        %v6582 = vld [vmem:[%s4564 + $0xb4] sm:$0xf]
        %v6583 = vld [vmem:[%s4564 + $0xb8] sm:$0xf]
        %v6584 = vld [vmem:[%s4564 + $0xbc] sm:$0x1]
        %v6586 = vshrl.u32 %v6537, 16
        %v6588 = vrot.slane %v6586, 4
        %v6589 = vshll.u32 %v6537, 16
        %v6591 = vrot.slane %v6589, 5
        %v6592 = vor.u32 %v6588, %v6591
        %v6593 = vrot.slane %v6592, 4
        %v6595 = vshll.u32 %v6538, 16
        %v6597 = vrot.slane %v6595, 5
        %v6598 = vsel %vm291, %v6593, %v6597
        %v6599 = vshrl.u32 %v6538, 16
        %v6601 = vrot.slane %v6599, 4
        %v6602 = vor.u32 %v6601, %v6597
        %v6603 = vrot.slane %v6602, 4
        %v6605 = vshll.u32 %v6539, 16
        %v6607 = vrot.slane %v6605, 5
        %v6608 = vsel %vm291, %v6603, %v6607
        %v6610 = vshrl.u32 %v6540, 16
        %v6612 = vrot.slane %v6610, 4
        %v6613 = vshll.u32 %v6540, 16
        %v6615 = vrot.slane %v6613, 5
        %v6616 = vor.u32 %v6612, %v6615
        %v6617 = vrot.slane %v6616, 4
        %v6619 = vshll.u32 %v6541, 16
        %v6621 = vrot.slane %v6619, 5
        %v6622 = vsel %vm291, %v6617, %v6621
        %v6623 = vshrl.u32 %v6541, 16
        %v6625 = vrot.slane %v6623, 4
        %v6626 = vor.u32 %v6625, %v6621
        %v6627 = vrot.slane %v6626, 4
        %v6629 = vshll.u32 %v6542, 16
        %v6631 = vrot.slane %v6629, 5
        %v6632 = vsel %vm291, %v6627, %v6631
        %v6634 = vshrl.u32 %v6543, 16
        %v6636 = vrot.slane %v6634, 4
        %v6637 = vshll.u32 %v6543, 16
        %v6639 = vrot.slane %v6637, 5
        %v6640 = vor.u32 %v6636, %v6639
        %v6641 = vrot.slane %v6640, 4
        %v6643 = vshll.u32 %v6544, 16
        %v6645 = vrot.slane %v6643, 5
        %v6646 = vsel %vm291, %v6641, %v6645
        %v6647 = vshrl.u32 %v6544, 16
        %v6649 = vrot.slane %v6647, 4
        %v6650 = vor.u32 %v6649, %v6645
        %v6651 = vrot.slane %v6650, 4
        %v6653 = vshll.u32 %v6545, 16
        %v6655 = vrot.slane %v6653, 5
        %v6656 = vsel %vm291, %v6651, %v6655
        %v6658 = vshrl.u32 %v6546, 16
        %v6660 = vrot.slane %v6658, 4
        %v6661 = vshll.u32 %v6546, 16
        %v6663 = vrot.slane %v6661, 5
        %v6664 = vor.u32 %v6660, %v6663
        %v6665 = vrot.slane %v6664, 4
        %v6667 = vshll.u32 %v6547, 16
        %v6669 = vrot.slane %v6667, 5
        %v6670 = vsel %vm291, %v6665, %v6669
        %v6671 = vshrl.u32 %v6547, 16
        %v6673 = vrot.slane %v6671, 4
        %v6674 = vor.u32 %v6673, %v6669
        %v6675 = vrot.slane %v6674, 4
        %v6677 = vshll.u32 %v6548, 16
        %v6679 = vrot.slane %v6677, 5
        %v6680 = vsel %vm291, %v6675, %v6679
        %v6682 = vshrl.u32 %v6549, 16
        %v6684 = vrot.slane %v6682, 4
        %v6685 = vshll.u32 %v6549, 16
        %v6687 = vrot.slane %v6685, 5
        %v6688 = vor.u32 %v6684, %v6687
        %v6689 = vrot.slane %v6688, 4
        %v6691 = vshll.u32 %v6550, 16
        %v6693 = vrot.slane %v6691, 5
        %v6694 = vsel %vm291, %v6689, %v6693
        %v6695 = vshrl.u32 %v6550, 16
        %v6697 = vrot.slane %v6695, 4
        %v6698 = vor.u32 %v6697, %v6693
        %v6699 = vrot.slane %v6698, 4
        %v6701 = vshll.u32 %v6551, 16
        %v6703 = vrot.slane %v6701, 5
        %v6704 = vsel %vm291, %v6699, %v6703
        %v6706 = vshrl.u32 %v6552, 16
        %v6708 = vrot.slane %v6706, 4
        %v6709 = vshll.u32 %v6552, 16
        %v6711 = vrot.slane %v6709, 5
        %v6712 = vor.u32 %v6708, %v6711
        %v6713 = vrot.slane %v6712, 4
        %v6715 = vshll.u32 %v6553, 16
        %v6717 = vrot.slane %v6715, 5
        %v6718 = vsel %vm291, %v6713, %v6717
        %v6719 = vshrl.u32 %v6553, 16
        %v6721 = vrot.slane %v6719, 4
        %v6722 = vor.u32 %v6721, %v6717
        %v6723 = vrot.slane %v6722, 4
        %v6725 = vshll.u32 %v6554, 16
        %v6727 = vrot.slane %v6725, 5
        %v6728 = vsel %vm291, %v6723, %v6727
        %v6730 = vshrl.u32 %v6555, 16
        %v6732 = vrot.slane %v6730, 4
        %v6733 = vshll.u32 %v6555, 16
        %v6735 = vrot.slane %v6733, 5
        %v6736 = vor.u32 %v6732, %v6735
        %v6737 = vrot.slane %v6736, 4
        %v6739 = vshll.u32 %v6556, 16
        %v6741 = vrot.slane %v6739, 5
        %v6742 = vsel %vm291, %v6737, %v6741
        %v6743 = vshrl.u32 %v6556, 16
        %v6745 = vrot.slane %v6743, 4
        %v6746 = vor.u32 %v6745, %v6741
        %v6747 = vrot.slane %v6746, 4
        %v6749 = vshll.u32 %v6557, 16
        %v6751 = vrot.slane %v6749, 5
        %v6752 = vsel %vm291, %v6747, %v6751
        %v6754 = vshrl.u32 %v6558, 16
        %v6756 = vrot.slane %v6754, 4
        %v6757 = vshll.u32 %v6558, 16
        %v6759 = vrot.slane %v6757, 5
        %v6760 = vor.u32 %v6756, %v6759
        %v6761 = vrot.slane %v6760, 4
        %v6763 = vshll.u32 %v6559, 16
        %v6765 = vrot.slane %v6763, 5
        %v6766 = vsel %vm291, %v6761, %v6765
        %v6767 = vshrl.u32 %v6559, 16
        %v6769 = vrot.slane %v6767, 4
        %v6770 = vor.u32 %v6769, %v6765
        %v6771 = vrot.slane %v6770, 4
        %v6773 = vshll.u32 %v6560, 16
        %v6775 = vrot.slane %v6773, 5
        %v6776 = vsel %vm291, %v6771, %v6775
        %v6778 = vshrl.u32 %v6561, 16
        %v6780 = vrot.slane %v6778, 4
        %v6781 = vshll.u32 %v6561, 16
        %v6783 = vrot.slane %v6781, 5
        %v6784 = vor.u32 %v6780, %v6783
        %v6785 = vrot.slane %v6784, 4
        %v6787 = vshll.u32 %v6562, 16
        %v6789 = vrot.slane %v6787, 5
        %v6790 = vsel %vm291, %v6785, %v6789
        %v6791 = vshrl.u32 %v6562, 16
        %v6793 = vrot.slane %v6791, 4
        %v6794 = vor.u32 %v6793, %v6789
        %v6795 = vrot.slane %v6794, 4
        %v6797 = vshll.u32 %v6563, 16
        %v6799 = vrot.slane %v6797, 5
        %v6800 = vsel %vm291, %v6795, %v6799
        %v6802 = vshrl.u32 %v6564, 16
        %v6804 = vrot.slane %v6802, 4
        %v6805 = vshll.u32 %v6564, 16
        %v6807 = vrot.slane %v6805, 5
        %v6808 = vor.u32 %v6804, %v6807
        %v6809 = vrot.slane %v6808, 4
        %v6811 = vshll.u32 %v6565, 16
        %v6813 = vrot.slane %v6811, 5
        %v6814 = vsel %vm291, %v6809, %v6813
        %v6815 = vshrl.u32 %v6565, 16
        %v6817 = vrot.slane %v6815, 4
        %v6818 = vor.u32 %v6817, %v6813
        %v6819 = vrot.slane %v6818, 4
        %v6821 = vshll.u32 %v6566, 16
        %v6823 = vrot.slane %v6821, 5
        %v6824 = vsel %vm291, %v6819, %v6823
        %v6826 = vshrl.u32 %v6567, 16
        %v6828 = vrot.slane %v6826, 4
        %v6829 = vshll.u32 %v6567, 16
        %v6831 = vrot.slane %v6829, 5
        %v6832 = vor.u32 %v6828, %v6831
        %v6833 = vrot.slane %v6832, 4
        %v6835 = vshll.u32 %v6568, 16
        %v6837 = vrot.slane %v6835, 5
        %v6838 = vsel %vm291, %v6833, %v6837
        %v6839 = vshrl.u32 %v6568, 16
        %v6841 = vrot.slane %v6839, 4
        %v6842 = vor.u32 %v6841, %v6837
        %v6843 = vrot.slane %v6842, 4
        %v6845 = vshll.u32 %v6569, 16
        %v6847 = vrot.slane %v6845, 5
        %v6848 = vsel %vm291, %v6843, %v6847
        %v6850 = vshrl.u32 %v6570, 16
        %v6852 = vrot.slane %v6850, 4
        %v6853 = vshll.u32 %v6570, 16
        %v6855 = vrot.slane %v6853, 5
        %v6856 = vor.u32 %v6852, %v6855
        %v6857 = vrot.slane %v6856, 4
        %v6859 = vshll.u32 %v6571, 16
        %v6861 = vrot.slane %v6859, 5
        %v6862 = vsel %vm291, %v6857, %v6861
        %v6863 = vshrl.u32 %v6571, 16
        %v6865 = vrot.slane %v6863, 4
        %v6866 = vor.u32 %v6865, %v6861
        %v6867 = vrot.slane %v6866, 4
        %v6869 = vshll.u32 %v6572, 16
        %v6871 = vrot.slane %v6869, 5
        %v6872 = vsel %vm291, %v6867, %v6871
        %v6874 = vshrl.u32 %v6573, 16
        %v6876 = vrot.slane %v6874, 4
        %v6877 = vshll.u32 %v6573, 16
        %v6879 = vrot.slane %v6877, 5
        %v6880 = vor.u32 %v6876, %v6879
        %v6881 = vrot.slane %v6880, 4
        %v6883 = vshll.u32 %v6574, 16
        %v6885 = vrot.slane %v6883, 5
        %v6886 = vsel %vm291, %v6881, %v6885
        %v6887 = vshrl.u32 %v6574, 16
        %v6889 = vrot.slane %v6887, 4
        %v6890 = vor.u32 %v6889, %v6885
        %v6891 = vrot.slane %v6890, 4
        %v6893 = vshll.u32 %v6575, 16
        %v6895 = vrot.slane %v6893, 5
        %v6896 = vsel %vm291, %v6891, %v6895
        %v6898 = vshrl.u32 %v6576, 16
        %v6900 = vrot.slane %v6898, 4
        %v6901 = vshll.u32 %v6576, 16
        %v6903 = vrot.slane %v6901, 5
        %v6904 = vor.u32 %v6900, %v6903
        %v6905 = vrot.slane %v6904, 4
        %v6907 = vshll.u32 %v6577, 16
        %v6909 = vrot.slane %v6907, 5
        %v6910 = vsel %vm291, %v6905, %v6909
        %v6911 = vshrl.u32 %v6577, 16
        %v6913 = vrot.slane %v6911, 4
        %v6914 = vor.u32 %v6913, %v6909
        %v6915 = vrot.slane %v6914, 4
        %v6917 = vshll.u32 %v6578, 16
        %v6919 = vrot.slane %v6917, 5
        %v6920 = vsel %vm291, %v6915, %v6919
        %v6922 = vshrl.u32 %v6579, 16
        %v6924 = vrot.slane %v6922, 4
        %v6925 = vshll.u32 %v6579, 16
        %v6927 = vrot.slane %v6925, 5
        %v6928 = vor.u32 %v6924, %v6927
        %v6929 = vrot.slane %v6928, 4
        %v6931 = vshll.u32 %v6580, 16
        %v6933 = vrot.slane %v6931, 5
        %v6934 = vsel %vm291, %v6929, %v6933
        %v6935 = vshrl.u32 %v6580, 16
        %v6937 = vrot.slane %v6935, 4
        %v6938 = vor.u32 %v6937, %v6933
        %v6939 = vrot.slane %v6938, 4
        %v6941 = vshll.u32 %v6581, 16
        %v6943 = vrot.slane %v6941, 5
        %v6944 = vsel %vm291, %v6939, %v6943
        %v6946 = vshrl.u32 %v6582, 16
        %v6948 = vrot.slane %v6946, 4
        %v6949 = vshll.u32 %v6582, 16
        %v6951 = vrot.slane %v6949, 5
        %v6952 = vor.u32 %v6948, %v6951
        %v6953 = vrot.slane %v6952, 4
        %v6955 = vshll.u32 %v6583, 16
        %v6957 = vrot.slane %v6955, 5
        %v6958 = vsel %vm291, %v6953, %v6957
        %v6959 = vshrl.u32 %v6583, 16
        %v6961 = vrot.slane %v6959, 4
        %v6962 = vor.u32 %v6961, %v6957
        %v6963 = vrot.slane %v6962, 4
        %v6965 = vshll.u32 %v6584, 16
        %v6967 = vrot.slane %v6965, 5
        %v6968 = vsel %vm291, %v6963, %v6967
        %v6969 = vld [vmem:[%s4564] sm:$0xe]
        %v6970 = vld [vmem:[%s4564 + $0xc] sm:$0xe]
        %v6971 = vld [vmem:[%s4564 + $0x18] sm:$0xe]
        %v6972 = vld [vmem:[%s4564 + $0x24] sm:$0xe]
        %v6973 = vld [vmem:[%s4564 + $0x30] sm:$0xe]
        %v6974 = vld [vmem:[%s4564 + $0x3c] sm:$0xe]
        %v6975 = vld [vmem:[%s4564 + $0x48] sm:$0xe]
        %v6976 = vld [vmem:[%s4564 + $0x54] sm:$0xe]
        %v6977 = vld [vmem:[%s4564 + $0x60] sm:$0xe]
        %v6978 = vld [vmem:[%s4564 + $0x6c] sm:$0xe]
        %v6979 = vld [vmem:[%s4564 + $0x78] sm:$0xe]
        %v6980 = vld [vmem:[%s4564 + $0x84] sm:$0xe]
        %v6981 = vld [vmem:[%s4564 + $0x90] sm:$0xe]
        %v6982 = vld [vmem:[%s4564 + $0x9c] sm:$0xe]
        %v6983 = vld [vmem:[%s4564 + $0xa8] sm:$0xe]
        %v6984 = vld [vmem:[%s4564 + $0xb4] sm:$0xe]
        %v7033 = vrot.slane %v6969, 5
        %v7034 = vrot.slane %v7033, 4
        %v7035 = vrot.slane %v6538, 5
        %v7036 = vsel %vm2543, %v7034, %v7035
        %v7037 = vrot.slane %v7035, 4
        %v7038 = vrot.slane %v6539, 5
        %v7039 = vsel %vm2543, %v7037, %v7038
        %v7040 = vrot.slane %v6970, 5
        %v7041 = vrot.slane %v7040, 4
        %v7042 = vrot.slane %v6541, 5
        %v7043 = vsel %vm2543, %v7041, %v7042
        %v7044 = vrot.slane %v7042, 4
        %v7045 = vrot.slane %v6542, 5
        %v7046 = vsel %vm2543, %v7044, %v7045
        %v7047 = vrot.slane %v6971, 5
        %v7048 = vrot.slane %v7047, 4
        %v7049 = vrot.slane %v6544, 5
        %v7050 = vsel %vm2543, %v7048, %v7049
        %v7051 = vrot.slane %v7049, 4
        %v7052 = vrot.slane %v6545, 5
        %v7053 = vsel %vm2543, %v7051, %v7052
        %v7054 = vrot.slane %v6972, 5
        %v7055 = vrot.slane %v7054, 4
        %v7056 = vrot.slane %v6547, 5
        %v7057 = vsel %vm2543, %v7055, %v7056
        %v7058 = vrot.slane %v7056, 4
        %v7059 = vrot.slane %v6548, 5
        %v7060 = vsel %vm2543, %v7058, %v7059
        %v7061 = vrot.slane %v6973, 5
        %v7062 = vrot.slane %v7061, 4
        %v7063 = vrot.slane %v6550, 5
        %v7064 = vsel %vm2543, %v7062, %v7063
        %v7065 = vrot.slane %v7063, 4
        %v7066 = vrot.slane %v6551, 5
        %v7067 = vsel %vm2543, %v7065, %v7066
        %v7068 = vrot.slane %v6974, 5
        %v7069 = vrot.slane %v7068, 4
        %v7070 = vrot.slane %v6553, 5
        %v7071 = vsel %vm2543, %v7069, %v7070
        %v7072 = vrot.slane %v7070, 4
        %v7073 = vrot.slane %v6554, 5
        %v7074 = vsel %vm2543, %v7072, %v7073
        %v7075 = vrot.slane %v6975, 5
        %v7076 = vrot.slane %v7075, 4
        %v7077 = vrot.slane %v6556, 5
        %v7078 = vsel %vm2543, %v7076, %v7077
        %v7079 = vrot.slane %v7077, 4
        %v7080 = vrot.slane %v6557, 5
        %v7081 = vsel %vm2543, %v7079, %v7080
        %v7082 = vrot.slane %v6976, 5
        %v7083 = vrot.slane %v7082, 4
        %v7084 = vrot.slane %v6559, 5
        %v7085 = vsel %vm2543, %v7083, %v7084
        %v7086 = vrot.slane %v7084, 4
        %v7087 = vrot.slane %v6560, 5
        %v7088 = vsel %vm2543, %v7086, %v7087
        %v7089 = vrot.slane %v6977, 5
        %v7090 = vrot.slane %v7089, 4
        %v7091 = vrot.slane %v6562, 5
        %v7092 = vsel %vm2543, %v7090, %v7091
        %v7093 = vrot.slane %v7091, 4
        %v7094 = vrot.slane %v6563, 5
        %v7095 = vsel %vm2543, %v7093, %v7094
        %v7096 = vrot.slane %v6978, 5
        %v7097 = vrot.slane %v7096, 4
        %v7098 = vrot.slane %v6565, 5
        %v7099 = vsel %vm2543, %v7097, %v7098
        %v7100 = vrot.slane %v7098, 4
        %v7101 = vrot.slane %v6566, 5
        %v7102 = vsel %vm2543, %v7100, %v7101
        %v7103 = vrot.slane %v6979, 5
        %v7104 = vrot.slane %v7103, 4
        %v7105 = vrot.slane %v6568, 5
        %v7106 = vsel %vm2543, %v7104, %v7105
        %v7107 = vrot.slane %v7105, 4
        %v7108 = vrot.slane %v6569, 5
        %v7109 = vsel %vm2543, %v7107, %v7108
        %v7110 = vrot.slane %v6980, 5
        %v7111 = vrot.slane %v7110, 4
        %v7112 = vrot.slane %v6571, 5
        %v7113 = vsel %vm2543, %v7111, %v7112
        %v7114 = vrot.slane %v7112, 4
        %v7115 = vrot.slane %v6572, 5
        %v7116 = vsel %vm2543, %v7114, %v7115
        %v7117 = vrot.slane %v6981, 5
        %v7118 = vrot.slane %v7117, 4
        %v7119 = vrot.slane %v6574, 5
        %v7120 = vsel %vm2543, %v7118, %v7119
        %v7121 = vrot.slane %v7119, 4
        %v7122 = vrot.slane %v6575, 5
        %v7123 = vsel %vm2543, %v7121, %v7122
        %v7124 = vrot.slane %v6982, 5
        %v7125 = vrot.slane %v7124, 4
        %v7126 = vrot.slane %v6577, 5
        %v7127 = vsel %vm2543, %v7125, %v7126
        %v7128 = vrot.slane %v7126, 4
        %v7129 = vrot.slane %v6578, 5
        %v7130 = vsel %vm2543, %v7128, %v7129
        %v7131 = vrot.slane %v6983, 5
        %v7132 = vrot.slane %v7131, 4
        %v7133 = vrot.slane %v6580, 5
        %v7134 = vsel %vm2543, %v7132, %v7133
        %v7135 = vrot.slane %v7133, 4
        %v7136 = vrot.slane %v6581, 5
        %v7137 = vsel %vm2543, %v7135, %v7136
        %v7138 = vrot.slane %v6984, 5
        %v7139 = vrot.slane %v7138, 4
        %v7140 = vrot.slane %v6583, 5
        %v7141 = vsel %vm2543, %v7139, %v7140
        %v7142 = vrot.slane %v7140, 4
        %v7143 = vrot.slane %v6584, 5
        %v7144 = vsel %vm2543, %v7142, %v7143
        %v7145 = vunpack.c.l.b16 %v5990
        %v7146 = vunpack.c.l.b16 %v6000
        %v7147 = vunpack.c.l.b16 %v6014
        %v7148 = vunpack.c.l.b16 %v6024
        %v7149 = vunpack.c.l.b16 %v6038
        %v7150 = vunpack.c.l.b16 %v6048
        %v7151 = vunpack.c.l.b16 %v6062
        %v7152 = vunpack.c.l.b16 %v6072
        %v7153 = vunpack.c.l.b16 %v6086
        %v7154 = vunpack.c.l.b16 %v6096
        %v7155 = vunpack.c.l.b16 %v6110
        %v7156 = vunpack.c.l.b16 %v6120
        %v7157 = vunpack.c.l.b16 %v6134
        %v7158 = vunpack.c.l.b16 %v6144
        %v7159 = vunpack.c.l.b16 %v6158
        %v7160 = vunpack.c.l.b16 %v6168
        %v7161 = vunpack.c.l.b16 %v6182
        %v7162 = vunpack.c.l.b16 %v6192
        %v7163 = vunpack.c.l.b16 %v6206
        %v7164 = vunpack.c.l.b16 %v6216
        %v7165 = vunpack.c.l.b16 %v6230
        %v7166 = vunpack.c.l.b16 %v6240
        %v7167 = vunpack.c.l.b16 %v6254
        %v7168 = vunpack.c.l.b16 %v6264
        %v7169 = vunpack.c.l.b16 %v6278
        %v7170 = vunpack.c.l.b16 %v6288
        %v7171 = vunpack.c.l.b16 %v6302
        %v7172 = vunpack.c.l.b16 %v6312
        %v7173 = vunpack.c.l.b16 %v6326
        %v7174 = vunpack.c.l.b16 %v6336
        %v7175 = vunpack.c.l.b16 %v6350
        %v7176 = vunpack.c.l.b16 %v6360
        %v7177 = vpack.c.b16 %v7146, %v7145
        %v7178 = vpack.c.b16 %v7148, %v7147
        %v7179 = vpack.c.b16 %v7150, %v7149
        %v7180 = vpack.c.b16 %v7152, %v7151
        %v7181 = vpack.c.b16 %v7154, %v7153
        %v7182 = vpack.c.b16 %v7156, %v7155
        %v7183 = vpack.c.b16 %v7158, %v7157
        %v7184 = vpack.c.b16 %v7160, %v7159
        %v7185 = vpack.c.b16 %v7162, %v7161
        %v7186 = vpack.c.b16 %v7164, %v7163
        %v7187 = vpack.c.b16 %v7166, %v7165
        %v7188 = vpack.c.b16 %v7168, %v7167
        %v7189 = vpack.c.b16 %v7170, %v7169
        %v7190 = vpack.c.b16 %v7172, %v7171
        %v7191 = vpack.c.b16 %v7174, %v7173
        %v7192 = vpack.c.b16 %v7176, %v7175
        %v7209 = vunpack.c.l.b16 %v6428
        %v7210 = vunpack.c.l.b16 %v6431
        %v7211 = vunpack.c.l.b16 %v6435
        %v7212 = vunpack.c.l.b16 %v6438
        %v7213 = vunpack.c.l.b16 %v6442
        %v7214 = vunpack.c.l.b16 %v6445
        %v7215 = vunpack.c.l.b16 %v6449
        %v7216 = vunpack.c.l.b16 %v6452
        %v7217 = vunpack.c.l.b16 %v6456
        %v7218 = vunpack.c.l.b16 %v6459
        %v7219 = vunpack.c.l.b16 %v6463
        %v7220 = vunpack.c.l.b16 %v6466
        %v7221 = vunpack.c.l.b16 %v6470
        %v7222 = vunpack.c.l.b16 %v6473
        %v7223 = vunpack.c.l.b16 %v6477
        %v7224 = vunpack.c.l.b16 %v6480
        %v7225 = vunpack.c.l.b16 %v6484
        %v7226 = vunpack.c.l.b16 %v6487
        %v7227 = vunpack.c.l.b16 %v6491
        %v7228 = vunpack.c.l.b16 %v6494
        %v7229 = vunpack.c.l.b16 %v6498
        %v7230 = vunpack.c.l.b16 %v6501
        %v7231 = vunpack.c.l.b16 %v6505
        %v7232 = vunpack.c.l.b16 %v6508
        %v7233 = vunpack.c.l.b16 %v6512
        %v7234 = vunpack.c.l.b16 %v6515
        %v7235 = vunpack.c.l.b16 %v6519
        %v7236 = vunpack.c.l.b16 %v6522
        %v7237 = vunpack.c.l.b16 %v6526
        %v7238 = vunpack.c.l.b16 %v6529
        %v7239 = vunpack.c.l.b16 %v6533
        %v7240 = vunpack.c.l.b16 %v6536
        %v7241 = vpack.c.b16 %v7210, %v7209
        %v7242 = vpack.c.b16 %v7212, %v7211
        %v7243 = vpack.c.b16 %v7214, %v7213
        %v7244 = vpack.c.b16 %v7216, %v7215
        %v7245 = vpack.c.b16 %v7218, %v7217
        %v7246 = vpack.c.b16 %v7220, %v7219
        %v7247 = vpack.c.b16 %v7222, %v7221
        %v7248 = vpack.c.b16 %v7224, %v7223
        %v7249 = vpack.c.b16 %v7226, %v7225
        %v7250 = vpack.c.b16 %v7228, %v7227
        %v7251 = vpack.c.b16 %v7230, %v7229
        %v7252 = vpack.c.b16 %v7232, %v7231
        %v7253 = vpack.c.b16 %v7234, %v7233
        %v7254 = vpack.c.b16 %v7236, %v7235
        %v7255 = vpack.c.b16 %v7238, %v7237
        %v7256 = vpack.c.b16 %v7240, %v7239
        %v7273 = vunpack.c.l.b16 %v6598
        %v7274 = vunpack.c.l.b16 %v6608
        %v7275 = vunpack.c.l.b16 %v6622
        %v7276 = vunpack.c.l.b16 %v6632
        %v7277 = vunpack.c.l.b16 %v6646
        %v7278 = vunpack.c.l.b16 %v6656
        %v7279 = vunpack.c.l.b16 %v6670
        %v7280 = vunpack.c.l.b16 %v6680
        %v7281 = vunpack.c.l.b16 %v6694
        %v7282 = vunpack.c.l.b16 %v6704
        %v7283 = vunpack.c.l.b16 %v6718
        %v7284 = vunpack.c.l.b16 %v6728
        %v7285 = vunpack.c.l.b16 %v6742
        %v7286 = vunpack.c.l.b16 %v6752
        %v7287 = vunpack.c.l.b16 %v6766
        %v7288 = vunpack.c.l.b16 %v6776
        %v7289 = vunpack.c.l.b16 %v6790
        %v7290 = vunpack.c.l.b16 %v6800
        %v7291 = vunpack.c.l.b16 %v6814
        %v7292 = vunpack.c.l.b16 %v6824
        %v7293 = vunpack.c.l.b16 %v6838
        %v7294 = vunpack.c.l.b16 %v6848
        %v7295 = vunpack.c.l.b16 %v6862
        %v7296 = vunpack.c.l.b16 %v6872
        %v7297 = vunpack.c.l.b16 %v6886
        %v7298 = vunpack.c.l.b16 %v6896
        %v7299 = vunpack.c.l.b16 %v6910
        %v7300 = vunpack.c.l.b16 %v6920
        %v7301 = vunpack.c.l.b16 %v6934
        %v7302 = vunpack.c.l.b16 %v6944
        %v7303 = vunpack.c.l.b16 %v6958
        %v7304 = vunpack.c.l.b16 %v6968
        %v7305 = vpack.c.b16 %v7274, %v7273
        %v7306 = vpack.c.b16 %v7276, %v7275
        %v7307 = vpack.c.b16 %v7278, %v7277
        %v7308 = vpack.c.b16 %v7280, %v7279
        %v7309 = vpack.c.b16 %v7282, %v7281
        %v7310 = vpack.c.b16 %v7284, %v7283
        %v7311 = vpack.c.b16 %v7286, %v7285
        %v7312 = vpack.c.b16 %v7288, %v7287
        %v7313 = vpack.c.b16 %v7290, %v7289
        %v7314 = vpack.c.b16 %v7292, %v7291
        %v7315 = vpack.c.b16 %v7294, %v7293
        %v7316 = vpack.c.b16 %v7296, %v7295
        %v7317 = vpack.c.b16 %v7298, %v7297
        %v7318 = vpack.c.b16 %v7300, %v7299
        %v7319 = vpack.c.b16 %v7302, %v7301
        %v7320 = vpack.c.b16 %v7304, %v7303
        %v7337 = vunpack.c.l.b16 %v7036
        %v7338 = vunpack.c.l.b16 %v7039
        %v7339 = vunpack.c.l.b16 %v7043
        %v7340 = vunpack.c.l.b16 %v7046
        %v7341 = vunpack.c.l.b16 %v7050
        %v7342 = vunpack.c.l.b16 %v7053
        %v7343 = vunpack.c.l.b16 %v7057
        %v7344 = vunpack.c.l.b16 %v7060
        %v7345 = vunpack.c.l.b16 %v7064
        %v7346 = vunpack.c.l.b16 %v7067
        %v7347 = vunpack.c.l.b16 %v7071
        %v7348 = vunpack.c.l.b16 %v7074
        %v7349 = vunpack.c.l.b16 %v7078
        %v7350 = vunpack.c.l.b16 %v7081
        %v7351 = vunpack.c.l.b16 %v7085
        %v7352 = vunpack.c.l.b16 %v7088
        %v7353 = vunpack.c.l.b16 %v7092
        %v7354 = vunpack.c.l.b16 %v7095
        %v7355 = vunpack.c.l.b16 %v7099
        %v7356 = vunpack.c.l.b16 %v7102
        %v7357 = vunpack.c.l.b16 %v7106
        %v7358 = vunpack.c.l.b16 %v7109
        %v7359 = vunpack.c.l.b16 %v7113
        %v7360 = vunpack.c.l.b16 %v7116
        %v7361 = vunpack.c.l.b16 %v7120
        %v7362 = vunpack.c.l.b16 %v7123
        %v7363 = vunpack.c.l.b16 %v7127
        %v7364 = vunpack.c.l.b16 %v7130
        %v7365 = vunpack.c.l.b16 %v7134
        %v7366 = vunpack.c.l.b16 %v7137
        %v7367 = vunpack.c.l.b16 %v7141
        %v7368 = vunpack.c.l.b16 %v7144
        %v7369 = vpack.c.b16 %v7338, %v7337
        %v7370 = vpack.c.b16 %v7340, %v7339
        %v7371 = vpack.c.b16 %v7342, %v7341
        %v7372 = vpack.c.b16 %v7344, %v7343
        %v7373 = vpack.c.b16 %v7346, %v7345
        %v7374 = vpack.c.b16 %v7348, %v7347
        %v7375 = vpack.c.b16 %v7350, %v7349
        %v7376 = vpack.c.b16 %v7352, %v7351
        %v7377 = vpack.c.b16 %v7354, %v7353
        %v7378 = vpack.c.b16 %v7356, %v7355
        %v7379 = vpack.c.b16 %v7358, %v7357
        %v7380 = vpack.c.b16 %v7360, %v7359
        %v7381 = vpack.c.b16 %v7362, %v7361
        %v7382 = vpack.c.b16 %v7364, %v7363
        %v7383 = vpack.c.b16 %v7366, %v7365
        %v7384 = vpack.c.b16 %v7368, %v7367
        %s7401 = scalar_lea.vmem [#allocation2], 768
        %v7402 = vld [vmem:[%s7401] sm:$0xf]
        %v7403 = vld [vmem:[%s7401 + $0x4] sm:$0xf]
        %v7404 = vld [vmem:[%s7401 + $0x8] sm:$0xf]
        %v7405 = vld [vmem:[%s7401 + $0xc] sm:$0xf]
        %v7406 = vld [vmem:[%s7401 + $0x10] sm:$0xf]
        %v7407 = vld [vmem:[%s7401 + $0x14] sm:$0xf]
        %v7408 = vld [vmem:[%s7401 + $0x18] sm:$0xf]
        %v7409 = vld [vmem:[%s7401 + $0x1c] sm:$0xf]
        %v7410 = vld [vmem:[%s7401 + $0x20] sm:$0xf]
        %v7411 = vld [vmem:[%s7401 + $0x24] sm:$0xf]
        %v7412 = vld [vmem:[%s7401 + $0x28] sm:$0xf]
        %v7413 = vld [vmem:[%s7401 + $0x2c] sm:$0xf]
        %v7414 = vld [vmem:[%s7401 + $0x30] sm:$0xf]
        %v7415 = vld [vmem:[%s7401 + $0x34] sm:$0xf]
        %v7416 = vld [vmem:[%s7401 + $0x38] sm:$0xf]
        %v7417 = vld [vmem:[%s7401 + $0x3c] sm:$0xf]
        %v7418 = vld [vmem:[%s7401 + $0x40] sm:$0xf]
        %v7419 = vld [vmem:[%s7401 + $0x44] sm:$0xf]
        %v7420 = vld [vmem:[%s7401 + $0x48] sm:$0xf]
        %v7421 = vld [vmem:[%s7401 + $0x4c] sm:$0xf]
        %v7422 = vld [vmem:[%s7401 + $0x50] sm:$0xf]
        %v7423 = vld [vmem:[%s7401 + $0x54] sm:$0xf]
        %v7424 = vld [vmem:[%s7401 + $0x58] sm:$0xf]
        %v7425 = vld [vmem:[%s7401 + $0x5c] sm:$0xf]
        %v7426 = vld [vmem:[%s7401 + $0x60] sm:$0xf]
        %v7427 = vld [vmem:[%s7401 + $0x64] sm:$0xf]
        %v7428 = vld [vmem:[%s7401 + $0x68] sm:$0xf]
        %v7429 = vld [vmem:[%s7401 + $0x6c] sm:$0xf]
        %v7430 = vld [vmem:[%s7401 + $0x70] sm:$0xf]
        %v7431 = vld [vmem:[%s7401 + $0x74] sm:$0xf]
        %v7432 = vld [vmem:[%s7401 + $0x78] sm:$0xf]
        %v7433 = vld [vmem:[%s7401 + $0x7c] sm:$0xf]
        %v7434 = vld [vmem:[%s7401 + $0x80] sm:$0xf]
        %v7435 = vld [vmem:[%s7401 + $0x84] sm:$0xf]
        %v7436 = vld [vmem:[%s7401 + $0x88] sm:$0xf]
        %v7437 = vld [vmem:[%s7401 + $0x8c] sm:$0xf]
        %v7438 = vld [vmem:[%s7401 + $0x90] sm:$0xf]
        %v7439 = vld [vmem:[%s7401 + $0x94] sm:$0xf]
        %v7440 = vld [vmem:[%s7401 + $0x98] sm:$0xf]
        %v7441 = vld [vmem:[%s7401 + $0x9c] sm:$0xf]
        %v7442 = vld [vmem:[%s7401 + $0xa0] sm:$0xf]
        %v7443 = vld [vmem:[%s7401 + $0xa4] sm:$0xf]
        %v7444 = vld [vmem:[%s7401 + $0xa8] sm:$0xf]
        %v7445 = vld [vmem:[%s7401 + $0xac] sm:$0xf]
        %v7446 = vld [vmem:[%s7401 + $0xb0] sm:$0xf]
        %v7447 = vld [vmem:[%s7401 + $0xb4] sm:$0xf]
        %v7448 = vld [vmem:[%s7401 + $0xb8] sm:$0xf]
        %v7449 = vld [vmem:[%s7401 + $0xbc] sm:$0xf]
        %v7450 = vld [vmem:[%s7401 + $0xc0] sm:$0xf]
        %v7451 = vld [vmem:[%s7401 + $0xc4] sm:$0xf]
        %v7452 = vld [vmem:[%s7401 + $0xc8] sm:$0xf]
        %v7453 = vld [vmem:[%s7401 + $0xcc] sm:$0xf]
        %v7454 = vld [vmem:[%s7401 + $0xd0] sm:$0xf]
        %v7455 = vld [vmem:[%s7401 + $0xd4] sm:$0xf]
        %v7456 = vld [vmem:[%s7401 + $0xd8] sm:$0xf]
        %v7457 = vld [vmem:[%s7401 + $0xdc] sm:$0xf]
        %v7458 = vld [vmem:[%s7401 + $0xe0] sm:$0xf]
        %v7459 = vld [vmem:[%s7401 + $0xe4] sm:$0xf]
        %v7460 = vld [vmem:[%s7401 + $0xe8] sm:$0xf]
        %v7461 = vld [vmem:[%s7401 + $0xec] sm:$0xf]
        %v7462 = vld [vmem:[%s7401 + $0xf0] sm:$0xf]
        %v7463 = vld [vmem:[%s7401 + $0xf4] sm:$0xf]
        %v7464 = vld [vmem:[%s7401 + $0xf8] sm:$0xf]
        %v7465 = vld [vmem:[%s7401 + $0xfc] sm:$0xf]
        %v7530 = vunpack.c.l.b16 %v7402
        %v7531 = vunpack.c.l.b16 %v7403
        %v7532 = vunpack.c.l.b16 %v7404
        %v7533 = vunpack.c.l.b16 %v7405
        %v7534 = vunpack.c.l.b16 %v7406
        %v7535 = vunpack.c.l.b16 %v7407
        %v7536 = vunpack.c.l.b16 %v7408
        %v7537 = vunpack.c.l.b16 %v7409
        %v7538 = vunpack.c.l.b16 %v7410
        %v7539 = vunpack.c.l.b16 %v7411
        %v7540 = vunpack.c.l.b16 %v7412
        %v7541 = vunpack.c.l.b16 %v7413
        %v7542 = vunpack.c.l.b16 %v7414
        %v7543 = vunpack.c.l.b16 %v7415
        %v7544 = vunpack.c.l.b16 %v7416
        %v7545 = vunpack.c.l.b16 %v7417
        %v7546 = vunpack.c.l.b16 %v7418
        %v7547 = vunpack.c.l.b16 %v7419
        %v7548 = vunpack.c.l.b16 %v7420
        %v7549 = vunpack.c.l.b16 %v7421
        %v7550 = vunpack.c.l.b16 %v7422
        %v7551 = vunpack.c.l.b16 %v7423
        %v7552 = vunpack.c.l.b16 %v7424
        %v7553 = vunpack.c.l.b16 %v7425
        %v7554 = vunpack.c.l.b16 %v7426
        %v7555 = vunpack.c.l.b16 %v7427
        %v7556 = vunpack.c.l.b16 %v7428
        %v7557 = vunpack.c.l.b16 %v7429
        %v7558 = vunpack.c.l.b16 %v7430
        %v7559 = vunpack.c.l.b16 %v7431
        %v7560 = vunpack.c.l.b16 %v7432
        %v7561 = vunpack.c.l.b16 %v7433
        %v7562 = vunpack.c.l.b16 %v7434
        %v7563 = vunpack.c.l.b16 %v7435
        %v7564 = vunpack.c.l.b16 %v7436
        %v7565 = vunpack.c.l.b16 %v7437
        %v7566 = vunpack.c.l.b16 %v7438
        %v7567 = vunpack.c.l.b16 %v7439
        %v7568 = vunpack.c.l.b16 %v7440
        %v7569 = vunpack.c.l.b16 %v7441
        %v7570 = vunpack.c.l.b16 %v7442
        %v7571 = vunpack.c.l.b16 %v7443
        %v7572 = vunpack.c.l.b16 %v7444
        %v7573 = vunpack.c.l.b16 %v7445
        %v7574 = vunpack.c.l.b16 %v7446
        %v7575 = vunpack.c.l.b16 %v7447
        %v7576 = vunpack.c.l.b16 %v7448
        %v7577 = vunpack.c.l.b16 %v7449
        %v7578 = vunpack.c.l.b16 %v7450
        %v7579 = vunpack.c.l.b16 %v7451
        %v7580 = vunpack.c.l.b16 %v7452
        %v7581 = vunpack.c.l.b16 %v7453
        %v7582 = vunpack.c.l.b16 %v7454
        %v7583 = vunpack.c.l.b16 %v7455
        %v7584 = vunpack.c.l.b16 %v7456
        %v7585 = vunpack.c.l.b16 %v7457
        %v7586 = vunpack.c.l.b16 %v7458
        %v7587 = vunpack.c.l.b16 %v7459
        %v7588 = vunpack.c.l.b16 %v7460
        %v7589 = vunpack.c.l.b16 %v7461
        %v7590 = vunpack.c.l.b16 %v7462
        %v7591 = vunpack.c.l.b16 %v7463
        %v7592 = vunpack.c.l.b16 %v7464
        %v7593 = vunpack.c.l.b16 %v7465
        %v7594 = vpack.c.b16 %v7531, %v7530
        %v7595 = vpack.c.b16 %v7533, %v7532
        %v7596 = vpack.c.b16 %v7535, %v7534
        %v7597 = vpack.c.b16 %v7537, %v7536
        %v7598 = vpack.c.b16 %v7539, %v7538
        %v7599 = vpack.c.b16 %v7541, %v7540
        %v7600 = vpack.c.b16 %v7543, %v7542
        %v7601 = vpack.c.b16 %v7545, %v7544
        %v7602 = vpack.c.b16 %v7547, %v7546
        %v7603 = vpack.c.b16 %v7549, %v7548
        %v7604 = vpack.c.b16 %v7551, %v7550
        %v7605 = vpack.c.b16 %v7553, %v7552
        %v7606 = vpack.c.b16 %v7555, %v7554
        %v7607 = vpack.c.b16 %v7557, %v7556
        %v7608 = vpack.c.b16 %v7559, %v7558
        %v7609 = vpack.c.b16 %v7561, %v7560
        %v7610 = vpack.c.b16 %v7563, %v7562
        %v7611 = vpack.c.b16 %v7565, %v7564
        %v7612 = vpack.c.b16 %v7567, %v7566
        %v7613 = vpack.c.b16 %v7569, %v7568
        %v7614 = vpack.c.b16 %v7571, %v7570
        %v7615 = vpack.c.b16 %v7573, %v7572
        %v7616 = vpack.c.b16 %v7575, %v7574
        %v7617 = vpack.c.b16 %v7577, %v7576
        %v7618 = vpack.c.b16 %v7579, %v7578
        %v7619 = vpack.c.b16 %v7581, %v7580
        %v7620 = vpack.c.b16 %v7583, %v7582
        %v7621 = vpack.c.b16 %v7585, %v7584
        %v7622 = vpack.c.b16 %v7587, %v7586
        %v7623 = vpack.c.b16 %v7589, %v7588
        %v7624 = vpack.c.b16 %v7591, %v7590
        %v7625 = vpack.c.b16 %v7593, %v7592
        %7658 = vmatprep.subr.bf16.mxu0 0
        %7659 = vmatpush1.bf16.msra.mxu0 %v7594
        %7660 = vmatprep.subr.bf16.mxu0 0
        %7661 = vmatpush1.bf16.msra.mxu0 %v7595
        %7662 = vmatprep.subr.bf16.mxu0 0
        %7663 = vmatpush1.bf16.msra.mxu0 %v7596
        %7664 = vmatprep.subr.bf16.mxu0 0
        %7665 = vmatpush1.bf16.msra.mxu0 %v7597
        %7666 = vmatprep.subr.bf16.mxu0 0
        %7667 = vmatpush1.bf16.msra.mxu0 %v7598
        %7668 = vmatprep.subr.bf16.mxu0 0
        %7669 = vmatpush1.bf16.msra.mxu0 %v7599
        %7670 = vmatprep.subr.bf16.mxu0 0
        %7671 = vmatpush1.bf16.msra.mxu0 %v7600
        %7672 = vmatprep.subr.bf16.mxu0 0
        %7673 = vmatpush1.bf16.msra.mxu0 %v7601
        %7674 = vmatprep.subr.bf16.mxu0 0
        %7675 = vmatpush1.bf16.msra.mxu0 %v7602
        %7676 = vmatprep.subr.bf16.mxu0 0
        %7677 = vmatpush1.bf16.msra.mxu0 %v7603
        %7678 = vmatprep.subr.bf16.mxu0 0
        %7679 = vmatpush1.bf16.msra.mxu0 %v7604
        %7680 = vmatprep.subr.bf16.mxu0 0
        %7681 = vmatpush1.bf16.msra.mxu0 %v7605
        %7682 = vmatprep.subr.bf16.mxu0 0
        %7683 = vmatpush1.bf16.msra.mxu0 %v7606
        %7684 = vmatprep.subr.bf16.mxu0 0
        %7685 = vmatpush1.bf16.msra.mxu0 %v7607
        %7686 = vmatprep.subr.bf16.mxu0 0
        %7687 = vmatpush1.bf16.msra.mxu0 %v7608
        %7688 = vmatprep.subr.bf16.mxu0 0
        %7689 = vmatpush1.bf16.msra.mxu0 %v7609
        %7690 = vmatprep.mubr.bf16.mxu0 %v7241
        %7691 = vmatmul.mubr.bf16.gmra.mrb[0].mxu0 %v7177
        %v7692 = vpop.f32.mrb[0].mxu0
        %v7693 = vadd.f32 %v1497, %v7692
        %v7694 = vpop.f32.mrb[0].mxu0
        %v7695 = vpop.f32.mrb[0].mxu0
        %v7696 = vadd.f32 %v1497, %v7695
        %v7697 = vpop.f32.mrb[0].mxu0
        %7698 = vmatprep.mubr.bf16.mxu0 %v7242
        %7699 = vmatmul.mubr.bf16.gmra.mrb[0].mxu0 %v7178
        %v7700 = vpop.f32.mrb[0].mxu0
        %v7701 = vadd.f32 %v1497, %v7700
        %v7702 = vpop.f32.mrb[0].mxu0
        %v7703 = vpop.f32.mrb[0].mxu0
        %v7704 = vadd.f32 %v1497, %v7703
        %v7705 = vpop.f32.mrb[0].mxu0
        %7706 = vmatprep.mubr.bf16.mxu0 %v7243
        %7707 = vmatmul.mubr.bf16.gmra.mrb[0].mxu0 %v7179
        %v7708 = vpop.f32.mrb[0].mxu0
        %v7709 = vadd.f32 %v1497, %v7708
        %v7710 = vpop.f32.mrb[0].mxu0
        %v7711 = vpop.f32.mrb[0].mxu0
        %v7712 = vadd.f32 %v1497, %v7711
        %v7713 = vpop.f32.mrb[0].mxu0
        %7714 = vmatprep.mubr.bf16.mxu0 %v7244
        %7715 = vmatmul.mubr.bf16.gmra.mrb[0].mxu0 %v7180
        %v7716 = vpop.f32.mrb[0].mxu0
        %v7717 = vadd.f32 %v1497, %v7716
        %v7718 = vpop.f32.mrb[0].mxu0
        %v7719 = vpop.f32.mrb[0].mxu0
        %v7720 = vadd.f32 %v1497, %v7719
        %v7721 = vpop.f32.mrb[0].mxu0
        %7722 = vmatprep.mubr.bf16.mxu0 %v7245
        %7723 = vmatmul.mubr.bf16.gmra.mrb[0].mxu0 %v7181
        %v7724 = vpop.f32.mrb[0].mxu0
        %v7725 = vadd.f32 %v1497, %v7724
        %v7726 = vpop.f32.mrb[0].mxu0
        %v7727 = vpop.f32.mrb[0].mxu0
        %v7728 = vadd.f32 %v1497, %v7727
        %v7729 = vpop.f32.mrb[0].mxu0
        %7730 = vmatprep.mubr.bf16.mxu0 %v7246
        %7731 = vmatmul.mubr.bf16.gmra.mrb[0].mxu0 %v7182
        %v7732 = vpop.f32.mrb[0].mxu0
        %v7733 = vadd.f32 %v1497, %v7732
        %v7734 = vpop.f32.mrb[0].mxu0
        %v7735 = vpop.f32.mrb[0].mxu0
        %v7736 = vadd.f32 %v1497, %v7735
        %v7737 = vpop.f32.mrb[0].mxu0
        %7738 = vmatprep.mubr.bf16.mxu0 %v7247
        %7739 = vmatmul.mubr.bf16.gmra.mrb[0].mxu0 %v7183
        %v7740 = vpop.f32.mrb[0].mxu0
        %v7741 = vadd.f32 %v1497, %v7740
        %v7742 = vpop.f32.mrb[0].mxu0
        %v7743 = vpop.f32.mrb[0].mxu0
        %v7744 = vadd.f32 %v1497, %v7743
        %v7745 = vpop.f32.mrb[0].mxu0
        %7746 = vmatprep.mubr.bf16.mxu0 %v7248
        %7747 = vmatmul.mubr.bf16.gmra.mrb[0].mxu0 %v7184
        %v7748 = vpop.f32.mrb[0].mxu0
        %v7749 = vadd.f32 %v1497, %v7748
        %v7750 = vpop.f32.mrb[0].mxu0
        %v7751 = vpop.f32.mrb[0].mxu0
        %v7752 = vadd.f32 %v1497, %v7751
        %v7753 = vpop.f32.mrb[0].mxu0
        %7754 = vmatprep.mubr.bf16.mxu0 %v7249
        %7755 = vmatmul.mubr.bf16.gmra.mrb[0].mxu0 %v7185
        %v7756 = vpop.f32.mrb[0].mxu0
        %v7757 = vadd.f32 %v1497, %v7756
        %v7758 = vpop.f32.mrb[0].mxu0
        %v7759 = vpop.f32.mrb[0].mxu0
        %v7760 = vadd.f32 %v1497, %v7759
        %v7761 = vpop.f32.mrb[0].mxu0
        %7762 = vmatprep.mubr.bf16.mxu0 %v7250
        %7763 = vmatmul.mubr.bf16.gmra.mrb[0].mxu0 %v7186
        %v7764 = vpop.f32.mrb[0].mxu0
        %v7765 = vadd.f32 %v1497, %v7764
        %v7766 = vpop.f32.mrb[0].mxu0
        %v7767 = vpop.f32.mrb[0].mxu0
        %v7768 = vadd.f32 %v1497, %v7767
        %v7769 = vpop.f32.mrb[0].mxu0
        %7770 = vmatprep.mubr.bf16.mxu0 %v7251
        %7771 = vmatmul.mubr.bf16.gmra.mrb[0].mxu0 %v7187
        %v7772 = vpop.f32.mrb[0].mxu0
        %v7773 = vadd.f32 %v1497, %v7772
        %v7774 = vpop.f32.mrb[0].mxu0
        %v7775 = vpop.f32.mrb[0].mxu0
        %v7776 = vadd.f32 %v1497, %v7775
        %v7777 = vpop.f32.mrb[0].mxu0
        %7778 = vmatprep.mubr.bf16.mxu0 %v7252
        %7779 = vmatmul.mubr.bf16.gmra.mrb[0].mxu0 %v7188
        %v7780 = vpop.f32.mrb[0].mxu0
        %v7781 = vadd.f32 %v1497, %v7780
        %v7782 = vpop.f32.mrb[0].mxu0
        %v7783 = vpop.f32.mrb[0].mxu0
        %v7784 = vadd.f32 %v1497, %v7783
        %v7785 = vpop.f32.mrb[0].mxu0
        %7786 = vmatprep.mubr.bf16.mxu0 %v7253
        %7787 = vmatmul.mubr.bf16.gmra.mrb[0].mxu0 %v7189
        %v7788 = vpop.f32.mrb[0].mxu0
        %v7789 = vadd.f32 %v1497, %v7788
        %v7790 = vpop.f32.mrb[0].mxu0
        %v7791 = vpop.f32.mrb[0].mxu0
        %v7792 = vadd.f32 %v1497, %v7791
        %v7793 = vpop.f32.mrb[0].mxu0
        %7794 = vmatprep.mubr.bf16.mxu0 %v7254
        %7795 = vmatmul.mubr.bf16.gmra.mrb[0].mxu0 %v7190
        %v7796 = vpop.f32.mrb[0].mxu0
        %v7797 = vadd.f32 %v1497, %v7796
        %v7798 = vpop.f32.mrb[0].mxu0
        %v7799 = vpop.f32.mrb[0].mxu0
        %v7800 = vadd.f32 %v1497, %v7799
        %v7801 = vpop.f32.mrb[0].mxu0
        %7802 = vmatprep.mubr.bf16.mxu0 %v7255
        %7803 = vmatmul.mubr.bf16.gmra.mrb[0].mxu0 %v7191
        %v7804 = vpop.f32.mrb[0].mxu0
        %v7805 = vadd.f32 %v1497, %v7804
        %v7806 = vpop.f32.mrb[0].mxu0
        %v7807 = vpop.f32.mrb[0].mxu0
        %v7808 = vadd.f32 %v1497, %v7807
        %v7809 = vpop.f32.mrb[0].mxu0
        %7810 = vmatprep.mubr.bf16.mxu0 %v7256
        %7811 = vmatmul.mubr.bf16.gmra.mrb[0].mxu0 %v7192
        %v7812 = vpop.f32.mrb[0].mxu0
        %v7813 = vadd.f32 %v1497, %v7812
        %v7814 = vpop.f32.mrb[0].mxu0
        %v7815 = vpop.f32.mrb[0].mxu0
        %v7816 = vadd.f32 %v1497, %v7815
        %v7817 = vpop.f32.mrb[0].mxu0
        %7818 = vdwg.mxu0
        %7819 = vmatprep.subr.bf16.mxu0 0
        %7820 = vmatpush1.bf16.msra.mxu0 %v7610
        %7821 = vmatprep.subr.bf16.mxu0 0
        %7822 = vmatpush1.bf16.msra.mxu0 %v7611
        %7823 = vmatprep.subr.bf16.mxu0 0
        %7824 = vmatpush1.bf16.msra.mxu0 %v7612
        %7825 = vmatprep.subr.bf16.mxu0 0
        %7826 = vmatpush1.bf16.msra.mxu0 %v7613
        %7827 = vmatprep.subr.bf16.mxu0 0
        %7828 = vmatpush1.bf16.msra.mxu0 %v7614
        %7829 = vmatprep.subr.bf16.mxu0 0
        %7830 = vmatpush1.bf16.msra.mxu0 %v7615
        %7831 = vmatprep.subr.bf16.mxu0 0
        %7832 = vmatpush1.bf16.msra.mxu0 %v7616
        %7833 = vmatprep.subr.bf16.mxu0 0
        %7834 = vmatpush1.bf16.msra.mxu0 %v7617
        %7835 = vmatprep.subr.bf16.mxu0 0
        %7836 = vmatpush1.bf16.msra.mxu0 %v7618
        %7837 = vmatprep.subr.bf16.mxu0 0
        %7838 = vmatpush1.bf16.msra.mxu0 %v7619
        %7839 = vmatprep.subr.bf16.mxu0 0
        %7840 = vmatpush1.bf16.msra.mxu0 %v7620
        %7841 = vmatprep.subr.bf16.mxu0 0
        %7842 = vmatpush1.bf16.msra.mxu0 %v7621
        %7843 = vmatprep.subr.bf16.mxu0 0
        %7844 = vmatpush1.bf16.msra.mxu0 %v7622
        %7845 = vmatprep.subr.bf16.mxu0 0
        %7846 = vmatpush1.bf16.msra.mxu0 %v7623
        %7847 = vmatprep.subr.bf16.mxu0 0
        %7848 = vmatpush1.bf16.msra.mxu0 %v7624
        %7849 = vmatprep.subr.bf16.mxu0 0
        %7850 = vmatpush1.bf16.msra.mxu0 %v7625
        %7851 = vmatprep.mubr.bf16.mxu0 %v7369
        %7852 = vmatmul.mubr.bf16.gmra.mrb[0].mxu0 %v7305
        %v7853 = vpop.f32.mrb[0].mxu0
        %v7854 = vadd.f32 %v7693, %v7853
        %v7855 = vpop.f32.mrb[0].mxu0
        %v7856 = vpop.f32.mrb[0].mxu0
        %v7857 = vadd.f32 %v7696, %v7856
        %v7858 = vpop.f32.mrb[0].mxu0
        %7859 = vmatprep.mubr.bf16.mxu0 %v7370
        %7860 = vmatmul.mubr.bf16.gmra.mrb[0].mxu0 %v7306
        %v7861 = vpop.f32.mrb[0].mxu0
        %v7862 = vadd.f32 %v7701, %v7861
        %v7863 = vpop.f32.mrb[0].mxu0
        %v7864 = vpop.f32.mrb[0].mxu0
        %v7865 = vadd.f32 %v7704, %v7864
        %v7866 = vpop.f32.mrb[0].mxu0
        %7867 = vmatprep.mubr.bf16.mxu0 %v7371
        %7868 = vmatmul.mubr.bf16.gmra.mrb[0].mxu0 %v7307
        %v7869 = vpop.f32.mrb[0].mxu0
        %v7870 = vadd.f32 %v7709, %v7869
        %v7871 = vpop.f32.mrb[0].mxu0
        %v7872 = vpop.f32.mrb[0].mxu0
        %v7873 = vadd.f32 %v7712, %v7872
        %v7874 = vpop.f32.mrb[0].mxu0
        %7875 = vmatprep.mubr.bf16.mxu0 %v7372
        %7876 = vmatmul.mubr.bf16.gmra.mrb[0].mxu0 %v7308
        %v7877 = vpop.f32.mrb[0].mxu0
        %v7878 = vadd.f32 %v7717, %v7877
        %v7879 = vpop.f32.mrb[0].mxu0
        %v7880 = vpop.f32.mrb[0].mxu0
        %v7881 = vadd.f32 %v7720, %v7880
        %v7882 = vpop.f32.mrb[0].mxu0
        %7883 = vmatprep.mubr.bf16.mxu0 %v7373
        %7884 = vmatmul.mubr.bf16.gmra.mrb[0].mxu0 %v7309
        %v7885 = vpop.f32.mrb[0].mxu0
        %v7886 = vadd.f32 %v7725, %v7885
        %v7887 = vpop.f32.mrb[0].mxu0
        %v7888 = vpop.f32.mrb[0].mxu0
        %v7889 = vadd.f32 %v7728, %v7888
        %v7890 = vpop.f32.mrb[0].mxu0
        %7891 = vmatprep.mubr.bf16.mxu0 %v7374
        %7892 = vmatmul.mubr.bf16.gmra.mrb[0].mxu0 %v7310
        %v7893 = vpop.f32.mrb[0].mxu0
        %v7894 = vadd.f32 %v7733, %v7893
        %v7895 = vpop.f32.mrb[0].mxu0
        %v7896 = vpop.f32.mrb[0].mxu0
        %v7897 = vadd.f32 %v7736, %v7896
        %v7898 = vpop.f32.mrb[0].mxu0
        %7899 = vmatprep.mubr.bf16.mxu0 %v7375
        %7900 = vmatmul.mubr.bf16.gmra.mrb[0].mxu0 %v7311
        %v7901 = vpop.f32.mrb[0].mxu0
        %v7902 = vadd.f32 %v7741, %v7901
        %v7903 = vpop.f32.mrb[0].mxu0
        %v7904 = vpop.f32.mrb[0].mxu0
        %v7905 = vadd.f32 %v7744, %v7904
        %v7906 = vpop.f32.mrb[0].mxu0
        %7907 = vmatprep.mubr.bf16.mxu0 %v7376
        %7908 = vmatmul.mubr.bf16.gmra.mrb[0].mxu0 %v7312
        %v7909 = vpop.f32.mrb[0].mxu0
        %v7910 = vadd.f32 %v7749, %v7909
        %v7911 = vpop.f32.mrb[0].mxu0
        %v7912 = vpop.f32.mrb[0].mxu0
        %v7913 = vadd.f32 %v7752, %v7912
        %v7914 = vpop.f32.mrb[0].mxu0
        %7915 = vmatprep.mubr.bf16.mxu0 %v7377
        %7916 = vmatmul.mubr.bf16.gmra.mrb[0].mxu0 %v7313
        %v7917 = vpop.f32.mrb[0].mxu0
        %v7918 = vadd.f32 %v7757, %v7917
        %v7919 = vpop.f32.mrb[0].mxu0
        %v7920 = vpop.f32.mrb[0].mxu0
        %v7921 = vadd.f32 %v7760, %v7920
        %v7922 = vpop.f32.mrb[0].mxu0
        %7923 = vmatprep.mubr.bf16.mxu0 %v7378
        %7924 = vmatmul.mubr.bf16.gmra.mrb[0].mxu0 %v7314
        %v7925 = vpop.f32.mrb[0].mxu0
        %v7926 = vadd.f32 %v7765, %v7925
        %v7927 = vpop.f32.mrb[0].mxu0
        %v7928 = vpop.f32.mrb[0].mxu0
        %v7929 = vadd.f32 %v7768, %v7928
        %v7930 = vpop.f32.mrb[0].mxu0
        %7931 = vmatprep.mubr.bf16.mxu0 %v7379
        %7932 = vmatmul.mubr.bf16.gmra.mrb[0].mxu0 %v7315
        %v7933 = vpop.f32.mrb[0].mxu0
        %v7934 = vadd.f32 %v7773, %v7933
        %v7935 = vpop.f32.mrb[0].mxu0
        %v7936 = vpop.f32.mrb[0].mxu0
        %v7937 = vadd.f32 %v7776, %v7936
        %v7938 = vpop.f32.mrb[0].mxu0
        %7939 = vmatprep.mubr.bf16.mxu0 %v7380
        %7940 = vmatmul.mubr.bf16.gmra.mrb[0].mxu0 %v7316
        %v7941 = vpop.f32.mrb[0].mxu0
        %v7942 = vadd.f32 %v7781, %v7941
        %v7943 = vpop.f32.mrb[0].mxu0
        %v7944 = vpop.f32.mrb[0].mxu0
        %v7945 = vadd.f32 %v7784, %v7944
        %v7946 = vpop.f32.mrb[0].mxu0
        %7947 = vmatprep.mubr.bf16.mxu0 %v7381
        %7948 = vmatmul.mubr.bf16.gmra.mrb[0].mxu0 %v7317
        %v7949 = vpop.f32.mrb[0].mxu0
        %v7950 = vadd.f32 %v7789, %v7949
        %v7951 = vpop.f32.mrb[0].mxu0
        %v7952 = vpop.f32.mrb[0].mxu0
        %v7953 = vadd.f32 %v7792, %v7952
        %v7954 = vpop.f32.mrb[0].mxu0
        %7955 = vmatprep.mubr.bf16.mxu0 %v7382
        %7956 = vmatmul.mubr.bf16.gmra.mrb[0].mxu0 %v7318
        %v7957 = vpop.f32.mrb[0].mxu0
        %v7958 = vadd.f32 %v7797, %v7957
        %v7959 = vpop.f32.mrb[0].mxu0
        %v7960 = vpop.f32.mrb[0].mxu0
        %v7961 = vadd.f32 %v7800, %v7960
        %v7962 = vpop.f32.mrb[0].mxu0
        %7963 = vmatprep.mubr.bf16.mxu0 %v7383
        %7964 = vmatmul.mubr.bf16.gmra.mrb[0].mxu0 %v7319
        %v7965 = vpop.f32.mrb[0].mxu0
        %v7966 = vadd.f32 %v7805, %v7965
        %v7967 = vpop.f32.mrb[0].mxu0
        %v7968 = vpop.f32.mrb[0].mxu0
        %v7969 = vadd.f32 %v7808, %v7968
        %v7970 = vpop.f32.mrb[0].mxu0
        %7971 = vmatprep.mubr.bf16.mxu0 %v7384
        %7972 = vmatmul.mubr.bf16.gmra.mrb[0].mxu0 %v7320
        %v7973 = vpop.f32.mrb[0].mxu0
        %v7974 = vadd.f32 %v7813, %v7973
        %v7975 = vpop.f32.mrb[0].mxu0
        %v7976 = vpop.f32.mrb[0].mxu0
        %v7977 = vadd.f32 %v7816, %v7976
        %v7978 = vpop.f32.mrb[0].mxu0
        %7979 = vdwg.mxu0
        %s7980 = scalar_lea.vmem %s233, 768
        %7981 = vst [vmem:[%s7980] sm:$0xff] %v7854
        %7982 = vst [vmem:[%s7980 + $0x8] sm:$0xff] %v7857
        %7983 = vst [vmem:[%s7980 + $0x10] sm:$0xff] %v7862
        %7984 = vst [vmem:[%s7980 + $0x18] sm:$0xff] %v7865
        %7985 = vst [vmem:[%s7980 + $0x20] sm:$0xff] %v7870
        %7986 = vst [vmem:[%s7980 + $0x28] sm:$0xff] %v7873
        %7987 = vst [vmem:[%s7980 + $0x30] sm:$0xff] %v7878
        %7988 = vst [vmem:[%s7980 + $0x38] sm:$0xff] %v7881
        %7989 = vst [vmem:[%s7980 + $0x40] sm:$0xff] %v7886
        %7990 = vst [vmem:[%s7980 + $0x48] sm:$0xff] %v7889
        %7991 = vst [vmem:[%s7980 + $0x50] sm:$0xff] %v7894
        %7992 = vst [vmem:[%s7980 + $0x58] sm:$0xff] %v7897
        %7993 = vst [vmem:[%s7980 + $0x60] sm:$0xff] %v7902
        %7994 = vst [vmem:[%s7980 + $0x68] sm:$0xff] %v7905
        %7995 = vst [vmem:[%s7980 + $0x70] sm:$0xff] %v7910
        %7996 = vst [vmem:[%s7980 + $0x78] sm:$0xff] %v7913
        %7997 = vst [vmem:[%s7980 + $0x80] sm:$0xff] %v7918
        %7998 = vst [vmem:[%s7980 + $0x88] sm:$0xff] %v7921
        %7999 = vst [vmem:[%s7980 + $0x90] sm:$0xff] %v7926
        %8000 = vst [vmem:[%s7980 + $0x98] sm:$0xff] %v7929
        %8001 = vst [vmem:[%s7980 + $0xa0] sm:$0xff] %v7934
        %8002 = vst [vmem:[%s7980 + $0xa8] sm:$0xff] %v7937
        %8003 = vst [vmem:[%s7980 + $0xb0] sm:$0xff] %v7942
        %8004 = vst [vmem:[%s7980 + $0xb8] sm:$0xff] %v7945
        %8005 = vst [vmem:[%s7980 + $0xc0] sm:$0xff] %v7950
        %8006 = vst [vmem:[%s7980 + $0xc8] sm:$0xff] %v7953
        %8007 = vst [vmem:[%s7980 + $0xd0] sm:$0xff] %v7958
        %8008 = vst [vmem:[%s7980 + $0xd8] sm:$0xff] %v7961
        %8009 = vst [vmem:[%s7980 + $0xe0] sm:$0xff] %v7966
        %8010 = vst [vmem:[%s7980 + $0xe8] sm:$0xff] %v7969
        %8011 = vst [vmem:[%s7980 + $0xf0] sm:$0xff] %v7974
        %8012 = vst [vmem:[%s7980 + $0xf8] sm:$0xff] %v7977
        %v8013 = vmul.f32 %v1887, 0.75
        %v8014 = vmul.f32 %v1890, 0.75
        %v8015 = vmul.f32 %v1895, 0.75
        %v8016 = vmul.f32 %v1898, 0.75
        %v8017 = vmul.f32 %v1903, 0.75
        %v8018 = vmul.f32 %v1906, 0.75
        %v8019 = vmul.f32 %v1911, 0.75
        %v8020 = vmul.f32 %v1914, 0.75
        %v8021 = vmul.f32 %v1919, 0.75
        %v8022 = vmul.f32 %v1922, 0.75
        %v8023 = vmul.f32 %v1927, 0.75
        %v8024 = vmul.f32 %v1930, 0.75
        %v8025 = vmul.f32 %v1935, 0.75
        %v8026 = vmul.f32 %v1938, 0.75
        %v8027 = vmul.f32 %v1943, 0.75
        %v8028 = vmul.f32 %v1946, 0.75
        %v8029 = vmul.f32 %v1951, 0.75
        %v8030 = vmul.f32 %v1954, 0.75
        %v8031 = vmul.f32 %v1959, 0.75
        %v8032 = vmul.f32 %v1962, 0.75
        %v8033 = vmul.f32 %v1967, 0.75
        %v8034 = vmul.f32 %v1970, 0.75
        %v8035 = vmul.f32 %v1975, 0.75
        %v8036 = vmul.f32 %v1978, 0.75
        %v8037 = vmul.f32 %v1983, 0.75
        %v8038 = vmul.f32 %v1986, 0.75
        %v8039 = vmul.f32 %v1991, 0.75
        %v8040 = vmul.f32 %v1994, 0.75
        %v8041 = vmul.f32 %v1999, 0.75
        %v8042 = vmul.f32 %v2002, 0.75
        %v8043 = vmul.f32 %v2007, 0.75
        %v8044 = vmul.f32 %v2010, 0.75
        %v8045 = vmul.f32 %v1887, 0.25
        %v8046 = vmul.f32 %v1890, 0.25
        %v8047 = vmul.f32 %v5770, 0.25
        %v8048 = vmul.f32 %v5773, 0.25
        %v8049 = vmul.f32 %v5778, 0.25
        %v8050 = vmul.f32 %v5781, 0.25
        %v8051 = vmul.f32 %v5786, 0.25
        %v8052 = vmul.f32 %v5789, 0.25
        %v8053 = vmul.f32 %v5794, 0.25
        %v8054 = vmul.f32 %v5797, 0.25
        %v8055 = vmul.f32 %v5802, 0.25
        %v8056 = vmul.f32 %v5805, 0.25
        %v8057 = vmul.f32 %v5810, 0.25
        %v8058 = vmul.f32 %v5813, 0.25
        %v8059 = vmul.f32 %v5818, 0.25
        %v8060 = vmul.f32 %v5821, 0.25
        %v8061 = vmul.f32 %v5826, 0.25
        %v8062 = vmul.f32 %v5829, 0.25
        %v8063 = vmul.f32 %v5834, 0.25
        %v8064 = vmul.f32 %v5837, 0.25
        %v8065 = vmul.f32 %v5842, 0.25
        %v8066 = vmul.f32 %v5845, 0.25
        %v8067 = vmul.f32 %v5850, 0.25
        %v8068 = vmul.f32 %v5853, 0.25
        %v8069 = vmul.f32 %v5858, 0.25
        %v8070 = vmul.f32 %v5861, 0.25
        %v8071 = vmul.f32 %v5866, 0.25
        %v8072 = vmul.f32 %v5869, 0.25
        %v8073 = vmul.f32 %v5874, 0.25
        %v8074 = vmul.f32 %v5877, 0.25
        %v8075 = vmul.f32 %v5882, 0.25
        %v8076 = vmul.f32 %v5885, 0.25
        %v8077 = vadd.f32 %v8013, %v8045
        %v8078 = vadd.f32 %v8014, %v8046
        %v8079 = vadd.f32 %v8015, %v8047
        %v8080 = vadd.f32 %v8016, %v8048
        %v8081 = vadd.f32 %v8017, %v8049
        %v8082 = vadd.f32 %v8018, %v8050
        %v8083 = vadd.f32 %v8019, %v8051
        %v8084 = vadd.f32 %v8020, %v8052
        %v8085 = vadd.f32 %v8021, %v8053
        %v8086 = vadd.f32 %v8022, %v8054
        %v8087 = vadd.f32 %v8023, %v8055
        %v8088 = vadd.f32 %v8024, %v8056
        %v8089 = vadd.f32 %v8025, %v8057
        %v8090 = vadd.f32 %v8026, %v8058
        %v8091 = vadd.f32 %v8027, %v8059
        %v8092 = vadd.f32 %v8028, %v8060
        %v8093 = vadd.f32 %v8029, %v8061
        %v8094 = vadd.f32 %v8030, %v8062
        %v8095 = vadd.f32 %v8031, %v8063
        %v8096 = vadd.f32 %v8032, %v8064
        %v8097 = vadd.f32 %v8033, %v8065
        %v8098 = vadd.f32 %v8034, %v8066
        %v8099 = vadd.f32 %v8035, %v8067
        %v8100 = vadd.f32 %v8036, %v8068
        %v8101 = vadd.f32 %v8037, %v8069
        %v8102 = vadd.f32 %v8038, %v8070
        %v8103 = vadd.f32 %v8039, %v8071
        %v8104 = vadd.f32 %v8040, %v8072
        %v8105 = vadd.f32 %v8041, %v8073
        %v8106 = vadd.f32 %v8042, %v8074
        %v8107 = vadd.f32 %v8043, %v8075
        %v8108 = vadd.f32 %v8044, %v8076
        %v8109 = vmul.f32 %v5890, 0.25
        %v8110 = vmul.f32 %v5893, 0.25
        %v8111 = vadd.f32 %v8013, %v8047
        %v8112 = vadd.f32 %v8014, %v8048
        %v8113 = vadd.f32 %v8015, %v8049
        %v8114 = vadd.f32 %v8016, %v8050
        %v8115 = vadd.f32 %v8017, %v8051
        %v8116 = vadd.f32 %v8018, %v8052
        %v8117 = vadd.f32 %v8019, %v8053
        %v8118 = vadd.f32 %v8020, %v8054
        %v8119 = vadd.f32 %v8021, %v8055
        %v8120 = vadd.f32 %v8022, %v8056
        %v8121 = vadd.f32 %v8023, %v8057
        %v8122 = vadd.f32 %v8024, %v8058
        %v8123 = vadd.f32 %v8025, %v8059
        %v8124 = vadd.f32 %v8026, %v8060
        %v8125 = vadd.f32 %v8027, %v8061
        %v8126 = vadd.f32 %v8028, %v8062
        %v8127 = vadd.f32 %v8029, %v8063
        %v8128 = vadd.f32 %v8030, %v8064
        %v8129 = vadd.f32 %v8031, %v8065
        %v8130 = vadd.f32 %v8032, %v8066
        %v8131 = vadd.f32 %v8033, %v8067
        %v8132 = vadd.f32 %v8034, %v8068
        %v8133 = vadd.f32 %v8035, %v8069
        %v8134 = vadd.f32 %v8036, %v8070
        %v8135 = vadd.f32 %v8037, %v8071
        %v8136 = vadd.f32 %v8038, %v8072
        %v8137 = vadd.f32 %v8039, %v8073
        %v8138 = vadd.f32 %v8040, %v8074
        %v8139 = vadd.f32 %v8041, %v8075
        %v8140 = vadd.f32 %v8042, %v8076
        %v8141 = vadd.f32 %v8043, %v8109
        %v8142 = vadd.f32 %v8044, %v8110
        %v8143 = vmul.f32 %v5770, 0.75
        %v8144 = vmul.f32 %v5773, 0.75
        %v8145 = vmul.f32 %v5778, 0.75
        %v8146 = vmul.f32 %v5781, 0.75
        %v8147 = vmul.f32 %v5786, 0.75
        %v8148 = vmul.f32 %v5789, 0.75
        %v8149 = vmul.f32 %v5794, 0.75
        %v8150 = vmul.f32 %v5797, 0.75
        %v8151 = vmul.f32 %v5802, 0.75
        %v8152 = vmul.f32 %v5805, 0.75
        %v8153 = vmul.f32 %v5810, 0.75
        %v8154 = vmul.f32 %v5813, 0.75
        %v8155 = vmul.f32 %v5818, 0.75
        %v8156 = vmul.f32 %v5821, 0.75
        %v8157 = vmul.f32 %v5826, 0.75
        %v8158 = vmul.f32 %v5829, 0.75
        %v8159 = vmul.f32 %v5834, 0.75
        %v8160 = vmul.f32 %v5837, 0.75
        %v8161 = vmul.f32 %v5842, 0.75
        %v8162 = vmul.f32 %v5845, 0.75
        %v8163 = vmul.f32 %v5850, 0.75
        %v8164 = vmul.f32 %v5853, 0.75
        %v8165 = vmul.f32 %v5858, 0.75
        %v8166 = vmul.f32 %v5861, 0.75
        %v8167 = vmul.f32 %v5866, 0.75
        %v8168 = vmul.f32 %v5869, 0.75
        %v8169 = vmul.f32 %v5874, 0.75
        %v8170 = vmul.f32 %v5877, 0.75
        %v8171 = vmul.f32 %v5882, 0.75
        %v8172 = vmul.f32 %v5885, 0.75
        %v8173 = vmul.f32 %v5890, 0.75
        %v8174 = vmul.f32 %v5893, 0.75
        %v8175 = vmul.f32 %v1895, 0.25
        %v8176 = vmul.f32 %v1898, 0.25
        %v8177 = vmul.f32 %v1903, 0.25
        %v8178 = vmul.f32 %v1906, 0.25
        %v8179 = vmul.f32 %v1911, 0.25
        %v8180 = vmul.f32 %v1914, 0.25
        %v8181 = vmul.f32 %v1919, 0.25
        %v8182 = vmul.f32 %v1922, 0.25
        %v8183 = vmul.f32 %v1927, 0.25
        %v8184 = vmul.f32 %v1930, 0.25
        %v8185 = vmul.f32 %v1935, 0.25
        %v8186 = vmul.f32 %v1938, 0.25
        %v8187 = vmul.f32 %v1943, 0.25
        %v8188 = vmul.f32 %v1946, 0.25
        %v8189 = vmul.f32 %v1951, 0.25
        %v8190 = vmul.f32 %v1954, 0.25
        %v8191 = vmul.f32 %v1959, 0.25
        %v8192 = vmul.f32 %v1962, 0.25
        %v8193 = vmul.f32 %v1967, 0.25
        %v8194 = vmul.f32 %v1970, 0.25
        %v8195 = vmul.f32 %v1975, 0.25
        %v8196 = vmul.f32 %v1978, 0.25
        %v8197 = vmul.f32 %v1983, 0.25
        %v8198 = vmul.f32 %v1986, 0.25
        %v8199 = vmul.f32 %v1991, 0.25
        %v8200 = vmul.f32 %v1994, 0.25
        %v8201 = vmul.f32 %v1999, 0.25
        %v8202 = vmul.f32 %v2002, 0.25
        %v8203 = vmul.f32 %v2007, 0.25
        %v8204 = vmul.f32 %v2010, 0.25
        %v8205 = vadd.f32 %v8143, %v8045
        %v8206 = vadd.f32 %v8144, %v8046
        %v8207 = vadd.f32 %v8145, %v8175
        %v8208 = vadd.f32 %v8146, %v8176
        %v8209 = vadd.f32 %v8147, %v8177
        %v8210 = vadd.f32 %v8148, %v8178
        %v8211 = vadd.f32 %v8149, %v8179
        %v8212 = vadd.f32 %v8150, %v8180
        %v8213 = vadd.f32 %v8151, %v8181
        %v8214 = vadd.f32 %v8152, %v8182
        %v8215 = vadd.f32 %v8153, %v8183
        %v8216 = vadd.f32 %v8154, %v8184
        %v8217 = vadd.f32 %v8155, %v8185
        %v8218 = vadd.f32 %v8156, %v8186
        %v8219 = vadd.f32 %v8157, %v8187
        %v8220 = vadd.f32 %v8158, %v8188
        %v8221 = vadd.f32 %v8159, %v8189
        %v8222 = vadd.f32 %v8160, %v8190
        %v8223 = vadd.f32 %v8161, %v8191
        %v8224 = vadd.f32 %v8162, %v8192
        %v8225 = vadd.f32 %v8163, %v8193
        %v8226 = vadd.f32 %v8164, %v8194
        %v8227 = vadd.f32 %v8165, %v8195
        %v8228 = vadd.f32 %v8166, %v8196
        %v8229 = vadd.f32 %v8167, %v8197
        %v8230 = vadd.f32 %v8168, %v8198
        %v8231 = vadd.f32 %v8169, %v8199
        %v8232 = vadd.f32 %v8170, %v8200
        %v8233 = vadd.f32 %v8171, %v8201
        %v8234 = vadd.f32 %v8172, %v8202
        %v8235 = vadd.f32 %v8173, %v8203
        %v8236 = vadd.f32 %v8174, %v8204
        %v8237 = vadd.f32 %v8143, %v8175
        %v8238 = vadd.f32 %v8144, %v8176
        %v8239 = vadd.f32 %v8145, %v8177
        %v8240 = vadd.f32 %v8146, %v8178
        %v8241 = vadd.f32 %v8147, %v8179
        %v8242 = vadd.f32 %v8148, %v8180
        %v8243 = vadd.f32 %v8149, %v8181
        %v8244 = vadd.f32 %v8150, %v8182
        %v8245 = vadd.f32 %v8151, %v8183
        %v8246 = vadd.f32 %v8152, %v8184
        %v8247 = vadd.f32 %v8153, %v8185
        %v8248 = vadd.f32 %v8154, %v8186
        %v8249 = vadd.f32 %v8155, %v8187
        %v8250 = vadd.f32 %v8156, %v8188
        %v8251 = vadd.f32 %v8157, %v8189
        %v8252 = vadd.f32 %v8158, %v8190
        %v8253 = vadd.f32 %v8159, %v8191
        %v8254 = vadd.f32 %v8160, %v8192
        %v8255 = vadd.f32 %v8161, %v8193
        %v8256 = vadd.f32 %v8162, %v8194
        %v8257 = vadd.f32 %v8163, %v8195
        %v8258 = vadd.f32 %v8164, %v8196
        %v8259 = vadd.f32 %v8165, %v8197
        %v8260 = vadd.f32 %v8166, %v8198
        %v8261 = vadd.f32 %v8167, %v8199
        %v8262 = vadd.f32 %v8168, %v8200
        %v8263 = vadd.f32 %v8169, %v8201
        %v8264 = vadd.f32 %v8170, %v8202
        %v8265 = vadd.f32 %v8171, %v8203
        %v8266 = vadd.f32 %v8172, %v8204
        %v8267 = vadd.f32 %v8173, %v8109
        %v8268 = vadd.f32 %v8174, %v8110
        %v8269 = vmul.f32 %v3973, 0.75
        %v8270 = vmul.f32 %v3976, 0.75
        %v8271 = vmul.f32 %v3981, 0.75
        %v8272 = vmul.f32 %v3984, 0.75
        %v8273 = vmul.f32 %v3989, 0.75
        %v8274 = vmul.f32 %v3992, 0.75
        %v8275 = vmul.f32 %v3997, 0.75
        %v8276 = vmul.f32 %v4000, 0.75
        %v8277 = vmul.f32 %v4005, 0.75
        %v8278 = vmul.f32 %v4008, 0.75
        %v8279 = vmul.f32 %v4013, 0.75
        %v8280 = vmul.f32 %v4016, 0.75
        %v8281 = vmul.f32 %v4021, 0.75
        %v8282 = vmul.f32 %v4024, 0.75
        %v8283 = vmul.f32 %v4029, 0.75
        %v8284 = vmul.f32 %v4032, 0.75
        %v8285 = vmul.f32 %v4037, 0.75
        %v8286 = vmul.f32 %v4040, 0.75
        %v8287 = vmul.f32 %v4045, 0.75
        %v8288 = vmul.f32 %v4048, 0.75
        %v8289 = vmul.f32 %v4053, 0.75
        %v8290 = vmul.f32 %v4056, 0.75
        %v8291 = vmul.f32 %v4061, 0.75
        %v8292 = vmul.f32 %v4064, 0.75
        %v8293 = vmul.f32 %v4069, 0.75
        %v8294 = vmul.f32 %v4072, 0.75
        %v8295 = vmul.f32 %v4077, 0.75
        %v8296 = vmul.f32 %v4080, 0.75
        %v8297 = vmul.f32 %v4085, 0.75
        %v8298 = vmul.f32 %v4088, 0.75
        %v8299 = vmul.f32 %v4093, 0.75
        %v8300 = vmul.f32 %v4096, 0.75
        %v8301 = vmul.f32 %v3973, 0.25
        %v8302 = vmul.f32 %v3976, 0.25
        %v8303 = vmul.f32 %v7854, 0.25
        %v8304 = vmul.f32 %v7857, 0.25
        %v8305 = vmul.f32 %v7862, 0.25
        %v8306 = vmul.f32 %v7865, 0.25
        %v8307 = vmul.f32 %v7870, 0.25
        %v8308 = vmul.f32 %v7873, 0.25
        %v8309 = vmul.f32 %v7878, 0.25
        %v8310 = vmul.f32 %v7881, 0.25
        %v8311 = vmul.f32 %v7886, 0.25
        %v8312 = vmul.f32 %v7889, 0.25
        %v8313 = vmul.f32 %v7894, 0.25
        %v8314 = vmul.f32 %v7897, 0.25
        %v8315 = vmul.f32 %v7902, 0.25
        %v8316 = vmul.f32 %v7905, 0.25
        %v8317 = vmul.f32 %v7910, 0.25
        %v8318 = vmul.f32 %v7913, 0.25
        %v8319 = vmul.f32 %v7918, 0.25
        %v8320 = vmul.f32 %v7921, 0.25
        %v8321 = vmul.f32 %v7926, 0.25
        %v8322 = vmul.f32 %v7929, 0.25
        %v8323 = vmul.f32 %v7934, 0.25
        %v8324 = vmul.f32 %v7937, 0.25
        %v8325 = vmul.f32 %v7942, 0.25
        %v8326 = vmul.f32 %v7945, 0.25
        %v8327 = vmul.f32 %v7950, 0.25
        %v8328 = vmul.f32 %v7953, 0.25
        %v8329 = vmul.f32 %v7958, 0.25
        %v8330 = vmul.f32 %v7961, 0.25
        %v8331 = vmul.f32 %v7966, 0.25
        %v8332 = vmul.f32 %v7969, 0.25
        %v8333 = vadd.f32 %v8269, %v8301
        %v8334 = vadd.f32 %v8270, %v8302
        %v8335 = vadd.f32 %v8271, %v8303
        %v8336 = vadd.f32 %v8272, %v8304
        %v8337 = vadd.f32 %v8273, %v8305
        %v8338 = vadd.f32 %v8274, %v8306
        %v8339 = vadd.f32 %v8275, %v8307
        %v8340 = vadd.f32 %v8276, %v8308
        %v8341 = vadd.f32 %v8277, %v8309
        %v8342 = vadd.f32 %v8278, %v8310
        %v8343 = vadd.f32 %v8279, %v8311
        %v8344 = vadd.f32 %v8280, %v8312
        %v8345 = vadd.f32 %v8281, %v8313
        %v8346 = vadd.f32 %v8282, %v8314
        %v8347 = vadd.f32 %v8283, %v8315
        %v8348 = vadd.f32 %v8284, %v8316
        %v8349 = vadd.f32 %v8285, %v8317
        %v8350 = vadd.f32 %v8286, %v8318
        %v8351 = vadd.f32 %v8287, %v8319
        %v8352 = vadd.f32 %v8288, %v8320
        %v8353 = vadd.f32 %v8289, %v8321
        %v8354 = vadd.f32 %v8290, %v8322
        %v8355 = vadd.f32 %v8291, %v8323
        %v8356 = vadd.f32 %v8292, %v8324
        %v8357 = vadd.f32 %v8293, %v8325
        %v8358 = vadd.f32 %v8294, %v8326
        %v8359 = vadd.f32 %v8295, %v8327
        %v8360 = vadd.f32 %v8296, %v8328
        %v8361 = vadd.f32 %v8297, %v8329
        %v8362 = vadd.f32 %v8298, %v8330
        %v8363 = vadd.f32 %v8299, %v8331
        %v8364 = vadd.f32 %v8300, %v8332
        %v8365 = vmul.f32 %v7974, 0.25
        %v8366 = vmul.f32 %v7977, 0.25
        %v8367 = vadd.f32 %v8269, %v8303
        %v8368 = vadd.f32 %v8270, %v8304
        %v8369 = vadd.f32 %v8271, %v8305
        %v8370 = vadd.f32 %v8272, %v8306
        %v8371 = vadd.f32 %v8273, %v8307
        %v8372 = vadd.f32 %v8274, %v8308
        %v8373 = vadd.f32 %v8275, %v8309
        %v8374 = vadd.f32 %v8276, %v8310
        %v8375 = vadd.f32 %v8277, %v8311
        %v8376 = vadd.f32 %v8278, %v8312
        %v8377 = vadd.f32 %v8279, %v8313
        %v8378 = vadd.f32 %v8280, %v8314
        %v8379 = vadd.f32 %v8281, %v8315
        %v8380 = vadd.f32 %v8282, %v8316
        %v8381 = vadd.f32 %v8283, %v8317
        %v8382 = vadd.f32 %v8284, %v8318
        %v8383 = vadd.f32 %v8285, %v8319
        %v8384 = vadd.f32 %v8286, %v8320
        %v8385 = vadd.f32 %v8287, %v8321
        %v8386 = vadd.f32 %v8288, %v8322
        %v8387 = vadd.f32 %v8289, %v8323
        %v8388 = vadd.f32 %v8290, %v8324
        %v8389 = vadd.f32 %v8291, %v8325
        %v8390 = vadd.f32 %v8292, %v8326
        %v8391 = vadd.f32 %v8293, %v8327
        %v8392 = vadd.f32 %v8294, %v8328
        %v8393 = vadd.f32 %v8295, %v8329
        %v8394 = vadd.f32 %v8296, %v8330
        %v8395 = vadd.f32 %v8297, %v8331
        %v8396 = vadd.f32 %v8298, %v8332
        %v8397 = vadd.f32 %v8299, %v8365
        %v8398 = vadd.f32 %v8300, %v8366
        %v8399 = vmul.f32 %v7854, 0.75
        %v8400 = vmul.f32 %v7857, 0.75
        %v8401 = vmul.f32 %v7862, 0.75
        %v8402 = vmul.f32 %v7865, 0.75
        %v8403 = vmul.f32 %v7870, 0.75
        %v8404 = vmul.f32 %v7873, 0.75
        %v8405 = vmul.f32 %v7878, 0.75
        %v8406 = vmul.f32 %v7881, 0.75
        %v8407 = vmul.f32 %v7886, 0.75
        %v8408 = vmul.f32 %v7889, 0.75
        %v8409 = vmul.f32 %v7894, 0.75
        %v8410 = vmul.f32 %v7897, 0.75
        %v8411 = vmul.f32 %v7902, 0.75
        %v8412 = vmul.f32 %v7905, 0.75
        %v8413 = vmul.f32 %v7910, 0.75
        %v8414 = vmul.f32 %v7913, 0.75
        %v8415 = vmul.f32 %v7918, 0.75
        %v8416 = vmul.f32 %v7921, 0.75
        %v8417 = vmul.f32 %v7926, 0.75
        %v8418 = vmul.f32 %v7929, 0.75
        %v8419 = vmul.f32 %v7934, 0.75
        %v8420 = vmul.f32 %v7937, 0.75
        %v8421 = vmul.f32 %v7942, 0.75
        %v8422 = vmul.f32 %v7945, 0.75
        %v8423 = vmul.f32 %v7950, 0.75
        %v8424 = vmul.f32 %v7953, 0.75
        %v8425 = vmul.f32 %v7958, 0.75
        %v8426 = vmul.f32 %v7961, 0.75
        %v8427 = vmul.f32 %v7966, 0.75
        %v8428 = vmul.f32 %v7969, 0.75
        %v8429 = vmul.f32 %v7974, 0.75
        %v8430 = vmul.f32 %v7977, 0.75
        %v8431 = vmul.f32 %v3981, 0.25
        %v8432 = vmul.f32 %v3984, 0.25
        %v8433 = vmul.f32 %v3989, 0.25
        %v8434 = vmul.f32 %v3992, 0.25
        %v8435 = vmul.f32 %v3997, 0.25
        %v8436 = vmul.f32 %v4000, 0.25
        %v8437 = vmul.f32 %v4005, 0.25
        %v8438 = vmul.f32 %v4008, 0.25
        %v8439 = vmul.f32 %v4013, 0.25
        %v8440 = vmul.f32 %v4016, 0.25
        %v8441 = vmul.f32 %v4021, 0.25
        %v8442 = vmul.f32 %v4024, 0.25
        %v8443 = vmul.f32 %v4029, 0.25
        %v8444 = vmul.f32 %v4032, 0.25
        %v8445 = vmul.f32 %v4037, 0.25
        %v8446 = vmul.f32 %v4040, 0.25
        %v8447 = vmul.f32 %v4045, 0.25
        %v8448 = vmul.f32 %v4048, 0.25
        %v8449 = vmul.f32 %v4053, 0.25
        %v8450 = vmul.f32 %v4056, 0.25
        %v8451 = vmul.f32 %v4061, 0.25
        %v8452 = vmul.f32 %v4064, 0.25
        %v8453 = vmul.f32 %v4069, 0.25
        %v8454 = vmul.f32 %v4072, 0.25
        %v8455 = vmul.f32 %v4077, 0.25
        %v8456 = vmul.f32 %v4080, 0.25
        %v8457 = vmul.f32 %v4085, 0.25
        %v8458 = vmul.f32 %v4088, 0.25
        %v8459 = vmul.f32 %v4093, 0.25
        %v8460 = vmul.f32 %v4096, 0.25
        %v8461 = vadd.f32 %v8399, %v8301
        %v8462 = vadd.f32 %v8400, %v8302
        %v8463 = vadd.f32 %v8401, %v8431
        %v8464 = vadd.f32 %v8402, %v8432
        %v8465 = vadd.f32 %v8403, %v8433
        %v8466 = vadd.f32 %v8404, %v8434
        %v8467 = vadd.f32 %v8405, %v8435
        %v8468 = vadd.f32 %v8406, %v8436
        %v8469 = vadd.f32 %v8407, %v8437
        %v8470 = vadd.f32 %v8408, %v8438
        %v8471 = vadd.f32 %v8409, %v8439
        %v8472 = vadd.f32 %v8410, %v8440
        %v8473 = vadd.f32 %v8411, %v8441
        %v8474 = vadd.f32 %v8412, %v8442
        %v8475 = vadd.f32 %v8413, %v8443
        %v8476 = vadd.f32 %v8414, %v8444
        %v8477 = vadd.f32 %v8415, %v8445
        %v8478 = vadd.f32 %v8416, %v8446
        %v8479 = vadd.f32 %v8417, %v8447
        %v8480 = vadd.f32 %v8418, %v8448
        %v8481 = vadd.f32 %v8419, %v8449
        %v8482 = vadd.f32 %v8420, %v8450
        %v8483 = vadd.f32 %v8421, %v8451
        %v8484 = vadd.f32 %v8422, %v8452
        %v8485 = vadd.f32 %v8423, %v8453
        %v8486 = vadd.f32 %v8424, %v8454
        %v8487 = vadd.f32 %v8425, %v8455
        %v8488 = vadd.f32 %v8426, %v8456
        %v8489 = vadd.f32 %v8427, %v8457
        %v8490 = vadd.f32 %v8428, %v8458
        %v8491 = vadd.f32 %v8429, %v8459
        %v8492 = vadd.f32 %v8430, %v8460
        %v8493 = vadd.f32 %v8399, %v8431
        %v8494 = vadd.f32 %v8400, %v8432
        %v8495 = vadd.f32 %v8401, %v8433
        %v8496 = vadd.f32 %v8402, %v8434
        %v8497 = vadd.f32 %v8403, %v8435
        %v8498 = vadd.f32 %v8404, %v8436
        %v8499 = vadd.f32 %v8405, %v8437
        %v8500 = vadd.f32 %v8406, %v8438
        %v8501 = vadd.f32 %v8407, %v8439
        %v8502 = vadd.f32 %v8408, %v8440
        %v8503 = vadd.f32 %v8409, %v8441
        %v8504 = vadd.f32 %v8410, %v8442
        %v8505 = vadd.f32 %v8411, %v8443
        %v8506 = vadd.f32 %v8412, %v8444
        %v8507 = vadd.f32 %v8413, %v8445
        %v8508 = vadd.f32 %v8414, %v8446
        %v8509 = vadd.f32 %v8415, %v8447
        %v8510 = vadd.f32 %v8416, %v8448
        %v8511 = vadd.f32 %v8417, %v8449
        %v8512 = vadd.f32 %v8418, %v8450
        %v8513 = vadd.f32 %v8419, %v8451
        %v8514 = vadd.f32 %v8420, %v8452
        %v8515 = vadd.f32 %v8421, %v8453
        %v8516 = vadd.f32 %v8422, %v8454
        %v8517 = vadd.f32 %v8423, %v8455
        %v8518 = vadd.f32 %v8424, %v8456
        %v8519 = vadd.f32 %v8425, %v8457
        %v8520 = vadd.f32 %v8426, %v8458
        %v8521 = vadd.f32 %v8427, %v8459
        %v8522 = vadd.f32 %v8428, %v8460
        %v8523 = vadd.f32 %v8429, %v8365
        %v8524 = vadd.f32 %v8430, %v8366
        %vm8557 = vcmask 1040384
        %v8558 = vrot.slane %v8333, 7
        %v8559 = vrot.slane %v8334, 7
        %v8560 = vsel %vm8557, %v8558, %v8559
        %v8561 = vrot.slane %v8335, 7
        %v8562 = vrot.slane %v8336, 7
        %v8563 = vsel %vm8557, %v8561, %v8562
        %v8564 = vrot.slane %v8337, 7
        %v8565 = vrot.slane %v8338, 7
        %v8566 = vsel %vm8557, %v8564, %v8565
        %v8567 = vrot.slane %v8339, 7
        %v8568 = vrot.slane %v8340, 7
        %v8569 = vsel %vm8557, %v8567, %v8568
        %v8570 = vrot.slane %v8341, 7
        %v8571 = vrot.slane %v8342, 7
        %v8572 = vsel %vm8557, %v8570, %v8571
        %v8573 = vrot.slane %v8343, 7
        %v8574 = vrot.slane %v8344, 7
        %v8575 = vsel %vm8557, %v8573, %v8574
        %v8576 = vrot.slane %v8345, 7
        %v8577 = vrot.slane %v8346, 7
        %v8578 = vsel %vm8557, %v8576, %v8577
        %v8579 = vrot.slane %v8347, 7
        %v8580 = vrot.slane %v8348, 7
        %v8581 = vsel %vm8557, %v8579, %v8580
        %v8582 = vrot.slane %v8349, 7
        %v8583 = vrot.slane %v8350, 7
        %v8584 = vsel %vm8557, %v8582, %v8583
        %v8585 = vrot.slane %v8351, 7
        %v8586 = vrot.slane %v8352, 7
        %v8587 = vsel %vm8557, %v8585, %v8586
        %v8588 = vrot.slane %v8353, 7
        %v8589 = vrot.slane %v8354, 7
        %v8590 = vsel %vm8557, %v8588, %v8589
        %v8591 = vrot.slane %v8355, 7
        %v8592 = vrot.slane %v8356, 7
        %v8593 = vsel %vm8557, %v8591, %v8592
        %v8594 = vrot.slane %v8357, 7
        %v8595 = vrot.slane %v8358, 7
        %v8596 = vsel %vm8557, %v8594, %v8595
        %v8597 = vrot.slane %v8359, 7
        %v8598 = vrot.slane %v8360, 7
        %v8599 = vsel %vm8557, %v8597, %v8598
        %v8600 = vrot.slane %v8361, 7
        %v8601 = vrot.slane %v8362, 7
        %v8602 = vsel %vm8557, %v8600, %v8601
        %v8603 = vrot.slane %v8363, 7
        %v8604 = vrot.slane %v8364, 7
        %v8605 = vsel %vm8557, %v8603, %v8604
        %v8638 = vsel %vm8557, %v8077, %v8558
        %v8639 = vsel %vm8557, %v8079, %v8561
        %v8640 = vsel %vm8557, %v8081, %v8564
        %v8641 = vsel %vm8557, %v8083, %v8567
        %v8642 = vsel %vm8557, %v8085, %v8570
        %v8643 = vsel %vm8557, %v8087, %v8573
        %v8644 = vsel %vm8557, %v8089, %v8576
        %v8645 = vsel %vm8557, %v8091, %v8579
        %v8646 = vsel %vm8557, %v8093, %v8582
        %v8647 = vsel %vm8557, %v8095, %v8585
        %v8648 = vsel %vm8557, %v8097, %v8588
        %v8649 = vsel %vm8557, %v8099, %v8591
        %v8650 = vsel %vm8557, %v8101, %v8594
        %v8651 = vsel %vm8557, %v8103, %v8597
        %v8652 = vsel %vm8557, %v8105, %v8600
        %v8653 = vsel %vm8557, %v8107, %v8603
        %vm8686 = vcmask 1046528
        %v8687 = vrot.slane %v8077, 1
        %v8688 = vrot.slane %v8078, 1
        %v8689 = vsel %vm8686, %v8687, %v8688
        %v8690 = vrot.slane %v8079, 1
        %v8691 = vrot.slane %v8080, 1
        %v8692 = vsel %vm8686, %v8690, %v8691
        %v8693 = vrot.slane %v8081, 1
        %v8694 = vrot.slane %v8082, 1
        %v8695 = vsel %vm8686, %v8693, %v8694
        %v8696 = vrot.slane %v8083, 1
        %v8697 = vrot.slane %v8084, 1
        %v8698 = vsel %vm8686, %v8696, %v8697
        %v8699 = vrot.slane %v8085, 1
        %v8700 = vrot.slane %v8086, 1
        %v8701 = vsel %vm8686, %v8699, %v8700
        %v8702 = vrot.slane %v8087, 1
        %v8703 = vrot.slane %v8088, 1
        %v8704 = vsel %vm8686, %v8702, %v8703
        %v8705 = vrot.slane %v8089, 1
        %v8706 = vrot.slane %v8090, 1
        %v8707 = vsel %vm8686, %v8705, %v8706
        %v8708 = vrot.slane %v8091, 1
        %v8709 = vrot.slane %v8092, 1
        %v8710 = vsel %vm8686, %v8708, %v8709
        %v8711 = vrot.slane %v8093, 1
        %v8712 = vrot.slane %v8094, 1
        %v8713 = vsel %vm8686, %v8711, %v8712
        %v8714 = vrot.slane %v8095, 1
        %v8715 = vrot.slane %v8096, 1
        %v8716 = vsel %vm8686, %v8714, %v8715
        %v8717 = vrot.slane %v8097, 1
        %v8718 = vrot.slane %v8098, 1
        %v8719 = vsel %vm8686, %v8717, %v8718
        %v8720 = vrot.slane %v8099, 1
        %v8721 = vrot.slane %v8100, 1
        %v8722 = vsel %vm8686, %v8720, %v8721
        %v8723 = vrot.slane %v8101, 1
        %v8724 = vrot.slane %v8102, 1
        %v8725 = vsel %vm8686, %v8723, %v8724
        %v8726 = vrot.slane %v8103, 1
        %v8727 = vrot.slane %v8104, 1
        %v8728 = vsel %vm8686, %v8726, %v8727
        %v8729 = vrot.slane %v8105, 1
        %v8730 = vrot.slane %v8106, 1
        %v8731 = vsel %vm8686, %v8729, %v8730
        %v8732 = vrot.slane %v8107, 1
        %v8733 = vrot.slane %v8108, 1
        %v8734 = vsel %vm8686, %v8732, %v8733
        %v8767 = vsel %vm8686, %v8688, %v8334
        %v8768 = vsel %vm8686, %v8691, %v8336
        %v8769 = vsel %vm8686, %v8694, %v8338
        %v8770 = vsel %vm8686, %v8697, %v8340
        %v8771 = vsel %vm8686, %v8700, %v8342
        %v8772 = vsel %vm8686, %v8703, %v8344
        %v8773 = vsel %vm8686, %v8706, %v8346
        %v8774 = vsel %vm8686, %v8709, %v8348
        %v8775 = vsel %vm8686, %v8712, %v8350
        %v8776 = vsel %vm8686, %v8715, %v8352
        %v8777 = vsel %vm8686, %v8718, %v8354
        %v8778 = vsel %vm8686, %v8721, %v8356
        %v8779 = vsel %vm8686, %v8724, %v8358
        %v8780 = vsel %vm8686, %v8727, %v8360
        %v8781 = vsel %vm8686, %v8730, %v8362
        %v8782 = vsel %vm8686, %v8733, %v8364
        %v8783 = vmul.f32 %v8077, 0.75
        %v8784 = vmul.f32 %v8078, 0.75
        %v8785 = vmul.f32 %v8079, 0.75
        %v8786 = vmul.f32 %v8080, 0.75
        %v8787 = vmul.f32 %v8081, 0.75
        %v8788 = vmul.f32 %v8082, 0.75
        %v8789 = vmul.f32 %v8083, 0.75
        %v8790 = vmul.f32 %v8084, 0.75
        %v8791 = vmul.f32 %v8085, 0.75
        %v8792 = vmul.f32 %v8086, 0.75
        %v8793 = vmul.f32 %v8087, 0.75
        %v8794 = vmul.f32 %v8088, 0.75
        %v8795 = vmul.f32 %v8089, 0.75
        %v8796 = vmul.f32 %v8090, 0.75
        %v8797 = vmul.f32 %v8091, 0.75
        %v8798 = vmul.f32 %v8092, 0.75
        %v8799 = vmul.f32 %v8093, 0.75
        %v8800 = vmul.f32 %v8094, 0.75
        %v8801 = vmul.f32 %v8095, 0.75
        %v8802 = vmul.f32 %v8096, 0.75
        %v8803 = vmul.f32 %v8097, 0.75
        %v8804 = vmul.f32 %v8098, 0.75
        %v8805 = vmul.f32 %v8099, 0.75
        %v8806 = vmul.f32 %v8100, 0.75
        %v8807 = vmul.f32 %v8101, 0.75
        %v8808 = vmul.f32 %v8102, 0.75
        %v8809 = vmul.f32 %v8103, 0.75
        %v8810 = vmul.f32 %v8104, 0.75
        %v8811 = vmul.f32 %v8105, 0.75
        %v8812 = vmul.f32 %v8106, 0.75
        %v8813 = vmul.f32 %v8107, 0.75
        %v8814 = vmul.f32 %v8108, 0.75
        %v8815 = vmul.f32 %v8638, 0.25
        %v8816 = vmul.f32 %v8560, 0.25
        %v8817 = vmul.f32 %v8639, 0.25
        %v8818 = vmul.f32 %v8563, 0.25
        %v8819 = vmul.f32 %v8640, 0.25
        %v8820 = vmul.f32 %v8566, 0.25
        %v8821 = vmul.f32 %v8641, 0.25
        %v8822 = vmul.f32 %v8569, 0.25
        %v8823 = vmul.f32 %v8642, 0.25
        %v8824 = vmul.f32 %v8572, 0.25
        %v8825 = vmul.f32 %v8643, 0.25
        %v8826 = vmul.f32 %v8575, 0.25
        %v8827 = vmul.f32 %v8644, 0.25
        %v8828 = vmul.f32 %v8578, 0.25
        %v8829 = vmul.f32 %v8645, 0.25
        %v8830 = vmul.f32 %v8581, 0.25
        %v8831 = vmul.f32 %v8646, 0.25
        %v8832 = vmul.f32 %v8584, 0.25
        %v8833 = vmul.f32 %v8647, 0.25
        %v8834 = vmul.f32 %v8587, 0.25
        %v8835 = vmul.f32 %v8648, 0.25
        %v8836 = vmul.f32 %v8590, 0.25
        %v8837 = vmul.f32 %v8649, 0.25
        %v8838 = vmul.f32 %v8593, 0.25
        %v8839 = vmul.f32 %v8650, 0.25
        %v8840 = vmul.f32 %v8596, 0.25
        %v8841 = vmul.f32 %v8651, 0.25
        %v8842 = vmul.f32 %v8599, 0.25
        %v8843 = vmul.f32 %v8652, 0.25
        %v8844 = vmul.f32 %v8602, 0.25
        %v8845 = vmul.f32 %v8653, 0.25
        %v8846 = vmul.f32 %v8605, 0.25
        %v8847 = vadd.f32 %v8783, %v8815
        %v8848 = vadd.f32 %v8784, %v8816
        %v8849 = vadd.f32 %v8785, %v8817
        %v8850 = vadd.f32 %v8786, %v8818
        %v8851 = vadd.f32 %v8787, %v8819
        %v8852 = vadd.f32 %v8788, %v8820
        %v8853 = vadd.f32 %v8789, %v8821
        %v8854 = vadd.f32 %v8790, %v8822
        %v8855 = vadd.f32 %v8791, %v8823
        %v8856 = vadd.f32 %v8792, %v8824
        %v8857 = vadd.f32 %v8793, %v8825
        %v8858 = vadd.f32 %v8794, %v8826
        %v8859 = vadd.f32 %v8795, %v8827
        %v8860 = vadd.f32 %v8796, %v8828
        %v8861 = vadd.f32 %v8797, %v8829
        %v8862 = vadd.f32 %v8798, %v8830
        %v8863 = vadd.f32 %v8799, %v8831
        %v8864 = vadd.f32 %v8800, %v8832
        %v8865 = vadd.f32 %v8801, %v8833
        %v8866 = vadd.f32 %v8802, %v8834
        %v8867 = vadd.f32 %v8803, %v8835
        %v8868 = vadd.f32 %v8804, %v8836
        %v8869 = vadd.f32 %v8805, %v8837
        %v8870 = vadd.f32 %v8806, %v8838
        %v8871 = vadd.f32 %v8807, %v8839
        %v8872 = vadd.f32 %v8808, %v8840
        %v8873 = vadd.f32 %v8809, %v8841
        %v8874 = vadd.f32 %v8810, %v8842
        %v8875 = vadd.f32 %v8811, %v8843
        %v8876 = vadd.f32 %v8812, %v8844
        %v8877 = vadd.f32 %v8813, %v8845
        %v8878 = vadd.f32 %v8814, %v8846
        %8879 = vst [vmem:[%s238] sm:$0xff] %v8847
        %8880 = vst [vmem:[%s238 + $0x8] sm:$0xff] %v8848
        %8881 = vst [vmem:[%s238 + $0x10] sm:$0xff] %v8849
        %8882 = vst [vmem:[%s238 + $0x18] sm:$0xff] %v8850
        %8883 = vst [vmem:[%s238 + $0x20] sm:$0xff] %v8851
        %8884 = vst [vmem:[%s238 + $0x28] sm:$0xff] %v8852
        %8885 = vst [vmem:[%s238 + $0x30] sm:$0xff] %v8853
        %8886 = vst [vmem:[%s238 + $0x38] sm:$0xff] %v8854
        %8887 = vst [vmem:[%s238 + $0x40] sm:$0xff] %v8855
        %8888 = vst [vmem:[%s238 + $0x48] sm:$0xff] %v8856
        %8889 = vst [vmem:[%s238 + $0x50] sm:$0xff] %v8857
        %8890 = vst [vmem:[%s238 + $0x58] sm:$0xff] %v8858
        %8891 = vst [vmem:[%s238 + $0x60] sm:$0xff] %v8859
        %8892 = vst [vmem:[%s238 + $0x68] sm:$0xff] %v8860
        %8893 = vst [vmem:[%s238 + $0x70] sm:$0xff] %v8861
        %8894 = vst [vmem:[%s238 + $0x78] sm:$0xff] %v8862
        %8895 = vst [vmem:[%s238 + $0x80] sm:$0xff] %v8863
        %8896 = vst [vmem:[%s238 + $0x88] sm:$0xff] %v8864
        %8897 = vst [vmem:[%s238 + $0x90] sm:$0xff] %v8865
        %8898 = vst [vmem:[%s238 + $0x98] sm:$0xff] %v8866
        %8899 = vst [vmem:[%s238 + $0xa0] sm:$0xff] %v8867
        %8900 = vst [vmem:[%s238 + $0xa8] sm:$0xff] %v8868
        %8901 = vst [vmem:[%s238 + $0xb0] sm:$0xff] %v8869
        %8902 = vst [vmem:[%s238 + $0xb8] sm:$0xff] %v8870
        %8903 = vst [vmem:[%s238 + $0xc0] sm:$0xff] %v8871
        %8904 = vst [vmem:[%s238 + $0xc8] sm:$0xff] %v8872
        %8905 = vst [vmem:[%s238 + $0xd0] sm:$0xff] %v8873
        %8906 = vst [vmem:[%s238 + $0xd8] sm:$0xff] %v8874
        %8907 = vst [vmem:[%s238 + $0xe0] sm:$0xff] %v8875
        %8908 = vst [vmem:[%s238 + $0xe8] sm:$0xff] %v8876
        %8909 = vst [vmem:[%s238 + $0xf0] sm:$0xff] %v8877
        %8910 = vst [vmem:[%s238 + $0xf8] sm:$0xff] %v8878
        %v8911 = vmul.f32 %v8333, 0.25
        %v8912 = vmul.f32 %v8334, 0.25
        %v8913 = vmul.f32 %v8335, 0.25
        %v8914 = vmul.f32 %v8336, 0.25
        %v8915 = vmul.f32 %v8337, 0.25
        %v8916 = vmul.f32 %v8338, 0.25
        %v8917 = vmul.f32 %v8339, 0.25
        %v8918 = vmul.f32 %v8340, 0.25
        %v8919 = vmul.f32 %v8341, 0.25
        %v8920 = vmul.f32 %v8342, 0.25
        %v8921 = vmul.f32 %v8343, 0.25
        %v8922 = vmul.f32 %v8344, 0.25
        %v8923 = vmul.f32 %v8345, 0.25
        %v8924 = vmul.f32 %v8346, 0.25
        %v8925 = vmul.f32 %v8347, 0.25
        %v8926 = vmul.f32 %v8348, 0.25
        %v8927 = vmul.f32 %v8349, 0.25
        %v8928 = vmul.f32 %v8350, 0.25
        %v8929 = vmul.f32 %v8351, 0.25
        %v8930 = vmul.f32 %v8352, 0.25
        %v8931 = vmul.f32 %v8353, 0.25
        %v8932 = vmul.f32 %v8354, 0.25
        %v8933 = vmul.f32 %v8355, 0.25
        %v8934 = vmul.f32 %v8356, 0.25
        %v8935 = vmul.f32 %v8357, 0.25
        %v8936 = vmul.f32 %v8358, 0.25
        %v8937 = vmul.f32 %v8359, 0.25
        %v8938 = vmul.f32 %v8360, 0.25
        %v8939 = vmul.f32 %v8361, 0.25
        %v8940 = vmul.f32 %v8362, 0.25
        %v8941 = vmul.f32 %v8363, 0.25
        %v8942 = vmul.f32 %v8364, 0.25
        %v8943 = vadd.f32 %v8783, %v8911
        %v8944 = vadd.f32 %v8784, %v8912
        %v8945 = vadd.f32 %v8785, %v8913
        %v8946 = vadd.f32 %v8786, %v8914
        %v8947 = vadd.f32 %v8787, %v8915
        %v8948 = vadd.f32 %v8788, %v8916
        %v8949 = vadd.f32 %v8789, %v8917
        %v8950 = vadd.f32 %v8790, %v8918
        %v8951 = vadd.f32 %v8791, %v8919
        %v8952 = vadd.f32 %v8792, %v8920
        %v8953 = vadd.f32 %v8793, %v8921
        %v8954 = vadd.f32 %v8794, %v8922
        %v8955 = vadd.f32 %v8795, %v8923
        %v8956 = vadd.f32 %v8796, %v8924
        %v8957 = vadd.f32 %v8797, %v8925
        %v8958 = vadd.f32 %v8798, %v8926
        %v8959 = vadd.f32 %v8799, %v8927
        %v8960 = vadd.f32 %v8800, %v8928
        %v8961 = vadd.f32 %v8801, %v8929
        %v8962 = vadd.f32 %v8802, %v8930
        %v8963 = vadd.f32 %v8803, %v8931
        %v8964 = vadd.f32 %v8804, %v8932
        %v8965 = vadd.f32 %v8805, %v8933
        %v8966 = vadd.f32 %v8806, %v8934
        %v8967 = vadd.f32 %v8807, %v8935
        %v8968 = vadd.f32 %v8808, %v8936
        %v8969 = vadd.f32 %v8809, %v8937
        %v8970 = vadd.f32 %v8810, %v8938
        %v8971 = vadd.f32 %v8811, %v8939
        %v8972 = vadd.f32 %v8812, %v8940
        %v8973 = vadd.f32 %v8813, %v8941
        %v8974 = vadd.f32 %v8814, %v8942
        %s8975 = scalar_lea.vmem %s238, 256
        %8976 = vst [vmem:[%s8975] sm:$0xff] %v8943
        %8977 = vst [vmem:[%s8975 + $0x8] sm:$0xff] %v8944
        %8978 = vst [vmem:[%s8975 + $0x10] sm:$0xff] %v8945
        %8979 = vst [vmem:[%s8975 + $0x18] sm:$0xff] %v8946
        %8980 = vst [vmem:[%s8975 + $0x20] sm:$0xff] %v8947
        %8981 = vst [vmem:[%s8975 + $0x28] sm:$0xff] %v8948
        %8982 = vst [vmem:[%s8975 + $0x30] sm:$0xff] %v8949
        %8983 = vst [vmem:[%s8975 + $0x38] sm:$0xff] %v8950
        %8984 = vst [vmem:[%s8975 + $0x40] sm:$0xff] %v8951
        %8985 = vst [vmem:[%s8975 + $0x48] sm:$0xff] %v8952
        %8986 = vst [vmem:[%s8975 + $0x50] sm:$0xff] %v8953
        %8987 = vst [vmem:[%s8975 + $0x58] sm:$0xff] %v8954
        %8988 = vst [vmem:[%s8975 + $0x60] sm:$0xff] %v8955
        %8989 = vst [vmem:[%s8975 + $0x68] sm:$0xff] %v8956
        %8990 = vst [vmem:[%s8975 + $0x70] sm:$0xff] %v8957
        %8991 = vst [vmem:[%s8975 + $0x78] sm:$0xff] %v8958
        %8992 = vst [vmem:[%s8975 + $0x80] sm:$0xff] %v8959
        %8993 = vst [vmem:[%s8975 + $0x88] sm:$0xff] %v8960
        %8994 = vst [vmem:[%s8975 + $0x90] sm:$0xff] %v8961
        %8995 = vst [vmem:[%s8975 + $0x98] sm:$0xff] %v8962
        %8996 = vst [vmem:[%s8975 + $0xa0] sm:$0xff] %v8963
        %8997 = vst [vmem:[%s8975 + $0xa8] sm:$0xff] %v8964
        %8998 = vst [vmem:[%s8975 + $0xb0] sm:$0xff] %v8965
        %8999 = vst [vmem:[%s8975 + $0xb8] sm:$0xff] %v8966
        %9000 = vst [vmem:[%s8975 + $0xc0] sm:$0xff] %v8967
        %9001 = vst [vmem:[%s8975 + $0xc8] sm:$0xff] %v8968
        %9002 = vst [vmem:[%s8975 + $0xd0] sm:$0xff] %v8969
        %9003 = vst [vmem:[%s8975 + $0xd8] sm:$0xff] %v8970
        %9004 = vst [vmem:[%s8975 + $0xe0] sm:$0xff] %v8971
        %9005 = vst [vmem:[%s8975 + $0xe8] sm:$0xff] %v8972
        %9006 = vst [vmem:[%s8975 + $0xf0] sm:$0xff] %v8973
        %9007 = vst [vmem:[%s8975 + $0xf8] sm:$0xff] %v8974
        %v9008 = vmul.f32 %v8333, 0.75
        %v9009 = vmul.f32 %v8334, 0.75
        %v9010 = vmul.f32 %v8335, 0.75
        %v9011 = vmul.f32 %v8336, 0.75
        %v9012 = vmul.f32 %v8337, 0.75
        %v9013 = vmul.f32 %v8338, 0.75
        %v9014 = vmul.f32 %v8339, 0.75
        %v9015 = vmul.f32 %v8340, 0.75
        %v9016 = vmul.f32 %v8341, 0.75
        %v9017 = vmul.f32 %v8342, 0.75
        %v9018 = vmul.f32 %v8343, 0.75
        %v9019 = vmul.f32 %v8344, 0.75
        %v9020 = vmul.f32 %v8345, 0.75
        %v9021 = vmul.f32 %v8346, 0.75
        %v9022 = vmul.f32 %v8347, 0.75
        %v9023 = vmul.f32 %v8348, 0.75
        %v9024 = vmul.f32 %v8349, 0.75
        %v9025 = vmul.f32 %v8350, 0.75
        %v9026 = vmul.f32 %v8351, 0.75
        %v9027 = vmul.f32 %v8352, 0.75
        %v9028 = vmul.f32 %v8353, 0.75
        %v9029 = vmul.f32 %v8354, 0.75
        %v9030 = vmul.f32 %v8355, 0.75
        %v9031 = vmul.f32 %v8356, 0.75
        %v9032 = vmul.f32 %v8357, 0.75
        %v9033 = vmul.f32 %v8358, 0.75
        %v9034 = vmul.f32 %v8359, 0.75
        %v9035 = vmul.f32 %v8360, 0.75
        %v9036 = vmul.f32 %v8361, 0.75
        %v9037 = vmul.f32 %v8362, 0.75
        %v9038 = vmul.f32 %v8363, 0.75
        %v9039 = vmul.f32 %v8364, 0.75
        %v9040 = vmul.f32 %v8077, 0.25
        %v9041 = vmul.f32 %v8078, 0.25
        %v9042 = vmul.f32 %v8079, 0.25
        %v9043 = vmul.f32 %v8080, 0.25
        %v9044 = vmul.f32 %v8081, 0.25
        %v9045 = vmul.f32 %v8082, 0.25
        %v9046 = vmul.f32 %v8083, 0.25
        %v9047 = vmul.f32 %v8084, 0.25
        %v9048 = vmul.f32 %v8085, 0.25
        %v9049 = vmul.f32 %v8086, 0.25
        %v9050 = vmul.f32 %v8087, 0.25
        %v9051 = vmul.f32 %v8088, 0.25
        %v9052 = vmul.f32 %v8089, 0.25
        %v9053 = vmul.f32 %v8090, 0.25
        %v9054 = vmul.f32 %v8091, 0.25
        %v9055 = vmul.f32 %v8092, 0.25
        %v9056 = vmul.f32 %v8093, 0.25
        %v9057 = vmul.f32 %v8094, 0.25
        %v9058 = vmul.f32 %v8095, 0.25
        %v9059 = vmul.f32 %v8096, 0.25
        %v9060 = vmul.f32 %v8097, 0.25
        %v9061 = vmul.f32 %v8098, 0.25
        %v9062 = vmul.f32 %v8099, 0.25
        %v9063 = vmul.f32 %v8100, 0.25
        %v9064 = vmul.f32 %v8101, 0.25
        %v9065 = vmul.f32 %v8102, 0.25
        %v9066 = vmul.f32 %v8103, 0.25
        %v9067 = vmul.f32 %v8104, 0.25
        %v9068 = vmul.f32 %v8105, 0.25
        %v9069 = vmul.f32 %v8106, 0.25
        %v9070 = vmul.f32 %v8107, 0.25
        %v9071 = vmul.f32 %v8108, 0.25
        %v9072 = vadd.f32 %v9008, %v9040
        %v9073 = vadd.f32 %v9009, %v9041
        %v9074 = vadd.f32 %v9010, %v9042
        %v9075 = vadd.f32 %v9011, %v9043
        %v9076 = vadd.f32 %v9012, %v9044
        %v9077 = vadd.f32 %v9013, %v9045
        %v9078 = vadd.f32 %v9014, %v9046
        %v9079 = vadd.f32 %v9015, %v9047
        %v9080 = vadd.f32 %v9016, %v9048
        %v9081 = vadd.f32 %v9017, %v9049
        %v9082 = vadd.f32 %v9018, %v9050
        %v9083 = vadd.f32 %v9019, %v9051
        %v9084 = vadd.f32 %v9020, %v9052
        %v9085 = vadd.f32 %v9021, %v9053
        %v9086 = vadd.f32 %v9022, %v9054
        %v9087 = vadd.f32 %v9023, %v9055
        %v9088 = vadd.f32 %v9024, %v9056
        %v9089 = vadd.f32 %v9025, %v9057
        %v9090 = vadd.f32 %v9026, %v9058
        %v9091 = vadd.f32 %v9027, %v9059
        %v9092 = vadd.f32 %v9028, %v9060
        %v9093 = vadd.f32 %v9029, %v9061
        %v9094 = vadd.f32 %v9030, %v9062
        %v9095 = vadd.f32 %v9031, %v9063
        %v9096 = vadd.f32 %v9032, %v9064
        %v9097 = vadd.f32 %v9033, %v9065
        %v9098 = vadd.f32 %v9034, %v9066
        %v9099 = vadd.f32 %v9035, %v9067
        %v9100 = vadd.f32 %v9036, %v9068
        %v9101 = vadd.f32 %v9037, %v9069
        %v9102 = vadd.f32 %v9038, %v9070
        %v9103 = vadd.f32 %v9039, %v9071
        %s9104 = scalar_lea.vmem %s238, 512
        %9105 = vst [vmem:[%s9104] sm:$0xff] %v9072
        %9106 = vst [vmem:[%s9104 + $0x8] sm:$0xff] %v9073
        %9107 = vst [vmem:[%s9104 + $0x10] sm:$0xff] %v9074
        %9108 = vst [vmem:[%s9104 + $0x18] sm:$0xff] %v9075
        %9109 = vst [vmem:[%s9104 + $0x20] sm:$0xff] %v9076
        %9110 = vst [vmem:[%s9104 + $0x28] sm:$0xff] %v9077
        %9111 = vst [vmem:[%s9104 + $0x30] sm:$0xff] %v9078
        %9112 = vst [vmem:[%s9104 + $0x38] sm:$0xff] %v9079
        %9113 = vst [vmem:[%s9104 + $0x40] sm:$0xff] %v9080
        %9114 = vst [vmem:[%s9104 + $0x48] sm:$0xff] %v9081
        %9115 = vst [vmem:[%s9104 + $0x50] sm:$0xff] %v9082
        %9116 = vst [vmem:[%s9104 + $0x58] sm:$0xff] %v9083
        %9117 = vst [vmem:[%s9104 + $0x60] sm:$0xff] %v9084
        %9118 = vst [vmem:[%s9104 + $0x68] sm:$0xff] %v9085
        %9119 = vst [vmem:[%s9104 + $0x70] sm:$0xff] %v9086
        %9120 = vst [vmem:[%s9104 + $0x78] sm:$0xff] %v9087
        %9121 = vst [vmem:[%s9104 + $0x80] sm:$0xff] %v9088
        %9122 = vst [vmem:[%s9104 + $0x88] sm:$0xff] %v9089
        %9123 = vst [vmem:[%s9104 + $0x90] sm:$0xff] %v9090
        %9124 = vst [vmem:[%s9104 + $0x98] sm:$0xff] %v9091
        %9125 = vst [vmem:[%s9104 + $0xa0] sm:$0xff] %v9092
        %9126 = vst [vmem:[%s9104 + $0xa8] sm:$0xff] %v9093
        %9127 = vst [vmem:[%s9104 + $0xb0] sm:$0xff] %v9094
        %9128 = vst [vmem:[%s9104 + $0xb8] sm:$0xff] %v9095
        %9129 = vst [vmem:[%s9104 + $0xc0] sm:$0xff] %v9096
        %9130 = vst [vmem:[%s9104 + $0xc8] sm:$0xff] %v9097
        %9131 = vst [vmem:[%s9104 + $0xd0] sm:$0xff] %v9098
        %9132 = vst [vmem:[%s9104 + $0xd8] sm:$0xff] %v9099
        %9133 = vst [vmem:[%s9104 + $0xe0] sm:$0xff] %v9100
        %9134 = vst [vmem:[%s9104 + $0xe8] sm:$0xff] %v9101
        %9135 = vst [vmem:[%s9104 + $0xf0] sm:$0xff] %v9102
        %9136 = vst [vmem:[%s9104 + $0xf8] sm:$0xff] %v9103
        %v9137 = vmul.f32 %v8689, 0.25
        %v9138 = vmul.f32 %v8767, 0.25
        %v9139 = vmul.f32 %v8692, 0.25
        %v9140 = vmul.f32 %v8768, 0.25
        %v9141 = vmul.f32 %v8695, 0.25
        %v9142 = vmul.f32 %v8769, 0.25
        %v9143 = vmul.f32 %v8698, 0.25
        %v9144 = vmul.f32 %v8770, 0.25
        %v9145 = vmul.f32 %v8701, 0.25
        %v9146 = vmul.f32 %v8771, 0.25
        %v9147 = vmul.f32 %v8704, 0.25
        %v9148 = vmul.f32 %v8772, 0.25
        %v9149 = vmul.f32 %v8707, 0.25
        %v9150 = vmul.f32 %v8773, 0.25
        %v9151 = vmul.f32 %v8710, 0.25
        %v9152 = vmul.f32 %v8774, 0.25
        %v9153 = vmul.f32 %v8713, 0.25
        %v9154 = vmul.f32 %v8775, 0.25
        %v9155 = vmul.f32 %v8716, 0.25
        %v9156 = vmul.f32 %v8776, 0.25
        %v9157 = vmul.f32 %v8719, 0.25
        %v9158 = vmul.f32 %v8777, 0.25
        %v9159 = vmul.f32 %v8722, 0.25
        %v9160 = vmul.f32 %v8778, 0.25
        %v9161 = vmul.f32 %v8725, 0.25
        %v9162 = vmul.f32 %v8779, 0.25
        %v9163 = vmul.f32 %v8728, 0.25
        %v9164 = vmul.f32 %v8780, 0.25
        %v9165 = vmul.f32 %v8731, 0.25
        %v9166 = vmul.f32 %v8781, 0.25
        %v9167 = vmul.f32 %v8734, 0.25
        %v9168 = vmul.f32 %v8782, 0.25
        %v9169 = vadd.f32 %v9008, %v9137
        %v9170 = vadd.f32 %v9009, %v9138
        %v9171 = vadd.f32 %v9010, %v9139
        %v9172 = vadd.f32 %v9011, %v9140
        %v9173 = vadd.f32 %v9012, %v9141
        %v9174 = vadd.f32 %v9013, %v9142
        %v9175 = vadd.f32 %v9014, %v9143
        %v9176 = vadd.f32 %v9015, %v9144
        %v9177 = vadd.f32 %v9016, %v9145
        %v9178 = vadd.f32 %v9017, %v9146
        %v9179 = vadd.f32 %v9018, %v9147
        %v9180 = vadd.f32 %v9019, %v9148
        %v9181 = vadd.f32 %v9020, %v9149
        %v9182 = vadd.f32 %v9021, %v9150
        %v9183 = vadd.f32 %v9022, %v9151
        %v9184 = vadd.f32 %v9023, %v9152
        %v9185 = vadd.f32 %v9024, %v9153
        %v9186 = vadd.f32 %v9025, %v9154
        %v9187 = vadd.f32 %v9026, %v9155
        %v9188 = vadd.f32 %v9027, %v9156
        %v9189 = vadd.f32 %v9028, %v9157
        %v9190 = vadd.f32 %v9029, %v9158
        %v9191 = vadd.f32 %v9030, %v9159
        %v9192 = vadd.f32 %v9031, %v9160
        %v9193 = vadd.f32 %v9032, %v9161
        %v9194 = vadd.f32 %v9033, %v9162
        %v9195 = vadd.f32 %v9034, %v9163
        %v9196 = vadd.f32 %v9035, %v9164
        %v9197 = vadd.f32 %v9036, %v9165
        %v9198 = vadd.f32 %v9037, %v9166
        %v9199 = vadd.f32 %v9038, %v9167
        %v9200 = vadd.f32 %v9039, %v9168
        %s9201 = scalar_lea.vmem %s238, 768
        %9202 = vst [vmem:[%s9201] sm:$0xff] %v9169
        %9203 = vst [vmem:[%s9201 + $0x8] sm:$0xff] %v9170
        %9204 = vst [vmem:[%s9201 + $0x10] sm:$0xff] %v9171
        %9205 = vst [vmem:[%s9201 + $0x18] sm:$0xff] %v9172
        %9206 = vst [vmem:[%s9201 + $0x20] sm:$0xff] %v9173
        %9207 = vst [vmem:[%s9201 + $0x28] sm:$0xff] %v9174
        %9208 = vst [vmem:[%s9201 + $0x30] sm:$0xff] %v9175
        %9209 = vst [vmem:[%s9201 + $0x38] sm:$0xff] %v9176
        %9210 = vst [vmem:[%s9201 + $0x40] sm:$0xff] %v9177
        %9211 = vst [vmem:[%s9201 + $0x48] sm:$0xff] %v9178
        %9212 = vst [vmem:[%s9201 + $0x50] sm:$0xff] %v9179
        %9213 = vst [vmem:[%s9201 + $0x58] sm:$0xff] %v9180
        %9214 = vst [vmem:[%s9201 + $0x60] sm:$0xff] %v9181
        %9215 = vst [vmem:[%s9201 + $0x68] sm:$0xff] %v9182
        %9216 = vst [vmem:[%s9201 + $0x70] sm:$0xff] %v9183
        %9217 = vst [vmem:[%s9201 + $0x78] sm:$0xff] %v9184
        %9218 = vst [vmem:[%s9201 + $0x80] sm:$0xff] %v9185
        %9219 = vst [vmem:[%s9201 + $0x88] sm:$0xff] %v9186
        %9220 = vst [vmem:[%s9201 + $0x90] sm:$0xff] %v9187
        %9221 = vst [vmem:[%s9201 + $0x98] sm:$0xff] %v9188
        %9222 = vst [vmem:[%s9201 + $0xa0] sm:$0xff] %v9189
        %9223 = vst [vmem:[%s9201 + $0xa8] sm:$0xff] %v9190
        %9224 = vst [vmem:[%s9201 + $0xb0] sm:$0xff] %v9191
        %9225 = vst [vmem:[%s9201 + $0xb8] sm:$0xff] %v9192
        %9226 = vst [vmem:[%s9201 + $0xc0] sm:$0xff] %v9193
        %9227 = vst [vmem:[%s9201 + $0xc8] sm:$0xff] %v9194
        %9228 = vst [vmem:[%s9201 + $0xd0] sm:$0xff] %v9195
        %9229 = vst [vmem:[%s9201 + $0xd8] sm:$0xff] %v9196
        %9230 = vst [vmem:[%s9201 + $0xe0] sm:$0xff] %v9197
        %9231 = vst [vmem:[%s9201 + $0xe8] sm:$0xff] %v9198
        %9232 = vst [vmem:[%s9201 + $0xf0] sm:$0xff] %v9199
        %9233 = vst [vmem:[%s9201 + $0xf8] sm:$0xff] %v9200
        %v9266 = vrot.slane %v8367, 7
        %v9267 = vrot.slane %v8368, 7
        %v9268 = vsel %vm8557, %v9266, %v9267
        %v9269 = vrot.slane %v8369, 7
        %v9270 = vrot.slane %v8370, 7
        %v9271 = vsel %vm8557, %v9269, %v9270
        %v9272 = vrot.slane %v8371, 7
        %v9273 = vrot.slane %v8372, 7
        %v9274 = vsel %vm8557, %v9272, %v9273
        %v9275 = vrot.slane %v8373, 7
        %v9276 = vrot.slane %v8374, 7
        %v9277 = vsel %vm8557, %v9275, %v9276
        %v9278 = vrot.slane %v8375, 7
        %v9279 = vrot.slane %v8376, 7
        %v9280 = vsel %vm8557, %v9278, %v9279
        %v9281 = vrot.slane %v8377, 7
        %v9282 = vrot.slane %v8378, 7
        %v9283 = vsel %vm8557, %v9281, %v9282
        %v9284 = vrot.slane %v8379, 7
        %v9285 = vrot.slane %v8380, 7
        %v9286 = vsel %vm8557, %v9284, %v9285
        %v9287 = vrot.slane %v8381, 7
        %v9288 = vrot.slane %v8382, 7
        %v9289 = vsel %vm8557, %v9287, %v9288
        %v9290 = vrot.slane %v8383, 7
        %v9291 = vrot.slane %v8384, 7
        %v9292 = vsel %vm8557, %v9290, %v9291
        %v9293 = vrot.slane %v8385, 7
        %v9294 = vrot.slane %v8386, 7
        %v9295 = vsel %vm8557, %v9293, %v9294
        %v9296 = vrot.slane %v8387, 7
        %v9297 = vrot.slane %v8388, 7
        %v9298 = vsel %vm8557, %v9296, %v9297
        %v9299 = vrot.slane %v8389, 7
        %v9300 = vrot.slane %v8390, 7
        %v9301 = vsel %vm8557, %v9299, %v9300
        %v9302 = vrot.slane %v8391, 7
        %v9303 = vrot.slane %v8392, 7
        %v9304 = vsel %vm8557, %v9302, %v9303
        %v9305 = vrot.slane %v8393, 7
        %v9306 = vrot.slane %v8394, 7
        %v9307 = vsel %vm8557, %v9305, %v9306
        %v9308 = vrot.slane %v8395, 7
        %v9309 = vrot.slane %v8396, 7
        %v9310 = vsel %vm8557, %v9308, %v9309
        %v9311 = vrot.slane %v8397, 7
        %v9312 = vrot.slane %v8398, 7
        %v9313 = vsel %vm8557, %v9311, %v9312
        %v9346 = vsel %vm8557, %v8111, %v9266
        %v9347 = vsel %vm8557, %v8113, %v9269
        %v9348 = vsel %vm8557, %v8115, %v9272
        %v9349 = vsel %vm8557, %v8117, %v9275
        %v9350 = vsel %vm8557, %v8119, %v9278
        %v9351 = vsel %vm8557, %v8121, %v9281
        %v9352 = vsel %vm8557, %v8123, %v9284
        %v9353 = vsel %vm8557, %v8125, %v9287
        %v9354 = vsel %vm8557, %v8127, %v9290
        %v9355 = vsel %vm8557, %v8129, %v9293
        %v9356 = vsel %vm8557, %v8131, %v9296
        %v9357 = vsel %vm8557, %v8133, %v9299
        %v9358 = vsel %vm8557, %v8135, %v9302
        %v9359 = vsel %vm8557, %v8137, %v9305
        %v9360 = vsel %vm8557, %v8139, %v9308
        %v9361 = vsel %vm8557, %v8141, %v9311
        %v9394 = vrot.slane %v8111, 1
        %v9395 = vrot.slane %v8112, 1
        %v9396 = vsel %vm8686, %v9394, %v9395
        %v9397 = vrot.slane %v8113, 1
        %v9398 = vrot.slane %v8114, 1
        %v9399 = vsel %vm8686, %v9397, %v9398
        %v9400 = vrot.slane %v8115, 1
        %v9401 = vrot.slane %v8116, 1
        %v9402 = vsel %vm8686, %v9400, %v9401
        %v9403 = vrot.slane %v8117, 1
        %v9404 = vrot.slane %v8118, 1
        %v9405 = vsel %vm8686, %v9403, %v9404
        %v9406 = vrot.slane %v8119, 1
        %v9407 = vrot.slane %v8120, 1
        %v9408 = vsel %vm8686, %v9406, %v9407
        %v9409 = vrot.slane %v8121, 1
        %v9410 = vrot.slane %v8122, 1
        %v9411 = vsel %vm8686, %v9409, %v9410
        %v9412 = vrot.slane %v8123, 1
        %v9413 = vrot.slane %v8124, 1
        %v9414 = vsel %vm8686, %v9412, %v9413
        %v9415 = vrot.slane %v8125, 1
        %v9416 = vrot.slane %v8126, 1
        %v9417 = vsel %vm8686, %v9415, %v9416
        %v9418 = vrot.slane %v8127, 1
        %v9419 = vrot.slane %v8128, 1
        %v9420 = vsel %vm8686, %v9418, %v9419
        %v9421 = vrot.slane %v8129, 1
        %v9422 = vrot.slane %v8130, 1
        %v9423 = vsel %vm8686, %v9421, %v9422
        %v9424 = vrot.slane %v8131, 1
        %v9425 = vrot.slane %v8132, 1
        %v9426 = vsel %vm8686, %v9424, %v9425
        %v9427 = vrot.slane %v8133, 1
        %v9428 = vrot.slane %v8134, 1
        %v9429 = vsel %vm8686, %v9427, %v9428
        %v9430 = vrot.slane %v8135, 1
        %v9431 = vrot.slane %v8136, 1
        %v9432 = vsel %vm8686, %v9430, %v9431
        %v9433 = vrot.slane %v8137, 1
        %v9434 = vrot.slane %v8138, 1
        %v9435 = vsel %vm8686, %v9433, %v9434
        %v9436 = vrot.slane %v8139, 1
        %v9437 = vrot.slane %v8140, 1
        %v9438 = vsel %vm8686, %v9436, %v9437
        %v9439 = vrot.slane %v8141, 1
        %v9440 = vrot.slane %v8142, 1
        %v9441 = vsel %vm8686, %v9439, %v9440
        %v9474 = vsel %vm8686, %v9395, %v8368
        %v9475 = vsel %vm8686, %v9398, %v8370
        %v9476 = vsel %vm8686, %v9401, %v8372
        %v9477 = vsel %vm8686, %v9404, %v8374
        %v9478 = vsel %vm8686, %v9407, %v8376
        %v9479 = vsel %vm8686, %v9410, %v8378
        %v9480 = vsel %vm8686, %v9413, %v8380
        %v9481 = vsel %vm8686, %v9416, %v8382
        %v9482 = vsel %vm8686, %v9419, %v8384
        %v9483 = vsel %vm8686, %v9422, %v8386
        %v9484 = vsel %vm8686, %v9425, %v8388
        %v9485 = vsel %vm8686, %v9428, %v8390
        %v9486 = vsel %vm8686, %v9431, %v8392
        %v9487 = vsel %vm8686, %v9434, %v8394
        %v9488 = vsel %vm8686, %v9437, %v8396
        %v9489 = vsel %vm8686, %v9440, %v8398
        %v9490 = vmul.f32 %v8111, 0.75
        %v9491 = vmul.f32 %v8112, 0.75
        %v9492 = vmul.f32 %v8113, 0.75
        %v9493 = vmul.f32 %v8114, 0.75
        %v9494 = vmul.f32 %v8115, 0.75
        %v9495 = vmul.f32 %v8116, 0.75
        %v9496 = vmul.f32 %v8117, 0.75
        %v9497 = vmul.f32 %v8118, 0.75
        %v9498 = vmul.f32 %v8119, 0.75
        %v9499 = vmul.f32 %v8120, 0.75
        %v9500 = vmul.f32 %v8121, 0.75
        %v9501 = vmul.f32 %v8122, 0.75
        %v9502 = vmul.f32 %v8123, 0.75
        %v9503 = vmul.f32 %v8124, 0.75
        %v9504 = vmul.f32 %v8125, 0.75
        %v9505 = vmul.f32 %v8126, 0.75
        %v9506 = vmul.f32 %v8127, 0.75
        %v9507 = vmul.f32 %v8128, 0.75
        %v9508 = vmul.f32 %v8129, 0.75
        %v9509 = vmul.f32 %v8130, 0.75
        %v9510 = vmul.f32 %v8131, 0.75
        %v9511 = vmul.f32 %v8132, 0.75
        %v9512 = vmul.f32 %v8133, 0.75
        %v9513 = vmul.f32 %v8134, 0.75
        %v9514 = vmul.f32 %v8135, 0.75
        %v9515 = vmul.f32 %v8136, 0.75
        %v9516 = vmul.f32 %v8137, 0.75
        %v9517 = vmul.f32 %v8138, 0.75
        %v9518 = vmul.f32 %v8139, 0.75
        %v9519 = vmul.f32 %v8140, 0.75
        %v9520 = vmul.f32 %v8141, 0.75
        %v9521 = vmul.f32 %v8142, 0.75
        %v9522 = vmul.f32 %v9346, 0.25
        %v9523 = vmul.f32 %v9268, 0.25
        %v9524 = vmul.f32 %v9347, 0.25
        %v9525 = vmul.f32 %v9271, 0.25
        %v9526 = vmul.f32 %v9348, 0.25
        %v9527 = vmul.f32 %v9274, 0.25
        %v9528 = vmul.f32 %v9349, 0.25
        %v9529 = vmul.f32 %v9277, 0.25
        %v9530 = vmul.f32 %v9350, 0.25
        %v9531 = vmul.f32 %v9280, 0.25
        %v9532 = vmul.f32 %v9351, 0.25
        %v9533 = vmul.f32 %v9283, 0.25
        %v9534 = vmul.f32 %v9352, 0.25
        %v9535 = vmul.f32 %v9286, 0.25
        %v9536 = vmul.f32 %v9353, 0.25
        %v9537 = vmul.f32 %v9289, 0.25
        %v9538 = vmul.f32 %v9354, 0.25
        %v9539 = vmul.f32 %v9292, 0.25
        %v9540 = vmul.f32 %v9355, 0.25
        %v9541 = vmul.f32 %v9295, 0.25
        %v9542 = vmul.f32 %v9356, 0.25
        %v9543 = vmul.f32 %v9298, 0.25
        %v9544 = vmul.f32 %v9357, 0.25
        %v9545 = vmul.f32 %v9301, 0.25
        %v9546 = vmul.f32 %v9358, 0.25
        %v9547 = vmul.f32 %v9304, 0.25
        %v9548 = vmul.f32 %v9359, 0.25
        %v9549 = vmul.f32 %v9307, 0.25
        %v9550 = vmul.f32 %v9360, 0.25
        %v9551 = vmul.f32 %v9310, 0.25
        %v9552 = vmul.f32 %v9361, 0.25
        %v9553 = vmul.f32 %v9313, 0.25
        %v9554 = vadd.f32 %v9490, %v9522
        %v9555 = vadd.f32 %v9491, %v9523
        %v9556 = vadd.f32 %v9492, %v9524
        %v9557 = vadd.f32 %v9493, %v9525
        %v9558 = vadd.f32 %v9494, %v9526
        %v9559 = vadd.f32 %v9495, %v9527
        %v9560 = vadd.f32 %v9496, %v9528
        %v9561 = vadd.f32 %v9497, %v9529
        %v9562 = vadd.f32 %v9498, %v9530
        %v9563 = vadd.f32 %v9499, %v9531
        %v9564 = vadd.f32 %v9500, %v9532
        %v9565 = vadd.f32 %v9501, %v9533
        %v9566 = vadd.f32 %v9502, %v9534
        %v9567 = vadd.f32 %v9503, %v9535
        %v9568 = vadd.f32 %v9504, %v9536
        %v9569 = vadd.f32 %v9505, %v9537
        %v9570 = vadd.f32 %v9506, %v9538
        %v9571 = vadd.f32 %v9507, %v9539
        %v9572 = vadd.f32 %v9508, %v9540
        %v9573 = vadd.f32 %v9509, %v9541
        %v9574 = vadd.f32 %v9510, %v9542
        %v9575 = vadd.f32 %v9511, %v9543
        %v9576 = vadd.f32 %v9512, %v9544
        %v9577 = vadd.f32 %v9513, %v9545
        %v9578 = vadd.f32 %v9514, %v9546
        %v9579 = vadd.f32 %v9515, %v9547
        %v9580 = vadd.f32 %v9516, %v9548
        %v9581 = vadd.f32 %v9517, %v9549
        %v9582 = vadd.f32 %v9518, %v9550
        %v9583 = vadd.f32 %v9519, %v9551
        %v9584 = vadd.f32 %v9520, %v9552
        %v9585 = vadd.f32 %v9521, %v9553
        %s9586 = scalar_lea.vmem %s238, 1024
        %9587 = vst [vmem:[%s9586] sm:$0xff] %v9554
        %9588 = vst [vmem:[%s9586 + $0x8] sm:$0xff] %v9555
        %9589 = vst [vmem:[%s9586 + $0x10] sm:$0xff] %v9556
        %9590 = vst [vmem:[%s9586 + $0x18] sm:$0xff] %v9557
        %9591 = vst [vmem:[%s9586 + $0x20] sm:$0xff] %v9558
        %9592 = vst [vmem:[%s9586 + $0x28] sm:$0xff] %v9559
        %9593 = vst [vmem:[%s9586 + $0x30] sm:$0xff] %v9560
        %9594 = vst [vmem:[%s9586 + $0x38] sm:$0xff] %v9561
        %9595 = vst [vmem:[%s9586 + $0x40] sm:$0xff] %v9562
        %9596 = vst [vmem:[%s9586 + $0x48] sm:$0xff] %v9563
        %9597 = vst [vmem:[%s9586 + $0x50] sm:$0xff] %v9564
        %9598 = vst [vmem:[%s9586 + $0x58] sm:$0xff] %v9565
        %9599 = vst [vmem:[%s9586 + $0x60] sm:$0xff] %v9566
        %9600 = vst [vmem:[%s9586 + $0x68] sm:$0xff] %v9567
        %9601 = vst [vmem:[%s9586 + $0x70] sm:$0xff] %v9568
        %9602 = vst [vmem:[%s9586 + $0x78] sm:$0xff] %v9569
        %9603 = vst [vmem:[%s9586 + $0x80] sm:$0xff] %v9570
        %9604 = vst [vmem:[%s9586 + $0x88] sm:$0xff] %v9571
        %9605 = vst [vmem:[%s9586 + $0x90] sm:$0xff] %v9572
        %9606 = vst [vmem:[%s9586 + $0x98] sm:$0xff] %v9573
        %9607 = vst [vmem:[%s9586 + $0xa0] sm:$0xff] %v9574
        %9608 = vst [vmem:[%s9586 + $0xa8] sm:$0xff] %v9575
        %9609 = vst [vmem:[%s9586 + $0xb0] sm:$0xff] %v9576
        %9610 = vst [vmem:[%s9586 + $0xb8] sm:$0xff] %v9577
        %9611 = vst [vmem:[%s9586 + $0xc0] sm:$0xff] %v9578
        %9612 = vst [vmem:[%s9586 + $0xc8] sm:$0xff] %v9579
        %9613 = vst [vmem:[%s9586 + $0xd0] sm:$0xff] %v9580
        %9614 = vst [vmem:[%s9586 + $0xd8] sm:$0xff] %v9581
        %9615 = vst [vmem:[%s9586 + $0xe0] sm:$0xff] %v9582
        %9616 = vst [vmem:[%s9586 + $0xe8] sm:$0xff] %v9583
        %9617 = vst [vmem:[%s9586 + $0xf0] sm:$0xff] %v9584
        %9618 = vst [vmem:[%s9586 + $0xf8] sm:$0xff] %v9585
        %v9619 = vmul.f32 %v8367, 0.25
        %v9620 = vmul.f32 %v8368, 0.25
        %v9621 = vmul.f32 %v8369, 0.25
        %v9622 = vmul.f32 %v8370, 0.25
        %v9623 = vmul.f32 %v8371, 0.25
        %v9624 = vmul.f32 %v8372, 0.25
        %v9625 = vmul.f32 %v8373, 0.25
        %v9626 = vmul.f32 %v8374, 0.25
        %v9627 = vmul.f32 %v8375, 0.25
        %v9628 = vmul.f32 %v8376, 0.25
        %v9629 = vmul.f32 %v8377, 0.25
        %v9630 = vmul.f32 %v8378, 0.25
        %v9631 = vmul.f32 %v8379, 0.25
        %v9632 = vmul.f32 %v8380, 0.25
        %v9633 = vmul.f32 %v8381, 0.25
        %v9634 = vmul.f32 %v8382, 0.25
        %v9635 = vmul.f32 %v8383, 0.25
        %v9636 = vmul.f32 %v8384, 0.25
        %v9637 = vmul.f32 %v8385, 0.25
        %v9638 = vmul.f32 %v8386, 0.25
        %v9639 = vmul.f32 %v8387, 0.25
        %v9640 = vmul.f32 %v8388, 0.25
        %v9641 = vmul.f32 %v8389, 0.25
        %v9642 = vmul.f32 %v8390, 0.25
        %v9643 = vmul.f32 %v8391, 0.25
        %v9644 = vmul.f32 %v8392, 0.25
        %v9645 = vmul.f32 %v8393, 0.25
        %v9646 = vmul.f32 %v8394, 0.25
        %v9647 = vmul.f32 %v8395, 0.25
        %v9648 = vmul.f32 %v8396, 0.25
        %v9649 = vmul.f32 %v8397, 0.25
        %v9650 = vmul.f32 %v8398, 0.25
        %v9651 = vadd.f32 %v9490, %v9619
        %v9652 = vadd.f32 %v9491, %v9620
        %v9653 = vadd.f32 %v9492, %v9621
        %v9654 = vadd.f32 %v9493, %v9622
        %v9655 = vadd.f32 %v9494, %v9623
        %v9656 = vadd.f32 %v9495, %v9624
        %v9657 = vadd.f32 %v9496, %v9625
        %v9658 = vadd.f32 %v9497, %v9626
        %v9659 = vadd.f32 %v9498, %v9627
        %v9660 = vadd.f32 %v9499, %v9628
        %v9661 = vadd.f32 %v9500, %v9629
        %v9662 = vadd.f32 %v9501, %v9630
        %v9663 = vadd.f32 %v9502, %v9631
        %v9664 = vadd.f32 %v9503, %v9632
        %v9665 = vadd.f32 %v9504, %v9633
        %v9666 = vadd.f32 %v9505, %v9634
        %v9667 = vadd.f32 %v9506, %v9635
        %v9668 = vadd.f32 %v9507, %v9636
        %v9669 = vadd.f32 %v9508, %v9637
        %v9670 = vadd.f32 %v9509, %v9638
        %v9671 = vadd.f32 %v9510, %v9639
        %v9672 = vadd.f32 %v9511, %v9640
        %v9673 = vadd.f32 %v9512, %v9641
        %v9674 = vadd.f32 %v9513, %v9642
        %v9675 = vadd.f32 %v9514, %v9643
        %v9676 = vadd.f32 %v9515, %v9644
        %v9677 = vadd.f32 %v9516, %v9645
        %v9678 = vadd.f32 %v9517, %v9646
        %v9679 = vadd.f32 %v9518, %v9647
        %v9680 = vadd.f32 %v9519, %v9648
        %v9681 = vadd.f32 %v9520, %v9649
        %v9682 = vadd.f32 %v9521, %v9650
        %s9683 = scalar_lea.vmem %s238, 1280
        %9684 = vst [vmem:[%s9683] sm:$0xff] %v9651
        %9685 = vst [vmem:[%s9683 + $0x8] sm:$0xff] %v9652
        %9686 = vst [vmem:[%s9683 + $0x10] sm:$0xff] %v9653
        %9687 = vst [vmem:[%s9683 + $0x18] sm:$0xff] %v9654
        %9688 = vst [vmem:[%s9683 + $0x20] sm:$0xff] %v9655
        %9689 = vst [vmem:[%s9683 + $0x28] sm:$0xff] %v9656
        %9690 = vst [vmem:[%s9683 + $0x30] sm:$0xff] %v9657
        %9691 = vst [vmem:[%s9683 + $0x38] sm:$0xff] %v9658
        %9692 = vst [vmem:[%s9683 + $0x40] sm:$0xff] %v9659
        %9693 = vst [vmem:[%s9683 + $0x48] sm:$0xff] %v9660
        %9694 = vst [vmem:[%s9683 + $0x50] sm:$0xff] %v9661
        %9695 = vst [vmem:[%s9683 + $0x58] sm:$0xff] %v9662
        %9696 = vst [vmem:[%s9683 + $0x60] sm:$0xff] %v9663
        %9697 = vst [vmem:[%s9683 + $0x68] sm:$0xff] %v9664
        %9698 = vst [vmem:[%s9683 + $0x70] sm:$0xff] %v9665
        %9699 = vst [vmem:[%s9683 + $0x78] sm:$0xff] %v9666
        %9700 = vst [vmem:[%s9683 + $0x80] sm:$0xff] %v9667
        %9701 = vst [vmem:[%s9683 + $0x88] sm:$0xff] %v9668
        %9702 = vst [vmem:[%s9683 + $0x90] sm:$0xff] %v9669
        %9703 = vst [vmem:[%s9683 + $0x98] sm:$0xff] %v9670
        %9704 = vst [vmem:[%s9683 + $0xa0] sm:$0xff] %v9671
        %9705 = vst [vmem:[%s9683 + $0xa8] sm:$0xff] %v9672
        %9706 = vst [vmem:[%s9683 + $0xb0] sm:$0xff] %v9673
        %9707 = vst [vmem:[%s9683 + $0xb8] sm:$0xff] %v9674
        %9708 = vst [vmem:[%s9683 + $0xc0] sm:$0xff] %v9675
        %9709 = vst [vmem:[%s9683 + $0xc8] sm:$0xff] %v9676
        %9710 = vst [vmem:[%s9683 + $0xd0] sm:$0xff] %v9677
        %9711 = vst [vmem:[%s9683 + $0xd8] sm:$0xff] %v9678
        %9712 = vst [vmem:[%s9683 + $0xe0] sm:$0xff] %v9679
        %9713 = vst [vmem:[%s9683 + $0xe8] sm:$0xff] %v9680
        %9714 = vst [vmem:[%s9683 + $0xf0] sm:$0xff] %v9681
        %9715 = vst [vmem:[%s9683 + $0xf8] sm:$0xff] %v9682
        %v9716 = vmul.f32 %v8367, 0.75
        %v9717 = vmul.f32 %v8368, 0.75
        %v9718 = vmul.f32 %v8369, 0.75
        %v9719 = vmul.f32 %v8370, 0.75
        %v9720 = vmul.f32 %v8371, 0.75
        %v9721 = vmul.f32 %v8372, 0.75
        %v9722 = vmul.f32 %v8373, 0.75
        %v9723 = vmul.f32 %v8374, 0.75
        %v9724 = vmul.f32 %v8375, 0.75
        %v9725 = vmul.f32 %v8376, 0.75
        %v9726 = vmul.f32 %v8377, 0.75
        %v9727 = vmul.f32 %v8378, 0.75
        %v9728 = vmul.f32 %v8379, 0.75
        %v9729 = vmul.f32 %v8380, 0.75
        %v9730 = vmul.f32 %v8381, 0.75
        %v9731 = vmul.f32 %v8382, 0.75
        %v9732 = vmul.f32 %v8383, 0.75
        %v9733 = vmul.f32 %v8384, 0.75
        %v9734 = vmul.f32 %v8385, 0.75
        %v9735 = vmul.f32 %v8386, 0.75
        %v9736 = vmul.f32 %v8387, 0.75
        %v9737 = vmul.f32 %v8388, 0.75
        %v9738 = vmul.f32 %v8389, 0.75
        %v9739 = vmul.f32 %v8390, 0.75
        %v9740 = vmul.f32 %v8391, 0.75
        %v9741 = vmul.f32 %v8392, 0.75
        %v9742 = vmul.f32 %v8393, 0.75
        %v9743 = vmul.f32 %v8394, 0.75
        %v9744 = vmul.f32 %v8395, 0.75
        %v9745 = vmul.f32 %v8396, 0.75
        %v9746 = vmul.f32 %v8397, 0.75
        %v9747 = vmul.f32 %v8398, 0.75
        %v9748 = vmul.f32 %v8111, 0.25
        %v9749 = vmul.f32 %v8112, 0.25
        %v9750 = vmul.f32 %v8113, 0.25
        %v9751 = vmul.f32 %v8114, 0.25
        %v9752 = vmul.f32 %v8115, 0.25
        %v9753 = vmul.f32 %v8116, 0.25
        %v9754 = vmul.f32 %v8117, 0.25
        %v9755 = vmul.f32 %v8118, 0.25
        %v9756 = vmul.f32 %v8119, 0.25
        %v9757 = vmul.f32 %v8120, 0.25
        %v9758 = vmul.f32 %v8121, 0.25
        %v9759 = vmul.f32 %v8122, 0.25
        %v9760 = vmul.f32 %v8123, 0.25
        %v9761 = vmul.f32 %v8124, 0.25
        %v9762 = vmul.f32 %v8125, 0.25
        %v9763 = vmul.f32 %v8126, 0.25
        %v9764 = vmul.f32 %v8127, 0.25
        %v9765 = vmul.f32 %v8128, 0.25
        %v9766 = vmul.f32 %v8129, 0.25
        %v9767 = vmul.f32 %v8130, 0.25
        %v9768 = vmul.f32 %v8131, 0.25
        %v9769 = vmul.f32 %v8132, 0.25
        %v9770 = vmul.f32 %v8133, 0.25
        %v9771 = vmul.f32 %v8134, 0.25
        %v9772 = vmul.f32 %v8135, 0.25
        %v9773 = vmul.f32 %v8136, 0.25
        %v9774 = vmul.f32 %v8137, 0.25
        %v9775 = vmul.f32 %v8138, 0.25
        %v9776 = vmul.f32 %v8139, 0.25
        %v9777 = vmul.f32 %v8140, 0.25
        %v9778 = vmul.f32 %v8141, 0.25
        %v9779 = vmul.f32 %v8142, 0.25
        %v9780 = vadd.f32 %v9716, %v9748
        %v9781 = vadd.f32 %v9717, %v9749
        %v9782 = vadd.f32 %v9718, %v9750
        %v9783 = vadd.f32 %v9719, %v9751
        %v9784 = vadd.f32 %v9720, %v9752
        %v9785 = vadd.f32 %v9721, %v9753
        %v9786 = vadd.f32 %v9722, %v9754
        %v9787 = vadd.f32 %v9723, %v9755
        %v9788 = vadd.f32 %v9724, %v9756
        %v9789 = vadd.f32 %v9725, %v9757
        %v9790 = vadd.f32 %v9726, %v9758
        %v9791 = vadd.f32 %v9727, %v9759
        %v9792 = vadd.f32 %v9728, %v9760
        %v9793 = vadd.f32 %v9729, %v9761
        %v9794 = vadd.f32 %v9730, %v9762
        %v9795 = vadd.f32 %v9731, %v9763
        %v9796 = vadd.f32 %v9732, %v9764
        %v9797 = vadd.f32 %v9733, %v9765
        %v9798 = vadd.f32 %v9734, %v9766
        %v9799 = vadd.f32 %v9735, %v9767
        %v9800 = vadd.f32 %v9736, %v9768
        %v9801 = vadd.f32 %v9737, %v9769
        %v9802 = vadd.f32 %v9738, %v9770
        %v9803 = vadd.f32 %v9739, %v9771
        %v9804 = vadd.f32 %v9740, %v9772
        %v9805 = vadd.f32 %v9741, %v9773
        %v9806 = vadd.f32 %v9742, %v9774
        %v9807 = vadd.f32 %v9743, %v9775
        %v9808 = vadd.f32 %v9744, %v9776
        %v9809 = vadd.f32 %v9745, %v9777
        %v9810 = vadd.f32 %v9746, %v9778
        %v9811 = vadd.f32 %v9747, %v9779
        %s9812 = scalar_lea.vmem %s238, 1536
        %9813 = vst [vmem:[%s9812] sm:$0xff] %v9780
        %9814 = vst [vmem:[%s9812 + $0x8] sm:$0xff] %v9781
        %9815 = vst [vmem:[%s9812 + $0x10] sm:$0xff] %v9782
        %9816 = vst [vmem:[%s9812 + $0x18] sm:$0xff] %v9783
        %9817 = vst [vmem:[%s9812 + $0x20] sm:$0xff] %v9784
        %9818 = vst [vmem:[%s9812 + $0x28] sm:$0xff] %v9785
        %9819 = vst [vmem:[%s9812 + $0x30] sm:$0xff] %v9786
        %9820 = vst [vmem:[%s9812 + $0x38] sm:$0xff] %v9787
        %9821 = vst [vmem:[%s9812 + $0x40] sm:$0xff] %v9788
        %9822 = vst [vmem:[%s9812 + $0x48] sm:$0xff] %v9789
        %9823 = vst [vmem:[%s9812 + $0x50] sm:$0xff] %v9790
        %9824 = vst [vmem:[%s9812 + $0x58] sm:$0xff] %v9791
        %9825 = vst [vmem:[%s9812 + $0x60] sm:$0xff] %v9792
        %9826 = vst [vmem:[%s9812 + $0x68] sm:$0xff] %v9793
        %9827 = vst [vmem:[%s9812 + $0x70] sm:$0xff] %v9794
        %9828 = vst [vmem:[%s9812 + $0x78] sm:$0xff] %v9795
        %9829 = vst [vmem:[%s9812 + $0x80] sm:$0xff] %v9796
        %9830 = vst [vmem:[%s9812 + $0x88] sm:$0xff] %v9797
        %9831 = vst [vmem:[%s9812 + $0x90] sm:$0xff] %v9798
        %9832 = vst [vmem:[%s9812 + $0x98] sm:$0xff] %v9799
        %9833 = vst [vmem:[%s9812 + $0xa0] sm:$0xff] %v9800
        %9834 = vst [vmem:[%s9812 + $0xa8] sm:$0xff] %v9801
        %9835 = vst [vmem:[%s9812 + $0xb0] sm:$0xff] %v9802
        %9836 = vst [vmem:[%s9812 + $0xb8] sm:$0xff] %v9803
        %9837 = vst [vmem:[%s9812 + $0xc0] sm:$0xff] %v9804
        %9838 = vst [vmem:[%s9812 + $0xc8] sm:$0xff] %v9805
        %9839 = vst [vmem:[%s9812 + $0xd0] sm:$0xff] %v9806
        %9840 = vst [vmem:[%s9812 + $0xd8] sm:$0xff] %v9807
        %9841 = vst [vmem:[%s9812 + $0xe0] sm:$0xff] %v9808
        %9842 = vst [vmem:[%s9812 + $0xe8] sm:$0xff] %v9809
        %9843 = vst [vmem:[%s9812 + $0xf0] sm:$0xff] %v9810
        %9844 = vst [vmem:[%s9812 + $0xf8] sm:$0xff] %v9811
        %v9845 = vmul.f32 %v9396, 0.25
        %v9846 = vmul.f32 %v9474, 0.25
        %v9847 = vmul.f32 %v9399, 0.25
        %v9848 = vmul.f32 %v9475, 0.25
        %v9849 = vmul.f32 %v9402, 0.25
        %v9850 = vmul.f32 %v9476, 0.25
        %v9851 = vmul.f32 %v9405, 0.25
        %v9852 = vmul.f32 %v9477, 0.25
        %v9853 = vmul.f32 %v9408, 0.25
        %v9854 = vmul.f32 %v9478, 0.25
        %v9855 = vmul.f32 %v9411, 0.25
        %v9856 = vmul.f32 %v9479, 0.25
        %v9857 = vmul.f32 %v9414, 0.25
        %v9858 = vmul.f32 %v9480, 0.25
        %v9859 = vmul.f32 %v9417, 0.25
        %v9860 = vmul.f32 %v9481, 0.25
        %v9861 = vmul.f32 %v9420, 0.25
        %v9862 = vmul.f32 %v9482, 0.25
        %v9863 = vmul.f32 %v9423, 0.25
        %v9864 = vmul.f32 %v9483, 0.25
        %v9865 = vmul.f32 %v9426, 0.25
        %v9866 = vmul.f32 %v9484, 0.25
        %v9867 = vmul.f32 %v9429, 0.25
        %v9868 = vmul.f32 %v9485, 0.25
        %v9869 = vmul.f32 %v9432, 0.25
        %v9870 = vmul.f32 %v9486, 0.25
        %v9871 = vmul.f32 %v9435, 0.25
        %v9872 = vmul.f32 %v9487, 0.25
        %v9873 = vmul.f32 %v9438, 0.25
        %v9874 = vmul.f32 %v9488, 0.25
        %v9875 = vmul.f32 %v9441, 0.25
        %v9876 = vmul.f32 %v9489, 0.25
        %v9877 = vadd.f32 %v9716, %v9845
        %v9878 = vadd.f32 %v9717, %v9846
        %v9879 = vadd.f32 %v9718, %v9847
        %v9880 = vadd.f32 %v9719, %v9848
        %v9881 = vadd.f32 %v9720, %v9849
        %v9882 = vadd.f32 %v9721, %v9850
        %v9883 = vadd.f32 %v9722, %v9851
        %v9884 = vadd.f32 %v9723, %v9852
        %v9885 = vadd.f32 %v9724, %v9853
        %v9886 = vadd.f32 %v9725, %v9854
        %v9887 = vadd.f32 %v9726, %v9855
        %v9888 = vadd.f32 %v9727, %v9856
        %v9889 = vadd.f32 %v9728, %v9857
        %v9890 = vadd.f32 %v9729, %v9858
        %v9891 = vadd.f32 %v9730, %v9859
        %v9892 = vadd.f32 %v9731, %v9860
        %v9893 = vadd.f32 %v9732, %v9861
        %v9894 = vadd.f32 %v9733, %v9862
        %v9895 = vadd.f32 %v9734, %v9863
        %v9896 = vadd.f32 %v9735, %v9864
        %v9897 = vadd.f32 %v9736, %v9865
        %v9898 = vadd.f32 %v9737, %v9866
        %v9899 = vadd.f32 %v9738, %v9867
        %v9900 = vadd.f32 %v9739, %v9868
        %v9901 = vadd.f32 %v9740, %v9869
        %v9902 = vadd.f32 %v9741, %v9870
        %v9903 = vadd.f32 %v9742, %v9871
        %v9904 = vadd.f32 %v9743, %v9872
        %v9905 = vadd.f32 %v9744, %v9873
        %v9906 = vadd.f32 %v9745, %v9874
        %v9907 = vadd.f32 %v9746, %v9875
        %v9908 = vadd.f32 %v9747, %v9876
        %s9909 = scalar_lea.vmem %s238, 1792
        %9910 = vst [vmem:[%s9909] sm:$0xff] %v9877
        %9911 = vst [vmem:[%s9909 + $0x8] sm:$0xff] %v9878
        %9912 = vst [vmem:[%s9909 + $0x10] sm:$0xff] %v9879
        %9913 = vst [vmem:[%s9909 + $0x18] sm:$0xff] %v9880
        %9914 = vst [vmem:[%s9909 + $0x20] sm:$0xff] %v9881
        %9915 = vst [vmem:[%s9909 + $0x28] sm:$0xff] %v9882
        %9916 = vst [vmem:[%s9909 + $0x30] sm:$0xff] %v9883
        %9917 = vst [vmem:[%s9909 + $0x38] sm:$0xff] %v9884
        %9918 = vst [vmem:[%s9909 + $0x40] sm:$0xff] %v9885
        %9919 = vst [vmem:[%s9909 + $0x48] sm:$0xff] %v9886
        %9920 = vst [vmem:[%s9909 + $0x50] sm:$0xff] %v9887
        %9921 = vst [vmem:[%s9909 + $0x58] sm:$0xff] %v9888
        %9922 = vst [vmem:[%s9909 + $0x60] sm:$0xff] %v9889
        %9923 = vst [vmem:[%s9909 + $0x68] sm:$0xff] %v9890
        %9924 = vst [vmem:[%s9909 + $0x70] sm:$0xff] %v9891
        %9925 = vst [vmem:[%s9909 + $0x78] sm:$0xff] %v9892
        %9926 = vst [vmem:[%s9909 + $0x80] sm:$0xff] %v9893
        %9927 = vst [vmem:[%s9909 + $0x88] sm:$0xff] %v9894
        %9928 = vst [vmem:[%s9909 + $0x90] sm:$0xff] %v9895
        %9929 = vst [vmem:[%s9909 + $0x98] sm:$0xff] %v9896
        %9930 = vst [vmem:[%s9909 + $0xa0] sm:$0xff] %v9897
        %9931 = vst [vmem:[%s9909 + $0xa8] sm:$0xff] %v9898
        %9932 = vst [vmem:[%s9909 + $0xb0] sm:$0xff] %v9899
        %9933 = vst [vmem:[%s9909 + $0xb8] sm:$0xff] %v9900
        %9934 = vst [vmem:[%s9909 + $0xc0] sm:$0xff] %v9901
        %9935 = vst [vmem:[%s9909 + $0xc8] sm:$0xff] %v9902
        %9936 = vst [vmem:[%s9909 + $0xd0] sm:$0xff] %v9903
        %9937 = vst [vmem:[%s9909 + $0xd8] sm:$0xff] %v9904
        %9938 = vst [vmem:[%s9909 + $0xe0] sm:$0xff] %v9905
        %9939 = vst [vmem:[%s9909 + $0xe8] sm:$0xff] %v9906
        %9940 = vst [vmem:[%s9909 + $0xf0] sm:$0xff] %v9907
        %9941 = vst [vmem:[%s9909 + $0xf8] sm:$0xff] %v9908
        %v9974 = vrot.slane %v8461, 7
        %v9975 = vrot.slane %v8462, 7
        %v9976 = vsel %vm8557, %v9974, %v9975
        %v9977 = vrot.slane %v8463, 7
        %v9978 = vrot.slane %v8464, 7
        %v9979 = vsel %vm8557, %v9977, %v9978
        %v9980 = vrot.slane %v8465, 7
        %v9981 = vrot.slane %v8466, 7
        %v9982 = vsel %vm8557, %v9980, %v9981
        %v9983 = vrot.slane %v8467, 7
        %v9984 = vrot.slane %v8468, 7
        %v9985 = vsel %vm8557, %v9983, %v9984
        %v9986 = vrot.slane %v8469, 7
        %v9987 = vrot.slane %v8470, 7
        %v9988 = vsel %vm8557, %v9986, %v9987
        %v9989 = vrot.slane %v8471, 7
        %v9990 = vrot.slane %v8472, 7
        %v9991 = vsel %vm8557, %v9989, %v9990
        %v9992 = vrot.slane %v8473, 7
        %v9993 = vrot.slane %v8474, 7
        %v9994 = vsel %vm8557, %v9992, %v9993
        %v9995 = vrot.slane %v8475, 7
        %v9996 = vrot.slane %v8476, 7
        %v9997 = vsel %vm8557, %v9995, %v9996
        %v9998 = vrot.slane %v8477, 7
        %v9999 = vrot.slane %v8478, 7
        %v10000 = vsel %vm8557, %v9998, %v9999
        %v10001 = vrot.slane %v8479, 7
        %v10002 = vrot.slane %v8480, 7
        %v10003 = vsel %vm8557, %v10001, %v10002
        %v10004 = vrot.slane %v8481, 7
        %v10005 = vrot.slane %v8482, 7
        %v10006 = vsel %vm8557, %v10004, %v10005
        %v10007 = vrot.slane %v8483, 7
        %v10008 = vrot.slane %v8484, 7
        %v10009 = vsel %vm8557, %v10007, %v10008
        %v10010 = vrot.slane %v8485, 7
        %v10011 = vrot.slane %v8486, 7
        %v10012 = vsel %vm8557, %v10010, %v10011
        %v10013 = vrot.slane %v8487, 7
        %v10014 = vrot.slane %v8488, 7
        %v10015 = vsel %vm8557, %v10013, %v10014
        %v10016 = vrot.slane %v8489, 7
        %v10017 = vrot.slane %v8490, 7
        %v10018 = vsel %vm8557, %v10016, %v10017
        %v10019 = vrot.slane %v8491, 7
        %v10020 = vrot.slane %v8492, 7
        %v10021 = vsel %vm8557, %v10019, %v10020
        %v10054 = vsel %vm8557, %v8205, %v9974
        %v10055 = vsel %vm8557, %v8207, %v9977
        %v10056 = vsel %vm8557, %v8209, %v9980
        %v10057 = vsel %vm8557, %v8211, %v9983
        %v10058 = vsel %vm8557, %v8213, %v9986
        %v10059 = vsel %vm8557, %v8215, %v9989
        %v10060 = vsel %vm8557, %v8217, %v9992
        %v10061 = vsel %vm8557, %v8219, %v9995
        %v10062 = vsel %vm8557, %v8221, %v9998
        %v10063 = vsel %vm8557, %v8223, %v10001
        %v10064 = vsel %vm8557, %v8225, %v10004
        %v10065 = vsel %vm8557, %v8227, %v10007
        %v10066 = vsel %vm8557, %v8229, %v10010
        %v10067 = vsel %vm8557, %v8231, %v10013
        %v10068 = vsel %vm8557, %v8233, %v10016
        %v10069 = vsel %vm8557, %v8235, %v10019
        %v10102 = vrot.slane %v8205, 1
        %v10103 = vrot.slane %v8206, 1
        %v10104 = vsel %vm8686, %v10102, %v10103
        %v10105 = vrot.slane %v8207, 1
        %v10106 = vrot.slane %v8208, 1
        %v10107 = vsel %vm8686, %v10105, %v10106
        %v10108 = vrot.slane %v8209, 1
        %v10109 = vrot.slane %v8210, 1
        %v10110 = vsel %vm8686, %v10108, %v10109
        %v10111 = vrot.slane %v8211, 1
        %v10112 = vrot.slane %v8212, 1
        %v10113 = vsel %vm8686, %v10111, %v10112
        %v10114 = vrot.slane %v8213, 1
        %v10115 = vrot.slane %v8214, 1
        %v10116 = vsel %vm8686, %v10114, %v10115
        %v10117 = vrot.slane %v8215, 1
        %v10118 = vrot.slane %v8216, 1
        %v10119 = vsel %vm8686, %v10117, %v10118
        %v10120 = vrot.slane %v8217, 1
        %v10121 = vrot.slane %v8218, 1
        %v10122 = vsel %vm8686, %v10120, %v10121
        %v10123 = vrot.slane %v8219, 1
        %v10124 = vrot.slane %v8220, 1
        %v10125 = vsel %vm8686, %v10123, %v10124
        %v10126 = vrot.slane %v8221, 1
        %v10127 = vrot.slane %v8222, 1
        %v10128 = vsel %vm8686, %v10126, %v10127
        %v10129 = vrot.slane %v8223, 1
        %v10130 = vrot.slane %v8224, 1
        %v10131 = vsel %vm8686, %v10129, %v10130
        %v10132 = vrot.slane %v8225, 1
        %v10133 = vrot.slane %v8226, 1
        %v10134 = vsel %vm8686, %v10132, %v10133
        %v10135 = vrot.slane %v8227, 1
        %v10136 = vrot.slane %v8228, 1
        %v10137 = vsel %vm8686, %v10135, %v10136
        %v10138 = vrot.slane %v8229, 1
        %v10139 = vrot.slane %v8230, 1
        %v10140 = vsel %vm8686, %v10138, %v10139
        %v10141 = vrot.slane %v8231, 1
        %v10142 = vrot.slane %v8232, 1
        %v10143 = vsel %vm8686, %v10141, %v10142
        %v10144 = vrot.slane %v8233, 1
        %v10145 = vrot.slane %v8234, 1
        %v10146 = vsel %vm8686, %v10144, %v10145
        %v10147 = vrot.slane %v8235, 1
        %v10148 = vrot.slane %v8236, 1
        %v10149 = vsel %vm8686, %v10147, %v10148
        %v10182 = vsel %vm8686, %v10103, %v8462
        %v10183 = vsel %vm8686, %v10106, %v8464
        %v10184 = vsel %vm8686, %v10109, %v8466
        %v10185 = vsel %vm8686, %v10112, %v8468
        %v10186 = vsel %vm8686, %v10115, %v8470
        %v10187 = vsel %vm8686, %v10118, %v8472
        %v10188 = vsel %vm8686, %v10121, %v8474
        %v10189 = vsel %vm8686, %v10124, %v8476
        %v10190 = vsel %vm8686, %v10127, %v8478
        %v10191 = vsel %vm8686, %v10130, %v8480
        %v10192 = vsel %vm8686, %v10133, %v8482
        %v10193 = vsel %vm8686, %v10136, %v8484
        %v10194 = vsel %vm8686, %v10139, %v8486
        %v10195 = vsel %vm8686, %v10142, %v8488
        %v10196 = vsel %vm8686, %v10145, %v8490
        %v10197 = vsel %vm8686, %v10148, %v8492
        %v10198 = vmul.f32 %v8205, 0.75
        %v10199 = vmul.f32 %v8206, 0.75
        %v10200 = vmul.f32 %v8207, 0.75
        %v10201 = vmul.f32 %v8208, 0.75
        %v10202 = vmul.f32 %v8209, 0.75
        %v10203 = vmul.f32 %v8210, 0.75
        %v10204 = vmul.f32 %v8211, 0.75
        %v10205 = vmul.f32 %v8212, 0.75
        %v10206 = vmul.f32 %v8213, 0.75
        %v10207 = vmul.f32 %v8214, 0.75
        %v10208 = vmul.f32 %v8215, 0.75
        %v10209 = vmul.f32 %v8216, 0.75
        %v10210 = vmul.f32 %v8217, 0.75
        %v10211 = vmul.f32 %v8218, 0.75
        %v10212 = vmul.f32 %v8219, 0.75
        %v10213 = vmul.f32 %v8220, 0.75
        %v10214 = vmul.f32 %v8221, 0.75
        %v10215 = vmul.f32 %v8222, 0.75
        %v10216 = vmul.f32 %v8223, 0.75
        %v10217 = vmul.f32 %v8224, 0.75
        %v10218 = vmul.f32 %v8225, 0.75
        %v10219 = vmul.f32 %v8226, 0.75
        %v10220 = vmul.f32 %v8227, 0.75
        %v10221 = vmul.f32 %v8228, 0.75
        %v10222 = vmul.f32 %v8229, 0.75
        %v10223 = vmul.f32 %v8230, 0.75
        %v10224 = vmul.f32 %v8231, 0.75
        %v10225 = vmul.f32 %v8232, 0.75
        %v10226 = vmul.f32 %v8233, 0.75
        %v10227 = vmul.f32 %v8234, 0.75
        %v10228 = vmul.f32 %v8235, 0.75
        %v10229 = vmul.f32 %v8236, 0.75
        %v10230 = vmul.f32 %v10054, 0.25
        %v10231 = vmul.f32 %v9976, 0.25
        %v10232 = vmul.f32 %v10055, 0.25
        %v10233 = vmul.f32 %v9979, 0.25
        %v10234 = vmul.f32 %v10056, 0.25
        %v10235 = vmul.f32 %v9982, 0.25
        %v10236 = vmul.f32 %v10057, 0.25
        %v10237 = vmul.f32 %v9985, 0.25
        %v10238 = vmul.f32 %v10058, 0.25
        %v10239 = vmul.f32 %v9988, 0.25
        %v10240 = vmul.f32 %v10059, 0.25
        %v10241 = vmul.f32 %v9991, 0.25
        %v10242 = vmul.f32 %v10060, 0.25
        %v10243 = vmul.f32 %v9994, 0.25
        %v10244 = vmul.f32 %v10061, 0.25
        %v10245 = vmul.f32 %v9997, 0.25
        %v10246 = vmul.f32 %v10062, 0.25
        %v10247 = vmul.f32 %v10000, 0.25
        %v10248 = vmul.f32 %v10063, 0.25
        %v10249 = vmul.f32 %v10003, 0.25
        %v10250 = vmul.f32 %v10064, 0.25
        %v10251 = vmul.f32 %v10006, 0.25
        %v10252 = vmul.f32 %v10065, 0.25
        %v10253 = vmul.f32 %v10009, 0.25
        %v10254 = vmul.f32 %v10066, 0.25
        %v10255 = vmul.f32 %v10012, 0.25
        %v10256 = vmul.f32 %v10067, 0.25
        %v10257 = vmul.f32 %v10015, 0.25
        %v10258 = vmul.f32 %v10068, 0.25
        %v10259 = vmul.f32 %v10018, 0.25
        %v10260 = vmul.f32 %v10069, 0.25
        %v10261 = vmul.f32 %v10021, 0.25
        %v10262 = vadd.f32 %v10198, %v10230
        %v10263 = vadd.f32 %v10199, %v10231
        %v10264 = vadd.f32 %v10200, %v10232
        %v10265 = vadd.f32 %v10201, %v10233
        %v10266 = vadd.f32 %v10202, %v10234
        %v10267 = vadd.f32 %v10203, %v10235
        %v10268 = vadd.f32 %v10204, %v10236
        %v10269 = vadd.f32 %v10205, %v10237
        %v10270 = vadd.f32 %v10206, %v10238
        %v10271 = vadd.f32 %v10207, %v10239
        %v10272 = vadd.f32 %v10208, %v10240
        %v10273 = vadd.f32 %v10209, %v10241
        %v10274 = vadd.f32 %v10210, %v10242
        %v10275 = vadd.f32 %v10211, %v10243
        %v10276 = vadd.f32 %v10212, %v10244
        %v10277 = vadd.f32 %v10213, %v10245
        %v10278 = vadd.f32 %v10214, %v10246
        %v10279 = vadd.f32 %v10215, %v10247
        %v10280 = vadd.f32 %v10216, %v10248
        %v10281 = vadd.f32 %v10217, %v10249
        %v10282 = vadd.f32 %v10218, %v10250
        %v10283 = vadd.f32 %v10219, %v10251
        %v10284 = vadd.f32 %v10220, %v10252
        %v10285 = vadd.f32 %v10221, %v10253
        %v10286 = vadd.f32 %v10222, %v10254
        %v10287 = vadd.f32 %v10223, %v10255
        %v10288 = vadd.f32 %v10224, %v10256
        %v10289 = vadd.f32 %v10225, %v10257
        %v10290 = vadd.f32 %v10226, %v10258
        %v10291 = vadd.f32 %v10227, %v10259
        %v10292 = vadd.f32 %v10228, %v10260
        %v10293 = vadd.f32 %v10229, %v10261
        %s10294 = scalar_lea.vmem %s238, 2048
        %10295 = vst [vmem:[%s10294] sm:$0xff] %v10262
        %10296 = vst [vmem:[%s10294 + $0x8] sm:$0xff] %v10263
        %10297 = vst [vmem:[%s10294 + $0x10] sm:$0xff] %v10264
        %10298 = vst [vmem:[%s10294 + $0x18] sm:$0xff] %v10265
        %10299 = vst [vmem:[%s10294 + $0x20] sm:$0xff] %v10266
        %10300 = vst [vmem:[%s10294 + $0x28] sm:$0xff] %v10267
        %10301 = vst [vmem:[%s10294 + $0x30] sm:$0xff] %v10268
        %10302 = vst [vmem:[%s10294 + $0x38] sm:$0xff] %v10269
        %10303 = vst [vmem:[%s10294 + $0x40] sm:$0xff] %v10270
        %10304 = vst [vmem:[%s10294 + $0x48] sm:$0xff] %v10271
        %10305 = vst [vmem:[%s10294 + $0x50] sm:$0xff] %v10272
        %10306 = vst [vmem:[%s10294 + $0x58] sm:$0xff] %v10273
        %10307 = vst [vmem:[%s10294 + $0x60] sm:$0xff] %v10274
        %10308 = vst [vmem:[%s10294 + $0x68] sm:$0xff] %v10275
        %10309 = vst [vmem:[%s10294 + $0x70] sm:$0xff] %v10276
        %10310 = vst [vmem:[%s10294 + $0x78] sm:$0xff] %v10277
        %10311 = vst [vmem:[%s10294 + $0x80] sm:$0xff] %v10278
        %10312 = vst [vmem:[%s10294 + $0x88] sm:$0xff] %v10279
        %10313 = vst [vmem:[%s10294 + $0x90] sm:$0xff] %v10280
        %10314 = vst [vmem:[%s10294 + $0x98] sm:$0xff] %v10281
        %10315 = vst [vmem:[%s10294 + $0xa0] sm:$0xff] %v10282
        %10316 = vst [vmem:[%s10294 + $0xa8] sm:$0xff] %v10283
        %10317 = vst [vmem:[%s10294 + $0xb0] sm:$0xff] %v10284
        %10318 = vst [vmem:[%s10294 + $0xb8] sm:$0xff] %v10285
        %10319 = vst [vmem:[%s10294 + $0xc0] sm:$0xff] %v10286
        %10320 = vst [vmem:[%s10294 + $0xc8] sm:$0xff] %v10287
        %10321 = vst [vmem:[%s10294 + $0xd0] sm:$0xff] %v10288
        %10322 = vst [vmem:[%s10294 + $0xd8] sm:$0xff] %v10289
        %10323 = vst [vmem:[%s10294 + $0xe0] sm:$0xff] %v10290
        %10324 = vst [vmem:[%s10294 + $0xe8] sm:$0xff] %v10291
        %10325 = vst [vmem:[%s10294 + $0xf0] sm:$0xff] %v10292
        %10326 = vst [vmem:[%s10294 + $0xf8] sm:$0xff] %v10293
        %v10327 = vmul.f32 %v8461, 0.25
        %v10328 = vmul.f32 %v8462, 0.25
        %v10329 = vmul.f32 %v8463, 0.25
        %v10330 = vmul.f32 %v8464, 0.25
        %v10331 = vmul.f32 %v8465, 0.25
        %v10332 = vmul.f32 %v8466, 0.25
        %v10333 = vmul.f32 %v8467, 0.25
        %v10334 = vmul.f32 %v8468, 0.25
        %v10335 = vmul.f32 %v8469, 0.25
        %v10336 = vmul.f32 %v8470, 0.25
        %v10337 = vmul.f32 %v8471, 0.25
        %v10338 = vmul.f32 %v8472, 0.25
        %v10339 = vmul.f32 %v8473, 0.25
        %v10340 = vmul.f32 %v8474, 0.25
        %v10341 = vmul.f32 %v8475, 0.25
        %v10342 = vmul.f32 %v8476, 0.25
        %v10343 = vmul.f32 %v8477, 0.25
        %v10344 = vmul.f32 %v8478, 0.25
        %v10345 = vmul.f32 %v8479, 0.25
        %v10346 = vmul.f32 %v8480, 0.25
        %v10347 = vmul.f32 %v8481, 0.25
        %v10348 = vmul.f32 %v8482, 0.25
        %v10349 = vmul.f32 %v8483, 0.25
        %v10350 = vmul.f32 %v8484, 0.25
        %v10351 = vmul.f32 %v8485, 0.25
        %v10352 = vmul.f32 %v8486, 0.25
        %v10353 = vmul.f32 %v8487, 0.25
        %v10354 = vmul.f32 %v8488, 0.25
        %v10355 = vmul.f32 %v8489, 0.25
        %v10356 = vmul.f32 %v8490, 0.25
        %v10357 = vmul.f32 %v8491, 0.25
        %v10358 = vmul.f32 %v8492, 0.25
        %v10359 = vadd.f32 %v10198, %v10327
        %v10360 = vadd.f32 %v10199, %v10328
        %v10361 = vadd.f32 %v10200, %v10329
        %v10362 = vadd.f32 %v10201, %v10330
        %v10363 = vadd.f32 %v10202, %v10331
        %v10364 = vadd.f32 %v10203, %v10332
        %v10365 = vadd.f32 %v10204, %v10333
        %v10366 = vadd.f32 %v10205, %v10334
        %v10367 = vadd.f32 %v10206, %v10335
        %v10368 = vadd.f32 %v10207, %v10336
        %v10369 = vadd.f32 %v10208, %v10337
        %v10370 = vadd.f32 %v10209, %v10338
        %v10371 = vadd.f32 %v10210, %v10339
        %v10372 = vadd.f32 %v10211, %v10340
        %v10373 = vadd.f32 %v10212, %v10341
        %v10374 = vadd.f32 %v10213, %v10342
        %v10375 = vadd.f32 %v10214, %v10343
        %v10376 = vadd.f32 %v10215, %v10344
        %v10377 = vadd.f32 %v10216, %v10345
        %v10378 = vadd.f32 %v10217, %v10346
        %v10379 = vadd.f32 %v10218, %v10347
        %v10380 = vadd.f32 %v10219, %v10348
        %v10381 = vadd.f32 %v10220, %v10349
        %v10382 = vadd.f32 %v10221, %v10350
        %v10383 = vadd.f32 %v10222, %v10351
        %v10384 = vadd.f32 %v10223, %v10352
        %v10385 = vadd.f32 %v10224, %v10353
        %v10386 = vadd.f32 %v10225, %v10354
        %v10387 = vadd.f32 %v10226, %v10355
        %v10388 = vadd.f32 %v10227, %v10356
        %v10389 = vadd.f32 %v10228, %v10357
        %v10390 = vadd.f32 %v10229, %v10358
        %s10391 = scalar_lea.vmem %s238, 2304
        %10392 = vst [vmem:[%s10391] sm:$0xff] %v10359
        %10393 = vst [vmem:[%s10391 + $0x8] sm:$0xff] %v10360
        %10394 = vst [vmem:[%s10391 + $0x10] sm:$0xff] %v10361
        %10395 = vst [vmem:[%s10391 + $0x18] sm:$0xff] %v10362
        %10396 = vst [vmem:[%s10391 + $0x20] sm:$0xff] %v10363
        %10397 = vst [vmem:[%s10391 + $0x28] sm:$0xff] %v10364
        %10398 = vst [vmem:[%s10391 + $0x30] sm:$0xff] %v10365
        %10399 = vst [vmem:[%s10391 + $0x38] sm:$0xff] %v10366
        %10400 = vst [vmem:[%s10391 + $0x40] sm:$0xff] %v10367
        %10401 = vst [vmem:[%s10391 + $0x48] sm:$0xff] %v10368
        %10402 = vst [vmem:[%s10391 + $0x50] sm:$0xff] %v10369
        %10403 = vst [vmem:[%s10391 + $0x58] sm:$0xff] %v10370
        %10404 = vst [vmem:[%s10391 + $0x60] sm:$0xff] %v10371
        %10405 = vst [vmem:[%s10391 + $0x68] sm:$0xff] %v10372
        %10406 = vst [vmem:[%s10391 + $0x70] sm:$0xff] %v10373
        %10407 = vst [vmem:[%s10391 + $0x78] sm:$0xff] %v10374
        %10408 = vst [vmem:[%s10391 + $0x80] sm:$0xff] %v10375
        %10409 = vst [vmem:[%s10391 + $0x88] sm:$0xff] %v10376
        %10410 = vst [vmem:[%s10391 + $0x90] sm:$0xff] %v10377
        %10411 = vst [vmem:[%s10391 + $0x98] sm:$0xff] %v10378
        %10412 = vst [vmem:[%s10391 + $0xa0] sm:$0xff] %v10379
        %10413 = vst [vmem:[%s10391 + $0xa8] sm:$0xff] %v10380
        %10414 = vst [vmem:[%s10391 + $0xb0] sm:$0xff] %v10381
        %10415 = vst [vmem:[%s10391 + $0xb8] sm:$0xff] %v10382
        %10416 = vst [vmem:[%s10391 + $0xc0] sm:$0xff] %v10383
        %10417 = vst [vmem:[%s10391 + $0xc8] sm:$0xff] %v10384
        %10418 = vst [vmem:[%s10391 + $0xd0] sm:$0xff] %v10385
        %10419 = vst [vmem:[%s10391 + $0xd8] sm:$0xff] %v10386
        %10420 = vst [vmem:[%s10391 + $0xe0] sm:$0xff] %v10387
        %10421 = vst [vmem:[%s10391 + $0xe8] sm:$0xff] %v10388
        %10422 = vst [vmem:[%s10391 + $0xf0] sm:$0xff] %v10389
        %10423 = vst [vmem:[%s10391 + $0xf8] sm:$0xff] %v10390
        %v10424 = vmul.f32 %v8461, 0.75
        %v10425 = vmul.f32 %v8462, 0.75
        %v10426 = vmul.f32 %v8463, 0.75
        %v10427 = vmul.f32 %v8464, 0.75
        %v10428 = vmul.f32 %v8465, 0.75
        %v10429 = vmul.f32 %v8466, 0.75
        %v10430 = vmul.f32 %v8467, 0.75
        %v10431 = vmul.f32 %v8468, 0.75
        %v10432 = vmul.f32 %v8469, 0.75
        %v10433 = vmul.f32 %v8470, 0.75
        %v10434 = vmul.f32 %v8471, 0.75
        %v10435 = vmul.f32 %v8472, 0.75
        %v10436 = vmul.f32 %v8473, 0.75
        %v10437 = vmul.f32 %v8474, 0.75
        %v10438 = vmul.f32 %v8475, 0.75
        %v10439 = vmul.f32 %v8476, 0.75
        %v10440 = vmul.f32 %v8477, 0.75
        %v10441 = vmul.f32 %v8478, 0.75
        %v10442 = vmul.f32 %v8479, 0.75
        %v10443 = vmul.f32 %v8480, 0.75
        %v10444 = vmul.f32 %v8481, 0.75
        %v10445 = vmul.f32 %v8482, 0.75
        %v10446 = vmul.f32 %v8483, 0.75
        %v10447 = vmul.f32 %v8484, 0.75
        %v10448 = vmul.f32 %v8485, 0.75
        %v10449 = vmul.f32 %v8486, 0.75
        %v10450 = vmul.f32 %v8487, 0.75
        %v10451 = vmul.f32 %v8488, 0.75
        %v10452 = vmul.f32 %v8489, 0.75
        %v10453 = vmul.f32 %v8490, 0.75
        %v10454 = vmul.f32 %v8491, 0.75
        %v10455 = vmul.f32 %v8492, 0.75
        %v10456 = vmul.f32 %v8205, 0.25
        %v10457 = vmul.f32 %v8206, 0.25
        %v10458 = vmul.f32 %v8207, 0.25
        %v10459 = vmul.f32 %v8208, 0.25
        %v10460 = vmul.f32 %v8209, 0.25
        %v10461 = vmul.f32 %v8210, 0.25
        %v10462 = vmul.f32 %v8211, 0.25
        %v10463 = vmul.f32 %v8212, 0.25
        %v10464 = vmul.f32 %v8213, 0.25
        %v10465 = vmul.f32 %v8214, 0.25
        %v10466 = vmul.f32 %v8215, 0.25
        %v10467 = vmul.f32 %v8216, 0.25
        %v10468 = vmul.f32 %v8217, 0.25
        %v10469 = vmul.f32 %v8218, 0.25
        %v10470 = vmul.f32 %v8219, 0.25
        %v10471 = vmul.f32 %v8220, 0.25
        %v10472 = vmul.f32 %v8221, 0.25
        %v10473 = vmul.f32 %v8222, 0.25
        %v10474 = vmul.f32 %v8223, 0.25
        %v10475 = vmul.f32 %v8224, 0.25
        %v10476 = vmul.f32 %v8225, 0.25
        %v10477 = vmul.f32 %v8226, 0.25
        %v10478 = vmul.f32 %v8227, 0.25
        %v10479 = vmul.f32 %v8228, 0.25
        %v10480 = vmul.f32 %v8229, 0.25
        %v10481 = vmul.f32 %v8230, 0.25
        %v10482 = vmul.f32 %v8231, 0.25
        %v10483 = vmul.f32 %v8232, 0.25
        %v10484 = vmul.f32 %v8233, 0.25
        %v10485 = vmul.f32 %v8234, 0.25
        %v10486 = vmul.f32 %v8235, 0.25
        %v10487 = vmul.f32 %v8236, 0.25
        %v10488 = vadd.f32 %v10424, %v10456
        %v10489 = vadd.f32 %v10425, %v10457
        %v10490 = vadd.f32 %v10426, %v10458
        %v10491 = vadd.f32 %v10427, %v10459
        %v10492 = vadd.f32 %v10428, %v10460
        %v10493 = vadd.f32 %v10429, %v10461
        %v10494 = vadd.f32 %v10430, %v10462
        %v10495 = vadd.f32 %v10431, %v10463
        %v10496 = vadd.f32 %v10432, %v10464
        %v10497 = vadd.f32 %v10433, %v10465
        %v10498 = vadd.f32 %v10434, %v10466
        %v10499 = vadd.f32 %v10435, %v10467
        %v10500 = vadd.f32 %v10436, %v10468
        %v10501 = vadd.f32 %v10437, %v10469
        %v10502 = vadd.f32 %v10438, %v10470
        %v10503 = vadd.f32 %v10439, %v10471
        %v10504 = vadd.f32 %v10440, %v10472
        %v10505 = vadd.f32 %v10441, %v10473
        %v10506 = vadd.f32 %v10442, %v10474
        %v10507 = vadd.f32 %v10443, %v10475
        %v10508 = vadd.f32 %v10444, %v10476
        %v10509 = vadd.f32 %v10445, %v10477
        %v10510 = vadd.f32 %v10446, %v10478
        %v10511 = vadd.f32 %v10447, %v10479
        %v10512 = vadd.f32 %v10448, %v10480
        %v10513 = vadd.f32 %v10449, %v10481
        %v10514 = vadd.f32 %v10450, %v10482
        %v10515 = vadd.f32 %v10451, %v10483
        %v10516 = vadd.f32 %v10452, %v10484
        %v10517 = vadd.f32 %v10453, %v10485
        %v10518 = vadd.f32 %v10454, %v10486
        %v10519 = vadd.f32 %v10455, %v10487
        %s10520 = scalar_lea.vmem %s238, 2560
        %10521 = vst [vmem:[%s10520] sm:$0xff] %v10488
        %10522 = vst [vmem:[%s10520 + $0x8] sm:$0xff] %v10489
        %10523 = vst [vmem:[%s10520 + $0x10] sm:$0xff] %v10490
        %10524 = vst [vmem:[%s10520 + $0x18] sm:$0xff] %v10491
        %10525 = vst [vmem:[%s10520 + $0x20] sm:$0xff] %v10492
        %10526 = vst [vmem:[%s10520 + $0x28] sm:$0xff] %v10493
        %10527 = vst [vmem:[%s10520 + $0x30] sm:$0xff] %v10494
        %10528 = vst [vmem:[%s10520 + $0x38] sm:$0xff] %v10495
        %10529 = vst [vmem:[%s10520 + $0x40] sm:$0xff] %v10496
        %10530 = vst [vmem:[%s10520 + $0x48] sm:$0xff] %v10497
        %10531 = vst [vmem:[%s10520 + $0x50] sm:$0xff] %v10498
        %10532 = vst [vmem:[%s10520 + $0x58] sm:$0xff] %v10499
        %10533 = vst [vmem:[%s10520 + $0x60] sm:$0xff] %v10500
        %10534 = vst [vmem:[%s10520 + $0x68] sm:$0xff] %v10501
        %10535 = vst [vmem:[%s10520 + $0x70] sm:$0xff] %v10502
        %10536 = vst [vmem:[%s10520 + $0x78] sm:$0xff] %v10503
        %10537 = vst [vmem:[%s10520 + $0x80] sm:$0xff] %v10504
        %10538 = vst [vmem:[%s10520 + $0x88] sm:$0xff] %v10505
        %10539 = vst [vmem:[%s10520 + $0x90] sm:$0xff] %v10506
        %10540 = vst [vmem:[%s10520 + $0x98] sm:$0xff] %v10507
        %10541 = vst [vmem:[%s10520 + $0xa0] sm:$0xff] %v10508
        %10542 = vst [vmem:[%s10520 + $0xa8] sm:$0xff] %v10509
        %10543 = vst [vmem:[%s10520 + $0xb0] sm:$0xff] %v10510
        %10544 = vst [vmem:[%s10520 + $0xb8] sm:$0xff] %v10511
        %10545 = vst [vmem:[%s10520 + $0xc0] sm:$0xff] %v10512
        %10546 = vst [vmem:[%s10520 + $0xc8] sm:$0xff] %v10513
        %10547 = vst [vmem:[%s10520 + $0xd0] sm:$0xff] %v10514
        %10548 = vst [vmem:[%s10520 + $0xd8] sm:$0xff] %v10515
        %10549 = vst [vmem:[%s10520 + $0xe0] sm:$0xff] %v10516
        %10550 = vst [vmem:[%s10520 + $0xe8] sm:$0xff] %v10517
        %10551 = vst [vmem:[%s10520 + $0xf0] sm:$0xff] %v10518
        %10552 = vst [vmem:[%s10520 + $0xf8] sm:$0xff] %v10519
        %v10553 = vmul.f32 %v10104, 0.25
        %v10554 = vmul.f32 %v10182, 0.25
        %v10555 = vmul.f32 %v10107, 0.25
        %v10556 = vmul.f32 %v10183, 0.25
        %v10557 = vmul.f32 %v10110, 0.25
        %v10558 = vmul.f32 %v10184, 0.25
        %v10559 = vmul.f32 %v10113, 0.25
        %v10560 = vmul.f32 %v10185, 0.25
        %v10561 = vmul.f32 %v10116, 0.25
        %v10562 = vmul.f32 %v10186, 0.25
        %v10563 = vmul.f32 %v10119, 0.25
        %v10564 = vmul.f32 %v10187, 0.25
        %v10565 = vmul.f32 %v10122, 0.25
        %v10566 = vmul.f32 %v10188, 0.25
        %v10567 = vmul.f32 %v10125, 0.25
        %v10568 = vmul.f32 %v10189, 0.25
        %v10569 = vmul.f32 %v10128, 0.25
        %v10570 = vmul.f32 %v10190, 0.25
        %v10571 = vmul.f32 %v10131, 0.25
        %v10572 = vmul.f32 %v10191, 0.25
        %v10573 = vmul.f32 %v10134, 0.25
        %v10574 = vmul.f32 %v10192, 0.25
        %v10575 = vmul.f32 %v10137, 0.25
        %v10576 = vmul.f32 %v10193, 0.25
        %v10577 = vmul.f32 %v10140, 0.25
        %v10578 = vmul.f32 %v10194, 0.25
        %v10579 = vmul.f32 %v10143, 0.25
        %v10580 = vmul.f32 %v10195, 0.25
        %v10581 = vmul.f32 %v10146, 0.25
        %v10582 = vmul.f32 %v10196, 0.25
        %v10583 = vmul.f32 %v10149, 0.25
        %v10584 = vmul.f32 %v10197, 0.25
        %v10585 = vadd.f32 %v10424, %v10553
        %v10586 = vadd.f32 %v10425, %v10554
        %v10587 = vadd.f32 %v10426, %v10555
        %v10588 = vadd.f32 %v10427, %v10556
        %v10589 = vadd.f32 %v10428, %v10557
        %v10590 = vadd.f32 %v10429, %v10558
        %v10591 = vadd.f32 %v10430, %v10559
        %v10592 = vadd.f32 %v10431, %v10560
        %v10593 = vadd.f32 %v10432, %v10561
        %v10594 = vadd.f32 %v10433, %v10562
        %v10595 = vadd.f32 %v10434, %v10563
        %v10596 = vadd.f32 %v10435, %v10564
        %v10597 = vadd.f32 %v10436, %v10565
        %v10598 = vadd.f32 %v10437, %v10566
        %v10599 = vadd.f32 %v10438, %v10567
        %v10600 = vadd.f32 %v10439, %v10568
        %v10601 = vadd.f32 %v10440, %v10569
        %v10602 = vadd.f32 %v10441, %v10570
        %v10603 = vadd.f32 %v10442, %v10571
        %v10604 = vadd.f32 %v10443, %v10572
        %v10605 = vadd.f32 %v10444, %v10573
        %v10606 = vadd.f32 %v10445, %v10574
        %v10607 = vadd.f32 %v10446, %v10575
        %v10608 = vadd.f32 %v10447, %v10576
        %v10609 = vadd.f32 %v10448, %v10577
        %v10610 = vadd.f32 %v10449, %v10578
        %v10611 = vadd.f32 %v10450, %v10579
        %v10612 = vadd.f32 %v10451, %v10580
        %v10613 = vadd.f32 %v10452, %v10581
        %v10614 = vadd.f32 %v10453, %v10582
        %v10615 = vadd.f32 %v10454, %v10583
        %v10616 = vadd.f32 %v10455, %v10584
        %s10617 = scalar_lea.vmem %s238, 2816
        %10618 = vst [vmem:[%s10617] sm:$0xff] %v10585
        %10619 = vst [vmem:[%s10617 + $0x8] sm:$0xff] %v10586
        %10620 = vst [vmem:[%s10617 + $0x10] sm:$0xff] %v10587
        %10621 = vst [vmem:[%s10617 + $0x18] sm:$0xff] %v10588
        %10622 = vst [vmem:[%s10617 + $0x20] sm:$0xff] %v10589
        %10623 = vst [vmem:[%s10617 + $0x28] sm:$0xff] %v10590
        %10624 = vst [vmem:[%s10617 + $0x30] sm:$0xff] %v10591
        %10625 = vst [vmem:[%s10617 + $0x38] sm:$0xff] %v10592
        %10626 = vst [vmem:[%s10617 + $0x40] sm:$0xff] %v10593
        %10627 = vst [vmem:[%s10617 + $0x48] sm:$0xff] %v10594
        %10628 = vst [vmem:[%s10617 + $0x50] sm:$0xff] %v10595
        %10629 = vst [vmem:[%s10617 + $0x58] sm:$0xff] %v10596
        %10630 = vst [vmem:[%s10617 + $0x60] sm:$0xff] %v10597
        %10631 = vst [vmem:[%s10617 + $0x68] sm:$0xff] %v10598
        %10632 = vst [vmem:[%s10617 + $0x70] sm:$0xff] %v10599
        %10633 = vst [vmem:[%s10617 + $0x78] sm:$0xff] %v10600
        %10634 = vst [vmem:[%s10617 + $0x80] sm:$0xff] %v10601
        %10635 = vst [vmem:[%s10617 + $0x88] sm:$0xff] %v10602
        %10636 = vst [vmem:[%s10617 + $0x90] sm:$0xff] %v10603
        %10637 = vst [vmem:[%s10617 + $0x98] sm:$0xff] %v10604
        %10638 = vst [vmem:[%s10617 + $0xa0] sm:$0xff] %v10605
        %10639 = vst [vmem:[%s10617 + $0xa8] sm:$0xff] %v10606
        %10640 = vst [vmem:[%s10617 + $0xb0] sm:$0xff] %v10607
        %10641 = vst [vmem:[%s10617 + $0xb8] sm:$0xff] %v10608
        %10642 = vst [vmem:[%s10617 + $0xc0] sm:$0xff] %v10609
        %10643 = vst [vmem:[%s10617 + $0xc8] sm:$0xff] %v10610
        %10644 = vst [vmem:[%s10617 + $0xd0] sm:$0xff] %v10611
        %10645 = vst [vmem:[%s10617 + $0xd8] sm:$0xff] %v10612
        %10646 = vst [vmem:[%s10617 + $0xe0] sm:$0xff] %v10613
        %10647 = vst [vmem:[%s10617 + $0xe8] sm:$0xff] %v10614
        %10648 = vst [vmem:[%s10617 + $0xf0] sm:$0xff] %v10615
        %10649 = vst [vmem:[%s10617 + $0xf8] sm:$0xff] %v10616
        %v10682 = vrot.slane %v8493, 7
        %v10683 = vrot.slane %v8494, 7
        %v10684 = vsel %vm8557, %v10682, %v10683
        %v10685 = vrot.slane %v8495, 7
        %v10686 = vrot.slane %v8496, 7
        %v10687 = vsel %vm8557, %v10685, %v10686
        %v10688 = vrot.slane %v8497, 7
        %v10689 = vrot.slane %v8498, 7
        %v10690 = vsel %vm8557, %v10688, %v10689
        %v10691 = vrot.slane %v8499, 7
        %v10692 = vrot.slane %v8500, 7
        %v10693 = vsel %vm8557, %v10691, %v10692
        %v10694 = vrot.slane %v8501, 7
        %v10695 = vrot.slane %v8502, 7
        %v10696 = vsel %vm8557, %v10694, %v10695
        %v10697 = vrot.slane %v8503, 7
        %v10698 = vrot.slane %v8504, 7
        %v10699 = vsel %vm8557, %v10697, %v10698
        %v10700 = vrot.slane %v8505, 7
        %v10701 = vrot.slane %v8506, 7
        %v10702 = vsel %vm8557, %v10700, %v10701
        %v10703 = vrot.slane %v8507, 7
        %v10704 = vrot.slane %v8508, 7
        %v10705 = vsel %vm8557, %v10703, %v10704
        %v10706 = vrot.slane %v8509, 7
        %v10707 = vrot.slane %v8510, 7
        %v10708 = vsel %vm8557, %v10706, %v10707
        %v10709 = vrot.slane %v8511, 7
        %v10710 = vrot.slane %v8512, 7
        %v10711 = vsel %vm8557, %v10709, %v10710
        %v10712 = vrot.slane %v8513, 7
        %v10713 = vrot.slane %v8514, 7
        %v10714 = vsel %vm8557, %v10712, %v10713
        %v10715 = vrot.slane %v8515, 7
        %v10716 = vrot.slane %v8516, 7
        %v10717 = vsel %vm8557, %v10715, %v10716
        %v10718 = vrot.slane %v8517, 7
        %v10719 = vrot.slane %v8518, 7
        %v10720 = vsel %vm8557, %v10718, %v10719
        %v10721 = vrot.slane %v8519, 7
        %v10722 = vrot.slane %v8520, 7
        %v10723 = vsel %vm8557, %v10721, %v10722
        %v10724 = vrot.slane %v8521, 7
        %v10725 = vrot.slane %v8522, 7
        %v10726 = vsel %vm8557, %v10724, %v10725
        %v10727 = vrot.slane %v8523, 7
        %v10728 = vrot.slane %v8524, 7
        %v10729 = vsel %vm8557, %v10727, %v10728
        %v10762 = vsel %vm8557, %v8237, %v10682
        %v10763 = vsel %vm8557, %v8239, %v10685
        %v10764 = vsel %vm8557, %v8241, %v10688
        %v10765 = vsel %vm8557, %v8243, %v10691
        %v10766 = vsel %vm8557, %v8245, %v10694
        %v10767 = vsel %vm8557, %v8247, %v10697
        %v10768 = vsel %vm8557, %v8249, %v10700
        %v10769 = vsel %vm8557, %v8251, %v10703
        %v10770 = vsel %vm8557, %v8253, %v10706
        %v10771 = vsel %vm8557, %v8255, %v10709
        %v10772 = vsel %vm8557, %v8257, %v10712
        %v10773 = vsel %vm8557, %v8259, %v10715
        %v10774 = vsel %vm8557, %v8261, %v10718
        %v10775 = vsel %vm8557, %v8263, %v10721
        %v10776 = vsel %vm8557, %v8265, %v10724
        %v10777 = vsel %vm8557, %v8267, %v10727
        %v10810 = vrot.slane %v8237, 1
        %v10811 = vrot.slane %v8238, 1
        %v10812 = vsel %vm8686, %v10810, %v10811
        %v10813 = vrot.slane %v8239, 1
        %v10814 = vrot.slane %v8240, 1
        %v10815 = vsel %vm8686, %v10813, %v10814
        %v10816 = vrot.slane %v8241, 1
        %v10817 = vrot.slane %v8242, 1
        %v10818 = vsel %vm8686, %v10816, %v10817
        %v10819 = vrot.slane %v8243, 1
        %v10820 = vrot.slane %v8244, 1
        %v10821 = vsel %vm8686, %v10819, %v10820
        %v10822 = vrot.slane %v8245, 1
        %v10823 = vrot.slane %v8246, 1
        %v10824 = vsel %vm8686, %v10822, %v10823
        %v10825 = vrot.slane %v8247, 1
        %v10826 = vrot.slane %v8248, 1
        %v10827 = vsel %vm8686, %v10825, %v10826
        %v10828 = vrot.slane %v8249, 1
        %v10829 = vrot.slane %v8250, 1
        %v10830 = vsel %vm8686, %v10828, %v10829
        %v10831 = vrot.slane %v8251, 1
        %v10832 = vrot.slane %v8252, 1
        %v10833 = vsel %vm8686, %v10831, %v10832
        %v10834 = vrot.slane %v8253, 1
        %v10835 = vrot.slane %v8254, 1
        %v10836 = vsel %vm8686, %v10834, %v10835
        %v10837 = vrot.slane %v8255, 1
        %v10838 = vrot.slane %v8256, 1
        %v10839 = vsel %vm8686, %v10837, %v10838
        %v10840 = vrot.slane %v8257, 1
        %v10841 = vrot.slane %v8258, 1
        %v10842 = vsel %vm8686, %v10840, %v10841
        %v10843 = vrot.slane %v8259, 1
        %v10844 = vrot.slane %v8260, 1
        %v10845 = vsel %vm8686, %v10843, %v10844
        %v10846 = vrot.slane %v8261, 1
        %v10847 = vrot.slane %v8262, 1
        %v10848 = vsel %vm8686, %v10846, %v10847
        %v10849 = vrot.slane %v8263, 1
        %v10850 = vrot.slane %v8264, 1
        %v10851 = vsel %vm8686, %v10849, %v10850
        %v10852 = vrot.slane %v8265, 1
        %v10853 = vrot.slane %v8266, 1
        %v10854 = vsel %vm8686, %v10852, %v10853
        %v10855 = vrot.slane %v8267, 1
        %v10856 = vrot.slane %v8268, 1
        %v10857 = vsel %vm8686, %v10855, %v10856
        %v10890 = vsel %vm8686, %v10811, %v8494
        %v10891 = vsel %vm8686, %v10814, %v8496
        %v10892 = vsel %vm8686, %v10817, %v8498
        %v10893 = vsel %vm8686, %v10820, %v8500
        %v10894 = vsel %vm8686, %v10823, %v8502
        %v10895 = vsel %vm8686, %v10826, %v8504
        %v10896 = vsel %vm8686, %v10829, %v8506
        %v10897 = vsel %vm8686, %v10832, %v8508
        %v10898 = vsel %vm8686, %v10835, %v8510
        %v10899 = vsel %vm8686, %v10838, %v8512
        %v10900 = vsel %vm8686, %v10841, %v8514
        %v10901 = vsel %vm8686, %v10844, %v8516
        %v10902 = vsel %vm8686, %v10847, %v8518
        %v10903 = vsel %vm8686, %v10850, %v8520
        %v10904 = vsel %vm8686, %v10853, %v8522
        %v10905 = vsel %vm8686, %v10856, %v8524
        %v10906 = vmul.f32 %v8237, 0.75
        %v10907 = vmul.f32 %v8238, 0.75
        %v10908 = vmul.f32 %v8239, 0.75
        %v10909 = vmul.f32 %v8240, 0.75
        %v10910 = vmul.f32 %v8241, 0.75
        %v10911 = vmul.f32 %v8242, 0.75
        %v10912 = vmul.f32 %v8243, 0.75
        %v10913 = vmul.f32 %v8244, 0.75
        %v10914 = vmul.f32 %v8245, 0.75
        %v10915 = vmul.f32 %v8246, 0.75
        %v10916 = vmul.f32 %v8247, 0.75
        %v10917 = vmul.f32 %v8248, 0.75
        %v10918 = vmul.f32 %v8249, 0.75
        %v10919 = vmul.f32 %v8250, 0.75
        %v10920 = vmul.f32 %v8251, 0.75
        %v10921 = vmul.f32 %v8252, 0.75
        %v10922 = vmul.f32 %v8253, 0.75
        %v10923 = vmul.f32 %v8254, 0.75
        %v10924 = vmul.f32 %v8255, 0.75
        %v10925 = vmul.f32 %v8256, 0.75
        %v10926 = vmul.f32 %v8257, 0.75
        %v10927 = vmul.f32 %v8258, 0.75
        %v10928 = vmul.f32 %v8259, 0.75
        %v10929 = vmul.f32 %v8260, 0.75
        %v10930 = vmul.f32 %v8261, 0.75
        %v10931 = vmul.f32 %v8262, 0.75
        %v10932 = vmul.f32 %v8263, 0.75
        %v10933 = vmul.f32 %v8264, 0.75
        %v10934 = vmul.f32 %v8265, 0.75
        %v10935 = vmul.f32 %v8266, 0.75
        %v10936 = vmul.f32 %v8267, 0.75
        %v10937 = vmul.f32 %v8268, 0.75
        %v10938 = vmul.f32 %v10762, 0.25
        %v10939 = vmul.f32 %v10684, 0.25
        %v10940 = vmul.f32 %v10763, 0.25
        %v10941 = vmul.f32 %v10687, 0.25
        %v10942 = vmul.f32 %v10764, 0.25
        %v10943 = vmul.f32 %v10690, 0.25
        %v10944 = vmul.f32 %v10765, 0.25
        %v10945 = vmul.f32 %v10693, 0.25
        %v10946 = vmul.f32 %v10766, 0.25
        %v10947 = vmul.f32 %v10696, 0.25
        %v10948 = vmul.f32 %v10767, 0.25
        %v10949 = vmul.f32 %v10699, 0.25
        %v10950 = vmul.f32 %v10768, 0.25
        %v10951 = vmul.f32 %v10702, 0.25
        %v10952 = vmul.f32 %v10769, 0.25
        %v10953 = vmul.f32 %v10705, 0.25
        %v10954 = vmul.f32 %v10770, 0.25
        %v10955 = vmul.f32 %v10708, 0.25
        %v10956 = vmul.f32 %v10771, 0.25
        %v10957 = vmul.f32 %v10711, 0.25
        %v10958 = vmul.f32 %v10772, 0.25
        %v10959 = vmul.f32 %v10714, 0.25
        %v10960 = vmul.f32 %v10773, 0.25
        %v10961 = vmul.f32 %v10717, 0.25
        %v10962 = vmul.f32 %v10774, 0.25
        %v10963 = vmul.f32 %v10720, 0.25
        %v10964 = vmul.f32 %v10775, 0.25
        %v10965 = vmul.f32 %v10723, 0.25
        %v10966 = vmul.f32 %v10776, 0.25
        %v10967 = vmul.f32 %v10726, 0.25
        %v10968 = vmul.f32 %v10777, 0.25
        %v10969 = vmul.f32 %v10729, 0.25
        %v10970 = vadd.f32 %v10906, %v10938
        %v10971 = vadd.f32 %v10907, %v10939
        %v10972 = vadd.f32 %v10908, %v10940
        %v10973 = vadd.f32 %v10909, %v10941
        %v10974 = vadd.f32 %v10910, %v10942
        %v10975 = vadd.f32 %v10911, %v10943
        %v10976 = vadd.f32 %v10912, %v10944
        %v10977 = vadd.f32 %v10913, %v10945
        %v10978 = vadd.f32 %v10914, %v10946
        %v10979 = vadd.f32 %v10915, %v10947
        %v10980 = vadd.f32 %v10916, %v10948
        %v10981 = vadd.f32 %v10917, %v10949
        %v10982 = vadd.f32 %v10918, %v10950
        %v10983 = vadd.f32 %v10919, %v10951
        %v10984 = vadd.f32 %v10920, %v10952
        %v10985 = vadd.f32 %v10921, %v10953
        %v10986 = vadd.f32 %v10922, %v10954
        %v10987 = vadd.f32 %v10923, %v10955
        %v10988 = vadd.f32 %v10924, %v10956
        %v10989 = vadd.f32 %v10925, %v10957
        %v10990 = vadd.f32 %v10926, %v10958
        %v10991 = vadd.f32 %v10927, %v10959
        %v10992 = vadd.f32 %v10928, %v10960
        %v10993 = vadd.f32 %v10929, %v10961
        %v10994 = vadd.f32 %v10930, %v10962
        %v10995 = vadd.f32 %v10931, %v10963
        %v10996 = vadd.f32 %v10932, %v10964
        %v10997 = vadd.f32 %v10933, %v10965
        %v10998 = vadd.f32 %v10934, %v10966
        %v10999 = vadd.f32 %v10935, %v10967
        %v11000 = vadd.f32 %v10936, %v10968
        %v11001 = vadd.f32 %v10937, %v10969
        %s11002 = scalar_lea.vmem %s238, 3072
        %11003 = vst [vmem:[%s11002] sm:$0xff] %v10970
        %11004 = vst [vmem:[%s11002 + $0x8] sm:$0xff] %v10971
        %11005 = vst [vmem:[%s11002 + $0x10] sm:$0xff] %v10972
        %11006 = vst [vmem:[%s11002 + $0x18] sm:$0xff] %v10973
        %11007 = vst [vmem:[%s11002 + $0x20] sm:$0xff] %v10974
        %11008 = vst [vmem:[%s11002 + $0x28] sm:$0xff] %v10975
        %11009 = vst [vmem:[%s11002 + $0x30] sm:$0xff] %v10976
        %11010 = vst [vmem:[%s11002 + $0x38] sm:$0xff] %v10977
        %11011 = vst [vmem:[%s11002 + $0x40] sm:$0xff] %v10978
        %11012 = vst [vmem:[%s11002 + $0x48] sm:$0xff] %v10979
        %11013 = vst [vmem:[%s11002 + $0x50] sm:$0xff] %v10980
        %11014 = vst [vmem:[%s11002 + $0x58] sm:$0xff] %v10981
        %11015 = vst [vmem:[%s11002 + $0x60] sm:$0xff] %v10982
        %11016 = vst [vmem:[%s11002 + $0x68] sm:$0xff] %v10983
        %11017 = vst [vmem:[%s11002 + $0x70] sm:$0xff] %v10984
        %11018 = vst [vmem:[%s11002 + $0x78] sm:$0xff] %v10985
        %11019 = vst [vmem:[%s11002 + $0x80] sm:$0xff] %v10986
        %11020 = vst [vmem:[%s11002 + $0x88] sm:$0xff] %v10987
        %11021 = vst [vmem:[%s11002 + $0x90] sm:$0xff] %v10988
        %11022 = vst [vmem:[%s11002 + $0x98] sm:$0xff] %v10989
        %11023 = vst [vmem:[%s11002 + $0xa0] sm:$0xff] %v10990
        %11024 = vst [vmem:[%s11002 + $0xa8] sm:$0xff] %v10991
        %11025 = vst [vmem:[%s11002 + $0xb0] sm:$0xff] %v10992
        %11026 = vst [vmem:[%s11002 + $0xb8] sm:$0xff] %v10993
        %11027 = vst [vmem:[%s11002 + $0xc0] sm:$0xff] %v10994
        %11028 = vst [vmem:[%s11002 + $0xc8] sm:$0xff] %v10995
        %11029 = vst [vmem:[%s11002 + $0xd0] sm:$0xff] %v10996
        %11030 = vst [vmem:[%s11002 + $0xd8] sm:$0xff] %v10997
        %11031 = vst [vmem:[%s11002 + $0xe0] sm:$0xff] %v10998
        %11032 = vst [vmem:[%s11002 + $0xe8] sm:$0xff] %v10999
        %11033 = vst [vmem:[%s11002 + $0xf0] sm:$0xff] %v11000
        %11034 = vst [vmem:[%s11002 + $0xf8] sm:$0xff] %v11001
        %v11035 = vmul.f32 %v8493, 0.25
        %v11036 = vmul.f32 %v8494, 0.25
        %v11037 = vmul.f32 %v8495, 0.25
        %v11038 = vmul.f32 %v8496, 0.25
        %v11039 = vmul.f32 %v8497, 0.25
        %v11040 = vmul.f32 %v8498, 0.25
        %v11041 = vmul.f32 %v8499, 0.25
        %v11042 = vmul.f32 %v8500, 0.25
        %v11043 = vmul.f32 %v8501, 0.25
        %v11044 = vmul.f32 %v8502, 0.25
        %v11045 = vmul.f32 %v8503, 0.25
        %v11046 = vmul.f32 %v8504, 0.25
        %v11047 = vmul.f32 %v8505, 0.25
        %v11048 = vmul.f32 %v8506, 0.25
        %v11049 = vmul.f32 %v8507, 0.25
        %v11050 = vmul.f32 %v8508, 0.25
        %v11051 = vmul.f32 %v8509, 0.25
        %v11052 = vmul.f32 %v8510, 0.25
        %v11053 = vmul.f32 %v8511, 0.25
        %v11054 = vmul.f32 %v8512, 0.25
        %v11055 = vmul.f32 %v8513, 0.25
        %v11056 = vmul.f32 %v8514, 0.25
        %v11057 = vmul.f32 %v8515, 0.25
        %v11058 = vmul.f32 %v8516, 0.25
        %v11059 = vmul.f32 %v8517, 0.25
        %v11060 = vmul.f32 %v8518, 0.25
        %v11061 = vmul.f32 %v8519, 0.25
        %v11062 = vmul.f32 %v8520, 0.25
        %v11063 = vmul.f32 %v8521, 0.25
        %v11064 = vmul.f32 %v8522, 0.25
        %v11065 = vmul.f32 %v8523, 0.25
        %v11066 = vmul.f32 %v8524, 0.25
        %v11067 = vadd.f32 %v10906, %v11035
        %v11068 = vadd.f32 %v10907, %v11036
        %v11069 = vadd.f32 %v10908, %v11037
        %v11070 = vadd.f32 %v10909, %v11038
        %v11071 = vadd.f32 %v10910, %v11039
        %v11072 = vadd.f32 %v10911, %v11040
        %v11073 = vadd.f32 %v10912, %v11041
        %v11074 = vadd.f32 %v10913, %v11042
        %v11075 = vadd.f32 %v10914, %v11043
        %v11076 = vadd.f32 %v10915, %v11044
        %v11077 = vadd.f32 %v10916, %v11045
        %v11078 = vadd.f32 %v10917, %v11046
        %v11079 = vadd.f32 %v10918, %v11047
        %v11080 = vadd.f32 %v10919, %v11048
        %v11081 = vadd.f32 %v10920, %v11049
        %v11082 = vadd.f32 %v10921, %v11050
        %v11083 = vadd.f32 %v10922, %v11051
        %v11084 = vadd.f32 %v10923, %v11052
        %v11085 = vadd.f32 %v10924, %v11053
        %v11086 = vadd.f32 %v10925, %v11054
        %v11087 = vadd.f32 %v10926, %v11055
        %v11088 = vadd.f32 %v10927, %v11056
        %v11089 = vadd.f32 %v10928, %v11057
        %v11090 = vadd.f32 %v10929, %v11058
        %v11091 = vadd.f32 %v10930, %v11059
        %v11092 = vadd.f32 %v10931, %v11060
        %v11093 = vadd.f32 %v10932, %v11061
        %v11094 = vadd.f32 %v10933, %v11062
        %v11095 = vadd.f32 %v10934, %v11063
        %v11096 = vadd.f32 %v10935, %v11064
        %v11097 = vadd.f32 %v10936, %v11065
        %v11098 = vadd.f32 %v10937, %v11066
        %s11099 = scalar_lea.vmem %s238, 3328
        %11100 = vst [vmem:[%s11099] sm:$0xff] %v11067
        %11101 = vst [vmem:[%s11099 + $0x8] sm:$0xff] %v11068
        %11102 = vst [vmem:[%s11099 + $0x10] sm:$0xff] %v11069
        %11103 = vst [vmem:[%s11099 + $0x18] sm:$0xff] %v11070
        %11104 = vst [vmem:[%s11099 + $0x20] sm:$0xff] %v11071
        %11105 = vst [vmem:[%s11099 + $0x28] sm:$0xff] %v11072
        %11106 = vst [vmem:[%s11099 + $0x30] sm:$0xff] %v11073
        %11107 = vst [vmem:[%s11099 + $0x38] sm:$0xff] %v11074
        %11108 = vst [vmem:[%s11099 + $0x40] sm:$0xff] %v11075
        %11109 = vst [vmem:[%s11099 + $0x48] sm:$0xff] %v11076
        %11110 = vst [vmem:[%s11099 + $0x50] sm:$0xff] %v11077
        %11111 = vst [vmem:[%s11099 + $0x58] sm:$0xff] %v11078
        %11112 = vst [vmem:[%s11099 + $0x60] sm:$0xff] %v11079
        %11113 = vst [vmem:[%s11099 + $0x68] sm:$0xff] %v11080
        %11114 = vst [vmem:[%s11099 + $0x70] sm:$0xff] %v11081
        %11115 = vst [vmem:[%s11099 + $0x78] sm:$0xff] %v11082
        %11116 = vst [vmem:[%s11099 + $0x80] sm:$0xff] %v11083
        %11117 = vst [vmem:[%s11099 + $0x88] sm:$0xff] %v11084
        %11118 = vst [vmem:[%s11099 + $0x90] sm:$0xff] %v11085
        %11119 = vst [vmem:[%s11099 + $0x98] sm:$0xff] %v11086
        %11120 = vst [vmem:[%s11099 + $0xa0] sm:$0xff] %v11087
        %11121 = vst [vmem:[%s11099 + $0xa8] sm:$0xff] %v11088
        %11122 = vst [vmem:[%s11099 + $0xb0] sm:$0xff] %v11089
        %11123 = vst [vmem:[%s11099 + $0xb8] sm:$0xff] %v11090
        %11124 = vst [vmem:[%s11099 + $0xc0] sm:$0xff] %v11091
        %11125 = vst [vmem:[%s11099 + $0xc8] sm:$0xff] %v11092
        %11126 = vst [vmem:[%s11099 + $0xd0] sm:$0xff] %v11093
        %11127 = vst [vmem:[%s11099 + $0xd8] sm:$0xff] %v11094
        %11128 = vst [vmem:[%s11099 + $0xe0] sm:$0xff] %v11095
        %11129 = vst [vmem:[%s11099 + $0xe8] sm:$0xff] %v11096
        %11130 = vst [vmem:[%s11099 + $0xf0] sm:$0xff] %v11097
        %11131 = vst [vmem:[%s11099 + $0xf8] sm:$0xff] %v11098
        %v11132 = vmul.f32 %v8493, 0.75
        %v11133 = vmul.f32 %v8494, 0.75
        %v11134 = vmul.f32 %v8495, 0.75
        %v11135 = vmul.f32 %v8496, 0.75
        %v11136 = vmul.f32 %v8497, 0.75
        %v11137 = vmul.f32 %v8498, 0.75
        %v11138 = vmul.f32 %v8499, 0.75
        %v11139 = vmul.f32 %v8500, 0.75
        %v11140 = vmul.f32 %v8501, 0.75
        %v11141 = vmul.f32 %v8502, 0.75
        %v11142 = vmul.f32 %v8503, 0.75
        %v11143 = vmul.f32 %v8504, 0.75
        %v11144 = vmul.f32 %v8505, 0.75
        %v11145 = vmul.f32 %v8506, 0.75
        %v11146 = vmul.f32 %v8507, 0.75
        %v11147 = vmul.f32 %v8508, 0.75
        %v11148 = vmul.f32 %v8509, 0.75
        %v11149 = vmul.f32 %v8510, 0.75
        %v11150 = vmul.f32 %v8511, 0.75
        %v11151 = vmul.f32 %v8512, 0.75
        %v11152 = vmul.f32 %v8513, 0.75
        %v11153 = vmul.f32 %v8514, 0.75
        %v11154 = vmul.f32 %v8515, 0.75
        %v11155 = vmul.f32 %v8516, 0.75
        %v11156 = vmul.f32 %v8517, 0.75
        %v11157 = vmul.f32 %v8518, 0.75
        %v11158 = vmul.f32 %v8519, 0.75
        %v11159 = vmul.f32 %v8520, 0.75
        %v11160 = vmul.f32 %v8521, 0.75
        %v11161 = vmul.f32 %v8522, 0.75
        %v11162 = vmul.f32 %v8523, 0.75
        %v11163 = vmul.f32 %v8524, 0.75
        %v11164 = vmul.f32 %v8237, 0.25
        %v11165 = vmul.f32 %v8238, 0.25
        %v11166 = vmul.f32 %v8239, 0.25
        %v11167 = vmul.f32 %v8240, 0.25
        %v11168 = vmul.f32 %v8241, 0.25
        %v11169 = vmul.f32 %v8242, 0.25
        %v11170 = vmul.f32 %v8243, 0.25
        %v11171 = vmul.f32 %v8244, 0.25
        %v11172 = vmul.f32 %v8245, 0.25
        %v11173 = vmul.f32 %v8246, 0.25
        %v11174 = vmul.f32 %v8247, 0.25
        %v11175 = vmul.f32 %v8248, 0.25
        %v11176 = vmul.f32 %v8249, 0.25
        %v11177 = vmul.f32 %v8250, 0.25
        %v11178 = vmul.f32 %v8251, 0.25
        %v11179 = vmul.f32 %v8252, 0.25
        %v11180 = vmul.f32 %v8253, 0.25
        %v11181 = vmul.f32 %v8254, 0.25
        %v11182 = vmul.f32 %v8255, 0.25
        %v11183 = vmul.f32 %v8256, 0.25
        %v11184 = vmul.f32 %v8257, 0.25
        %v11185 = vmul.f32 %v8258, 0.25
        %v11186 = vmul.f32 %v8259, 0.25
        %v11187 = vmul.f32 %v8260, 0.25
        %v11188 = vmul.f32 %v8261, 0.25
        %v11189 = vmul.f32 %v8262, 0.25
        %v11190 = vmul.f32 %v8263, 0.25
        %v11191 = vmul.f32 %v8264, 0.25
        %v11192 = vmul.f32 %v8265, 0.25
        %v11193 = vmul.f32 %v8266, 0.25
        %v11194 = vmul.f32 %v8267, 0.25
        %v11195 = vmul.f32 %v8268, 0.25
        %v11196 = vadd.f32 %v11132, %v11164
        %v11197 = vadd.f32 %v11133, %v11165
        %v11198 = vadd.f32 %v11134, %v11166
        %v11199 = vadd.f32 %v11135, %v11167
        %v11200 = vadd.f32 %v11136, %v11168
        %v11201 = vadd.f32 %v11137, %v11169
        %v11202 = vadd.f32 %v11138, %v11170
        %v11203 = vadd.f32 %v11139, %v11171
        %v11204 = vadd.f32 %v11140, %v11172
        %v11205 = vadd.f32 %v11141, %v11173
        %v11206 = vadd.f32 %v11142, %v11174
        %v11207 = vadd.f32 %v11143, %v11175
        %v11208 = vadd.f32 %v11144, %v11176
        %v11209 = vadd.f32 %v11145, %v11177
        %v11210 = vadd.f32 %v11146, %v11178
        %v11211 = vadd.f32 %v11147, %v11179
        %v11212 = vadd.f32 %v11148, %v11180
        %v11213 = vadd.f32 %v11149, %v11181
        %v11214 = vadd.f32 %v11150, %v11182
        %v11215 = vadd.f32 %v11151, %v11183
        %v11216 = vadd.f32 %v11152, %v11184
        %v11217 = vadd.f32 %v11153, %v11185
        %v11218 = vadd.f32 %v11154, %v11186
        %v11219 = vadd.f32 %v11155, %v11187
        %v11220 = vadd.f32 %v11156, %v11188
        %v11221 = vadd.f32 %v11157, %v11189
        %v11222 = vadd.f32 %v11158, %v11190
        %v11223 = vadd.f32 %v11159, %v11191
        %v11224 = vadd.f32 %v11160, %v11192
        %v11225 = vadd.f32 %v11161, %v11193
        %v11226 = vadd.f32 %v11162, %v11194
        %v11227 = vadd.f32 %v11163, %v11195
        %s11228 = scalar_lea.vmem %s238, 3584
        %11229 = vst [vmem:[%s11228] sm:$0xff] %v11196
        %11230 = vst [vmem:[%s11228 + $0x8] sm:$0xff] %v11197
        %11231 = vst [vmem:[%s11228 + $0x10] sm:$0xff] %v11198
        %11232 = vst [vmem:[%s11228 + $0x18] sm:$0xff] %v11199
        %11233 = vst [vmem:[%s11228 + $0x20] sm:$0xff] %v11200
        %11234 = vst [vmem:[%s11228 + $0x28] sm:$0xff] %v11201
        %11235 = vst [vmem:[%s11228 + $0x30] sm:$0xff] %v11202
        %11236 = vst [vmem:[%s11228 + $0x38] sm:$0xff] %v11203
        %11237 = vst [vmem:[%s11228 + $0x40] sm:$0xff] %v11204
        %11238 = vst [vmem:[%s11228 + $0x48] sm:$0xff] %v11205
        %11239 = vst [vmem:[%s11228 + $0x50] sm:$0xff] %v11206
        %11240 = vst [vmem:[%s11228 + $0x58] sm:$0xff] %v11207
        %11241 = vst [vmem:[%s11228 + $0x60] sm:$0xff] %v11208
        %11242 = vst [vmem:[%s11228 + $0x68] sm:$0xff] %v11209
        %11243 = vst [vmem:[%s11228 + $0x70] sm:$0xff] %v11210
        %11244 = vst [vmem:[%s11228 + $0x78] sm:$0xff] %v11211
        %11245 = vst [vmem:[%s11228 + $0x80] sm:$0xff] %v11212
        %11246 = vst [vmem:[%s11228 + $0x88] sm:$0xff] %v11213
        %11247 = vst [vmem:[%s11228 + $0x90] sm:$0xff] %v11214
        %11248 = vst [vmem:[%s11228 + $0x98] sm:$0xff] %v11215
        %11249 = vst [vmem:[%s11228 + $0xa0] sm:$0xff] %v11216
        %11250 = vst [vmem:[%s11228 + $0xa8] sm:$0xff] %v11217
        %11251 = vst [vmem:[%s11228 + $0xb0] sm:$0xff] %v11218
        %11252 = vst [vmem:[%s11228 + $0xb8] sm:$0xff] %v11219
        %11253 = vst [vmem:[%s11228 + $0xc0] sm:$0xff] %v11220
        %11254 = vst [vmem:[%s11228 + $0xc8] sm:$0xff] %v11221
        %11255 = vst [vmem:[%s11228 + $0xd0] sm:$0xff] %v11222
        %11256 = vst [vmem:[%s11228 + $0xd8] sm:$0xff] %v11223
        %11257 = vst [vmem:[%s11228 + $0xe0] sm:$0xff] %v11224
        %11258 = vst [vmem:[%s11228 + $0xe8] sm:$0xff] %v11225
        %11259 = vst [vmem:[%s11228 + $0xf0] sm:$0xff] %v11226
        %11260 = vst [vmem:[%s11228 + $0xf8] sm:$0xff] %v11227
        %v11261 = vmul.f32 %v10812, 0.25
        %v11262 = vmul.f32 %v10890, 0.25
        %v11263 = vmul.f32 %v10815, 0.25
        %v11264 = vmul.f32 %v10891, 0.25
        %v11265 = vmul.f32 %v10818, 0.25
        %v11266 = vmul.f32 %v10892, 0.25
        %v11267 = vmul.f32 %v10821, 0.25
        %v11268 = vmul.f32 %v10893, 0.25
        %v11269 = vmul.f32 %v10824, 0.25
        %v11270 = vmul.f32 %v10894, 0.25
        %v11271 = vmul.f32 %v10827, 0.25
        %v11272 = vmul.f32 %v10895, 0.25
        %v11273 = vmul.f32 %v10830, 0.25
        %v11274 = vmul.f32 %v10896, 0.25
        %v11275 = vmul.f32 %v10833, 0.25
        %v11276 = vmul.f32 %v10897, 0.25
        %v11277 = vmul.f32 %v10836, 0.25
        %v11278 = vmul.f32 %v10898, 0.25
        %v11279 = vmul.f32 %v10839, 0.25
        %v11280 = vmul.f32 %v10899, 0.25
        %v11281 = vmul.f32 %v10842, 0.25
        %v11282 = vmul.f32 %v10900, 0.25
        %v11283 = vmul.f32 %v10845, 0.25
        %v11284 = vmul.f32 %v10901, 0.25
        %v11285 = vmul.f32 %v10848, 0.25
        %v11286 = vmul.f32 %v10902, 0.25
        %v11287 = vmul.f32 %v10851, 0.25
        %v11288 = vmul.f32 %v10903, 0.25
        %v11289 = vmul.f32 %v10854, 0.25
        %v11290 = vmul.f32 %v10904, 0.25
        %v11291 = vmul.f32 %v10857, 0.25
        %v11292 = vmul.f32 %v10905, 0.25
        %v11293 = vadd.f32 %v11132, %v11261
        %v11294 = vadd.f32 %v11133, %v11262
        %v11295 = vadd.f32 %v11134, %v11263
        %v11296 = vadd.f32 %v11135, %v11264
        %v11297 = vadd.f32 %v11136, %v11265
        %v11298 = vadd.f32 %v11137, %v11266
        %v11299 = vadd.f32 %v11138, %v11267
        %v11300 = vadd.f32 %v11139, %v11268
        %v11301 = vadd.f32 %v11140, %v11269
        %v11302 = vadd.f32 %v11141, %v11270
        %v11303 = vadd.f32 %v11142, %v11271
        %v11304 = vadd.f32 %v11143, %v11272
        %v11305 = vadd.f32 %v11144, %v11273
        %v11306 = vadd.f32 %v11145, %v11274
        %v11307 = vadd.f32 %v11146, %v11275
        %v11308 = vadd.f32 %v11147, %v11276
        %v11309 = vadd.f32 %v11148, %v11277
        %v11310 = vadd.f32 %v11149, %v11278
        %v11311 = vadd.f32 %v11150, %v11279
        %v11312 = vadd.f32 %v11151, %v11280
        %v11313 = vadd.f32 %v11152, %v11281
        %v11314 = vadd.f32 %v11153, %v11282
        %v11315 = vadd.f32 %v11154, %v11283
        %v11316 = vadd.f32 %v11155, %v11284
        %v11317 = vadd.f32 %v11156, %v11285
        %v11318 = vadd.f32 %v11157, %v11286
        %v11319 = vadd.f32 %v11158, %v11287
        %v11320 = vadd.f32 %v11159, %v11288
        %v11321 = vadd.f32 %v11160, %v11289
        %v11322 = vadd.f32 %v11161, %v11290
        %v11323 = vadd.f32 %v11162, %v11291
        %v11324 = vadd.f32 %v11163, %v11292
        %s11325 = scalar_lea.vmem %s238, 3840
        %11326 = vst [vmem:[%s11325] sm:$0xff] %v11293
        %11327 = vst [vmem:[%s11325 + $0x8] sm:$0xff] %v11294
        %11328 = vst [vmem:[%s11325 + $0x10] sm:$0xff] %v11295
        %11329 = vst [vmem:[%s11325 + $0x18] sm:$0xff] %v11296
        %11330 = vst [vmem:[%s11325 + $0x20] sm:$0xff] %v11297
        %11331 = vst [vmem:[%s11325 + $0x28] sm:$0xff] %v11298
        %11332 = vst [vmem:[%s11325 + $0x30] sm:$0xff] %v11299
        %11333 = vst [vmem:[%s11325 + $0x38] sm:$0xff] %v11300
        %11334 = vst [vmem:[%s11325 + $0x40] sm:$0xff] %v11301
        %11335 = vst [vmem:[%s11325 + $0x48] sm:$0xff] %v11302
        %11336 = vst [vmem:[%s11325 + $0x50] sm:$0xff] %v11303
        %11337 = vst [vmem:[%s11325 + $0x58] sm:$0xff] %v11304
        %11338 = vst [vmem:[%s11325 + $0x60] sm:$0xff] %v11305
        %11339 = vst [vmem:[%s11325 + $0x68] sm:$0xff] %v11306
        %11340 = vst [vmem:[%s11325 + $0x70] sm:$0xff] %v11307
        %11341 = vst [vmem:[%s11325 + $0x78] sm:$0xff] %v11308
        %11342 = vst [vmem:[%s11325 + $0x80] sm:$0xff] %v11309
        %11343 = vst [vmem:[%s11325 + $0x88] sm:$0xff] %v11310
        %11344 = vst [vmem:[%s11325 + $0x90] sm:$0xff] %v11311
        %11345 = vst [vmem:[%s11325 + $0x98] sm:$0xff] %v11312
        %11346 = vst [vmem:[%s11325 + $0xa0] sm:$0xff] %v11313
        %11347 = vst [vmem:[%s11325 + $0xa8] sm:$0xff] %v11314
        %11348 = vst [vmem:[%s11325 + $0xb0] sm:$0xff] %v11315
        %11349 = vst [vmem:[%s11325 + $0xb8] sm:$0xff] %v11316
        %11350 = vst [vmem:[%s11325 + $0xc0] sm:$0xff] %v11317
        %11351 = vst [vmem:[%s11325 + $0xc8] sm:$0xff] %v11318
        %11352 = vst [vmem:[%s11325 + $0xd0] sm:$0xff] %v11319
        %11353 = vst [vmem:[%s11325 + $0xd8] sm:$0xff] %v11320
        %11354 = vst [vmem:[%s11325 + $0xe0] sm:$0xff] %v11321
        %11355 = vst [vmem:[%s11325 + $0xe8] sm:$0xff] %v11322
        %11356 = vst [vmem:[%s11325 + $0xf0] sm:$0xff] %v11323
        %11357 = vst [vmem:[%s11325 + $0xf8] sm:$0xff] %v11324
        %p11358 = scmp.lt.s32.totalorder %s18, 1
        %s11359 = scalar_select %p11358, %s18, 1
        %s11360 = smul.addr %s11359, 128
        %s11361 = smul.addr %s11360, 8
        %s11362 = scalar_lea.vmem %s3, %s11361
        %p11363 = scmp.lt.s32.totalorder %s18, 1
        %s11364 = scalar_select %p11363, %s18, 1
        %s11365 = smul.addr %s11364, 512
        %s11366 = smul.addr %s11365, 8
        %s11367 = scalar_lea.vmem %s4, %s11366
        // Predicated region
        $region41: #{densepose_predictor_forward.1} parent=31 // pred_check
          %p11368 = pneg %p104
        $region42: #{densepose_predictor_forward.1} parent=31 // pred_check_branch
          %11370 = sbr.rel (%p11368) target = $region44
        $region43: #{densepose_predictor_forward.1} parent=31 // pred_region
          _
        $region44: #{densepose_predictor_forward.1} parent=31 // pred_fallthru
          _
        // Predicated region
        $region45: #{densepose_predictor_forward.1} parent=31 // pred_check
          %p11371 = pneg %p130
        $region46: #{densepose_predictor_forward.1} parent=31 // pred_check_branch
          %11373 = sbr.rel (%p11371) target = $region48
        $region47: #{densepose_predictor_forward.1} parent=31 // pred_region
          _
        $region48: #{densepose_predictor_forward.1} parent=31 // pred_fallthru
          _
      $region32: #{densepose_predictor_forward.1} parent=5 // pred_fallthru
        _
      %p11374 = scmp.le.s32.totalorder 2, %s13
      // Predicated region
      $region49: #{densepose_predictor_forward.1} parent=5 // pred_check
        %p11375 = pneg %p11374
      $region50: #{densepose_predictor_forward.1} parent=5 // pred_check_branch
        %11377 = sbr.rel (%p11375) target = $region52
      $region51: #{densepose_predictor_forward.1} parent=5 // pred_region
        %s11378 = ssub.s32 %s13, 2
        // Predicated region
        $region53: #{densepose_predictor_forward.1} parent=51 // pred_check
          %p11379 = pneg %p110
        $region54: #{densepose_predictor_forward.1} parent=51 // pred_check_branch
          %11381 = sbr.rel (%p11379) target = $region56
        $region55: #{densepose_predictor_forward.1} parent=51 // pred_region
          %p11382 = scmp.lt.s32.totalorder %s19, 1
          %s11383 = scalar_select %p11382, %s19, 1
          %s11384 = smul.addr %s11383, 128
          %s11385 = smul.addr %s11384, 8
          %s11386 = scalar_lea.vmem %s3, %s11385
        $region56: #{densepose_predictor_forward.1} parent=51 // pred_fallthru
          _
        // Predicated region
        $region57: #{densepose_predictor_forward.1} parent=51 // pred_check
          %p11387 = pneg %p136
        $region58: #{densepose_predictor_forward.1} parent=51 // pred_check_branch
          %11389 = sbr.rel (%p11387) target = $region60
        $region59: #{densepose_predictor_forward.1} parent=51 // pred_region
          %p11390 = scmp.lt.s32.totalorder %s19, 1
          %s11391 = scalar_select %p11390, %s19, 1
          %s11392 = smul.addr %s11391, 512
          %s11393 = smul.addr %s11392, 8
          %s11394 = scalar_lea.vmem %s4, %s11393
        $region60: #{densepose_predictor_forward.1} parent=51 // pred_fallthru
          _
      $region52: #{densepose_predictor_forward.1} parent=5 // pred_fallthru
        _
    $region6: #{densepose_predictor_forward.1} parent=1 // loop_footer
      %s17 = sadd.s32 1, %s13
    $region7: #{densepose_predictor_forward.1} parent=1 // loop_footer_branch
      %12 = sbr.rel target = $region3
    $region8: #{densepose_predictor_forward.1} parent=1 // loop_exit
      _
    %11395 = vsyncpa [#allocation3], 1
    %s11396 = scalar_lea.sflag [#allocation3], 1
    %11397 = vsyncpa %s11396, 1
    %11398 = vsyncpa [#allocation5], 1

</llo_original>
